<compile_context>
chip_gen: v6e
topology: v6e:2x2x1
jax: 0.10.0
libtpu: 0.0.40
codegen_flags: <defaults>
</compile_context>

<pallas_src>
import jax
import jax.numpy as jnp
from jax.experimental import pallas as pl
from jax.experimental.pallas import tpu as pltpu

_BF16_SUBLANE = 16                      # bf16 sublane tile; channel padding target
_LANE = 128                             # lane tile
_TILE_VMEM_BUDGET = 8 * 1024 * 1024     # per-block budget (fits v7x 32 MiB scoped default)


def _round_up(x, m):
    return ((x + m - 1) // m) * m


def _vmem_byte_cap():
    """Per-generation scoped-VMEM cap (~100 MiB on v5e/v6e, ~51 MiB on v7x)."""
    cap = 64 * 1024 * 1024
    try:
        cap = int(pltpu.get_tpu_info().vmem_capacity_bytes)
    except Exception:
        pass
    return min(100 * 1024 * 1024, max(16 * 1024 * 1024, int(cap * 0.8)))


# ----------------------------------------------------------------------------
# Pallas kernel: fused {3x3 dilated conv over 1 or 2 input branches} +
# folded BatchNorm(eval) + ReLU, with optional fused residual add.
#
#   x window  branch i : (Cpad_i, TM + halo)  bf16  (flat padded image window)
#   weights   branch i : (9, Cout, Cpad_i)    bf16  (tap-major, ky*3+kx)
#   sb                 : (Cout, 2)            f32   ([:,0]=scale, [:,1]=bias)
#   residual (opt)     : (Cout, TM)           f32
#   output             : (Cout, TM)                 lane-dense
# ----------------------------------------------------------------------------
def _make_rebnconv_kernel(n_in, offs, tm, has_res):
    def kernel(*refs):
        x_refs = refs[:n_in]
        w_refs = refs[n_in:2 * n_in]
        sb_ref = refs[2 * n_in]
        res_ref = refs[2 * n_in + 1] if has_res else None
        out_ref = refs[-1]

        # Per-tap matmuls accumulated into one f32 accumulator: no (9*Cpad, TM)
        # patches temporary, no per-branch (Cout, TM) partials.
        acc = None
        for x_ref, w_ref in zip(x_refs, w_refs):
            x = x_ref[...]                       # (Cpad, TM + halo) bf16
            w = w_ref[...]                       # (9, Cout, Cpad)   bf16
            for t, off in enumerate(offs):
                part = jnp.dot(w[t], x[:, off:off + tm],
                               preferred_element_type=jnp.float32)
                acc = part if acc is None else acc + part

        sb = sb_ref[...]                         # (Cout, 2) f32
        y = acc * sb[:, 0:1] + sb[:, 1:2]        # folded BN + conv bias
        y = jnp.maximum(y, 0.0)                  # ReLU
        if has_res:
            y = y + res_ref[...].astype(jnp.float32)
        out_ref[...] = y.astype(out_ref.dtype)

    return kernel


def _choose_tile_m(m, cout, cpads, halo, out_itemsize):
    """Flat-spatial tile (multiple of 128 lanes), sized from a VMEM budget and
    aiming for >= 2 tiles per image (pipeline + both v7x TCs at batch 1)."""
    m128 = _round_up(m, _LANE)
    if m128 <= _LANE:
        return _LANE
    # Per-output-lane block bytes: double-buffered bf16 input windows,
    # double-buffered output, f32 accumulator + (worst case) f32 residual.
    per_lane = 2 * 2 * sum(cpads) + 2 * out_itemsize * cout + 8 * cout
    fixed = 2 * 2 * sum(cpads) * halo            # halo part of the input windows
    cap = max(_LANE,
              ((_TILE_VMEM_BUDGET - fixed) // max(per_lane, 1)) // _LANE * _LANE)
    half = _round_up((m128 + 1) // 2, _LANE)
    return max(_LANE, min(m128, cap, half))


def _flatten_pad(x, d, c_pad, wp, lf):
    """(N, C, H, W) -> (N, Cpad, Lf) bf16: zero-pad C/H/W, flatten spatial."""
    n, c, h, w = x.shape
    hp = h + 2 * d
    xp = jnp.pad(x.astype(jnp.bfloat16),
                 ((0, 0), (0, c_pad - c), (d, d), (d, wp - w - d)))
    flat = xp.reshape(n, c_pad, hp * wp)
    return jnp.pad(flat, ((0, 0), (0, 0), (0, lf - hp * wp)))


def _window_tiles(flat, tm, n_tiles, tw):
    """(N, Cpad, Lf) -> (N, n_tiles, Cpad, TW) overlapping halo windows."""
    return jnp.stack([flat[:, :, t * tm:t * tm + tw] for t in range(n_tiles)],
                     axis=1)


def rebnconv(xs, params, dirate, residual=None, out_dtype=jnp.bfloat16):
    """Fused REBNCONV over 1 or 2 input branches (the decoder torch.cat is fused:
    the concatenated tensor is never materialized in HBM).

    xs: list of NCHW tensors sharing (H, W).  Returns (N, Cout, H, W)."""
    wgt, scale, bias = params            # (3,3,cin_tot,cout) f32, (cout,1) x2
    n, _, h, w = xs[0].shape
    d = dirate
    wp = w + 2 * d
    if w >= _LANE:
        # Lane-align the 3 row offsets (ky*d*wp); only kx shifts then need
        # cross-lane rotation.  Skipped for small W (zero-lane inflation).
        wp = _round_up(wp, _LANE)
    m = h * wp
    halo = 2 * d * wp + 2 * d            # largest tap offset
    cout = int(wgt.shape[-1])
    cins = [int(x.shape[1]) for x in xs]
    cpads = [_round_up(ci, _BF16_SUBLANE) for ci in cins]
    out_itemsize = jnp.dtype(out_dtype).itemsize

    tm = _choose_tile_m(m, cout, cpads, halo, out_itemsize)
    m_pad = _round_up(m, tm)             # lane-dense output width (mult. of 128)
    n_tiles = m_pad // tm
    tw = tm + halo                       # input window = tile + halo
    lf = m_pad + halo

    # Conv weights: split per input branch, pad Cin to the bf16 sublane tile,
    # reorder to (9, Cout, Cpad) so each tap's weight slab is its own sub-block.
    w_mats, off_c = [], 0
    for ci, cp in zip(cins, cpads):
        wb = wgt[:, :, off_c:off_c + ci, :]
        wb = jnp.pad(wb, ((0, 0), (0, 0), (0, cp - ci), (0, 0)))
        w_mats.append(wb.reshape(9, cp, cout).transpose(0, 2, 1)
                        .astype(jnp.bfloat16))
        off_c += ci

    # Feature maps -> flat padded bf16 -> overlapping (TM + halo) windows.
    x_windows = [_window_tiles(_flatten_pad(x, d, cp, wp, lf), tm, n_tiles, tw)
                 for x, cp in zip(xs, cpads)]

    sb = jnp.concatenate([scale, bias], axis=1).astype(jnp.float32)   # (cout, 2)

    # Tap offsets, ky-major then kx (matches the (9, cout, cp) weight order).
    offs = [(ky * d) * wp + kx * d for ky in range(3) for kx in range(3)]

    args, in_specs = [], []
    for xw, cp in zip(x_windows, cpads):
        args.append(xw)
        in_specs.append(pl.BlockSpec((None, None, cp, tw),
                                     lambda b, t: (b, t, 0, 0)))
    for wm in w_mats:
        args.append(wm)
        in_specs.append(pl.BlockSpec(wm.shape, lambda b, t: (0, 0, 0)))
    args.append(sb)
    in_specs.append(pl.BlockSpec((cout, 2), lambda b, t: (0, 0)))

    has_res = residual is not None
    if has_res:
        res = jnp.pad(residual.astype(jnp.float32),
                      ((0, 0), (0, 0), (0, 0), (0, wp - w)))
        res = res.reshape(n, cout, h * wp)
        res = jnp.pad(res, ((0, 0), (0, 0), (0, m_pad - h * wp)))
        args.append(res)
        in_specs.append(pl.BlockSpec((None, cout, tm), lambda b, t: (b, 0, t)))

    # Scoped-VMEM request from the actual block footprint (x2 double buffering),
    # capped per-generation.
    block_bytes = (2 * sum(cp * tw * 2 for cp in cpads)          # input windows
                   + sum(int(wm.size) * 2 for wm in w_mats)      # weights
                   + cout * 2 * 4                                # scale|bias
                   + 2 * cout * tm * out_itemsize                # output
                   + (2 * cout * tm * 4 if has_res else 0)       # residual
                   + cout * tm * 4                               # f32 accumulator
                   + 2 * max(cpads) * tm * 2)                    # live tap slices
    vmem_limit = min(_vmem_byte_cap(),
                     max(16 * 1024 * 1024, block_bytes + 8 * 1024 * 1024))

    flops = 2 * n * n_tiles * tm * 9 * sum(cpads) * cout
    bytes_accessed = (sum(int(a.size) * jnp.dtype(a.dtype).itemsize for a in args)
                      + n * cout * m_pad * out_itemsize)

    y_flat = pl.pallas_call(
        _make_rebnconv_kernel(len(xs), offs, tm, has_res),
        out_shape=jax.ShapeDtypeStruct((n, cout, m_pad), out_dtype),
        grid=(n, n_tiles),
        in_specs=in_specs,
        out_specs=pl.BlockSpec((None, cout, tm), lambda b, t: (b, 0, t)),
        compiler_params=pltpu.CompilerParams(
            dimension_semantics=("parallel", "parallel"),
            vmem_limit_bytes=int(vmem_limit)),
        cost_estimate=pl.CostEstimate(flops=int(flops), transcendentals=0,
                                      bytes_accessed=int(bytes_accessed)),
    )(*args)

    # (N, Cout, m_pad) -> (N, Cout, H, W): drop lane padding and Wp-W columns.
    return y_flat[:, :, :m].reshape(n, cout, h, wp)[:, :, :, :w]


# ----------------------------------------------------------------------------
# Glue ops (plain JAX), NCHW: maxpool 2x2 ceil_mode=True, bilinear upsample
# (align_corners=False, PyTorch semantics).
# ----------------------------------------------------------------------------
def _maxpool2_ceil(x):
    n, c, h, w = x.shape
    oh, ow = -(-h // 2), -(-w // 2)
    xp = jnp.pad(x, ((0, 0), (0, 0), (0, oh * 2 - h), (0, ow * 2 - w)),
                 constant_values=-jnp.inf)
    return xp.reshape(n, c, oh, 2, ow, 2).max(axis=(3, 5))


def _bilinear_resize(x, oh, ow):
    n, c, h, w = x.shape
    dtype = x.dtype
    xf = x.astype(jnp.float32)

    def coords(out_size, in_size):
        s = in_size / out_size
        src = (jnp.arange(out_size, dtype=jnp.float32) + 0.5) * s - 0.5
        src = jnp.maximum(src, 0.0)
        i0 = jnp.minimum(jnp.floor(src).astype(jnp.int32), in_size - 1)
        i1 = jnp.minimum(i0 + 1, in_size - 1)
        return i0, i1, src - i0.astype(jnp.float32)

    y0, y1, fy = coords(oh, h)
    x0, x1, fx = coords(ow, w)
    fy = fy[None, None, :, None]
    fx = fx[None, None, None, :]

    r0 = xf[:, :, y0]
    r1 = xf[:, :, y1]
    top = r0[:, :, :, x0] * (1.0 - fx) + r0[:, :, :, x1] * fx
    bot = r1[:, :, :, x0] * (1.0 - fx) + r1[:, :, :, x1] * fx
    out = top * (1.0 - fy) + bot * fy
    return out.astype(dtype)


# ----------------------------------------------------------------------------
# Parameter init (deterministic; folds BN eval-mode stats + conv bias).
# ----------------------------------------------------------------------------
def _init_rebnconv_params(key, cin, cout):
    k1, k2, k3, k4, k5, k6 = jax.random.split(key, 6)
    wgt = jax.random.normal(k1, (3, 3, cin, cout), jnp.float32) / jnp.sqrt(9.0 * cin)
    conv_b = 0.05 * jax.random.normal(k2, (cout,), jnp.float32)
    gamma = 1.0 + 0.1 * jax.random.normal(k3, (cout,), jnp.float32)
    beta = 0.1 * jax.random.normal(k4, (cout,), jnp.float32)
    r_mean = 0.1 * jax.random.normal(k5, (cout,), jnp.float32)
    r_var = 1.0 + 0.1 * jnp.abs(jax.random.normal(k6, (cout,), jnp.float32))
    eps = 1e-5
    scale = gamma / jnp.sqrt(r_var + eps)
    bias = (conv_b - r_mean) * scale + beta
    return wgt, scale.reshape(cout, 1), bias.reshape(cout, 1)


def init_rsu4_params(key, in_ch, mid_ch, out_ch):
    names_shapes = [
        ("rebnconvin", in_ch, out_ch),
        ("rebnconv1", out_ch, mid_ch),
        ("rebnconv2", mid_ch, mid_ch),
        ("rebnconv3", mid_ch, mid_ch),
        ("rebnconv4", mid_ch, mid_ch),
        ("rebnconv3d", mid_ch * 2, mid_ch),
        ("rebnconv2d", mid_ch * 2, mid_ch),
        ("rebnconv1d", mid_ch * 2, out_ch),
    ]
    keys = jax.random.split(key, len(names_shapes))
    return {name: _init_rebnconv_params(k, ci, co)
            for k, (name, ci, co) in zip(keys, names_shapes)}


# ----------------------------------------------------------------------------
# RSU4 forward (NCHW in, NCHW f32 out, matching the torch module).
# ----------------------------------------------------------------------------
@jax.jit
def rsu4_forward(x_nchw, params):
    # hxin is kept f32: it is the residual, added exactly once in the final kernel.
    hxin = rebnconv([x_nchw], params["rebnconvin"], dirate=1,
                    out_dtype=jnp.float32)
    hx1 = rebnconv([hxin], params["rebnconv1"], dirate=1)
    hx = _maxpool2_ceil(hx1)
    hx2 = rebnconv([hx], params["rebnconv2"], dirate=1)
    hx = _maxpool2_ceil(hx2)
    hx3 = rebnconv([hx], params["rebnconv3"], dirate=1)
    hx4 = rebnconv([hx3], params["rebnconv4"], dirate=2)

    # Decoder: torch.cat((a, b), 1) is fused into the conv kernels.
    hx3d = rebnconv([hx4, hx3], params["rebnconv3d"], dirate=1)
    hx3dup = _bilinear_resize(hx3d, hx2.shape[2], hx2.shape[3])
    hx2d = rebnconv([hx3dup, hx2], params["rebnconv2d"], dirate=1)
    hx2dup = _bilinear_resize(hx2d, hx1.shape[2], hx1.shape[3])
    # Final REBNCONV with the residual add (hx1d + hxin) fused in-kernel.
    out = rebnconv([hx2dup, hx1], params["rebnconv1d"], dirate=1,
                   residual=hxin, out_dtype=jnp.float32)
    return out


# ----------------------------------------------------------------------------
# Pure-XLA f32 reference for a numerical cross-check.
# ----------------------------------------------------------------------------
def _ref_rebnconv(x, params, d):
    wgt, scale, bias = params
    y = jax.lax.conv_general_dilated(
        x, wgt, window_strides=(1, 1), padding=((d, d), (d, d)),
        rhs_dilation=(d, d), dimension_numbers=("NCHW", "HWIO", "NCHW"))
    y = y * scale.reshape(1, -1, 1, 1) + bias.reshape(1, -1, 1, 1)
    return jnp.maximum(y, 0.0)


@jax.jit
def rsu4_reference(x, params):
    hxin = _ref_rebnconv(x, params["rebnconvin"], 1)
    hx1 = _ref_rebnconv(hxin, params["rebnconv1"], 1)
    hx = _maxpool2_ceil(hx1)
    hx2 = _ref_rebnconv(hx, params["rebnconv2"], 1)
    hx = _maxpool2_ceil(hx2)
    hx3 = _ref_rebnconv(hx, params["rebnconv3"], 1)
    hx4 = _ref_rebnconv(hx3, params["rebnconv4"], 2)
    hx3d = _ref_rebnconv(jnp.concatenate([hx4, hx3], 1), params["rebnconv3d"], 1)
    hx3dup = _bilinear_resize(hx3d, hx2.shape[2], hx2.shape[3])
    hx2d = _ref_rebnconv(jnp.concatenate([hx3dup, hx2], 1), params["rebnconv2d"], 1)
    hx2dup = _bilinear_resize(hx2d, hx1.shape[2], hx1.shape[3])
    hx1d = _ref_rebnconv(jnp.concatenate([hx2dup, hx1], 1), params["rebnconv1d"], 1)
    return hx1d + hxin


if __name__ == "__main__":
    key = jax.random.PRNGKey(0)
    k_x, k_p = jax.random.split(key)

    N, IN_CH, MID_CH, OUT_CH, H, W = 2, 4, 8, 4, 16, 16
    x = jax.random.normal(k_x, (N, IN_CH, H, W), jnp.float32)   # NCHW input
    params = init_rsu4_params(k_p, IN_CH, MID_CH, OUT_CH)

    y = rsu4_forward(x, params)
    jax.block_until_ready(y)
    assert y.shape == (N, OUT_CH, H, W)
    assert y.dtype == jnp.float32

    # Cross-check against the f32 XLA reference; tolerance covers the bf16
    # feature-map storage / bf16 MXU operands used on the Pallas path.
    y_ref = rsu4_reference(x, params)
    jax.block_until_ready(y_ref)
    max_err = float(jnp.max(jnp.abs(y - y_ref)))
    assert jnp.allclose(y, y_ref, rtol=0.1, atol=0.25), \
        f"mismatch vs reference (max abs err = {max_err})"

    print("KERNEL_OK")
</pallas_src>

<mosaic_0001>
module attributes {stable_mosaic.version = 11 : i64} {
  func.func @kernel(%arg0: i32, %arg1: i32, %arg2: memref<1x1x16x294xbf16, #tpu.memory_space<vmem>>, %arg3: memref<9x4x16xbf16, #tpu.memory_space<vmem>>, %arg4: memref<4x2xf32, #tpu.memory_space<vmem>>, %arg5: memref<1x4x256xf32, #tpu.memory_space<vmem>>) attributes {dimension_semantics = [#tpu.dimension_semantics<parallel>, #tpu.dimension_semantics<parallel>], iteration_bounds = array<i64: 2, 2>, scalar_prefetch = 0 : i64, scratch_operands = 0 : i64, tpu.core_type = #tpu.core_type<tc>, window_params = [{transform_indices = @transform_0, window_bounds = array<i64: 1, 1, 16, 294>}, {pipeline_mode = #tpu.pipeline_mode<synchronous>, transform_indices = @transform_1, window_bounds = array<i64: 9, 4, 16>}, {pipeline_mode = #tpu.pipeline_mode<synchronous>, transform_indices = @transform_2, window_bounds = array<i64: 4, 2>}, {transform_indices = @transform_3, window_bounds = array<i64: 1, 4, 256>}]} {
    %c0 = arith.constant 0 : index
    %c0_0 = arith.constant 0 : index
    %c0_1 = arith.constant 0 : index
    %c0_2 = arith.constant 0 : index
    %0 = vector.load %arg2[%c0, %c0_0, %c0_1, %c0_2] : memref<1x1x16x294xbf16, #tpu.memory_space<vmem>>, vector<1x1x16x294xbf16>
    %1 = vector.shape_cast %0 : vector<1x1x16x294xbf16> to vector<16x294xbf16>
    %c0_3 = arith.constant 0 : index
    %c0_4 = arith.constant 0 : index
    %c0_5 = arith.constant 0 : index
    %2 = vector.load %arg3[%c0_3, %c0_4, %c0_5] : memref<9x4x16xbf16, #tpu.memory_space<vmem>>, vector<9x4x16xbf16>
    %3 = vector.extract_strided_slice %2 {offsets = [0, 0, 0], sizes = [1, 4, 16], strides = [1, 1, 1]} : vector<9x4x16xbf16> to vector<1x4x16xbf16>
    %4 = vector.shape_cast %3 : vector<1x4x16xbf16> to vector<4x16xbf16>
    %5 = vector.extract_strided_slice %1 {offsets = [0, 0], sizes = [16, 256], strides = [1, 1]} : vector<16x294xbf16> to vector<16x256xbf16>
    %cst = arith.constant dense<0.000000e+00> : vector<4x256xf32>
    %6 = tpu.matmul %4, %5, %cst {dimension_numbers = #tpu.dot_dimension_numbers<[1], [0], [0], [1], [0, 0, 1, 1], [], []>} : vector<4x16xbf16>, vector<16x256xbf16>, vector<4x256xf32> -> vector<4x256xf32>
    %7 = vector.extract_strided_slice %2 {offsets = [1, 0, 0], sizes = [1, 4, 16], strides = [1, 1, 1]} : vector<9x4x16xbf16> to vector<1x4x16xbf16>
    %8 = vector.shape_cast %7 : vector<1x4x16xbf16> to vector<4x16xbf16>
    %9 = vector.extract_strided_slice %1 {offsets = [0, 1], sizes = [16, 256], strides = [1, 1]} : vector<16x294xbf16> to vector<16x256xbf16>
    %cst_6 = arith.constant dense<0.000000e+00> : vector<4x256xf32>
    %10 = tpu.matmul %8, %9, %cst_6 {dimension_numbers = #tpu.dot_dimension_numbers<[1], [0], [0], [1], [0, 0, 1, 1], [], []>} : vector<4x16xbf16>, vector<16x256xbf16>, vector<4x256xf32> -> vector<4x256xf32>
    %11 = arith.addf %6, %10 : vector<4x256xf32>
    %12 = vector.extract_strided_slice %2 {offsets = [2, 0, 0], sizes = [1, 4, 16], strides = [1, 1, 1]} : vector<9x4x16xbf16> to vector<1x4x16xbf16>
    %13 = vector.shape_cast %12 : vector<1x4x16xbf16> to vector<4x16xbf16>
    %14 = vector.extract_strided_slice %1 {offsets = [0, 2], sizes = [16, 256], strides = [1, 1]} : vector<16x294xbf16> to vector<16x256xbf16>
    %cst_7 = arith.constant dense<0.000000e+00> : vector<4x256xf32>
    %15 = tpu.matmul %13, %14, %cst_7 {dimension_numbers = #tpu.dot_dimension_numbers<[1], [0], [0], [1], [0, 0, 1, 1], [], []>} : vector<4x16xbf16>, vector<16x256xbf16>, vector<4x256xf32> -> vector<4x256xf32>
    %16 = arith.addf %11, %15 : vector<4x256xf32>
    %17 = vector.extract_strided_slice %2 {offsets = [3, 0, 0], sizes = [1, 4, 16], strides = [1, 1, 1]} : vector<9x4x16xbf16> to vector<1x4x16xbf16>
    %18 = vector.shape_cast %17 : vector<1x4x16xbf16> to vector<4x16xbf16>
    %19 = vector.extract_strided_slice %1 {offsets = [0, 18], sizes = [16, 256], strides = [1, 1]} : vector<16x294xbf16> to vector<16x256xbf16>
    %cst_8 = arith.constant dense<0.000000e+00> : vector<4x256xf32>
    %20 = tpu.matmul %18, %19, %cst_8 {dimension_numbers = #tpu.dot_dimension_numbers<[1], [0], [0], [1], [0, 0, 1, 1], [], []>} : vector<4x16xbf16>, vector<16x256xbf16>, vector<4x256xf32> -> vector<4x256xf32>
    %21 = arith.addf %16, %20 : vector<4x256xf32>
    %22 = vector.extract_strided_slice %2 {offsets = [4, 0, 0], sizes = [1, 4, 16], strides = [1, 1, 1]} : vector<9x4x16xbf16> to vector<1x4x16xbf16>
    %23 = vector.shape_cast %22 : vector<1x4x16xbf16> to vector<4x16xbf16>
    %24 = vector.extract_strided_slice %1 {offsets = [0, 19], sizes = [16, 256], strides = [1, 1]} : vector<16x294xbf16> to vector<16x256xbf16>
    %cst_9 = arith.constant dense<0.000000e+00> : vector<4x256xf32>
    %25 = tpu.matmul %23, %24, %cst_9 {dimension_numbers = #tpu.dot_dimension_numbers<[1], [0], [0], [1], [0, 0, 1, 1], [], []>} : vector<4x16xbf16>, vector<16x256xbf16>, vector<4x256xf32> -> vector<4x256xf32>
    %26 = arith.addf %21, %25 : vector<4x256xf32>
    %27 = vector.extract_strided_slice %2 {offsets = [5, 0, 0], sizes = [1, 4, 16], strides = [1, 1, 1]} : vector<9x4x16xbf16> to vector<1x4x16xbf16>
    %28 = vector.shape_cast %27 : vector<1x4x16xbf16> to vector<4x16xbf16>
    %29 = vector.extract_strided_slice %1 {offsets = [0, 20], sizes = [16, 256], strides = [1, 1]} : vector<16x294xbf16> to vector<16x256xbf16>
    %cst_10 = arith.constant dense<0.000000e+00> : vector<4x256xf32>
    %30 = tpu.matmul %28, %29, %cst_10 {dimension_numbers = #tpu.dot_dimension_numbers<[1], [0], [0], [1], [0, 0, 1, 1], [], []>} : vector<4x16xbf16>, vector<16x256xbf16>, vector<4x256xf32> -> vector<4x256xf32>
    %31 = arith.addf %26, %30 : vector<4x256xf32>
    %32 = vector.extract_strided_slice %2 {offsets = [6, 0, 0], sizes = [1, 4, 16], strides = [1, 1, 1]} : vector<9x4x16xbf16> to vector<1x4x16xbf16>
    %33 = vector.shape_cast %32 : vector<1x4x16xbf16> to vector<4x16xbf16>
    %34 = vector.extract_strided_slice %1 {offsets = [0, 36], sizes = [16, 256], strides = [1, 1]} : vector<16x294xbf16> to vector<16x256xbf16>
    %cst_11 = arith.constant dense<0.000000e+00> : vector<4x256xf32>
    %35 = tpu.matmul %33, %34, %cst_11 {dimension_numbers = #tpu.dot_dimension_numbers<[1], [0], [0], [1], [0, 0, 1, 1], [], []>} : vector<4x16xbf16>, vector<16x256xbf16>, vector<4x256xf32> -> vector<4x256xf32>
    %36 = arith.addf %31, %35 : vector<4x256xf32>
    %37 = vector.extract_strided_slice %2 {offsets = [7, 0, 0], sizes = [1, 4, 16], strides = [1, 1, 1]} : vector<9x4x16xbf16> to vector<1x4x16xbf16>
    %38 = vector.shape_cast %37 : vector<1x4x16xbf16> to vector<4x16xbf16>
    %39 = vector.extract_strided_slice %1 {offsets = [0, 37], sizes = [16, 256], strides = [1, 1]} : vector<16x294xbf16> to vector<16x256xbf16>
    %cst_12 = arith.constant dense<0.000000e+00> : vector<4x256xf32>
    %40 = tpu.matmul %38, %39, %cst_12 {dimension_numbers = #tpu.dot_dimension_numbers<[1], [0], [0], [1], [0, 0, 1, 1], [], []>} : vector<4x16xbf16>, vector<16x256xbf16>, vector<4x256xf32> -> vector<4x256xf32>
    %41 = arith.addf %36, %40 : vector<4x256xf32>
    %42 = vector.extract_strided_slice %2 {offsets = [8, 0, 0], sizes = [1, 4, 16], strides = [1, 1, 1]} : vector<9x4x16xbf16> to vector<1x4x16xbf16>
    %43 = vector.shape_cast %42 : vector<1x4x16xbf16> to vector<4x16xbf16>
    %44 = vector.extract_strided_slice %1 {offsets = [0, 38], sizes = [16, 256], strides = [1, 1]} : vector<16x294xbf16> to vector<16x256xbf16>
    %cst_13 = arith.constant dense<0.000000e+00> : vector<4x256xf32>
    %45 = tpu.matmul %43, %44, %cst_13 {dimension_numbers = #tpu.dot_dimension_numbers<[1], [0], [0], [1], [0, 0, 1, 1], [], []>} : vector<4x16xbf16>, vector<16x256xbf16>, vector<4x256xf32> -> vector<4x256xf32>
    %46 = arith.addf %41, %45 : vector<4x256xf32>
    %c0_14 = arith.constant 0 : index
    %c0_15 = arith.constant 0 : index
    %47 = vector.load %arg4[%c0_14, %c0_15] : memref<4x2xf32, #tpu.memory_space<vmem>>, vector<4x2xf32>
    %48 = vector.extract_strided_slice %47 {offsets = [0, 0], sizes = [4, 1], strides = [1, 1]} : vector<4x2xf32> to vector<4x1xf32>
    %49 = vector.broadcast %48 : vector<4x1xf32> to vector<4x256xf32>
    %50 = arith.mulf %46, %49 : vector<4x256xf32>
    %51 = vector.extract_strided_slice %47 {offsets = [0, 1], sizes = [4, 1], strides = [1, 1]} : vector<4x2xf32> to vector<4x1xf32>
    %52 = vector.broadcast %51 : vector<4x1xf32> to vector<4x256xf32>
    %53 = arith.addf %50, %52 : vector<4x256xf32>
    %cst_16 = arith.constant 0.000000e+00 : f32
    %54 = vector.broadcast %cst_16 : f32 to vector<4x256xf32>
    %55 = arith.maximumf %53, %54 : vector<4x256xf32>
    %c0_17 = arith.constant 0 : index
    %c0_18 = arith.constant 0 : index
    %c0_19 = arith.constant 0 : index
    %56 = vector.load %arg5[%c0_17, %c0_18, %c0_19] : memref<1x4x256xf32, #tpu.memory_space<vmem>>, vector<1x4x256xf32>
    %57 = vector.shape_cast %56 : vector<1x4x256xf32> to vector<4x256xf32>
    %58 = vector.shape_cast %55 : vector<4x256xf32> to vector<1x4x256xf32>
    tpu.vector_store %arg5[%c0_17, %c0_18, %c0_19], %58 {strides = array<i32>} : memref<1x4x256xf32, #tpu.memory_space<vmem>>, vector<1x4x256xf32>,
    return
  }
  func.func @transform_0(%arg0: i32, %arg1: i32) -> (i32, i32, i32, i32) {
    %c0_i32 = arith.constant 0 : i32
    %c0_i32_0 = arith.constant 0 : i32
    %c0_i32_1 = arith.constant 0 : i32
    return %arg0, %arg1, %c0_i32, %c0_i32_0 : i32, i32, i32, i32
  }
  func.func @transform_1(%arg0: i32, %arg1: i32) -> (i32, i32, i32) {
    %c0_i32 = arith.constant 0 : i32
    %c0_i32_0 = arith.constant 0 : i32
    %c0_i32_1 = arith.constant 0 : i32
    %c0_i32_2 = arith.constant 0 : i32
    return %c0_i32, %c0_i32_0, %c0_i32_1 : i32, i32, i32
  }
  func.func @transform_2(%arg0: i32, %arg1: i32) -> (i32, i32) {
    %c0_i32 = arith.constant 0 : i32
    %c0_i32_0 = arith.constant 0 : i32
    %c0_i32_1 = arith.constant 0 : i32
    return %c0_i32, %c0_i32_0 : i32, i32
  }
  func.func @transform_3(%arg0: i32, %arg1: i32) -> (i32, i32, i32) {
    %c0_i32 = arith.constant 0 : i32
    %c0_i32_0 = arith.constant 0 : i32
    return %arg0, %c0_i32, %arg1 : i32, i32, i32
  }
}

module attributes {stable_mosaic.version = 11 : i64} {
  func.func @kernel(%arg0: i32, %arg1: i32, %arg2: memref<1x1x16x294xbf16, #tpu.memory_space<vmem>>, %arg3: memref<9x8x16xbf16, #tpu.memory_space<vmem>>, %arg4: memref<8x2xf32, #tpu.memory_space<vmem>>, %arg5: memref<1x8x256xbf16, #tpu.memory_space<vmem>>) attributes {dimension_semantics = [#tpu.dimension_semantics<parallel>, #tpu.dimension_semantics<parallel>], iteration_bounds = array<i64: 2, 2>, scalar_prefetch = 0 : i64, scratch_operands = 0 : i64, tpu.core_type = #tpu.core_type<tc>, window_params = [{transform_indices = @transform_0, window_bounds = array<i64: 1, 1, 16, 294>}, {pipeline_mode = #tpu.pipeline_mode<synchronous>, transform_indices = @transform_1, window_bounds = array<i64: 9, 8, 16>}, {pipeline_mode = #tpu.pipeline_mode<synchronous>, transform_indices = @transform_2, window_bounds = array<i64: 8, 2>}, {transform_indices = @transform_3, window_bounds = array<i64: 1, 8, 256>}]} {
    %c0 = arith.constant 0 : index
    %c0_0 = arith.constant 0 : index
    %c0_1 = arith.constant 0 : index
    %c0_2 = arith.constant 0 : index
    %0 = vector.load %arg2[%c0, %c0_0, %c0_1, %c0_2] : memref<1x1x16x294xbf16, #tpu.memory_space<vmem>>, vector<1x1x16x294xbf16>
    %1 = vector.shape_cast %0 : vector<1x1x16x294xbf16> to vector<16x294xbf16>
    %c0_3 = arith.constant 0 : index
    %c0_4 = arith.constant 0 : index
    %c0_5 = arith.constant 0 : index
    %2 = vector.load %arg3[%c0_3, %c0_4, %c0_5] : memref<9x8x16xbf16, #tpu.memory_space<vmem>>, vector<9x8x16xbf16>
    %3 = vector.extract_strided_slice %2 {offsets = [0, 0, 0], sizes = [1, 8, 16], strides = [1, 1, 1]} : vector<9x8x16xbf16> to vector<1x8x16xbf16>
    %4 = vector.shape_cast %3 : vector<1x8x16xbf16> to vector<8x16xbf16>
    %5 = vector.extract_strided_slice %1 {offsets = [0, 0], sizes = [16, 256], strides = [1, 1]} : vector<16x294xbf16> to vector<16x256xbf16>
    %cst = arith.constant dense<0.000000e+00> : vector<8x256xf32>
    %6 = tpu.matmul %4, %5, %cst {dimension_numbers = #tpu.dot_dimension_numbers<[1], [0], [0], [1], [0, 0, 1, 1], [], []>} : vector<8x16xbf16>, vector<16x256xbf16>, vector<8x256xf32> -> vector<8x256xf32>
    %7 = vector.extract_strided_slice %2 {offsets = [1, 0, 0], sizes = [1, 8, 16], strides = [1, 1, 1]} : vector<9x8x16xbf16> to vector<1x8x16xbf16>
    %8 = vector.shape_cast %7 : vector<1x8x16xbf16> to vector<8x16xbf16>
    %9 = vector.extract_strided_slice %1 {offsets = [0, 1], sizes = [16, 256], strides = [1, 1]} : vector<16x294xbf16> to vector<16x256xbf16>
    %cst_6 = arith.constant dense<0.000000e+00> : vector<8x256xf32>
    %10 = tpu.matmul %8, %9, %cst_6 {dimension_numbers = #tpu.dot_dimension_numbers<[1], [0], [0], [1], [0, 0, 1, 1], [], []>} : vector<8x16xbf16>, vector<16x256xbf16>, vector<8x256xf32> -> vector<8x256xf32>
    %11 = arith.addf %6, %10 : vector<8x256xf32>
    %12 = vector.extract_strided_slice %2 {offsets = [2, 0, 0], sizes = [1, 8, 16], strides = [1, 1, 1]} : vector<9x8x16xbf16> to vector<1x8x16xbf16>
    %13 = vector.shape_cast %12 : vector<1x8x16xbf16> to vector<8x16xbf16>
    %14 = vector.extract_strided_slice %1 {offsets = [0, 2], sizes = [16, 256], strides = [1, 1]} : vector<16x294xbf16> to vector<16x256xbf16>
    %cst_7 = arith.constant dense<0.000000e+00> : vector<8x256xf32>
    %15 = tpu.matmul %13, %14, %cst_7 {dimension_numbers = #tpu.dot_dimension_numbers<[1], [0], [0], [1], [0, 0, 1, 1], [], []>} : vector<8x16xbf16>, vector<16x256xbf16>, vector<8x256xf32> -> vector<8x256xf32>
    %16 = arith.addf %11, %15 : vector<8x256xf32>
    %17 = vector.extract_strided_slice %2 {offsets = [3, 0, 0], sizes = [1, 8, 16], strides = [1, 1, 1]} : vector<9x8x16xbf16> to vector<1x8x16xbf16>
    %18 = vector.shape_cast %17 : vector<1x8x16xbf16> to vector<8x16xbf16>
    %19 = vector.extract_strided_slice %1 {offsets = [0, 18], sizes = [16, 256], strides = [1, 1]} : vector<16x294xbf16> to vector<16x256xbf16>
    %cst_8 = arith.constant dense<0.000000e+00> : vector<8x256xf32>
    %20 = tpu.matmul %18, %19, %cst_8 {dimension_numbers = #tpu.dot_dimension_numbers<[1], [0], [0], [1], [0, 0, 1, 1], [], []>} : vector<8x16xbf16>, vector<16x256xbf16>, vector<8x256xf32> -> vector<8x256xf32>
    %21 = arith.addf %16, %20 : vector<8x256xf32>
    %22 = vector.extract_strided_slice %2 {offsets = [4, 0, 0], sizes = [1, 8, 16], strides = [1, 1, 1]} : vector<9x8x16xbf16> to vector<1x8x16xbf16>
    %23 = vector.shape_cast %22 : vector<1x8x16xbf16> to vector<8x16xbf16>
    %24 = vector.extract_strided_slice %1 {offsets = [0, 19], sizes = [16, 256], strides = [1, 1]} : vector<16x294xbf16> to vector<16x256xbf16>
    %cst_9 = arith.constant dense<0.000000e+00> : vector<8x256xf32>
    %25 = tpu.matmul %23, %24, %cst_9 {dimension_numbers = #tpu.dot_dimension_numbers<[1], [0], [0], [1], [0, 0, 1, 1], [], []>} : vector<8x16xbf16>, vector<16x256xbf16>, vector<8x256xf32> -> vector<8x256xf32>
    %26 = arith.addf %21, %25 : vector<8x256xf32>
    %27 = vector.extract_strided_slice %2 {offsets = [5, 0, 0], sizes = [1, 8, 16], strides = [1, 1, 1]} : vector<9x8x16xbf16> to vector<1x8x16xbf16>
    %28 = vector.shape_cast %27 : vector<1x8x16xbf16> to vector<8x16xbf16>
    %29 = vector.extract_strided_slice %1 {offsets = [0, 20], sizes = [16, 256], strides = [1, 1]} : vector<16x294xbf16> to vector<16x256xbf16>
    %cst_10 = arith.constant dense<0.000000e+00> : vector<8x256xf32>
    %30 = tpu.matmul %28, %29, %cst_10 {dimension_numbers = #tpu.dot_dimension_numbers<[1], [0], [0], [1], [0, 0, 1, 1], [], []>} : vector<8x16xbf16>, vector<16x256xbf16>, vector<8x256xf32> -> vector<8x256xf32>
    %31 = arith.addf %26, %30 : vector<8x256xf32>
    %32 = vector.extract_strided_slice %2 {offsets = [6, 0, 0], sizes = [1, 8, 16], strides = [1, 1, 1]} : vector<9x8x16xbf16> to vector<1x8x16xbf16>
    %33 = vector.shape_cast %32 : vector<1x8x16xbf16> to vector<8x16xbf16>
    %34 = vector.extract_strided_slice %1 {offsets = [0, 36], sizes = [16, 256], strides = [1, 1]} : vector<16x294xbf16> to vector<16x256xbf16>
    %cst_11 = arith.constant dense<0.000000e+00> : vector<8x256xf32>
    %35 = tpu.matmul %33, %34, %cst_11 {dimension_numbers = #tpu.dot_dimension_numbers<[1], [0], [0], [1], [0, 0, 1, 1], [], []>} : vector<8x16xbf16>, vector<16x256xbf16>, vector<8x256xf32> -> vector<8x256xf32>
    %36 = arith.addf %31, %35 : vector<8x256xf32>
    %37 = vector.extract_strided_slice %2 {offsets = [7, 0, 0], sizes = [1, 8, 16], strides = [1, 1, 1]} : vector<9x8x16xbf16> to vector<1x8x16xbf16>
    %38 = vector.shape_cast %37 : vector<1x8x16xbf16> to vector<8x16xbf16>
    %39 = vector.extract_strided_slice %1 {offsets = [0, 37], sizes = [16, 256], strides = [1, 1]} : vector<16x294xbf16> to vector<16x256xbf16>
    %cst_12 = arith.constant dense<0.000000e+00> : vector<8x256xf32>
    %40 = tpu.matmul %38, %39, %cst_12 {dimension_numbers = #tpu.dot_dimension_numbers<[1], [0], [0], [1], [0, 0, 1, 1], [], []>} : vector<8x16xbf16>, vector<16x256xbf16>, vector<8x256xf32> -> vector<8x256xf32>
    %41 = arith.addf %36, %40 : vector<8x256xf32>
    %42 = vector.extract_strided_slice %2 {offsets = [8, 0, 0], sizes = [1, 8, 16], strides = [1, 1, 1]} : vector<9x8x16xbf16> to vector<1x8x16xbf16>
    %43 = vector.shape_cast %42 : vector<1x8x16xbf16> to vector<8x16xbf16>
    %44 = vector.extract_strided_slice %1 {offsets = [0, 38], sizes = [16, 256], strides = [1, 1]} : vector<16x294xbf16> to vector<16x256xbf16>
    %cst_13 = arith.constant dense<0.000000e+00> : vector<8x256xf32>
    %45 = tpu.matmul %43, %44, %cst_13 {dimension_numbers = #tpu.dot_dimension_numbers<[1], [0], [0], [1], [0, 0, 1, 1], [], []>} : vector<8x16xbf16>, vector<16x256xbf16>, vector<8x256xf32> -> vector<8x256xf32>
    %46 = arith.addf %41, %45 : vector<8x256xf32>
    %c0_14 = arith.constant 0 : index
    %c0_15 = arith.constant 0 : index
    %47 = vector.load %arg4[%c0_14, %c0_15] : memref<8x2xf32, #tpu.memory_space<vmem>>, vector<8x2xf32>
    %48 = vector.extract_strided_slice %47 {offsets = [0, 0], sizes = [8, 1], strides = [1, 1]} : vector<8x2xf32> to vector<8x1xf32>
    %49 = vector.broadcast %48 : vector<8x1xf32> to vector<8x256xf32>
    %50 = arith.mulf %46, %49 : vector<8x256xf32>
    %51 = vector.extract_strided_slice %47 {offsets = [0, 1], sizes = [8, 1], strides = [1, 1]} : vector<8x2xf32> to vector<8x1xf32>
    %52 = vector.broadcast %51 : vector<8x1xf32> to vector<8x256xf32>
    %53 = arith.addf %50, %52 : vector<8x256xf32>
    %cst_16 = arith.constant 0.000000e+00 : f32
    %54 = vector.broadcast %cst_16 : f32 to vector<8x256xf32>
    %55 = arith.maximumf %53, %54 : vector<8x256xf32>
    %56 = arith.truncf %55 : vector<8x256xf32> to vector<8x256xbf16>
    %c0_17 = arith.constant 0 : index
    %c0_18 = arith.constant 0 : index
    %c0_19 = arith.constant 0 : index
    %57 = vector.load %arg5[%c0_17, %c0_18, %c0_19] : memref<1x8x256xbf16, #tpu.memory_space<vmem>>, vector<1x8x256xbf16>
    %58 = vector.shape_cast %57 : vector<1x8x256xbf16> to vector<8x256xbf16>
    %59 = vector.shape_cast %56 : vector<8x256xbf16> to vector<1x8x256xbf16>
    tpu.vector_store %arg5[%c0_17, %c0_18, %c0_19], %59 {strides = array<i32>} : memref<1x8x256xbf16, #tpu.memory_space<vmem>>, vector<1x8x256xbf16>,
    return
  }
  func.func @transform_0(%arg0: i32, %arg1: i32) -> (i32, i32, i32, i32) {
    %c0_i32 = arith.constant 0 : i32
    %c0_i32_0 = arith.constant 0 : i32
    %c0_i32_1 = arith.constant 0 : i32
    return %arg0, %arg1, %c0_i32, %c0_i32_0 : i32, i32, i32, i32
  }
  func.func @transform_1(%arg0: i32, %arg1: i32) -> (i32, i32, i32) {
    %c0_i32 = arith.constant 0 : i32
    %c0_i32_0 = arith.constant 0 : i32
    %c0_i32_1 = arith.constant 0 : i32
    %c0_i32_2 = arith.constant 0 : i32
    return %c0_i32, %c0_i32_0, %c0_i32_1 : i32, i32, i32
  }
  func.func @transform_2(%arg0: i32, %arg1: i32) -> (i32, i32) {
    %c0_i32 = arith.constant 0 : i32
    %c0_i32_0 = arith.constant 0 : i32
    %c0_i32_1 = arith.constant 0 : i32
    return %c0_i32, %c0_i32_0 : i32, i32
  }
  func.func @transform_3(%arg0: i32, %arg1: i32) -> (i32, i32, i32) {
    %c0_i32 = arith.constant 0 : i32
    %c0_i32_0 = arith.constant 0 : i32
    return %arg0, %c0_i32, %arg1 : i32, i32, i32
  }
}

module attributes {stable_mosaic.version = 11 : i64} {
  func.func @kernel(%arg0: i32, %arg1: i32, %arg2: memref<1x1x16x150xbf16, #tpu.memory_space<vmem>>, %arg3: memref<9x8x16xbf16, #tpu.memory_space<vmem>>, %arg4: memref<8x2xf32, #tpu.memory_space<vmem>>, %arg5: memref<1x8x128xbf16, #tpu.memory_space<vmem>>) attributes {dimension_semantics = [#tpu.dimension_semantics<parallel>, #tpu.dimension_semantics<parallel>], iteration_bounds = array<i64: 2, 1>, scalar_prefetch = 0 : i64, scratch_operands = 0 : i64, tpu.core_type = #tpu.core_type<tc>, window_params = [{transform_indices = @transform_0, window_bounds = array<i64: 1, 1, 16, 150>}, {pipeline_mode = #tpu.pipeline_mode<synchronous>, transform_indices = @transform_1, window_bounds = array<i64: 9, 8, 16>}, {pipeline_mode = #tpu.pipeline_mode<synchronous>, transform_indices = @transform_2, window_bounds = array<i64: 8, 2>}, {transform_indices = @transform_3, window_bounds = array<i64: 1, 8, 128>}]} {
    %c0 = arith.constant 0 : index
    %c0_0 = arith.constant 0 : index
    %c0_1 = arith.constant 0 : index
    %c0_2 = arith.constant 0 : index
    %0 = vector.load %arg2[%c0, %c0_0, %c0_1, %c0_2] : memref<1x1x16x150xbf16, #tpu.memory_space<vmem>>, vector<1x1x16x150xbf16>
    %1 = vector.shape_cast %0 : vector<1x1x16x150xbf16> to vector<16x150xbf16>
    %c0_3 = arith.constant 0 : index
    %c0_4 = arith.constant 0 : index
    %c0_5 = arith.constant 0 : index
    %2 = vector.load %arg3[%c0_3, %c0_4, %c0_5] : memref<9x8x16xbf16, #tpu.memory_space<vmem>>, vector<9x8x16xbf16>
    %3 = vector.extract_strided_slice %2 {offsets = [0, 0, 0], sizes = [1, 8, 16], strides = [1, 1, 1]} : vector<9x8x16xbf16> to vector<1x8x16xbf16>
    %4 = vector.shape_cast %3 : vector<1x8x16xbf16> to vector<8x16xbf16>
    %5 = vector.extract_strided_slice %1 {offsets = [0, 0], sizes = [16, 128], strides = [1, 1]} : vector<16x150xbf16> to vector<16x128xbf16>
    %cst = arith.constant dense<0.000000e+00> : vector<8x128xf32>
    %6 = tpu.matmul %4, %5, %cst {dimension_numbers = #tpu.dot_dimension_numbers<[1], [0], [0], [1], [0, 0, 1, 1], [], []>} : vector<8x16xbf16>, vector<16x128xbf16>, vector<8x128xf32> -> vector<8x128xf32>
    %7 = vector.extract_strided_slice %2 {offsets = [1, 0, 0], sizes = [1, 8, 16], strides = [1, 1, 1]} : vector<9x8x16xbf16> to vector<1x8x16xbf16>
    %8 = vector.shape_cast %7 : vector<1x8x16xbf16> to vector<8x16xbf16>
    %9 = vector.extract_strided_slice %1 {offsets = [0, 1], sizes = [16, 128], strides = [1, 1]} : vector<16x150xbf16> to vector<16x128xbf16>
    %cst_6 = arith.constant dense<0.000000e+00> : vector<8x128xf32>
    %10 = tpu.matmul %8, %9, %cst_6 {dimension_numbers = #tpu.dot_dimension_numbers<[1], [0], [0], [1], [0, 0, 1, 1], [], []>} : vector<8x16xbf16>, vector<16x128xbf16>, vector<8x128xf32> -> vector<8x128xf32>
    %11 = arith.addf %6, %10 : vector<8x128xf32>
    %12 = vector.extract_strided_slice %2 {offsets = [2, 0, 0], sizes = [1, 8, 16], strides = [1, 1, 1]} : vector<9x8x16xbf16> to vector<1x8x16xbf16>
    %13 = vector.shape_cast %12 : vector<1x8x16xbf16> to vector<8x16xbf16>
    %14 = vector.extract_strided_slice %1 {offsets = [0, 2], sizes = [16, 128], strides = [1, 1]} : vector<16x150xbf16> to vector<16x128xbf16>
    %cst_7 = arith.constant dense<0.000000e+00> : vector<8x128xf32>
    %15 = tpu.matmul %13, %14, %cst_7 {dimension_numbers = #tpu.dot_dimension_numbers<[1], [0], [0], [1], [0, 0, 1, 1], [], []>} : vector<8x16xbf16>, vector<16x128xbf16>, vector<8x128xf32> -> vector<8x128xf32>
    %16 = arith.addf %11, %15 : vector<8x128xf32>
    %17 = vector.extract_strided_slice %2 {offsets = [3, 0, 0], sizes = [1, 8, 16], strides = [1, 1, 1]} : vector<9x8x16xbf16> to vector<1x8x16xbf16>
    %18 = vector.shape_cast %17 : vector<1x8x16xbf16> to vector<8x16xbf16>
    %19 = vector.extract_strided_slice %1 {offsets = [0, 10], sizes = [16, 128], strides = [1, 1]} : vector<16x150xbf16> to vector<16x128xbf16>
    %cst_8 = arith.constant dense<0.000000e+00> : vector<8x128xf32>
    %20 = tpu.matmul %18, %19, %cst_8 {dimension_numbers = #tpu.dot_dimension_numbers<[1], [0], [0], [1], [0, 0, 1, 1], [], []>} : vector<8x16xbf16>, vector<16x128xbf16>, vector<8x128xf32> -> vector<8x128xf32>
    %21 = arith.addf %16, %20 : vector<8x128xf32>
    %22 = vector.extract_strided_slice %2 {offsets = [4, 0, 0], sizes = [1, 8, 16], strides = [1, 1, 1]} : vector<9x8x16xbf16> to vector<1x8x16xbf16>
    %23 = vector.shape_cast %22 : vector<1x8x16xbf16> to vector<8x16xbf16>
    %24 = vector.extract_strided_slice %1 {offsets = [0, 11], sizes = [16, 128], strides = [1, 1]} : vector<16x150xbf16> to vector<16x128xbf16>
    %cst_9 = arith.constant dense<0.000000e+00> : vector<8x128xf32>
    %25 = tpu.matmul %23, %24, %cst_9 {dimension_numbers = #tpu.dot_dimension_numbers<[1], [0], [0], [1], [0, 0, 1, 1], [], []>} : vector<8x16xbf16>, vector<16x128xbf16>, vector<8x128xf32> -> vector<8x128xf32>
    %26 = arith.addf %21, %25 : vector<8x128xf32>
    %27 = vector.extract_strided_slice %2 {offsets = [5, 0, 0], sizes = [1, 8, 16], strides = [1, 1, 1]} : vector<9x8x16xbf16> to vector<1x8x16xbf16>
    %28 = vector.shape_cast %27 : vector<1x8x16xbf16> to vector<8x16xbf16>
    %29 = vector.extract_strided_slice %1 {offsets = [0, 12], sizes = [16, 128], strides = [1, 1]} : vector<16x150xbf16> to vector<16x128xbf16>
    %cst_10 = arith.constant dense<0.000000e+00> : vector<8x128xf32>
    %30 = tpu.matmul %28, %29, %cst_10 {dimension_numbers = #tpu.dot_dimension_numbers<[1], [0], [0], [1], [0, 0, 1, 1], [], []>} : vector<8x16xbf16>, vector<16x128xbf16>, vector<8x128xf32> -> vector<8x128xf32>
    %31 = arith.addf %26, %30 : vector<8x128xf32>
    %32 = vector.extract_strided_slice %2 {offsets = [6, 0, 0], sizes = [1, 8, 16], strides = [1, 1, 1]} : vector<9x8x16xbf16> to vector<1x8x16xbf16>
    %33 = vector.shape_cast %32 : vector<1x8x16xbf16> to vector<8x16xbf16>
    %34 = vector.extract_strided_slice %1 {offsets = [0, 20], sizes = [16, 128], strides = [1, 1]} : vector<16x150xbf16> to vector<16x128xbf16>
    %cst_11 = arith.constant dense<0.000000e+00> : vector<8x128xf32>
    %35 = tpu.matmul %33, %34, %cst_11 {dimension_numbers = #tpu.dot_dimension_numbers<[1], [0], [0], [1], [0, 0, 1, 1], [], []>} : vector<8x16xbf16>, vector<16x128xbf16>, vector<8x128xf32> -> vector<8x128xf32>
    %36 = arith.addf %31, %35 : vector<8x128xf32>
    %37 = vector.extract_strided_slice %2 {offsets = [7, 0, 0], sizes = [1, 8, 16], strides = [1, 1, 1]} : vector<9x8x16xbf16> to vector<1x8x16xbf16>
    %38 = vector.shape_cast %37 : vector<1x8x16xbf16> to vector<8x16xbf16>
    %39 = vector.extract_strided_slice %1 {offsets = [0, 21], sizes = [16, 128], strides = [1, 1]} : vector<16x150xbf16> to vector<16x128xbf16>
    %cst_12 = arith.constant dense<0.000000e+00> : vector<8x128xf32>
    %40 = tpu.matmul %38, %39, %cst_12 {dimension_numbers = #tpu.dot_dimension_numbers<[1], [0], [0], [1], [0, 0, 1, 1], [], []>} : vector<8x16xbf16>, vector<16x128xbf16>, vector<8x128xf32> -> vector<8x128xf32>
    %41 = arith.addf %36, %40 : vector<8x128xf32>
    %42 = vector.extract_strided_slice %2 {offsets = [8, 0, 0], sizes = [1, 8, 16], strides = [1, 1, 1]} : vector<9x8x16xbf16> to vector<1x8x16xbf16>
    %43 = vector.shape_cast %42 : vector<1x8x16xbf16> to vector<8x16xbf16>
    %44 = vector.extract_strided_slice %1 {offsets = [0, 22], sizes = [16, 128], strides = [1, 1]} : vector<16x150xbf16> to vector<16x128xbf16>
    %cst_13 = arith.constant dense<0.000000e+00> : vector<8x128xf32>
    %45 = tpu.matmul %43, %44, %cst_13 {dimension_numbers = #tpu.dot_dimension_numbers<[1], [0], [0], [1], [0, 0, 1, 1], [], []>} : vector<8x16xbf16>, vector<16x128xbf16>, vector<8x128xf32> -> vector<8x128xf32>
    %46 = arith.addf %41, %45 : vector<8x128xf32>
    %c0_14 = arith.constant 0 : index
    %c0_15 = arith.constant 0 : index
    %47 = vector.load %arg4[%c0_14, %c0_15] : memref<8x2xf32, #tpu.memory_space<vmem>>, vector<8x2xf32>
    %48 = vector.extract_strided_slice %47 {offsets = [0, 0], sizes = [8, 1], strides = [1, 1]} : vector<8x2xf32> to vector<8x1xf32>
    %49 = vector.broadcast %48 : vector<8x1xf32> to vector<8x128xf32>
    %50 = arith.mulf %46, %49 : vector<8x128xf32>
    %51 = vector.extract_strided_slice %47 {offsets = [0, 1], sizes = [8, 1], strides = [1, 1]} : vector<8x2xf32> to vector<8x1xf32>
    %52 = vector.broadcast %51 : vector<8x1xf32> to vector<8x128xf32>
    %53 = arith.addf %50, %52 : vector<8x128xf32>
    %cst_16 = arith.constant 0.000000e+00 : f32
    %54 = vector.broadcast %cst_16 : f32 to vector<8x128xf32>
    %55 = arith.maximumf %53, %54 : vector<8x128xf32>
    %56 = arith.truncf %55 : vector<8x128xf32> to vector<8x128xbf16>
    %c0_17 = arith.constant 0 : index
    %c0_18 = arith.constant 0 : index
    %c0_19 = arith.constant 0 : index
    %57 = vector.load %arg5[%c0_17, %c0_18, %c0_19] : memref<1x8x128xbf16, #tpu.memory_space<vmem>>, vector<1x8x128xbf16>
    %58 = vector.shape_cast %57 : vector<1x8x128xbf16> to vector<8x128xbf16>
    %59 = vector.shape_cast %56 : vector<8x128xbf16> to vector<1x8x128xbf16>
    tpu.vector_store %arg5[%c0_17, %c0_18, %c0_19], %59 {strides = array<i32>} : memref<1x8x128xbf16, #tpu.memory_space<vmem>>, vector<1x8x128xbf16>,
    return
  }
  func.func @transform_0(%arg0: i32, %arg1: i32) -> (i32, i32, i32, i32) {
    %c0_i32 = arith.constant 0 : i32
    %c0_i32_0 = arith.constant 0 : i32
    %c0_i32_1 = arith.constant 0 : i32
    return %arg0, %arg1, %c0_i32, %c0_i32_0 : i32, i32, i32, i32
  }
  func.func @transform_1(%arg0: i32, %arg1: i32) -> (i32, i32, i32) {
    %c0_i32 = arith.constant 0 : i32
    %c0_i32_0 = arith.constant 0 : i32
    %c0_i32_1 = arith.constant 0 : i32
    %c0_i32_2 = arith.constant 0 : i32
    return %c0_i32, %c0_i32_0, %c0_i32_1 : i32, i32, i32
  }
  func.func @transform_2(%arg0: i32, %arg1: i32) -> (i32, i32) {
    %c0_i32 = arith.constant 0 : i32
    %c0_i32_0 = arith.constant 0 : i32
    %c0_i32_1 = arith.constant 0 : i32
    return %c0_i32, %c0_i32_0 : i32, i32
  }
  func.func @transform_3(%arg0: i32, %arg1: i32) -> (i32, i32, i32) {
    %c0_i32 = arith.constant 0 : i32
    %c0_i32_0 = arith.constant 0 : i32
    return %arg0, %c0_i32, %arg1 : i32, i32, i32
  }
}

module attributes {stable_mosaic.version = 11 : i64} {
  func.func @kernel(%arg0: i32, %arg1: i32, %arg2: memref<1x1x16x142xbf16, #tpu.memory_space<vmem>>, %arg3: memref<9x8x16xbf16, #tpu.memory_space<vmem>>, %arg4: memref<8x2xf32, #tpu.memory_space<vmem>>, %arg5: memref<1x8x128xbf16, #tpu.memory_space<vmem>>) attributes {dimension_semantics = [#tpu.dimension_semantics<parallel>, #tpu.dimension_semantics<parallel>], iteration_bounds = array<i64: 2, 1>, scalar_prefetch = 0 : i64, scratch_operands = 0 : i64, tpu.core_type = #tpu.core_type<tc>, window_params = [{transform_indices = @transform_0, window_bounds = array<i64: 1, 1, 16, 142>}, {pipeline_mode = #tpu.pipeline_mode<synchronous>, transform_indices = @transform_1, window_bounds = array<i64: 9, 8, 16>}, {pipeline_mode = #tpu.pipeline_mode<synchronous>, transform_indices = @transform_2, window_bounds = array<i64: 8, 2>}, {transform_indices = @transform_3, window_bounds = array<i64: 1, 8, 128>}]} {
    %c0 = arith.constant 0 : index
    %c0_0 = arith.constant 0 : index
    %c0_1 = arith.constant 0 : index
    %c0_2 = arith.constant 0 : index
    %0 = vector.load %arg2[%c0, %c0_0, %c0_1, %c0_2] : memref<1x1x16x142xbf16, #tpu.memory_space<vmem>>, vector<1x1x16x142xbf16>
    %1 = vector.shape_cast %0 : vector<1x1x16x142xbf16> to vector<16x142xbf16>
    %c0_3 = arith.constant 0 : index
    %c0_4 = arith.constant 0 : index
    %c0_5 = arith.constant 0 : index
    %2 = vector.load %arg3[%c0_3, %c0_4, %c0_5] : memref<9x8x16xbf16, #tpu.memory_space<vmem>>, vector<9x8x16xbf16>
    %3 = vector.extract_strided_slice %2 {offsets = [0, 0, 0], sizes = [1, 8, 16], strides = [1, 1, 1]} : vector<9x8x16xbf16> to vector<1x8x16xbf16>
    %4 = vector.shape_cast %3 : vector<1x8x16xbf16> to vector<8x16xbf16>
    %5 = vector.extract_strided_slice %1 {offsets = [0, 0], sizes = [16, 128], strides = [1, 1]} : vector<16x142xbf16> to vector<16x128xbf16>
    %cst = arith.constant dense<0.000000e+00> : vector<8x128xf32>
    %6 = tpu.matmul %4, %5, %cst {dimension_numbers = #tpu.dot_dimension_numbers<[1], [0], [0], [1], [0, 0, 1, 1], [], []>} : vector<8x16xbf16>, vector<16x128xbf16>, vector<8x128xf32> -> vector<8x128xf32>
    %7 = vector.extract_strided_slice %2 {offsets = [1, 0, 0], sizes = [1, 8, 16], strides = [1, 1, 1]} : vector<9x8x16xbf16> to vector<1x8x16xbf16>
    %8 = vector.shape_cast %7 : vector<1x8x16xbf16> to vector<8x16xbf16>
    %9 = vector.extract_strided_slice %1 {offsets = [0, 1], sizes = [16, 128], strides = [1, 1]} : vector<16x142xbf16> to vector<16x128xbf16>
    %cst_6 = arith.constant dense<0.000000e+00> : vector<8x128xf32>
    %10 = tpu.matmul %8, %9, %cst_6 {dimension_numbers = #tpu.dot_dimension_numbers<[1], [0], [0], [1], [0, 0, 1, 1], [], []>} : vector<8x16xbf16>, vector<16x128xbf16>, vector<8x128xf32> -> vector<8x128xf32>
    %11 = arith.addf %6, %10 : vector<8x128xf32>
    %12 = vector.extract_strided_slice %2 {offsets = [2, 0, 0], sizes = [1, 8, 16], strides = [1, 1, 1]} : vector<9x8x16xbf16> to vector<1x8x16xbf16>
    %13 = vector.shape_cast %12 : vector<1x8x16xbf16> to vector<8x16xbf16>
    %14 = vector.extract_strided_slice %1 {offsets = [0, 2], sizes = [16, 128], strides = [1, 1]} : vector<16x142xbf16> to vector<16x128xbf16>
    %cst_7 = arith.constant dense<0.000000e+00> : vector<8x128xf32>
    %15 = tpu.matmul %13, %14, %cst_7 {dimension_numbers = #tpu.dot_dimension_numbers<[1], [0], [0], [1], [0, 0, 1, 1], [], []>} : vector<8x16xbf16>, vector<16x128xbf16>, vector<8x128xf32> -> vector<8x128xf32>
    %16 = arith.addf %11, %15 : vector<8x128xf32>
    %17 = vector.extract_strided_slice %2 {offsets = [3, 0, 0], sizes = [1, 8, 16], strides = [1, 1, 1]} : vector<9x8x16xbf16> to vector<1x8x16xbf16>
    %18 = vector.shape_cast %17 : vector<1x8x16xbf16> to vector<8x16xbf16>
    %19 = vector.extract_strided_slice %1 {offsets = [0, 6], sizes = [16, 128], strides = [1, 1]} : vector<16x142xbf16> to vector<16x128xbf16>
    %cst_8 = arith.constant dense<0.000000e+00> : vector<8x128xf32>
    %20 = tpu.matmul %18, %19, %cst_8 {dimension_numbers = #tpu.dot_dimension_numbers<[1], [0], [0], [1], [0, 0, 1, 1], [], []>} : vector<8x16xbf16>, vector<16x128xbf16>, vector<8x128xf32> -> vector<8x128xf32>
    %21 = arith.addf %16, %20 : vector<8x128xf32>
    %22 = vector.extract_strided_slice %2 {offsets = [4, 0, 0], sizes = [1, 8, 16], strides = [1, 1, 1]} : vector<9x8x16xbf16> to vector<1x8x16xbf16>
    %23 = vector.shape_cast %22 : vector<1x8x16xbf16> to vector<8x16xbf16>
    %24 = vector.extract_strided_slice %1 {offsets = [0, 7], sizes = [16, 128], strides = [1, 1]} : vector<16x142xbf16> to vector<16x128xbf16>
    %cst_9 = arith.constant dense<0.000000e+00> : vector<8x128xf32>
    %25 = tpu.matmul %23, %24, %cst_9 {dimension_numbers = #tpu.dot_dimension_numbers<[1], [0], [0], [1], [0, 0, 1, 1], [], []>} : vector<8x16xbf16>, vector<16x128xbf16>, vector<8x128xf32> -> vector<8x128xf32>
    %26 = arith.addf %21, %25 : vector<8x128xf32>
    %27 = vector.extract_strided_slice %2 {offsets = [5, 0, 0], sizes = [1, 8, 16], strides = [1, 1, 1]} : vector<9x8x16xbf16> to vector<1x8x16xbf16>
    %28 = vector.shape_cast %27 : vector<1x8x16xbf16> to vector<8x16xbf16>
    %29 = vector.extract_strided_slice %1 {offsets = [0, 8], sizes = [16, 128], strides = [1, 1]} : vector<16x142xbf16> to vector<16x128xbf16>
    %cst_10 = arith.constant dense<0.000000e+00> : vector<8x128xf32>
    %30 = tpu.matmul %28, %29, %cst_10 {dimension_numbers = #tpu.dot_dimension_numbers<[1], [0], [0], [1], [0, 0, 1, 1], [], []>} : vector<8x16xbf16>, vector<16x128xbf16>, vector<8x128xf32> -> vector<8x128xf32>
    %31 = arith.addf %26, %30 : vector<8x128xf32>
    %32 = vector.extract_strided_slice %2 {offsets = [6, 0, 0], sizes = [1, 8, 16], strides = [1, 1, 1]} : vector<9x8x16xbf16> to vector<1x8x16xbf16>
    %33 = vector.shape_cast %32 : vector<1x8x16xbf16> to vector<8x16xbf16>
    %34 = vector.extract_strided_slice %1 {offsets = [0, 12], sizes = [16, 128], strides = [1, 1]} : vector<16x142xbf16> to vector<16x128xbf16>
    %cst_11 = arith.constant dense<0.000000e+00> : vector<8x128xf32>
    %35 = tpu.matmul %33, %34, %cst_11 {dimension_numbers = #tpu.dot_dimension_numbers<[1], [0], [0], [1], [0, 0, 1, 1], [], []>} : vector<8x16xbf16>, vector<16x128xbf16>, vector<8x128xf32> -> vector<8x128xf32>
    %36 = arith.addf %31, %35 : vector<8x128xf32>
    %37 = vector.extract_strided_slice %2 {offsets = [7, 0, 0], sizes = [1, 8, 16], strides = [1, 1, 1]} : vector<9x8x16xbf16> to vector<1x8x16xbf16>
    %38 = vector.shape_cast %37 : vector<1x8x16xbf16> to vector<8x16xbf16>
    %39 = vector.extract_strided_slice %1 {offsets = [0, 13], sizes = [16, 128], strides = [1, 1]} : vector<16x142xbf16> to vector<16x128xbf16>
    %cst_12 = arith.constant dense<0.000000e+00> : vector<8x128xf32>
    %40 = tpu.matmul %38, %39, %cst_12 {dimension_numbers = #tpu.dot_dimension_numbers<[1], [0], [0], [1], [0, 0, 1, 1], [], []>} : vector<8x16xbf16>, vector<16x128xbf16>, vector<8x128xf32> -> vector<8x128xf32>
    %41 = arith.addf %36, %40 : vector<8x128xf32>
    %42 = vector.extract_strided_slice %2 {offsets = [8, 0, 0], sizes = [1, 8, 16], strides = [1, 1, 1]} : vector<9x8x16xbf16> to vector<1x8x16xbf16>
    %43 = vector.shape_cast %42 : vector<1x8x16xbf16> to vector<8x16xbf16>
    %44 = vector.extract_strided_slice %1 {offsets = [0, 14], sizes = [16, 128], strides = [1, 1]} : vector<16x142xbf16> to vector<16x128xbf16>
    %cst_13 = arith.constant dense<0.000000e+00> : vector<8x128xf32>
    %45 = tpu.matmul %43, %44, %cst_13 {dimension_numbers = #tpu.dot_dimension_numbers<[1], [0], [0], [1], [0, 0, 1, 1], [], []>} : vector<8x16xbf16>, vector<16x128xbf16>, vector<8x128xf32> -> vector<8x128xf32>
    %46 = arith.addf %41, %45 : vector<8x128xf32>
    %c0_14 = arith.constant 0 : index
    %c0_15 = arith.constant 0 : index
    %47 = vector.load %arg4[%c0_14, %c0_15] : memref<8x2xf32, #tpu.memory_space<vmem>>, vector<8x2xf32>
    %48 = vector.extract_strided_slice %47 {offsets = [0, 0], sizes = [8, 1], strides = [1, 1]} : vector<8x2xf32> to vector<8x1xf32>
    %49 = vector.broadcast %48 : vector<8x1xf32> to vector<8x128xf32>
    %50 = arith.mulf %46, %49 : vector<8x128xf32>
    %51 = vector.extract_strided_slice %47 {offsets = [0, 1], sizes = [8, 1], strides = [1, 1]} : vector<8x2xf32> to vector<8x1xf32>
    %52 = vector.broadcast %51 : vector<8x1xf32> to vector<8x128xf32>
    %53 = arith.addf %50, %52 : vector<8x128xf32>
    %cst_16 = arith.constant 0.000000e+00 : f32
    %54 = vector.broadcast %cst_16 : f32 to vector<8x128xf32>
    %55 = arith.maximumf %53, %54 : vector<8x128xf32>
    %56 = arith.truncf %55 : vector<8x128xf32> to vector<8x128xbf16>
    %c0_17 = arith.constant 0 : index
    %c0_18 = arith.constant 0 : index
    %c0_19 = arith.constant 0 : index
    %57 = vector.load %arg5[%c0_17, %c0_18, %c0_19] : memref<1x8x128xbf16, #tpu.memory_space<vmem>>, vector<1x8x128xbf16>
    %58 = vector.shape_cast %57 : vector<1x8x128xbf16> to vector<8x128xbf16>
    %59 = vector.shape_cast %56 : vector<8x128xbf16> to vector<1x8x128xbf16>
    tpu.vector_store %arg5[%c0_17, %c0_18, %c0_19], %59 {strides = array<i32>} : memref<1x8x128xbf16, #tpu.memory_space<vmem>>, vector<1x8x128xbf16>,
    return
  }
  func.func @transform_0(%arg0: i32, %arg1: i32) -> (i32, i32, i32, i32) {
    %c0_i32 = arith.constant 0 : i32
    %c0_i32_0 = arith.constant 0 : i32
    %c0_i32_1 = arith.constant 0 : i32
    return %arg0, %arg1, %c0_i32, %c0_i32_0 : i32, i32, i32, i32
  }
  func.func @transform_1(%arg0: i32, %arg1: i32) -> (i32, i32, i32) {
    %c0_i32 = arith.constant 0 : i32
    %c0_i32_0 = arith.constant 0 : i32
    %c0_i32_1 = arith.constant 0 : i32
    %c0_i32_2 = arith.constant 0 : i32
    return %c0_i32, %c0_i32_0, %c0_i32_1 : i32, i32, i32
  }
  func.func @transform_2(%arg0: i32, %arg1: i32) -> (i32, i32) {
    %c0_i32 = arith.constant 0 : i32
    %c0_i32_0 = arith.constant 0 : i32
    %c0_i32_1 = arith.constant 0 : i32
    return %c0_i32, %c0_i32_0 : i32, i32
  }
  func.func @transform_3(%arg0: i32, %arg1: i32) -> (i32, i32, i32) {
    %c0_i32 = arith.constant 0 : i32
    %c0_i32_0 = arith.constant 0 : i32
    return %arg0, %c0_i32, %arg1 : i32, i32, i32
  }
}

module attributes {stable_mosaic.version = 11 : i64} {
  func.func @kernel(%arg0: i32, %arg1: i32, %arg2: memref<1x1x16x164xbf16, #tpu.memory_space<vmem>>, %arg3: memref<9x8x16xbf16, #tpu.memory_space<vmem>>, %arg4: memref<8x2xf32, #tpu.memory_space<vmem>>, %arg5: memref<1x8x128xbf16, #tpu.memory_space<vmem>>) attributes {dimension_semantics = [#tpu.dimension_semantics<parallel>, #tpu.dimension_semantics<parallel>], iteration_bounds = array<i64: 2, 1>, scalar_prefetch = 0 : i64, scratch_operands = 0 : i64, tpu.core_type = #tpu.core_type<tc>, window_params = [{transform_indices = @transform_0, window_bounds = array<i64: 1, 1, 16, 164>}, {pipeline_mode = #tpu.pipeline_mode<synchronous>, transform_indices = @transform_1, window_bounds = array<i64: 9, 8, 16>}, {pipeline_mode = #tpu.pipeline_mode<synchronous>, transform_indices = @transform_2, window_bounds = array<i64: 8, 2>}, {transform_indices = @transform_3, window_bounds = array<i64: 1, 8, 128>}]} {
    %c0 = arith.constant 0 : index
    %c0_0 = arith.constant 0 : index
    %c0_1 = arith.constant 0 : index
    %c0_2 = arith.constant 0 : index
    %0 = vector.load %arg2[%c0, %c0_0, %c0_1, %c0_2] : memref<1x1x16x164xbf16, #tpu.memory_space<vmem>>, vector<1x1x16x164xbf16>
    %1 = vector.shape_cast %0 : vector<1x1x16x164xbf16> to vector<16x164xbf16>
    %c0_3 = arith.constant 0 : index
    %c0_4 = arith.constant 0 : index
    %c0_5 = arith.constant 0 : index
    %2 = vector.load %arg3[%c0_3, %c0_4, %c0_5] : memref<9x8x16xbf16, #tpu.memory_space<vmem>>, vector<9x8x16xbf16>
    %3 = vector.extract_strided_slice %2 {offsets = [0, 0, 0], sizes = [1, 8, 16], strides = [1, 1, 1]} : vector<9x8x16xbf16> to vector<1x8x16xbf16>
    %4 = vector.shape_cast %3 : vector<1x8x16xbf16> to vector<8x16xbf16>
    %5 = vector.extract_strided_slice %1 {offsets = [0, 0], sizes = [16, 128], strides = [1, 1]} : vector<16x164xbf16> to vector<16x128xbf16>
    %cst = arith.constant dense<0.000000e+00> : vector<8x128xf32>
    %6 = tpu.matmul %4, %5, %cst {dimension_numbers = #tpu.dot_dimension_numbers<[1], [0], [0], [1], [0, 0, 1, 1], [], []>} : vector<8x16xbf16>, vector<16x128xbf16>, vector<8x128xf32> -> vector<8x128xf32>
    %7 = vector.extract_strided_slice %2 {offsets = [1, 0, 0], sizes = [1, 8, 16], strides = [1, 1, 1]} : vector<9x8x16xbf16> to vector<1x8x16xbf16>
    %8 = vector.shape_cast %7 : vector<1x8x16xbf16> to vector<8x16xbf16>
    %9 = vector.extract_strided_slice %1 {offsets = [0, 2], sizes = [16, 128], strides = [1, 1]} : vector<16x164xbf16> to vector<16x128xbf16>
    %cst_6 = arith.constant dense<0.000000e+00> : vector<8x128xf32>
    %10 = tpu.matmul %8, %9, %cst_6 {dimension_numbers = #tpu.dot_dimension_numbers<[1], [0], [0], [1], [0, 0, 1, 1], [], []>} : vector<8x16xbf16>, vector<16x128xbf16>, vector<8x128xf32> -> vector<8x128xf32>
    %11 = arith.addf %6, %10 : vector<8x128xf32>
    %12 = vector.extract_strided_slice %2 {offsets = [2, 0, 0], sizes = [1, 8, 16], strides = [1, 1, 1]} : vector<9x8x16xbf16> to vector<1x8x16xbf16>
    %13 = vector.shape_cast %12 : vector<1x8x16xbf16> to vector<8x16xbf16>
    %14 = vector.extract_strided_slice %1 {offsets = [0, 4], sizes = [16, 128], strides = [1, 1]} : vector<16x164xbf16> to vector<16x128xbf16>
    %cst_7 = arith.constant dense<0.000000e+00> : vector<8x128xf32>
    %15 = tpu.matmul %13, %14, %cst_7 {dimension_numbers = #tpu.dot_dimension_numbers<[1], [0], [0], [1], [0, 0, 1, 1], [], []>} : vector<8x16xbf16>, vector<16x128xbf16>, vector<8x128xf32> -> vector<8x128xf32>
    %16 = arith.addf %11, %15 : vector<8x128xf32>
    %17 = vector.extract_strided_slice %2 {offsets = [3, 0, 0], sizes = [1, 8, 16], strides = [1, 1, 1]} : vector<9x8x16xbf16> to vector<1x8x16xbf16>
    %18 = vector.shape_cast %17 : vector<1x8x16xbf16> to vector<8x16xbf16>
    %19 = vector.extract_strided_slice %1 {offsets = [0, 16], sizes = [16, 128], strides = [1, 1]} : vector<16x164xbf16> to vector<16x128xbf16>
    %cst_8 = arith.constant dense<0.000000e+00> : vector<8x128xf32>
    %20 = tpu.matmul %18, %19, %cst_8 {dimension_numbers = #tpu.dot_dimension_numbers<[1], [0], [0], [1], [0, 0, 1, 1], [], []>} : vector<8x16xbf16>, vector<16x128xbf16>, vector<8x128xf32> -> vector<8x128xf32>
    %21 = arith.addf %16, %20 : vector<8x128xf32>
    %22 = vector.extract_strided_slice %2 {offsets = [4, 0, 0], sizes = [1, 8, 16], strides = [1, 1, 1]} : vector<9x8x16xbf16> to vector<1x8x16xbf16>
    %23 = vector.shape_cast %22 : vector<1x8x16xbf16> to vector<8x16xbf16>
    %24 = vector.extract_strided_slice %1 {offsets = [0, 18], sizes = [16, 128], strides = [1, 1]} : vector<16x164xbf16> to vector<16x128xbf16>
    %cst_9 = arith.constant dense<0.000000e+00> : vector<8x128xf32>
    %25 = tpu.matmul %23, %24, %cst_9 {dimension_numbers = #tpu.dot_dimension_numbers<[1], [0], [0], [1], [0, 0, 1, 1], [], []>} : vector<8x16xbf16>, vector<16x128xbf16>, vector<8x128xf32> -> vector<8x128xf32>
    %26 = arith.addf %21, %25 : vector<8x128xf32>
    %27 = vector.extract_strided_slice %2 {offsets = [5, 0, 0], sizes = [1, 8, 16], strides = [1, 1, 1]} : vector<9x8x16xbf16> to vector<1x8x16xbf16>
    %28 = vector.shape_cast %27 : vector<1x8x16xbf16> to vector<8x16xbf16>
    %29 = vector.extract_strided_slice %1 {offsets = [0, 20], sizes = [16, 128], strides = [1, 1]} : vector<16x164xbf16> to vector<16x128xbf16>
    %cst_10 = arith.constant dense<0.000000e+00> : vector<8x128xf32>
    %30 = tpu.matmul %28, %29, %cst_10 {dimension_numbers = #tpu.dot_dimension_numbers<[1], [0], [0], [1], [0, 0, 1, 1], [], []>} : vector<8x16xbf16>, vector<16x128xbf16>, vector<8x128xf32> -> vector<8x128xf32>
    %31 = arith.addf %26, %30 : vector<8x128xf32>
    %32 = vector.extract_strided_slice %2 {offsets = [6, 0, 0], sizes = [1, 8, 16], strides = [1, 1, 1]} : vector<9x8x16xbf16> to vector<1x8x16xbf16>
    %33 = vector.shape_cast %32 : vector<1x8x16xbf16> to vector<8x16xbf16>
    %34 = vector.extract_strided_slice %1 {offsets = [0, 32], sizes = [16, 128], strides = [1, 1]} : vector<16x164xbf16> to vector<16x128xbf16>
    %cst_11 = arith.constant dense<0.000000e+00> : vector<8x128xf32>
    %35 = tpu.matmul %33, %34, %cst_11 {dimension_numbers = #tpu.dot_dimension_numbers<[1], [0], [0], [1], [0, 0, 1, 1], [], []>} : vector<8x16xbf16>, vector<16x128xbf16>, vector<8x128xf32> -> vector<8x128xf32>
    %36 = arith.addf %31, %35 : vector<8x128xf32>
    %37 = vector.extract_strided_slice %2 {offsets = [7, 0, 0], sizes = [1, 8, 16], strides = [1, 1, 1]} : vector<9x8x16xbf16> to vector<1x8x16xbf16>
    %38 = vector.shape_cast %37 : vector<1x8x16xbf16> to vector<8x16xbf16>
    %39 = vector.extract_strided_slice %1 {offsets = [0, 34], sizes = [16, 128], strides = [1, 1]} : vector<16x164xbf16> to vector<16x128xbf16>
    %cst_12 = arith.constant dense<0.000000e+00> : vector<8x128xf32>
    %40 = tpu.matmul %38, %39, %cst_12 {dimension_numbers = #tpu.dot_dimension_numbers<[1], [0], [0], [1], [0, 0, 1, 1], [], []>} : vector<8x16xbf16>, vector<16x128xbf16>, vector<8x128xf32> -> vector<8x128xf32>
    %41 = arith.addf %36, %40 : vector<8x128xf32>
    %42 = vector.extract_strided_slice %2 {offsets = [8, 0, 0], sizes = [1, 8, 16], strides = [1, 1, 1]} : vector<9x8x16xbf16> to vector<1x8x16xbf16>
    %43 = vector.shape_cast %42 : vector<1x8x16xbf16> to vector<8x16xbf16>
    %44 = vector.extract_strided_slice %1 {offsets = [0, 36], sizes = [16, 128], strides = [1, 1]} : vector<16x164xbf16> to vector<16x128xbf16>
    %cst_13 = arith.constant dense<0.000000e+00> : vector<8x128xf32>
    %45 = tpu.matmul %43, %44, %cst_13 {dimension_numbers = #tpu.dot_dimension_numbers<[1], [0], [0], [1], [0, 0, 1, 1], [], []>} : vector<8x16xbf16>, vector<16x128xbf16>, vector<8x128xf32> -> vector<8x128xf32>
    %46 = arith.addf %41, %45 : vector<8x128xf32>
    %c0_14 = arith.constant 0 : index
    %c0_15 = arith.constant 0 : index
    %47 = vector.load %arg4[%c0_14, %c0_15] : memref<8x2xf32, #tpu.memory_space<vmem>>, vector<8x2xf32>
    %48 = vector.extract_strided_slice %47 {offsets = [0, 0], sizes = [8, 1], strides = [1, 1]} : vector<8x2xf32> to vector<8x1xf32>
    %49 = vector.broadcast %48 : vector<8x1xf32> to vector<8x128xf32>
    %50 = arith.mulf %46, %49 : vector<8x128xf32>
    %51 = vector.extract_strided_slice %47 {offsets = [0, 1], sizes = [8, 1], strides = [1, 1]} : vector<8x2xf32> to vector<8x1xf32>
    %52 = vector.broadcast %51 : vector<8x1xf32> to vector<8x128xf32>
    %53 = arith.addf %50, %52 : vector<8x128xf32>
    %cst_16 = arith.constant 0.000000e+00 : f32
    %54 = vector.broadcast %cst_16 : f32 to vector<8x128xf32>
    %55 = arith.maximumf %53, %54 : vector<8x128xf32>
    %56 = arith.truncf %55 : vector<8x128xf32> to vector<8x128xbf16>
    %c0_17 = arith.constant 0 : index
    %c0_18 = arith.constant 0 : index
    %c0_19 = arith.constant 0 : index
    %57 = vector.load %arg5[%c0_17, %c0_18, %c0_19] : memref<1x8x128xbf16, #tpu.memory_space<vmem>>, vector<1x8x128xbf16>
    %58 = vector.shape_cast %57 : vector<1x8x128xbf16> to vector<8x128xbf16>
    %59 = vector.shape_cast %56 : vector<8x128xbf16> to vector<1x8x128xbf16>
    tpu.vector_store %arg5[%c0_17, %c0_18, %c0_19], %59 {strides = array<i32>} : memref<1x8x128xbf16, #tpu.memory_space<vmem>>, vector<1x8x128xbf16>,
    return
  }
  func.func @transform_0(%arg0: i32, %arg1: i32) -> (i32, i32, i32, i32) {
    %c0_i32 = arith.constant 0 : i32
    %c0_i32_0 = arith.constant 0 : i32
    %c0_i32_1 = arith.constant 0 : i32
    return %arg0, %arg1, %c0_i32, %c0_i32_0 : i32, i32, i32, i32
  }
  func.func @transform_1(%arg0: i32, %arg1: i32) -> (i32, i32, i32) {
    %c0_i32 = arith.constant 0 : i32
    %c0_i32_0 = arith.constant 0 : i32
    %c0_i32_1 = arith.constant 0 : i32
    %c0_i32_2 = arith.constant 0 : i32
    return %c0_i32, %c0_i32_0, %c0_i32_1 : i32, i32, i32
  }
  func.func @transform_2(%arg0: i32, %arg1: i32) -> (i32, i32) {
    %c0_i32 = arith.constant 0 : i32
    %c0_i32_0 = arith.constant 0 : i32
    %c0_i32_1 = arith.constant 0 : i32
    return %c0_i32, %c0_i32_0 : i32, i32
  }
  func.func @transform_3(%arg0: i32, %arg1: i32) -> (i32, i32, i32) {
    %c0_i32 = arith.constant 0 : i32
    %c0_i32_0 = arith.constant 0 : i32
    return %arg0, %c0_i32, %arg1 : i32, i32, i32
  }
}

module attributes {stable_mosaic.version = 11 : i64} {
  func.func @kernel(%arg0: i32, %arg1: i32, %arg2: memref<1x1x16x142xbf16, #tpu.memory_space<vmem>>, %arg3: memref<1x1x16x142xbf16, #tpu.memory_space<vmem>>, %arg4: memref<9x8x16xbf16, #tpu.memory_space<vmem>>, %arg5: memref<9x8x16xbf16, #tpu.memory_space<vmem>>, %arg6: memref<8x2xf32, #tpu.memory_space<vmem>>, %arg7: memref<1x8x128xbf16, #tpu.memory_space<vmem>>) attributes {dimension_semantics = [#tpu.dimension_semantics<parallel>, #tpu.dimension_semantics<parallel>], iteration_bounds = array<i64: 2, 1>, scalar_prefetch = 0 : i64, scratch_operands = 0 : i64, tpu.core_type = #tpu.core_type<tc>, window_params = [{transform_indices = @transform_0, window_bounds = array<i64: 1, 1, 16, 142>}, {transform_indices = @transform_1, window_bounds = array<i64: 1, 1, 16, 142>}, {pipeline_mode = #tpu.pipeline_mode<synchronous>, transform_indices = @transform_2, window_bounds = array<i64: 9, 8, 16>}, {pipeline_mode = #tpu.pipeline_mode<synchronous>, transform_indices = @transform_3, window_bounds = array<i64: 9, 8, 16>}, {pipeline_mode = #tpu.pipeline_mode<synchronous>, transform_indices = @transform_4, window_bounds = array<i64: 8, 2>}, {transform_indices = @transform_5, window_bounds = array<i64: 1, 8, 128>}]} {
    %c0 = arith.constant 0 : index
    %c0_0 = arith.constant 0 : index
    %c0_1 = arith.constant 0 : index
    %c0_2 = arith.constant 0 : index
    %0 = vector.load %arg2[%c0, %c0_0, %c0_1, %c0_2] : memref<1x1x16x142xbf16, #tpu.memory_space<vmem>>, vector<1x1x16x142xbf16>
    %1 = vector.shape_cast %0 : vector<1x1x16x142xbf16> to vector<16x142xbf16>
    %c0_3 = arith.constant 0 : index
    %c0_4 = arith.constant 0 : index
    %c0_5 = arith.constant 0 : index
    %2 = vector.load %arg4[%c0_3, %c0_4, %c0_5] : memref<9x8x16xbf16, #tpu.memory_space<vmem>>, vector<9x8x16xbf16>
    %3 = vector.extract_strided_slice %2 {offsets = [0, 0, 0], sizes = [1, 8, 16], strides = [1, 1, 1]} : vector<9x8x16xbf16> to vector<1x8x16xbf16>
    %4 = vector.shape_cast %3 : vector<1x8x16xbf16> to vector<8x16xbf16>
    %5 = vector.extract_strided_slice %1 {offsets = [0, 0], sizes = [16, 128], strides = [1, 1]} : vector<16x142xbf16> to vector<16x128xbf16>
    %cst = arith.constant dense<0.000000e+00> : vector<8x128xf32>
    %6 = tpu.matmul %4, %5, %cst {dimension_numbers = #tpu.dot_dimension_numbers<[1], [0], [0], [1], [0, 0, 1, 1], [], []>} : vector<8x16xbf16>, vector<16x128xbf16>, vector<8x128xf32> -> vector<8x128xf32>
    %7 = vector.extract_strided_slice %2 {offsets = [1, 0, 0], sizes = [1, 8, 16], strides = [1, 1, 1]} : vector<9x8x16xbf16> to vector<1x8x16xbf16>
    %8 = vector.shape_cast %7 : vector<1x8x16xbf16> to vector<8x16xbf16>
    %9 = vector.extract_strided_slice %1 {offsets = [0, 1], sizes = [16, 128], strides = [1, 1]} : vector<16x142xbf16> to vector<16x128xbf16>
    %cst_6 = arith.constant dense<0.000000e+00> : vector<8x128xf32>
    %10 = tpu.matmul %8, %9, %cst_6 {dimension_numbers = #tpu.dot_dimension_numbers<[1], [0], [0], [1], [0, 0, 1, 1], [], []>} : vector<8x16xbf16>, vector<16x128xbf16>, vector<8x128xf32> -> vector<8x128xf32>
    %11 = arith.addf %6, %10 : vector<8x128xf32>
    %12 = vector.extract_strided_slice %2 {offsets = [2, 0, 0], sizes = [1, 8, 16], strides = [1, 1, 1]} : vector<9x8x16xbf16> to vector<1x8x16xbf16>
    %13 = vector.shape_cast %12 : vector<1x8x16xbf16> to vector<8x16xbf16>
    %14 = vector.extract_strided_slice %1 {offsets = [0, 2], sizes = [16, 128], strides = [1, 1]} : vector<16x142xbf16> to vector<16x128xbf16>
    %cst_7 = arith.constant dense<0.000000e+00> : vector<8x128xf32>
    %15 = tpu.matmul %13, %14, %cst_7 {dimension_numbers = #tpu.dot_dimension_numbers<[1], [0], [0], [1], [0, 0, 1, 1], [], []>} : vector<8x16xbf16>, vector<16x128xbf16>, vector<8x128xf32> -> vector<8x128xf32>
    %16 = arith.addf %11, %15 : vector<8x128xf32>
    %17 = vector.extract_strided_slice %2 {offsets = [3, 0, 0], sizes = [1, 8, 16], strides = [1, 1, 1]} : vector<9x8x16xbf16> to vector<1x8x16xbf16>
    %18 = vector.shape_cast %17 : vector<1x8x16xbf16> to vector<8x16xbf16>
    %19 = vector.extract_strided_slice %1 {offsets = [0, 6], sizes = [16, 128], strides = [1, 1]} : vector<16x142xbf16> to vector<16x128xbf16>
    %cst_8 = arith.constant dense<0.000000e+00> : vector<8x128xf32>
    %20 = tpu.matmul %18, %19, %cst_8 {dimension_numbers = #tpu.dot_dimension_numbers<[1], [0], [0], [1], [0, 0, 1, 1], [], []>} : vector<8x16xbf16>, vector<16x128xbf16>, vector<8x128xf32> -> vector<8x128xf32>
    %21 = arith.addf %16, %20 : vector<8x128xf32>
    %22 = vector.extract_strided_slice %2 {offsets = [4, 0, 0], sizes = [1, 8, 16], strides = [1, 1, 1]} : vector<9x8x16xbf16> to vector<1x8x16xbf16>
    %23 = vector.shape_cast %22 : vector<1x8x16xbf16> to vector<8x16xbf16>
    %24 = vector.extract_strided_slice %1 {offsets = [0, 7], sizes = [16, 128], strides = [1, 1]} : vector<16x142xbf16> to vector<16x128xbf16>
    %cst_9 = arith.constant dense<0.000000e+00> : vector<8x128xf32>
    %25 = tpu.matmul %23, %24, %cst_9 {dimension_numbers = #tpu.dot_dimension_numbers<[1], [0], [0], [1], [0, 0, 1, 1], [], []>} : vector<8x16xbf16>, vector<16x128xbf16>, vector<8x128xf32> -> vector<8x128xf32>
    %26 = arith.addf %21, %25 : vector<8x128xf32>
    %27 = vector.extract_strided_slice %2 {offsets = [5, 0, 0], sizes = [1, 8, 16], strides = [1, 1, 1]} : vector<9x8x16xbf16> to vector<1x8x16xbf16>
    %28 = vector.shape_cast %27 : vector<1x8x16xbf16> to vector<8x16xbf16>
    %29 = vector.extract_strided_slice %1 {offsets = [0, 8], sizes = [16, 128], strides = [1, 1]} : vector<16x142xbf16> to vector<16x128xbf16>
    %cst_10 = arith.constant dense<0.000000e+00> : vector<8x128xf32>
    %30 = tpu.matmul %28, %29, %cst_10 {dimension_numbers = #tpu.dot_dimension_numbers<[1], [0], [0], [1], [0, 0, 1, 1], [], []>} : vector<8x16xbf16>, vector<16x128xbf16>, vector<8x128xf32> -> vector<8x128xf32>
    %31 = arith.addf %26, %30 : vector<8x128xf32>
    %32 = vector.extract_strided_slice %2 {offsets = [6, 0, 0], sizes = [1, 8, 16], strides = [1, 1, 1]} : vector<9x8x16xbf16> to vector<1x8x16xbf16>
    %33 = vector.shape_cast %32 : vector<1x8x16xbf16> to vector<8x16xbf16>
    %34 = vector.extract_strided_slice %1 {offsets = [0, 12], sizes = [16, 128], strides = [1, 1]} : vector<16x142xbf16> to vector<16x128xbf16>
    %cst_11 = arith.constant dense<0.000000e+00> : vector<8x128xf32>
    %35 = tpu.matmul %33, %34, %cst_11 {dimension_numbers = #tpu.dot_dimension_numbers<[1], [0], [0], [1], [0, 0, 1, 1], [], []>} : vector<8x16xbf16>, vector<16x128xbf16>, vector<8x128xf32> -> vector<8x128xf32>
    %36 = arith.addf %31, %35 : vector<8x128xf32>
    %37 = vector.extract_strided_slice %2 {offsets = [7, 0, 0], sizes = [1, 8, 16], strides = [1, 1, 1]} : vector<9x8x16xbf16> to vector<1x8x16xbf16>
    %38 = vector.shape_cast %37 : vector<1x8x16xbf16> to vector<8x16xbf16>
    %39 = vector.extract_strided_slice %1 {offsets = [0, 13], sizes = [16, 128], strides = [1, 1]} : vector<16x142xbf16> to vector<16x128xbf16>
    %cst_12 = arith.constant dense<0.000000e+00> : vector<8x128xf32>
    %40 = tpu.matmul %38, %39, %cst_12 {dimension_numbers = #tpu.dot_dimension_numbers<[1], [0], [0], [1], [0, 0, 1, 1], [], []>} : vector<8x16xbf16>, vector<16x128xbf16>, vector<8x128xf32> -> vector<8x128xf32>
    %41 = arith.addf %36, %40 : vector<8x128xf32>
    %42 = vector.extract_strided_slice %2 {offsets = [8, 0, 0], sizes = [1, 8, 16], strides = [1, 1, 1]} : vector<9x8x16xbf16> to vector<1x8x16xbf16>
    %43 = vector.shape_cast %42 : vector<1x8x16xbf16> to vector<8x16xbf16>
    %44 = vector.extract_strided_slice %1 {offsets = [0, 14], sizes = [16, 128], strides = [1, 1]} : vector<16x142xbf16> to vector<16x128xbf16>
    %cst_13 = arith.constant dense<0.000000e+00> : vector<8x128xf32>
    %45 = tpu.matmul %43, %44, %cst_13 {dimension_numbers = #tpu.dot_dimension_numbers<[1], [0], [0], [1], [0, 0, 1, 1], [], []>} : vector<8x16xbf16>, vector<16x128xbf16>, vector<8x128xf32> -> vector<8x128xf32>
    %46 = arith.addf %41, %45 : vector<8x128xf32>
    %c0_14 = arith.constant 0 : index
    %c0_15 = arith.constant 0 : index
    %c0_16 = arith.constant 0 : index
    %c0_17 = arith.constant 0 : index
    %47 = vector.load %arg3[%c0_14, %c0_15, %c0_16, %c0_17] : memref<1x1x16x142xbf16, #tpu.memory_space<vmem>>, vector<1x1x16x142xbf16>
    %48 = vector.shape_cast %47 : vector<1x1x16x142xbf16> to vector<16x142xbf16>
    %c0_18 = arith.constant 0 : index
    %c0_19 = arith.constant 0 : index
    %c0_20 = arith.constant 0 : index
    %49 = vector.load %arg5[%c0_18, %c0_19, %c0_20] : memref<9x8x16xbf16, #tpu.memory_space<vmem>>, vector<9x8x16xbf16>
    %50 = vector.extract_strided_slice %49 {offsets = [0, 0, 0], sizes = [1, 8, 16], strides = [1, 1, 1]} : vector<9x8x16xbf16> to vector<1x8x16xbf16>
    %51 = vector.shape_cast %50 : vector<1x8x16xbf16> to vector<8x16xbf16>
    %52 = vector.extract_strided_slice %48 {offsets = [0, 0], sizes = [16, 128], strides = [1, 1]} : vector<16x142xbf16> to vector<16x128xbf16>
    %cst_21 = arith.constant dense<0.000000e+00> : vector<8x128xf32>
    %53 = tpu.matmul %51, %52, %cst_21 {dimension_numbers = #tpu.dot_dimension_numbers<[1], [0], [0], [1], [0, 0, 1, 1], [], []>} : vector<8x16xbf16>, vector<16x128xbf16>, vector<8x128xf32> -> vector<8x128xf32>
    %54 = arith.addf %46, %53 : vector<8x128xf32>
    %55 = vector.extract_strided_slice %49 {offsets = [1, 0, 0], sizes = [1, 8, 16], strides = [1, 1, 1]} : vector<9x8x16xbf16> to vector<1x8x16xbf16>
    %56 = vector.shape_cast %55 : vector<1x8x16xbf16> to vector<8x16xbf16>
    %57 = vector.extract_strided_slice %48 {offsets = [0, 1], sizes = [16, 128], strides = [1, 1]} : vector<16x142xbf16> to vector<16x128xbf16>
    %cst_22 = arith.constant dense<0.000000e+00> : vector<8x128xf32>
    %58 = tpu.matmul %56, %57, %cst_22 {dimension_numbers = #tpu.dot_dimension_numbers<[1], [0], [0], [1], [0, 0, 1, 1], [], []>} : vector<8x16xbf16>, vector<16x128xbf16>, vector<8x128xf32> -> vector<8x128xf32>
    %59 = arith.addf %54, %58 : vector<8x128xf32>
    %60 = vector.extract_strided_slice %49 {offsets = [2, 0, 0], sizes = [1, 8, 16], strides = [1, 1, 1]} : vector<9x8x16xbf16> to vector<1x8x16xbf16>
    %61 = vector.shape_cast %60 : vector<1x8x16xbf16> to vector<8x16xbf16>
    %62 = vector.extract_strided_slice %48 {offsets = [0, 2], sizes = [16, 128], strides = [1, 1]} : vector<16x142xbf16> to vector<16x128xbf16>
    %cst_23 = arith.constant dense<0.000000e+00> : vector<8x128xf32>
    %63 = tpu.matmul %61, %62, %cst_23 {dimension_numbers = #tpu.dot_dimension_numbers<[1], [0], [0], [1], [0, 0, 1, 1], [], []>} : vector<8x16xbf16>, vector<16x128xbf16>, vector<8x128xf32> -> vector<8x128xf32>
    %64 = arith.addf %59, %63 : vector<8x128xf32>
    %65 = vector.extract_strided_slice %49 {offsets = [3, 0, 0], sizes = [1, 8, 16], strides = [1, 1, 1]} : vector<9x8x16xbf16> to vector<1x8x16xbf16>
    %66 = vector.shape_cast %65 : vector<1x8x16xbf16> to vector<8x16xbf16>
    %67 = vector.extract_strided_slice %48 {offsets = [0, 6], sizes = [16, 128], strides = [1, 1]} : vector<16x142xbf16> to vector<16x128xbf16>
    %cst_24 = arith.constant dense<0.000000e+00> : vector<8x128xf32>
    %68 = tpu.matmul %66, %67, %cst_24 {dimension_numbers = #tpu.dot_dimension_numbers<[1], [0], [0], [1], [0, 0, 1, 1], [], []>} : vector<8x16xbf16>, vector<16x128xbf16>, vector<8x128xf32> -> vector<8x128xf32>
    %69 = arith.addf %64, %68 : vector<8x128xf32>
    %70 = vector.extract_strided_slice %49 {offsets = [4, 0, 0], sizes = [1, 8, 16], strides = [1, 1, 1]} : vector<9x8x16xbf16> to vector<1x8x16xbf16>
    %71 = vector.shape_cast %70 : vector<1x8x16xbf16> to vector<8x16xbf16>
    %72 = vector.extract_strided_slice %48 {offsets = [0, 7], sizes = [16, 128], strides = [1, 1]} : vector<16x142xbf16> to vector<16x128xbf16>
    %cst_25 = arith.constant dense<0.000000e+00> : vector<8x128xf32>
    %73 = tpu.matmul %71, %72, %cst_25 {dimension_numbers = #tpu.dot_dimension_numbers<[1], [0], [0], [1], [0, 0, 1, 1], [], []>} : vector<8x16xbf16>, vector<16x128xbf16>, vector<8x128xf32> -> vector<8x128xf32>
    %74 = arith.addf %69, %73 : vector<8x128xf32>
    %75 = vector.extract_strided_slice %49 {offsets = [5, 0, 0], sizes = [1, 8, 16], strides = [1, 1, 1]} : vector<9x8x16xbf16> to vector<1x8x16xbf16>
    %76 = vector.shape_cast %75 : vector<1x8x16xbf16> to vector<8x16xbf16>
    %77 = vector.extract_strided_slice %48 {offsets = [0, 8], sizes = [16, 128], strides = [1, 1]} : vector<16x142xbf16> to vector<16x128xbf16>
    %cst_26 = arith.constant dense<0.000000e+00> : vector<8x128xf32>
    %78 = tpu.matmul %76, %77, %cst_26 {dimension_numbers = #tpu.dot_dimension_numbers<[1], [0], [0], [1], [0, 0, 1, 1], [], []>} : vector<8x16xbf16>, vector<16x128xbf16>, vector<8x128xf32> -> vector<8x128xf32>
    %79 = arith.addf %74, %78 : vector<8x128xf32>
    %80 = vector.extract_strided_slice %49 {offsets = [6, 0, 0], sizes = [1, 8, 16], strides = [1, 1, 1]} : vector<9x8x16xbf16> to vector<1x8x16xbf16>
    %81 = vector.shape_cast %80 : vector<1x8x16xbf16> to vector<8x16xbf16>
    %82 = vector.extract_strided_slice %48 {offsets = [0, 12], sizes = [16, 128], strides = [1, 1]} : vector<16x142xbf16> to vector<16x128xbf16>
    %cst_27 = arith.constant dense<0.000000e+00> : vector<8x128xf32>
    %83 = tpu.matmul %81, %82, %cst_27 {dimension_numbers = #tpu.dot_dimension_numbers<[1], [0], [0], [1], [0, 0, 1, 1], [], []>} : vector<8x16xbf16>, vector<16x128xbf16>, vector<8x128xf32> -> vector<8x128xf32>
    %84 = arith.addf %79, %83 : vector<8x128xf32>
    %85 = vector.extract_strided_slice %49 {offsets = [7, 0, 0], sizes = [1, 8, 16], strides = [1, 1, 1]} : vector<9x8x16xbf16> to vector<1x8x16xbf16>
    %86 = vector.shape_cast %85 : vector<1x8x16xbf16> to vector<8x16xbf16>
    %87 = vector.extract_strided_slice %48 {offsets = [0, 13], sizes = [16, 128], strides = [1, 1]} : vector<16x142xbf16> to vector<16x128xbf16>
    %cst_28 = arith.constant dense<0.000000e+00> : vector<8x128xf32>
    %88 = tpu.matmul %86, %87, %cst_28 {dimension_numbers = #tpu.dot_dimension_numbers<[1], [0], [0], [1], [0, 0, 1, 1], [], []>} : vector<8x16xbf16>, vector<16x128xbf16>, vector<8x128xf32> -> vector<8x128xf32>
    %89 = arith.addf %84, %88 : vector<8x128xf32>
    %90 = vector.extract_strided_slice %49 {offsets = [8, 0, 0], sizes = [1, 8, 16], strides = [1, 1, 1]} : vector<9x8x16xbf16> to vector<1x8x16xbf16>
    %91 = vector.shape_cast %90 : vector<1x8x16xbf16> to vector<8x16xbf16>
    %92 = vector.extract_strided_slice %48 {offsets = [0, 14], sizes = [16, 128], strides = [1, 1]} : vector<16x142xbf16> to vector<16x128xbf16>
    %cst_29 = arith.constant dense<0.000000e+00> : vector<8x128xf32>
    %93 = tpu.matmul %91, %92, %cst_29 {dimension_numbers = #tpu.dot_dimension_numbers<[1], [0], [0], [1], [0, 0, 1, 1], [], []>} : vector<8x16xbf16>, vector<16x128xbf16>, vector<8x128xf32> -> vector<8x128xf32>
    %94 = arith.addf %89, %93 : vector<8x128xf32>
    %c0_30 = arith.constant 0 : index
    %c0_31 = arith.constant 0 : index
    %95 = vector.load %arg6[%c0_30, %c0_31] : memref<8x2xf32, #tpu.memory_space<vmem>>, vector<8x2xf32>
    %96 = vector.extract_strided_slice %95 {offsets = [0, 0], sizes = [8, 1], strides = [1, 1]} : vector<8x2xf32> to vector<8x1xf32>
    %97 = vector.broadcast %96 : vector<8x1xf32> to vector<8x128xf32>
    %98 = arith.mulf %94, %97 : vector<8x128xf32>
    %99 = vector.extract_strided_slice %95 {offsets = [0, 1], sizes = [8, 1], strides = [1, 1]} : vector<8x2xf32> to vector<8x1xf32>
    %100 = vector.broadcast %99 : vector<8x1xf32> to vector<8x128xf32>
    %101 = arith.addf %98, %100 : vector<8x128xf32>
    %cst_32 = arith.constant 0.000000e+00 : f32
    %102 = vector.broadcast %cst_32 : f32 to vector<8x128xf32>
    %103 = arith.maximumf %101, %102 : vector<8x128xf32>
    %104 = arith.truncf %103 : vector<8x128xf32> to vector<8x128xbf16>
    %c0_33 = arith.constant 0 : index
    %c0_34 = arith.constant 0 : index
    %c0_35 = arith.constant 0 : index
    %105 = vector.load %arg7[%c0_33, %c0_34, %c0_35] : memref<1x8x128xbf16, #tpu.memory_space<vmem>>, vector<1x8x128xbf16>
    %106 = vector.shape_cast %105 : vector<1x8x128xbf16> to vector<8x128xbf16>
    %107 = vector.shape_cast %104 : vector<8x128xbf16> to vector<1x8x128xbf16>
    tpu.vector_store %arg7[%c0_33, %c0_34, %c0_35], %107 {strides = array<i32>} : memref<1x8x128xbf16, #tpu.memory_space<vmem>>, vector<1x8x128xbf16>,
    return
  }
  func.func @transform_0(%arg0: i32, %arg1: i32) -> (i32, i32, i32, i32) {
    %c0_i32 = arith.constant 0 : i32
    %c0_i32_0 = arith.constant 0 : i32
    %c0_i32_1 = arith.constant 0 : i32
    return %arg0, %arg1, %c0_i32, %c0_i32_0 : i32, i32, i32, i32
  }
  func.func @transform_1(%arg0: i32, %arg1: i32) -> (i32, i32, i32, i32) {
    %c0_i32 = arith.constant 0 : i32
    %c0_i32_0 = arith.constant 0 : i32
    %c0_i32_1 = arith.constant 0 : i32
    return %arg0, %arg1, %c0_i32, %c0_i32_0 : i32, i32, i32, i32
  }
  func.func @transform_2(%arg0: i32, %arg1: i32) -> (i32, i32, i32) {
    %c0_i32 = arith.constant 0 : i32
    %c0_i32_0 = arith.constant 0 : i32
    %c0_i32_1 = arith.constant 0 : i32
    %c0_i32_2 = arith.constant 0 : i32
    return %c0_i32, %c0_i32_0, %c0_i32_1 : i32, i32, i32
  }
  func.func @transform_3(%arg0: i32, %arg1: i32) -> (i32, i32, i32) {
    %c0_i32 = arith.constant 0 : i32
    %c0_i32_0 = arith.constant 0 : i32
    %c0_i32_1 = arith.constant 0 : i32
    %c0_i32_2 = arith.constant 0 : i32
    return %c0_i32, %c0_i32_0, %c0_i32_1 : i32, i32, i32
  }
  func.func @transform_4(%arg0: i32, %arg1: i32) -> (i32, i32) {
    %c0_i32 = arith.constant 0 : i32
    %c0_i32_0 = arith.constant 0 : i32
    %c0_i32_1 = arith.constant 0 : i32
    return %c0_i32, %c0_i32_0 : i32, i32
  }
  func.func @transform_5(%arg0: i32, %arg1: i32) -> (i32, i32, i32) {
    %c0_i32 = arith.constant 0 : i32
    %c0_i32_0 = arith.constant 0 : i32
    return %arg0, %c0_i32, %arg1 : i32, i32, i32
  }
}

module attributes {stable_mosaic.version = 11 : i64} {
  func.func @kernel(%arg0: i32, %arg1: i32, %arg2: memref<1x1x16x150xbf16, #tpu.memory_space<vmem>>, %arg3: memref<1x1x16x150xbf16, #tpu.memory_space<vmem>>, %arg4: memref<9x8x16xbf16, #tpu.memory_space<vmem>>, %arg5: memref<9x8x16xbf16, #tpu.memory_space<vmem>>, %arg6: memref<8x2xf32, #tpu.memory_space<vmem>>, %arg7: memref<1x8x128xbf16, #tpu.memory_space<vmem>>) attributes {dimension_semantics = [#tpu.dimension_semantics<parallel>, #tpu.dimension_semantics<parallel>], iteration_bounds = array<i64: 2, 1>, scalar_prefetch = 0 : i64, scratch_operands = 0 : i64, tpu.core_type = #tpu.core_type<tc>, window_params = [{transform_indices = @transform_0, window_bounds = array<i64: 1, 1, 16, 150>}, {transform_indices = @transform_1, window_bounds = array<i64: 1, 1, 16, 150>}, {pipeline_mode = #tpu.pipeline_mode<synchronous>, transform_indices = @transform_2, window_bounds = array<i64: 9, 8, 16>}, {pipeline_mode = #tpu.pipeline_mode<synchronous>, transform_indices = @transform_3, window_bounds = array<i64: 9, 8, 16>}, {pipeline_mode = #tpu.pipeline_mode<synchronous>, transform_indices = @transform_4, window_bounds = array<i64: 8, 2>}, {transform_indices = @transform_5, window_bounds = array<i64: 1, 8, 128>}]} {
    %c0 = arith.constant 0 : index
    %c0_0 = arith.constant 0 : index
    %c0_1 = arith.constant 0 : index
    %c0_2 = arith.constant 0 : index
    %0 = vector.load %arg2[%c0, %c0_0, %c0_1, %c0_2] : memref<1x1x16x150xbf16, #tpu.memory_space<vmem>>, vector<1x1x16x150xbf16>
    %1 = vector.shape_cast %0 : vector<1x1x16x150xbf16> to vector<16x150xbf16>
    %c0_3 = arith.constant 0 : index
    %c0_4 = arith.constant 0 : index
    %c0_5 = arith.constant 0 : index
    %2 = vector.load %arg4[%c0_3, %c0_4, %c0_5] : memref<9x8x16xbf16, #tpu.memory_space<vmem>>, vector<9x8x16xbf16>
    %3 = vector.extract_strided_slice %2 {offsets = [0, 0, 0], sizes = [1, 8, 16], strides = [1, 1, 1]} : vector<9x8x16xbf16> to vector<1x8x16xbf16>
    %4 = vector.shape_cast %3 : vector<1x8x16xbf16> to vector<8x16xbf16>
    %5 = vector.extract_strided_slice %1 {offsets = [0, 0], sizes = [16, 128], strides = [1, 1]} : vector<16x150xbf16> to vector<16x128xbf16>
    %cst = arith.constant dense<0.000000e+00> : vector<8x128xf32>
    %6 = tpu.matmul %4, %5, %cst {dimension_numbers = #tpu.dot_dimension_numbers<[1], [0], [0], [1], [0, 0, 1, 1], [], []>} : vector<8x16xbf16>, vector<16x128xbf16>, vector<8x128xf32> -> vector<8x128xf32>
    %7 = vector.extract_strided_slice %2 {offsets = [1, 0, 0], sizes = [1, 8, 16], strides = [1, 1, 1]} : vector<9x8x16xbf16> to vector<1x8x16xbf16>
    %8 = vector.shape_cast %7 : vector<1x8x16xbf16> to vector<8x16xbf16>
    %9 = vector.extract_strided_slice %1 {offsets = [0, 1], sizes = [16, 128], strides = [1, 1]} : vector<16x150xbf16> to vector<16x128xbf16>
    %cst_6 = arith.constant dense<0.000000e+00> : vector<8x128xf32>
    %10 = tpu.matmul %8, %9, %cst_6 {dimension_numbers = #tpu.dot_dimension_numbers<[1], [0], [0], [1], [0, 0, 1, 1], [], []>} : vector<8x16xbf16>, vector<16x128xbf16>, vector<8x128xf32> -> vector<8x128xf32>
    %11 = arith.addf %6, %10 : vector<8x128xf32>
    %12 = vector.extract_strided_slice %2 {offsets = [2, 0, 0], sizes = [1, 8, 16], strides = [1, 1, 1]} : vector<9x8x16xbf16> to vector<1x8x16xbf16>
    %13 = vector.shape_cast %12 : vector<1x8x16xbf16> to vector<8x16xbf16>
    %14 = vector.extract_strided_slice %1 {offsets = [0, 2], sizes = [16, 128], strides = [1, 1]} : vector<16x150xbf16> to vector<16x128xbf16>
    %cst_7 = arith.constant dense<0.000000e+00> : vector<8x128xf32>
    %15 = tpu.matmul %13, %14, %cst_7 {dimension_numbers = #tpu.dot_dimension_numbers<[1], [0], [0], [1], [0, 0, 1, 1], [], []>} : vector<8x16xbf16>, vector<16x128xbf16>, vector<8x128xf32> -> vector<8x128xf32>
    %16 = arith.addf %11, %15 : vector<8x128xf32>
    %17 = vector.extract_strided_slice %2 {offsets = [3, 0, 0], sizes = [1, 8, 16], strides = [1, 1, 1]} : vector<9x8x16xbf16> to vector<1x8x16xbf16>
    %18 = vector.shape_cast %17 : vector<1x8x16xbf16> to vector<8x16xbf16>
    %19 = vector.extract_strided_slice %1 {offsets = [0, 10], sizes = [16, 128], strides = [1, 1]} : vector<16x150xbf16> to vector<16x128xbf16>
    %cst_8 = arith.constant dense<0.000000e+00> : vector<8x128xf32>
    %20 = tpu.matmul %18, %19, %cst_8 {dimension_numbers = #tpu.dot_dimension_numbers<[1], [0], [0], [1], [0, 0, 1, 1], [], []>} : vector<8x16xbf16>, vector<16x128xbf16>, vector<8x128xf32> -> vector<8x128xf32>
    %21 = arith.addf %16, %20 : vector<8x128xf32>
    %22 = vector.extract_strided_slice %2 {offsets = [4, 0, 0], sizes = [1, 8, 16], strides = [1, 1, 1]} : vector<9x8x16xbf16> to vector<1x8x16xbf16>
    %23 = vector.shape_cast %22 : vector<1x8x16xbf16> to vector<8x16xbf16>
    %24 = vector.extract_strided_slice %1 {offsets = [0, 11], sizes = [16, 128], strides = [1, 1]} : vector<16x150xbf16> to vector<16x128xbf16>
    %cst_9 = arith.constant dense<0.000000e+00> : vector<8x128xf32>
    %25 = tpu.matmul %23, %24, %cst_9 {dimension_numbers = #tpu.dot_dimension_numbers<[1], [0], [0], [1], [0, 0, 1, 1], [], []>} : vector<8x16xbf16>, vector<16x128xbf16>, vector<8x128xf32> -> vector<8x128xf32>
    %26 = arith.addf %21, %25 : vector<8x128xf32>
    %27 = vector.extract_strided_slice %2 {offsets = [5, 0, 0], sizes = [1, 8, 16], strides = [1, 1, 1]} : vector<9x8x16xbf16> to vector<1x8x16xbf16>
    %28 = vector.shape_cast %27 : vector<1x8x16xbf16> to vector<8x16xbf16>
    %29 = vector.extract_strided_slice %1 {offsets = [0, 12], sizes = [16, 128], strides = [1, 1]} : vector<16x150xbf16> to vector<16x128xbf16>
    %cst_10 = arith.constant dense<0.000000e+00> : vector<8x128xf32>
    %30 = tpu.matmul %28, %29, %cst_10 {dimension_numbers = #tpu.dot_dimension_numbers<[1], [0], [0], [1], [0, 0, 1, 1], [], []>} : vector<8x16xbf16>, vector<16x128xbf16>, vector<8x128xf32> -> vector<8x128xf32>
    %31 = arith.addf %26, %30 : vector<8x128xf32>
    %32 = vector.extract_strided_slice %2 {offsets = [6, 0, 0], sizes = [1, 8, 16], strides = [1, 1, 1]} : vector<9x8x16xbf16> to vector<1x8x16xbf16>
    %33 = vector.shape_cast %32 : vector<1x8x16xbf16> to vector<8x16xbf16>
    %34 = vector.extract_strided_slice %1 {offsets = [0, 20], sizes = [16, 128], strides = [1, 1]} : vector<16x150xbf16> to vector<16x128xbf16>
    %cst_11 = arith.constant dense<0.000000e+00> : vector<8x128xf32>
    %35 = tpu.matmul %33, %34, %cst_11 {dimension_numbers = #tpu.dot_dimension_numbers<[1], [0], [0], [1], [0, 0, 1, 1], [], []>} : vector<8x16xbf16>, vector<16x128xbf16>, vector<8x128xf32> -> vector<8x128xf32>
    %36 = arith.addf %31, %35 : vector<8x128xf32>
    %37 = vector.extract_strided_slice %2 {offsets = [7, 0, 0], sizes = [1, 8, 16], strides = [1, 1, 1]} : vector<9x8x16xbf16> to vector<1x8x16xbf16>
    %38 = vector.shape_cast %37 : vector<1x8x16xbf16> to vector<8x16xbf16>
    %39 = vector.extract_strided_slice %1 {offsets = [0, 21], sizes = [16, 128], strides = [1, 1]} : vector<16x150xbf16> to vector<16x128xbf16>
    %cst_12 = arith.constant dense<0.000000e+00> : vector<8x128xf32>
    %40 = tpu.matmul %38, %39, %cst_12 {dimension_numbers = #tpu.dot_dimension_numbers<[1], [0], [0], [1], [0, 0, 1, 1], [], []>} : vector<8x16xbf16>, vector<16x128xbf16>, vector<8x128xf32> -> vector<8x128xf32>
    %41 = arith.addf %36, %40 : vector<8x128xf32>
    %42 = vector.extract_strided_slice %2 {offsets = [8, 0, 0], sizes = [1, 8, 16], strides = [1, 1, 1]} : vector<9x8x16xbf16> to vector<1x8x16xbf16>
    %43 = vector.shape_cast %42 : vector<1x8x16xbf16> to vector<8x16xbf16>
    %44 = vector.extract_strided_slice %1 {offsets = [0, 22], sizes = [16, 128], strides = [1, 1]} : vector<16x150xbf16> to vector<16x128xbf16>
    %cst_13 = arith.constant dense<0.000000e+00> : vector<8x128xf32>
    %45 = tpu.matmul %43, %44, %cst_13 {dimension_numbers = #tpu.dot_dimension_numbers<[1], [0], [0], [1], [0, 0, 1, 1], [], []>} : vector<8x16xbf16>, vector<16x128xbf16>, vector<8x128xf32> -> vector<8x128xf32>
    %46 = arith.addf %41, %45 : vector<8x128xf32>
    %c0_14 = arith.constant 0 : index
    %c0_15 = arith.constant 0 : index
    %c0_16 = arith.constant 0 : index
    %c0_17 = arith.constant 0 : index
    %47 = vector.load %arg3[%c0_14, %c0_15, %c0_16, %c0_17] : memref<1x1x16x150xbf16, #tpu.memory_space<vmem>>, vector<1x1x16x150xbf16>
    %48 = vector.shape_cast %47 : vector<1x1x16x150xbf16> to vector<16x150xbf16>
    %c0_18 = arith.constant 0 : index
    %c0_19 = arith.constant 0 : index
    %c0_20 = arith.constant 0 : index
    %49 = vector.load %arg5[%c0_18, %c0_19, %c0_20] : memref<9x8x16xbf16, #tpu.memory_space<vmem>>, vector<9x8x16xbf16>
    %50 = vector.extract_strided_slice %49 {offsets = [0, 0, 0], sizes = [1, 8, 16], strides = [1, 1, 1]} : vector<9x8x16xbf16> to vector<1x8x16xbf16>
    %51 = vector.shape_cast %50 : vector<1x8x16xbf16> to vector<8x16xbf16>
    %52 = vector.extract_strided_slice %48 {offsets = [0, 0], sizes = [16, 128], strides = [1, 1]} : vector<16x150xbf16> to vector<16x128xbf16>
    %cst_21 = arith.constant dense<0.000000e+00> : vector<8x128xf32>
    %53 = tpu.matmul %51, %52, %cst_21 {dimension_numbers = #tpu.dot_dimension_numbers<[1], [0], [0], [1], [0, 0, 1, 1], [], []>} : vector<8x16xbf16>, vector<16x128xbf16>, vector<8x128xf32> -> vector<8x128xf32>
    %54 = arith.addf %46, %53 : vector<8x128xf32>
    %55 = vector.extract_strided_slice %49 {offsets = [1, 0, 0], sizes = [1, 8, 16], strides = [1, 1, 1]} : vector<9x8x16xbf16> to vector<1x8x16xbf16>
    %56 = vector.shape_cast %55 : vector<1x8x16xbf16> to vector<8x16xbf16>
    %57 = vector.extract_strided_slice %48 {offsets = [0, 1], sizes = [16, 128], strides = [1, 1]} : vector<16x150xbf16> to vector<16x128xbf16>
    %cst_22 = arith.constant dense<0.000000e+00> : vector<8x128xf32>
    %58 = tpu.matmul %56, %57, %cst_22 {dimension_numbers = #tpu.dot_dimension_numbers<[1], [0], [0], [1], [0, 0, 1, 1], [], []>} : vector<8x16xbf16>, vector<16x128xbf16>, vector<8x128xf32> -> vector<8x128xf32>
    %59 = arith.addf %54, %58 : vector<8x128xf32>
    %60 = vector.extract_strided_slice %49 {offsets = [2, 0, 0], sizes = [1, 8, 16], strides = [1, 1, 1]} : vector<9x8x16xbf16> to vector<1x8x16xbf16>
    %61 = vector.shape_cast %60 : vector<1x8x16xbf16> to vector<8x16xbf16>
    %62 = vector.extract_strided_slice %48 {offsets = [0, 2], sizes = [16, 128], strides = [1, 1]} : vector<16x150xbf16> to vector<16x128xbf16>
    %cst_23 = arith.constant dense<0.000000e+00> : vector<8x128xf32>
    %63 = tpu.matmul %61, %62, %cst_23 {dimension_numbers = #tpu.dot_dimension_numbers<[1], [0], [0], [1], [0, 0, 1, 1], [], []>} : vector<8x16xbf16>, vector<16x128xbf16>, vector<8x128xf32> -> vector<8x128xf32>
    %64 = arith.addf %59, %63 : vector<8x128xf32>
    %65 = vector.extract_strided_slice %49 {offsets = [3, 0, 0], sizes = [1, 8, 16], strides = [1, 1, 1]} : vector<9x8x16xbf16> to vector<1x8x16xbf16>
    %66 = vector.shape_cast %65 : vector<1x8x16xbf16> to vector<8x16xbf16>
    %67 = vector.extract_strided_slice %48 {offsets = [0, 10], sizes = [16, 128], strides = [1, 1]} : vector<16x150xbf16> to vector<16x128xbf16>
    %cst_24 = arith.constant dense<0.000000e+00> : vector<8x128xf32>
    %68 = tpu.matmul %66, %67, %cst_24 {dimension_numbers = #tpu.dot_dimension_numbers<[1], [0], [0], [1], [0, 0, 1, 1], [], []>} : vector<8x16xbf16>, vector<16x128xbf16>, vector<8x128xf32> -> vector<8x128xf32>
    %69 = arith.addf %64, %68 : vector<8x128xf32>
    %70 = vector.extract_strided_slice %49 {offsets = [4, 0, 0], sizes = [1, 8, 16], strides = [1, 1, 1]} : vector<9x8x16xbf16> to vector<1x8x16xbf16>
    %71 = vector.shape_cast %70 : vector<1x8x16xbf16> to vector<8x16xbf16>
    %72 = vector.extract_strided_slice %48 {offsets = [0, 11], sizes = [16, 128], strides = [1, 1]} : vector<16x150xbf16> to vector<16x128xbf16>
    %cst_25 = arith.constant dense<0.000000e+00> : vector<8x128xf32>
    %73 = tpu.matmul %71, %72, %cst_25 {dimension_numbers = #tpu.dot_dimension_numbers<[1], [0], [0], [1], [0, 0, 1, 1], [], []>} : vector<8x16xbf16>, vector<16x128xbf16>, vector<8x128xf32> -> vector<8x128xf32>
    %74 = arith.addf %69, %73 : vector<8x128xf32>
    %75 = vector.extract_strided_slice %49 {offsets = [5, 0, 0], sizes = [1, 8, 16], strides = [1, 1, 1]} : vector<9x8x16xbf16> to vector<1x8x16xbf16>
    %76 = vector.shape_cast %75 : vector<1x8x16xbf16> to vector<8x16xbf16>
    %77 = vector.extract_strided_slice %48 {offsets = [0, 12], sizes = [16, 128], strides = [1, 1]} : vector<16x150xbf16> to vector<16x128xbf16>
    %cst_26 = arith.constant dense<0.000000e+00> : vector<8x128xf32>
    %78 = tpu.matmul %76, %77, %cst_26 {dimension_numbers = #tpu.dot_dimension_numbers<[1], [0], [0], [1], [0, 0, 1, 1], [], []>} : vector<8x16xbf16>, vector<16x128xbf16>, vector<8x128xf32> -> vector<8x128xf32>
    %79 = arith.addf %74, %78 : vector<8x128xf32>
    %80 = vector.extract_strided_slice %49 {offsets = [6, 0, 0], sizes = [1, 8, 16], strides = [1, 1, 1]} : vector<9x8x16xbf16> to vector<1x8x16xbf16>
    %81 = vector.shape_cast %80 : vector<1x8x16xbf16> to vector<8x16xbf16>
    %82 = vector.extract_strided_slice %48 {offsets = [0, 20], sizes = [16, 128], strides = [1, 1]} : vector<16x150xbf16> to vector<16x128xbf16>
    %cst_27 = arith.constant dense<0.000000e+00> : vector<8x128xf32>
    %83 = tpu.matmul %81, %82, %cst_27 {dimension_numbers = #tpu.dot_dimension_numbers<[1], [0], [0], [1], [0, 0, 1, 1], [], []>} : vector<8x16xbf16>, vector<16x128xbf16>, vector<8x128xf32> -> vector<8x128xf32>
    %84 = arith.addf %79, %83 : vector<8x128xf32>
    %85 = vector.extract_strided_slice %49 {offsets = [7, 0, 0], sizes = [1, 8, 16], strides = [1, 1, 1]} : vector<9x8x16xbf16> to vector<1x8x16xbf16>
    %86 = vector.shape_cast %85 : vector<1x8x16xbf16> to vector<8x16xbf16>
    %87 = vector.extract_strided_slice %48 {offsets = [0, 21], sizes = [16, 128], strides = [1, 1]} : vector<16x150xbf16> to vector<16x128xbf16>
    %cst_28 = arith.constant dense<0.000000e+00> : vector<8x128xf32>
    %88 = tpu.matmul %86, %87, %cst_28 {dimension_numbers = #tpu.dot_dimension_numbers<[1], [0], [0], [1], [0, 0, 1, 1], [], []>} : vector<8x16xbf16>, vector<16x128xbf16>, vector<8x128xf32> -> vector<8x128xf32>
    %89 = arith.addf %84, %88 : vector<8x128xf32>
    %90 = vector.extract_strided_slice %49 {offsets = [8, 0, 0], sizes = [1, 8, 16], strides = [1, 1, 1]} : vector<9x8x16xbf16> to vector<1x8x16xbf16>
    %91 = vector.shape_cast %90 : vector<1x8x16xbf16> to vector<8x16xbf16>
    %92 = vector.extract_strided_slice %48 {offsets = [0, 22], sizes = [16, 128], strides = [1, 1]} : vector<16x150xbf16> to vector<16x128xbf16>
    %cst_29 = arith.constant dense<0.000000e+00> : vector<8x128xf32>
    %93 = tpu.matmul %91, %92, %cst_29 {dimension_numbers = #tpu.dot_dimension_numbers<[1], [0], [0], [1], [0, 0, 1, 1], [], []>} : vector<8x16xbf16>, vector<16x128xbf16>, vector<8x128xf32> -> vector<8x128xf32>
    %94 = arith.addf %89, %93 : vector<8x128xf32>
    %c0_30 = arith.constant 0 : index
    %c0_31 = arith.constant 0 : index
    %95 = vector.load %arg6[%c0_30, %c0_31] : memref<8x2xf32, #tpu.memory_space<vmem>>, vector<8x2xf32>
    %96 = vector.extract_strided_slice %95 {offsets = [0, 0], sizes = [8, 1], strides = [1, 1]} : vector<8x2xf32> to vector<8x1xf32>
    %97 = vector.broadcast %96 : vector<8x1xf32> to vector<8x128xf32>
    %98 = arith.mulf %94, %97 : vector<8x128xf32>
    %99 = vector.extract_strided_slice %95 {offsets = [0, 1], sizes = [8, 1], strides = [1, 1]} : vector<8x2xf32> to vector<8x1xf32>
    %100 = vector.broadcast %99 : vector<8x1xf32> to vector<8x128xf32>
    %101 = arith.addf %98, %100 : vector<8x128xf32>
    %cst_32 = arith.constant 0.000000e+00 : f32
    %102 = vector.broadcast %cst_32 : f32 to vector<8x128xf32>
    %103 = arith.maximumf %101, %102 : vector<8x128xf32>
    %104 = arith.truncf %103 : vector<8x128xf32> to vector<8x128xbf16>
    %c0_33 = arith.constant 0 : index
    %c0_34 = arith.constant 0 : index
    %c0_35 = arith.constant 0 : index
    %105 = vector.load %arg7[%c0_33, %c0_34, %c0_35] : memref<1x8x128xbf16, #tpu.memory_space<vmem>>, vector<1x8x128xbf16>
    %106 = vector.shape_cast %105 : vector<1x8x128xbf16> to vector<8x128xbf16>
    %107 = vector.shape_cast %104 : vector<8x128xbf16> to vector<1x8x128xbf16>
    tpu.vector_store %arg7[%c0_33, %c0_34, %c0_35], %107 {strides = array<i32>} : memref<1x8x128xbf16, #tpu.memory_space<vmem>>, vector<1x8x128xbf16>,
    return
  }
  func.func @transform_0(%arg0: i32, %arg1: i32) -> (i32, i32, i32, i32) {
    %c0_i32 = arith.constant 0 : i32
    %c0_i32_0 = arith.constant 0 : i32
    %c0_i32_1 = arith.constant 0 : i32
    return %arg0, %arg1, %c0_i32, %c0_i32_0 : i32, i32, i32, i32
  }
  func.func @transform_1(%arg0: i32, %arg1: i32) -> (i32, i32, i32, i32) {
    %c0_i32 = arith.constant 0 : i32
    %c0_i32_0 = arith.constant 0 : i32
    %c0_i32_1 = arith.constant 0 : i32
    return %arg0, %arg1, %c0_i32, %c0_i32_0 : i32, i32, i32, i32
  }
  func.func @transform_2(%arg0: i32, %arg1: i32) -> (i32, i32, i32) {
    %c0_i32 = arith.constant 0 : i32
    %c0_i32_0 = arith.constant 0 : i32
    %c0_i32_1 = arith.constant 0 : i32
    %c0_i32_2 = arith.constant 0 : i32
    return %c0_i32, %c0_i32_0, %c0_i32_1 : i32, i32, i32
  }
  func.func @transform_3(%arg0: i32, %arg1: i32) -> (i32, i32, i32) {
    %c0_i32 = arith.constant 0 : i32
    %c0_i32_0 = arith.constant 0 : i32
    %c0_i32_1 = arith.constant 0 : i32
    %c0_i32_2 = arith.constant 0 : i32
    return %c0_i32, %c0_i32_0, %c0_i32_1 : i32, i32, i32
  }
  func.func @transform_4(%arg0: i32, %arg1: i32) -> (i32, i32) {
    %c0_i32 = arith.constant 0 : i32
    %c0_i32_0 = arith.constant 0 : i32
    %c0_i32_1 = arith.constant 0 : i32
    return %c0_i32, %c0_i32_0 : i32, i32
  }
  func.func @transform_5(%arg0: i32, %arg1: i32) -> (i32, i32, i32) {
    %c0_i32 = arith.constant 0 : i32
    %c0_i32_0 = arith.constant 0 : i32
    return %arg0, %c0_i32, %arg1 : i32, i32, i32
  }
}

module attributes {stable_mosaic.version = 11 : i64} {
  func.func @kernel(%arg0: i32, %arg1: i32, %arg2: memref<1x1x16x294xbf16, #tpu.memory_space<vmem>>, %arg3: memref<1x1x16x294xbf16, #tpu.memory_space<vmem>>, %arg4: memref<9x4x16xbf16, #tpu.memory_space<vmem>>, %arg5: memref<9x4x16xbf16, #tpu.memory_space<vmem>>, %arg6: memref<4x2xf32, #tpu.memory_space<vmem>>, %arg7: memref<1x4x256xf32, #tpu.memory_space<vmem>>, %arg8: memref<1x4x256xf32, #tpu.memory_space<vmem>>) attributes {dimension_semantics = [#tpu.dimension_semantics<parallel>, #tpu.dimension_semantics<parallel>], iteration_bounds = array<i64: 2, 2>, scalar_prefetch = 0 : i64, scratch_operands = 0 : i64, tpu.core_type = #tpu.core_type<tc>, window_params = [{transform_indices = @transform_0, window_bounds = array<i64: 1, 1, 16, 294>}, {transform_indices = @transform_1, window_bounds = array<i64: 1, 1, 16, 294>}, {pipeline_mode = #tpu.pipeline_mode<synchronous>, transform_indices = @transform_2, window_bounds = array<i64: 9, 4, 16>}, {pipeline_mode = #tpu.pipeline_mode<synchronous>, transform_indices = @transform_3, window_bounds = array<i64: 9, 4, 16>}, {pipeline_mode = #tpu.pipeline_mode<synchronous>, transform_indices = @transform_4, window_bounds = array<i64: 4, 2>}, {transform_indices = @transform_5, window_bounds = array<i64: 1, 4, 256>}, {transform_indices = @transform_6, window_bounds = array<i64: 1, 4, 256>}]} {
    %c0 = arith.constant 0 : index
    %c0_0 = arith.constant 0 : index
    %c0_1 = arith.constant 0 : index
    %c0_2 = arith.constant 0 : index
    %0 = vector.load %arg2[%c0, %c0_0, %c0_1, %c0_2] : memref<1x1x16x294xbf16, #tpu.memory_space<vmem>>, vector<1x1x16x294xbf16>
    %1 = vector.shape_cast %0 : vector<1x1x16x294xbf16> to vector<16x294xbf16>
    %c0_3 = arith.constant 0 : index
    %c0_4 = arith.constant 0 : index
    %c0_5 = arith.constant 0 : index
    %2 = vector.load %arg4[%c0_3, %c0_4, %c0_5] : memref<9x4x16xbf16, #tpu.memory_space<vmem>>, vector<9x4x16xbf16>
    %3 = vector.extract_strided_slice %2 {offsets = [0, 0, 0], sizes = [1, 4, 16], strides = [1, 1, 1]} : vector<9x4x16xbf16> to vector<1x4x16xbf16>
    %4 = vector.shape_cast %3 : vector<1x4x16xbf16> to vector<4x16xbf16>
    %5 = vector.extract_strided_slice %1 {offsets = [0, 0], sizes = [16, 256], strides = [1, 1]} : vector<16x294xbf16> to vector<16x256xbf16>
    %cst = arith.constant dense<0.000000e+00> : vector<4x256xf32>
    %6 = tpu.matmul %4, %5, %cst {dimension_numbers = #tpu.dot_dimension_numbers<[1], [0], [0], [1], [0, 0, 1, 1], [], []>} : vector<4x16xbf16>, vector<16x256xbf16>, vector<4x256xf32> -> vector<4x256xf32>
    %7 = vector.extract_strided_slice %2 {offsets = [1, 0, 0], sizes = [1, 4, 16], strides = [1, 1, 1]} : vector<9x4x16xbf16> to vector<1x4x16xbf16>
    %8 = vector.shape_cast %7 : vector<1x4x16xbf16> to vector<4x16xbf16>
    %9 = vector.extract_strided_slice %1 {offsets = [0, 1], sizes = [16, 256], strides = [1, 1]} : vector<16x294xbf16> to vector<16x256xbf16>
    %cst_6 = arith.constant dense<0.000000e+00> : vector<4x256xf32>
    %10 = tpu.matmul %8, %9, %cst_6 {dimension_numbers = #tpu.dot_dimension_numbers<[1], [0], [0], [1], [0, 0, 1, 1], [], []>} : vector<4x16xbf16>, vector<16x256xbf16>, vector<4x256xf32> -> vector<4x256xf32>
    %11 = arith.addf %6, %10 : vector<4x256xf32>
    %12 = vector.extract_strided_slice %2 {offsets = [2, 0, 0], sizes = [1, 4, 16], strides = [1, 1, 1]} : vector<9x4x16xbf16> to vector<1x4x16xbf16>
    %13 = vector.shape_cast %12 : vector<1x4x16xbf16> to vector<4x16xbf16>
    %14 = vector.extract_strided_slice %1 {offsets = [0, 2], sizes = [16, 256], strides = [1, 1]} : vector<16x294xbf16> to vector<16x256xbf16>
    %cst_7 = arith.constant dense<0.000000e+00> : vector<4x256xf32>
    %15 = tpu.matmul %13, %14, %cst_7 {dimension_numbers = #tpu.dot_dimension_numbers<[1], [0], [0], [1], [0, 0, 1, 1], [], []>} : vector<4x16xbf16>, vector<16x256xbf16>, vector<4x256xf32> -> vector<4x256xf32>
    %16 = arith.addf %11, %15 : vector<4x256xf32>
    %17 = vector.extract_strided_slice %2 {offsets = [3, 0, 0], sizes = [1, 4, 16], strides = [1, 1, 1]} : vector<9x4x16xbf16> to vector<1x4x16xbf16>
    %18 = vector.shape_cast %17 : vector<1x4x16xbf16> to vector<4x16xbf16>
    %19 = vector.extract_strided_slice %1 {offsets = [0, 18], sizes = [16, 256], strides = [1, 1]} : vector<16x294xbf16> to vector<16x256xbf16>
    %cst_8 = arith.constant dense<0.000000e+00> : vector<4x256xf32>
    %20 = tpu.matmul %18, %19, %cst_8 {dimension_numbers = #tpu.dot_dimension_numbers<[1], [0], [0], [1], [0, 0, 1, 1], [], []>} : vector<4x16xbf16>, vector<16x256xbf16>, vector<4x256xf32> -> vector<4x256xf32>
    %21 = arith.addf %16, %20 : vector<4x256xf32>
    %22 = vector.extract_strided_slice %2 {offsets = [4, 0, 0], sizes = [1, 4, 16], strides = [1, 1, 1]} : vector<9x4x16xbf16> to vector<1x4x16xbf16>
    %23 = vector.shape_cast %22 : vector<1x4x16xbf16> to vector<4x16xbf16>
    %24 = vector.extract_strided_slice %1 {offsets = [0, 19], sizes = [16, 256], strides = [1, 1]} : vector<16x294xbf16> to vector<16x256xbf16>
    %cst_9 = arith.constant dense<0.000000e+00> : vector<4x256xf32>
    %25 = tpu.matmul %23, %24, %cst_9 {dimension_numbers = #tpu.dot_dimension_numbers<[1], [0], [0], [1], [0, 0, 1, 1], [], []>} : vector<4x16xbf16>, vector<16x256xbf16>, vector<4x256xf32> -> vector<4x256xf32>
    %26 = arith.addf %21, %25 : vector<4x256xf32>
    %27 = vector.extract_strided_slice %2 {offsets = [5, 0, 0], sizes = [1, 4, 16], strides = [1, 1, 1]} : vector<9x4x16xbf16> to vector<1x4x16xbf16>
    %28 = vector.shape_cast %27 : vector<1x4x16xbf16> to vector<4x16xbf16>
    %29 = vector.extract_strided_slice %1 {offsets = [0, 20], sizes = [16, 256], strides = [1, 1]} : vector<16x294xbf16> to vector<16x256xbf16>
    %cst_10 = arith.constant dense<0.000000e+00> : vector<4x256xf32>
    %30 = tpu.matmul %28, %29, %cst_10 {dimension_numbers = #tpu.dot_dimension_numbers<[1], [0], [0], [1], [0, 0, 1, 1], [], []>} : vector<4x16xbf16>, vector<16x256xbf16>, vector<4x256xf32> -> vector<4x256xf32>
    %31 = arith.addf %26, %30 : vector<4x256xf32>
    %32 = vector.extract_strided_slice %2 {offsets = [6, 0, 0], sizes = [1, 4, 16], strides = [1, 1, 1]} : vector<9x4x16xbf16> to vector<1x4x16xbf16>
    %33 = vector.shape_cast %32 : vector<1x4x16xbf16> to vector<4x16xbf16>
    %34 = vector.extract_strided_slice %1 {offsets = [0, 36], sizes = [16, 256], strides = [1, 1]} : vector<16x294xbf16> to vector<16x256xbf16>
    %cst_11 = arith.constant dense<0.000000e+00> : vector<4x256xf32>
    %35 = tpu.matmul %33, %34, %cst_11 {dimension_numbers = #tpu.dot_dimension_numbers<[1], [0], [0], [1], [0, 0, 1, 1], [], []>} : vector<4x16xbf16>, vector<16x256xbf16>, vector<4x256xf32> -> vector<4x256xf32>
    %36 = arith.addf %31, %35 : vector<4x256xf32>
    %37 = vector.extract_strided_slice %2 {offsets = [7, 0, 0], sizes = [1, 4, 16], strides = [1, 1, 1]} : vector<9x4x16xbf16> to vector<1x4x16xbf16>
    %38 = vector.shape_cast %37 : vector<1x4x16xbf16> to vector<4x16xbf16>
    %39 = vector.extract_strided_slice %1 {offsets = [0, 37], sizes = [16, 256], strides = [1, 1]} : vector<16x294xbf16> to vector<16x256xbf16>
    %cst_12 = arith.constant dense<0.000000e+00> : vector<4x256xf32>
    %40 = tpu.matmul %38, %39, %cst_12 {dimension_numbers = #tpu.dot_dimension_numbers<[1], [0], [0], [1], [0, 0, 1, 1], [], []>} : vector<4x16xbf16>, vector<16x256xbf16>, vector<4x256xf32> -> vector<4x256xf32>
    %41 = arith.addf %36, %40 : vector<4x256xf32>
    %42 = vector.extract_strided_slice %2 {offsets = [8, 0, 0], sizes = [1, 4, 16], strides = [1, 1, 1]} : vector<9x4x16xbf16> to vector<1x4x16xbf16>
    %43 = vector.shape_cast %42 : vector<1x4x16xbf16> to vector<4x16xbf16>
    %44 = vector.extract_strided_slice %1 {offsets = [0, 38], sizes = [16, 256], strides = [1, 1]} : vector<16x294xbf16> to vector<16x256xbf16>
    %cst_13 = arith.constant dense<0.000000e+00> : vector<4x256xf32>
    %45 = tpu.matmul %43, %44, %cst_13 {dimension_numbers = #tpu.dot_dimension_numbers<[1], [0], [0], [1], [0, 0, 1, 1], [], []>} : vector<4x16xbf16>, vector<16x256xbf16>, vector<4x256xf32> -> vector<4x256xf32>
    %46 = arith.addf %41, %45 : vector<4x256xf32>
    %c0_14 = arith.constant 0 : index
    %c0_15 = arith.constant 0 : index
    %c0_16 = arith.constant 0 : index
    %c0_17 = arith.constant 0 : index
    %47 = vector.load %arg3[%c0_14, %c0_15, %c0_16, %c0_17] : memref<1x1x16x294xbf16, #tpu.memory_space<vmem>>, vector<1x1x16x294xbf16>
    %48 = vector.shape_cast %47 : vector<1x1x16x294xbf16> to vector<16x294xbf16>
    %c0_18 = arith.constant 0 : index
    %c0_19 = arith.constant 0 : index
    %c0_20 = arith.constant 0 : index
    %49 = vector.load %arg5[%c0_18, %c0_19, %c0_20] : memref<9x4x16xbf16, #tpu.memory_space<vmem>>, vector<9x4x16xbf16>
    %50 = vector.extract_strided_slice %49 {offsets = [0, 0, 0], sizes = [1, 4, 16], strides = [1, 1, 1]} : vector<9x4x16xbf16> to vector<1x4x16xbf16>
    %51 = vector.shape_cast %50 : vector<1x4x16xbf16> to vector<4x16xbf16>
    %52 = vector.extract_strided_slice %48 {offsets = [0, 0], sizes = [16, 256], strides = [1, 1]} : vector<16x294xbf16> to vector<16x256xbf16>
    %cst_21 = arith.constant dense<0.000000e+00> : vector<4x256xf32>
    %53 = tpu.matmul %51, %52, %cst_21 {dimension_numbers = #tpu.dot_dimension_numbers<[1], [0], [0], [1], [0, 0, 1, 1], [], []>} : vector<4x16xbf16>, vector<16x256xbf16>, vector<4x256xf32> -> vector<4x256xf32>
    %54 = arith.addf %46, %53 : vector<4x256xf32>
    %55 = vector.extract_strided_slice %49 {offsets = [1, 0, 0], sizes = [1, 4, 16], strides = [1, 1, 1]} : vector<9x4x16xbf16> to vector<1x4x16xbf16>
    %56 = vector.shape_cast %55 : vector<1x4x16xbf16> to vector<4x16xbf16>
    %57 = vector.extract_strided_slice %48 {offsets = [0, 1], sizes = [16, 256], strides = [1, 1]} : vector<16x294xbf16> to vector<16x256xbf16>
    %cst_22 = arith.constant dense<0.000000e+00> : vector<4x256xf32>
    %58 = tpu.matmul %56, %57, %cst_22 {dimension_numbers = #tpu.dot_dimension_numbers<[1], [0], [0], [1], [0, 0, 1, 1], [], []>} : vector<4x16xbf16>, vector<16x256xbf16>, vector<4x256xf32> -> vector<4x256xf32>
    %59 = arith.addf %54, %58 : vector<4x256xf32>
    %60 = vector.extract_strided_slice %49 {offsets = [2, 0, 0], sizes = [1, 4, 16], strides = [1, 1, 1]} : vector<9x4x16xbf16> to vector<1x4x16xbf16>
    %61 = vector.shape_cast %60 : vector<1x4x16xbf16> to vector<4x16xbf16>
    %62 = vector.extract_strided_slice %48 {offsets = [0, 2], sizes = [16, 256], strides = [1, 1]} : vector<16x294xbf16> to vector<16x256xbf16>
    %cst_23 = arith.constant dense<0.000000e+00> : vector<4x256xf32>
    %63 = tpu.matmul %61, %62, %cst_23 {dimension_numbers = #tpu.dot_dimension_numbers<[1], [0], [0], [1], [0, 0, 1, 1], [], []>} : vector<4x16xbf16>, vector<16x256xbf16>, vector<4x256xf32> -> vector<4x256xf32>
    %64 = arith.addf %59, %63 : vector<4x256xf32>
    %65 = vector.extract_strided_slice %49 {offsets = [3, 0, 0], sizes = [1, 4, 16], strides = [1, 1, 1]} : vector<9x4x16xbf16> to vector<1x4x16xbf16>
    %66 = vector.shape_cast %65 : vector<1x4x16xbf16> to vector<4x16xbf16>
    %67 = vector.extract_strided_slice %48 {offsets = [0, 18], sizes = [16, 256], strides = [1, 1]} : vector<16x294xbf16> to vector<16x256xbf16>
    %cst_24 = arith.constant dense<0.000000e+00> : vector<4x256xf32>
    %68 = tpu.matmul %66, %67, %cst_24 {dimension_numbers = #tpu.dot_dimension_numbers<[1], [0], [0], [1], [0, 0, 1, 1], [], []>} : vector<4x16xbf16>, vector<16x256xbf16>, vector<4x256xf32> -> vector<4x256xf32>
    %69 = arith.addf %64, %68 : vector<4x256xf32>
    %70 = vector.extract_strided_slice %49 {offsets = [4, 0, 0], sizes = [1, 4, 16], strides = [1, 1, 1]} : vector<9x4x16xbf16> to vector<1x4x16xbf16>
    %71 = vector.shape_cast %70 : vector<1x4x16xbf16> to vector<4x16xbf16>
    %72 = vector.extract_strided_slice %48 {offsets = [0, 19], sizes = [16, 256], strides = [1, 1]} : vector<16x294xbf16> to vector<16x256xbf16>
    %cst_25 = arith.constant dense<0.000000e+00> : vector<4x256xf32>
    %73 = tpu.matmul %71, %72, %cst_25 {dimension_numbers = #tpu.dot_dimension_numbers<[1], [0], [0], [1], [0, 0, 1, 1], [], []>} : vector<4x16xbf16>, vector<16x256xbf16>, vector<4x256xf32> -> vector<4x256xf32>
    %74 = arith.addf %69, %73 : vector<4x256xf32>
    %75 = vector.extract_strided_slice %49 {offsets = [5, 0, 0], sizes = [1, 4, 16], strides = [1, 1, 1]} : vector<9x4x16xbf16> to vector<1x4x16xbf16>
    %76 = vector.shape_cast %75 : vector<1x4x16xbf16> to vector<4x16xbf16>
    %77 = vector.extract_strided_slice %48 {offsets = [0, 20], sizes = [16, 256], strides = [1, 1]} : vector<16x294xbf16> to vector<16x256xbf16>
    %cst_26 = arith.constant dense<0.000000e+00> : vector<4x256xf32>
    %78 = tpu.matmul %76, %77, %cst_26 {dimension_numbers = #tpu.dot_dimension_numbers<[1], [0], [0], [1], [0, 0, 1, 1], [], []>} : vector<4x16xbf16>, vector<16x256xbf16>, vector<4x256xf32> -> vector<4x256xf32>
    %79 = arith.addf %74, %78 : vector<4x256xf32>
    %80 = vector.extract_strided_slice %49 {offsets = [6, 0, 0], sizes = [1, 4, 16], strides = [1, 1, 1]} : vector<9x4x16xbf16> to vector<1x4x16xbf16>
    %81 = vector.shape_cast %80 : vector<1x4x16xbf16> to vector<4x16xbf16>
    %82 = vector.extract_strided_slice %48 {offsets = [0, 36], sizes = [16, 256], strides = [1, 1]} : vector<16x294xbf16> to vector<16x256xbf16>
    %cst_27 = arith.constant dense<0.000000e+00> : vector<4x256xf32>
    %83 = tpu.matmul %81, %82, %cst_27 {dimension_numbers = #tpu.dot_dimension_numbers<[1], [0], [0], [1], [0, 0, 1, 1], [], []>} : vector<4x16xbf16>, vector<16x256xbf16>, vector<4x256xf32> -> vector<4x256xf32>
    %84 = arith.addf %79, %83 : vector<4x256xf32>
    %85 = vector.extract_strided_slice %49 {offsets = [7, 0, 0], sizes = [1, 4, 16], strides = [1, 1, 1]} : vector<9x4x16xbf16> to vector<1x4x16xbf16>
    %86 = vector.shape_cast %85 : vector<1x4x16xbf16> to vector<4x16xbf16>
    %87 = vector.extract_strided_slice %48 {offsets = [0, 37], sizes = [16, 256], strides = [1, 1]} : vector<16x294xbf16> to vector<16x256xbf16>
    %cst_28 = arith.constant dense<0.000000e+00> : vector<4x256xf32>
    %88 = tpu.matmul %86, %87, %cst_28 {dimension_numbers = #tpu.dot_dimension_numbers<[1], [0], [0], [1], [0, 0, 1, 1], [], []>} : vector<4x16xbf16>, vector<16x256xbf16>, vector<4x256xf32> -> vector<4x256xf32>
    %89 = arith.addf %84, %88 : vector<4x256xf32>
    %90 = vector.extract_strided_slice %49 {offsets = [8, 0, 0], sizes = [1, 4, 16], strides = [1, 1, 1]} : vector<9x4x16xbf16> to vector<1x4x16xbf16>
    %91 = vector.shape_cast %90 : vector<1x4x16xbf16> to vector<4x16xbf16>
    %92 = vector.extract_strided_slice %48 {offsets = [0, 38], sizes = [16, 256], strides = [1, 1]} : vector<16x294xbf16> to vector<16x256xbf16>
    %cst_29 = arith.constant dense<0.000000e+00> : vector<4x256xf32>
    %93 = tpu.matmul %91, %92, %cst_29 {dimension_numbers = #tpu.dot_dimension_numbers<[1], [0], [0], [1], [0, 0, 1, 1], [], []>} : vector<4x16xbf16>, vector<16x256xbf16>, vector<4x256xf32> -> vector<4x256xf32>
    %94 = arith.addf %89, %93 : vector<4x256xf32>
    %c0_30 = arith.constant 0 : index
    %c0_31 = arith.constant 0 : index
    %95 = vector.load %arg6[%c0_30, %c0_31] : memref<4x2xf32, #tpu.memory_space<vmem>>, vector<4x2xf32>
    %96 = vector.extract_strided_slice %95 {offsets = [0, 0], sizes = [4, 1], strides = [1, 1]} : vector<4x2xf32> to vector<4x1xf32>
    %97 = vector.broadcast %96 : vector<4x1xf32> to vector<4x256xf32>
    %98 = arith.mulf %94, %97 : vector<4x256xf32>
    %99 = vector.extract_strided_slice %95 {offsets = [0, 1], sizes = [4, 1], strides = [1, 1]} : vector<4x2xf32> to vector<4x1xf32>
    %100 = vector.broadcast %99 : vector<4x1xf32> to vector<4x256xf32>
    %101 = arith.addf %98, %100 : vector<4x256xf32>
    %cst_32 = arith.constant 0.000000e+00 : f32
    %102 = vector.broadcast %cst_32 : f32 to vector<4x256xf32>
    %103 = arith.maximumf %101, %102 : vector<4x256xf32>
    %c0_33 = arith.constant 0 : index
    %c0_34 = arith.constant 0 : index
    %c0_35 = arith.constant 0 : index
    %104 = vector.load %arg7[%c0_33, %c0_34, %c0_35] : memref<1x4x256xf32, #tpu.memory_space<vmem>>, vector<1x4x256xf32>
    %105 = vector.shape_cast %104 : vector<1x4x256xf32> to vector<4x256xf32>
    %106 = arith.addf %103, %105 : vector<4x256xf32>
    %c0_36 = arith.constant 0 : index
    %c0_37 = arith.constant 0 : index
    %c0_38 = arith.constant 0 : index
    %107 = vector.load %arg8[%c0_36, %c0_37, %c0_38] : memref<1x4x256xf32, #tpu.memory_space<vmem>>, vector<1x4x256xf32>
    %108 = vector.shape_cast %107 : vector<1x4x256xf32> to vector<4x256xf32>
    %109 = vector.shape_cast %106 : vector<4x256xf32> to vector<1x4x256xf32>
    tpu.vector_store %arg8[%c0_36, %c0_37, %c0_38], %109 {strides = array<i32>} : memref<1x4x256xf32, #tpu.memory_space<vmem>>, vector<1x4x256xf32>,
    return
  }
  func.func @transform_0(%arg0: i32, %arg1: i32) -> (i32, i32, i32, i32) {
    %c0_i32 = arith.constant 0 : i32
    %c0_i32_0 = arith.constant 0 : i32
    %c0_i32_1 = arith.constant 0 : i32
    return %arg0, %arg1, %c0_i32, %c0_i32_0 : i32, i32, i32, i32
  }
  func.func @transform_1(%arg0: i32, %arg1: i32) -> (i32, i32, i32, i32) {
    %c0_i32 = arith.constant 0 : i32
    %c0_i32_0 = arith.constant 0 : i32
    %c0_i32_1 = arith.constant 0 : i32
    return %arg0, %arg1, %c0_i32, %c0_i32_0 : i32, i32, i32, i32
  }
  func.func @transform_2(%arg0: i32, %arg1: i32) -> (i32, i32, i32) {
    %c0_i32 = arith.constant 0 : i32
    %c0_i32_0 = arith.constant 0 : i32
    %c0_i32_1 = arith.constant 0 : i32
    %c0_i32_2 = arith.constant 0 : i32
    return %c0_i32, %c0_i32_0, %c0_i32_1 : i32, i32, i32
  }
  func.func @transform_3(%arg0: i32, %arg1: i32) -> (i32, i32, i32) {
    %c0_i32 = arith.constant 0 : i32
    %c0_i32_0 = arith.constant 0 : i32
    %c0_i32_1 = arith.constant 0 : i32
    %c0_i32_2 = arith.constant 0 : i32
    return %c0_i32, %c0_i32_0, %c0_i32_1 : i32, i32, i32
  }
  func.func @transform_4(%arg0: i32, %arg1: i32) -> (i32, i32) {
    %c0_i32 = arith.constant 0 : i32
    %c0_i32_0 = arith.constant 0 : i32
    %c0_i32_1 = arith.constant 0 : i32
    return %c0_i32, %c0_i32_0 : i32, i32
  }
  func.func @transform_5(%arg0: i32, %arg1: i32) -> (i32, i32, i32) {
    %c0_i32 = arith.constant 0 : i32
    %c0_i32_0 = arith.constant 0 : i32
    return %arg0, %c0_i32, %arg1 : i32, i32, i32
  }
  func.func @transform_6(%arg0: i32, %arg1: i32) -> (i32, i32, i32) {
    %c0_i32 = arith.constant 0 : i32
    %c0_i32_0 = arith.constant 0 : i32
    return %arg0, %c0_i32, %arg1 : i32, i32, i32
  }
}

</mosaic_0001>

<llo_original>
// kernel: rsu4_forward.8
$region0: #{rsu4_forward.8}
  #allocation0 [shape = 'u32[]', space=smem, size = 0x4, offset = 0x4, fixed_abs, tag = 'smem constant byte address 0x4 - core index']
  #allocation1 [shape = 'u32[144,128]{1,0:T(1,128)}', space=vmem, size = 0x12000, scoped, tag = 'internal scratch']
  %s0 = inlined_call_operand.vmem [shape: bf16[2,2,16,294], index: 0, kind: input, shape index: {}]
  %s1 = inlined_call_operand.vmem [shape: bf16[9,4,16], index: 1, kind: input, shape index: {}]
  %s2 = inlined_call_operand.vmem [shape: f32[4,2], index: 2, kind: input, shape index: {}]
  %s3 = inlined_call_operand.vmem [shape: f32[2,4,512], index: 3, kind: output, shape index: {}]
  %s4 = sld [smem:[#allocation0]]
  $region45: #{rsu4_forward.8} parent=0
    _
  %s6 = ssub.s32 1, %s4
  %s7 = scalar_select 0, %s6, %s4
  loop: start=0, step=1, limit=6
  $region2: #{rsu4_forward.8} parent=0 // loop_pre_header
    _
  $region3: #{rsu4_forward.8} parent=0 // loop_header
    %s9 = sphi 0, %s13
    %p10 = scmp.ge.s32.totalorder %s9, 6
    %s16 = sphi 0, %s28
    %s17 = sphi 0, %s24
    %s18 = sphi 0, %s16
    %s19 = sphi 0, %s17
    %s20 = sphi 0, %s18
    %s21 = sphi 0, %s19
    %s33 = sphi 0, %s35
    %s36 = sphi 0, %s33
    %s37 = sphi 0, %s36
    %s53 = sphi 0, %s37
    %s57 = sphi 0, %s57
    %s59 = sphi 0, %s57
    %s60 = sphi 0, %s59
    %s74 = sphi 0, %s60
    %s78 = sphi 0, %s78
    %s80 = sphi 0, %s78
    %s81 = sphi 0, %s80
    %s95 = sphi 0, %s81
    %s103 = sphi 0, %s105
    %s106 = sphi 0, %s103
    %s107 = sphi 0, %s106
    %s123 = sphi 0, %s107
  $region4: #{rsu4_forward.8} parent=0 // loop_header_branch
    %12 = sbr.rel (%p10) target = $region8
  $region5: #{rsu4_forward.8} parent=0 // loop_body
    %s14 = ssub.s32 %s9, 1
    %s15 = ssub.s32 %s9, 2
    %s22 = sadd.s32 1, %s17
    %p23 = scmp.ge.s32.totalorder %s22, 2
    %s24 = scalar_select %p23, 0, %s22
    %s25 = sadd.s32 1, %s16
    %s26 = scalar_select %p23, %s25, %s16
    %p27 = scmp.ge.s32.totalorder %s26, 2
    %s28 = scalar_select %p27, 0, %s26
    %s29 = ssub.s32 %s16, %s28
    %s30 = ssub.s32 %s17, %s24
    %s31 = sor.u32 %s29, %s30
    %p32 = scmp.eq.s32.totalorder %s31, 0
    %s34 = sadd.s32 %s33, 1
    %s35 = scalar_select %p32, %s33, %s34
    %p38 = pneg %p32
    %p39 = scmp.eq.s32.totalorder %s9, 3
    %p40 = por %p38, %p39
    %p41 = scmp.ne.s32.totalorder %s33, %s36
    %p42 = scmp.eq.s32.totalorder %s9, 0
    %p43 = por %p41, %p42
    %p44 = scmp.ne.s32.totalorder %s33, %s36
    %p45 = scmp.eq.s32.totalorder %s14, 3
    %p46 = por %p44, %p45
    %p47 = scmp.ne.s32.totalorder %s36, %s37
    %p48 = scmp.eq.s32.totalorder %s14, 0
    %p49 = por %p47, %p48
    %p50 = scmp.ne.s32.totalorder %s36, %s37
    %p51 = scmp.eq.s32.totalorder %s15, 3
    %p52 = por %p50, %p51
    %p54 = scmp.ne.s32.totalorder %s37, %s53
    %p55 = scmp.eq.s32.totalorder %s15, 0
    %p56 = por %p54, %p55
    %s58 = sadd.s32 %s57, 1
    %p61 = scmp.eq.s32.totalorder %s9, 3
    %p62 = scmp.ne.s32.totalorder %s57, %s59
    %p63 = scmp.eq.s32.totalorder %s9, 0
    %p64 = por %p62, %p63
    %p65 = scmp.ne.s32.totalorder %s57, %s59
    %p66 = scmp.eq.s32.totalorder %s14, 3
    %p67 = por %p65, %p66
    %p68 = scmp.ne.s32.totalorder %s59, %s60
    %p69 = scmp.eq.s32.totalorder %s14, 0
    %p70 = por %p68, %p69
    %p71 = scmp.ne.s32.totalorder %s59, %s60
    %p72 = scmp.eq.s32.totalorder %s15, 3
    %p73 = por %p71, %p72
    %p75 = scmp.ne.s32.totalorder %s60, %s74
    %p76 = scmp.eq.s32.totalorder %s15, 0
    %p77 = por %p75, %p76
    %s79 = sadd.s32 %s78, 1
    %p82 = scmp.eq.s32.totalorder %s9, 3
    %p83 = scmp.ne.s32.totalorder %s78, %s80
    %p84 = scmp.eq.s32.totalorder %s9, 0
    %p85 = por %p83, %p84
    %p86 = scmp.ne.s32.totalorder %s78, %s80
    %p87 = scmp.eq.s32.totalorder %s14, 3
    %p88 = por %p86, %p87
    %p89 = scmp.ne.s32.totalorder %s80, %s81
    %p90 = scmp.eq.s32.totalorder %s14, 0
    %p91 = por %p89, %p90
    %p92 = scmp.ne.s32.totalorder %s80, %s81
    %p93 = scmp.eq.s32.totalorder %s15, 3
    %p94 = por %p92, %p93
    %p96 = scmp.ne.s32.totalorder %s81, %s95
    %p97 = scmp.eq.s32.totalorder %s15, 0
    %p98 = por %p96, %p97
    %s99 = ssub.s32 %s16, %s28
    %s100 = ssub.s32 %s17, %s24
    %s101 = sor.u32 %s99, %s100
    %p102 = scmp.eq.s32.totalorder %s101, 0
    %s104 = sadd.s32 %s103, 1
    %s105 = scalar_select %p102, %s103, %s104
    %p108 = pneg %p102
    %p109 = scmp.eq.s32.totalorder %s9, 3
    %p110 = por %p108, %p109
    %p111 = scmp.ne.s32.totalorder %s103, %s106
    %p112 = scmp.eq.s32.totalorder %s9, 0
    %p113 = por %p111, %p112
    %p114 = scmp.ne.s32.totalorder %s103, %s106
    %p115 = scmp.eq.s32.totalorder %s14, 3
    %p116 = por %p114, %p115
    %p117 = scmp.ne.s32.totalorder %s106, %s107
    %p118 = scmp.eq.s32.totalorder %s14, 0
    %p119 = por %p117, %p118
    %p120 = scmp.ne.s32.totalorder %s106, %s107
    %p121 = scmp.eq.s32.totalorder %s15, 3
    %p122 = por %p120, %p121
    %p124 = scmp.ne.s32.totalorder %s107, %s123
    %p125 = scmp.eq.s32.totalorder %s15, 0
    %p126 = por %p124, %p125
    %p127 = scmp.le.s32.totalorder 1, %s9
    %p128 = scmp.lt.s32.totalorder %s9, 5
    %p129 = pnand %p127, %p128
    %p130 = pneg %p129
    // Predicated region
    $region9: #{rsu4_forward.8} parent=5 // pred_check
      _
    $region10: #{rsu4_forward.8} parent=5 // pred_check_branch
      %132 = sbr.rel (%p129) target = $region12
    $region11: #{rsu4_forward.8} parent=5 // pred_region
      %s133 = ssub.s32 %s9, 1
      // Predicated region
      $region13: #{rsu4_forward.8} parent=11 // pred_check
        %p134 = pneg %p70
      $region14: #{rsu4_forward.8} parent=11 // pred_check_branch
        %136 = sbr.rel (%p134) target = $region16
      $region15: #{rsu4_forward.8} parent=11 // pred_region
        _
      $region16: #{rsu4_forward.8} parent=11 // pred_fallthru
        _
      // Predicated region
      $region17: #{rsu4_forward.8} parent=11 // pred_check
        %p137 = pneg %p91
      $region18: #{rsu4_forward.8} parent=11 // pred_check_branch
        %139 = sbr.rel (%p137) target = $region20
      $region19: #{rsu4_forward.8} parent=11 // pred_region
        _
      $region20: #{rsu4_forward.8} parent=11 // pred_fallthru
        _
    $region12: #{rsu4_forward.8} parent=5 // pred_fallthru
      _
    %p140 = scmp.lt.s32.totalorder %s9, 4
    // Predicated region
    $region21: #{rsu4_forward.8} parent=5 // pred_check
      %p141 = pneg %p140
    $region22: #{rsu4_forward.8} parent=5 // pred_check_branch
      %143 = sbr.rel (%p141) target = $region24
    $region23: #{rsu4_forward.8} parent=5 // pred_region
      // Predicated region
      $region25: #{rsu4_forward.8} parent=23 // pred_check
        %p144 = pneg %p43
      $region26: #{rsu4_forward.8} parent=23 // pred_check_branch
        %146 = sbr.rel (%p144) target = $region28
      $region27: #{rsu4_forward.8} parent=23 // pred_region
        %p147 = scmp.lt.s32.totalorder %s16, 1
        %s148 = scalar_select %p147, %s16, 1
        %p149 = scmp.lt.s32.totalorder %s17, 1
        %s150 = scalar_select %p149, %s17, 1
        %s151 = smul.addr %s150, 6
        %s152 = smul.addr %s148, 12
        %s153 = sadd.s32 %s151, %s152
        %s154 = smul.addr %s153, 4
        %s155 = scalar_lea.vmem %s0, %s154
      $region28: #{rsu4_forward.8} parent=23 // pred_fallthru
        _
    $region24: #{rsu4_forward.8} parent=5 // pred_fallthru
      _
    %p156 = scmp.le.s32.totalorder 1, %s9
    %p157 = scmp.lt.s32.totalorder %s9, 5
    %p158 = pnand %p156, %p157
    %p159 = pneg %p158
    // Predicated region
    $region29: #{rsu4_forward.8} parent=5 // pred_check
      _
    $region30: #{rsu4_forward.8} parent=5 // pred_check_branch
      %161 = sbr.rel (%p158) target = $region32
    $region31: #{rsu4_forward.8} parent=5 // pred_region
      %s162 = ssub.s32 %s9, 1
      %p163 = scmp.lt.s32.totalorder %s18, 1
      %s164 = scalar_select %p163, %s18, 1
      %p165 = scmp.lt.s32.totalorder %s19, 1
      %s166 = scalar_select %p165, %s19, 1
      %s167 = smul.addr %s166, 6
      %s168 = smul.addr %s164, 12
      %s169 = sadd.s32 %s167, %s168
      %s170 = smul.addr %s169, 4
      %s171 = scalar_lea.vmem %s0, %s170
      %p172 = pneg %p49
      %p173 = pneg %p46
      %p174 = pneg %p70
      %p175 = pneg %p67
      %p176 = pneg %p91
      %p177 = pneg %p88
      %p178 = pneg %p119
      %p179 = pneg %p116
      %s180 = smul.u32 2, %s19
      %p181 = scmp.lt.s32.totalorder %s18, 1
      %s182 = scalar_select %p181, %s18, 1
      %p183 = scmp.lt.s32.totalorder %s180, 3
      %s184 = scalar_select %p183, %s180, 3
      %s185 = smul.addr %s182, 4
      %s186 = sadd.s32 %s184, %s185
      %s187 = smul.addr %s186, 4
      %s188 = scalar_lea.vmem %s3, %s187
      %p189 = scmp.lt.s32.totalorder %s18, 1
      %s190 = scalar_select %p189, %s18, 1
      %p191 = scmp.lt.s32.totalorder %s19, 1
      %s192 = scalar_select %p191, %s19, 1
      %s193 = smul.addr %s192, 6
      %s194 = smul.addr %s190, 12
      %s195 = sadd.s32 %s193, %s194
      %s196 = smul.addr %s195, 4
      %s197 = scalar_lea.vmem %s0, %s196
      %s198 = smul.u32 2, %s19
      %p199 = scmp.lt.s32.totalorder %s18, 1
      %s200 = scalar_select %p199, %s18, 1
      %p201 = scmp.lt.s32.totalorder %s198, 3
      %s202 = scalar_select %p201, %s198, 3
      %s203 = smul.addr %s200, 4
      %s204 = sadd.s32 %s202, %s203
      %s205 = smul.addr %s204, 4
      %s206 = scalar_lea.vmem %s3, %s205
      %s207 = smul.u32 2, %s19
      %v209 = vld [vmem:[%s197] sm:$0xff]
      %v210 = vld [vmem:[%s197 + $0x8] sm:$0xf]
      %v211 = vld [vmem:[%s197 + $0xc] sm:$0xff]
      %v212 = vld [vmem:[%s197 + $0x14] sm:$0xf]
      %v213 = vld [vmem:[%s1] sm:$0x3]
      %v214 = vld [vmem:[%s1 + $0x2] sm:$0x3]
      %v215 = vld [vmem:[%s1 + $0x4] sm:$0x3]
      %v216 = vld [vmem:[%s1 + $0x6] sm:$0x3]
      %v217 = vld [vmem:[%s1 + $0x8] sm:$0x3]
      %v218 = vld [vmem:[%s1 + $0xa] sm:$0x3]
      %v219 = vld [vmem:[%s1 + $0xc] sm:$0x3]
      %v220 = vld [vmem:[%s1 + $0xe] sm:$0x3]
      %v221 = vld [vmem:[%s1 + $0x10] sm:$0x3]
      %v226 = vunpack.c.l.b16 %v209
      %v227 = vunpack.c.h.b16 %v209
      %v228 = vunpack.c.l.b16 %v210
      %v229 = vunpack.c.l.b16 %v211
      %v230 = vunpack.c.h.b16 %v211
      %v231 = vunpack.c.l.b16 %v212
      %v232 = vpack.c.b16 %v229, %v226
      %v233 = vpack.c.b16 %v230, %v227
      %v234 = vpack.c.b16 %v231, %v228
      %235 = vrot.lane.b32.xlu0 %v232, 127
      %v236 = vpop.permute.xlu0 %235
      %237 = vrot.lane.b32.xlu0 %v233, 127
      %v238 = vpop.permute.xlu0 %237
      %239 = vrot.lane.b32.xlu0 %v234, 127
      %v240 = vpop.permute.xlu0 %239
      %vm241 = vcmask 1039360
      %v242 = vsel %vm241, %v236, %v238
      %v243 = vsel %vm241, %v238, %v240
      %vm246 = vcmask 130048
      %v248 = vsel %vm246, %v214, 0
      %250 = vmatprep.subr.bf16.mxu0 0
      %251 = vmatpush1.bf16.msra.mxu0 0
      %252 = vmatprep.subr.bf16.mxu0 0
      %253 = vmatpush1.bf16.msra.mxu0 0
      %254 = vmatprep.subr.bf16.mxu0 0
      %255 = vmatpush1.bf16.msra.mxu0 0
      %256 = vmatprep.subr.bf16.mxu0 0
      %257 = vmatpush1.bf16.msra.mxu0 0
      %258 = vmatprep.subr.bf16.mxu0 0
      %259 = vmatpush1.bf16.msra.mxu0 0
      %260 = vmatprep.subr.bf16.mxu0 0
      %261 = vmatpush1.bf16.msra.mxu0 0
      %262 = vmatprep.subr.bf16.mxu0 0
      %263 = vmatpush1.bf16.msra.mxu0 0
      %264 = vmatprep.subr.bf16.mxu0 %v243
      %265 = vmatpush1.bf16.msra.mxu0 %v242
      %266 = vmatprep.subr.bf16.mxu0 0
      %267 = vmatpush2.bf16.msra.mxu0 0
      %268 = vmatprep.subr.bf16.mxu0 0
      %269 = vmatpush2.bf16.msra.mxu0 0
      %270 = vmatprep.subr.bf16.mxu0 0
      %271 = vmatpush2.bf16.msra.mxu0 0
      %272 = vmatprep.subr.bf16.mxu0 0
      %273 = vmatpush2.bf16.msra.mxu0 0
      %274 = vmatprep.subr.bf16.mxu0 0
      %275 = vmatpush2.bf16.msra.mxu0 0
      %276 = vmatprep.subr.bf16.mxu0 0
      %277 = vmatpush2.bf16.msra.mxu0 0
      %278 = vmatprep.subr.bf16.mxu0 0
      %279 = vmatpush2.bf16.msra.mxu0 0
      %280 = vmatprep.subr.bf16.mxu0 0
      %281 = vmatpush2.bf16.msra.mxu0 0
      %282 = vmatprep.mubr.bf16.mxu0 0
      %283 = vmatmul.mubr.bf16.gmra.mxu0 %v248
      %v284 = vpop.f32.mrf.mxu0
      %v285 = vadd.f32 0.0, %v284
      %v286 = vpop.f32.mrf.mxu0
      %v287 = vadd.f32 0.0, %v286
      %v288 = vpop.f32.mrf.mxu0
      %v289 = vpop.f32.mrf.mxu0
      %290 = vdwg.mxu0
      %v294 = vsel %vm246, %v213, 0
      %296 = vmatprep.subr.bf16.mxu0 0
      %297 = vmatpush1.bf16.msra.mxu0 0
      %298 = vmatprep.subr.bf16.mxu0 0
      %299 = vmatpush1.bf16.msra.mxu0 0
      %300 = vmatprep.subr.bf16.mxu0 0
      %301 = vmatpush1.bf16.msra.mxu0 0
      %302 = vmatprep.subr.bf16.mxu0 0
      %303 = vmatpush1.bf16.msra.mxu0 0
      %304 = vmatprep.subr.bf16.mxu0 0
      %305 = vmatpush1.bf16.msra.mxu0 0
      %306 = vmatprep.subr.bf16.mxu0 0
      %307 = vmatpush1.bf16.msra.mxu0 0
      %308 = vmatprep.subr.bf16.mxu0 0
      %309 = vmatpush1.bf16.msra.mxu0 0
      %310 = vmatprep.subr.bf16.mxu0 %v233
      %311 = vmatpush1.bf16.msra.mxu0 %v232
      %312 = vmatprep.subr.bf16.mxu0 0
      %313 = vmatpush2.bf16.msra.mxu0 0
      %314 = vmatprep.subr.bf16.mxu0 0
      %315 = vmatpush2.bf16.msra.mxu0 0
      %316 = vmatprep.subr.bf16.mxu0 0
      %317 = vmatpush2.bf16.msra.mxu0 0
      %318 = vmatprep.subr.bf16.mxu0 0
      %319 = vmatpush2.bf16.msra.mxu0 0
      %320 = vmatprep.subr.bf16.mxu0 0
      %321 = vmatpush2.bf16.msra.mxu0 0
      %322 = vmatprep.subr.bf16.mxu0 0
      %323 = vmatpush2.bf16.msra.mxu0 0
      %324 = vmatprep.subr.bf16.mxu0 0
      %325 = vmatpush2.bf16.msra.mxu0 0
      %326 = vmatprep.subr.bf16.mxu0 0
      %327 = vmatpush2.bf16.msra.mxu0 0
      %328 = vmatprep.mubr.bf16.mxu0 0
      %329 = vmatmul.mubr.bf16.gmra.mxu0 %v294
      %v330 = vpop.f32.mrf.mxu0
      %v331 = vadd.f32 %v285, %v330
      %v332 = vpop.f32.mrf.mxu0
      %v333 = vadd.f32 %v287, %v332
      %v334 = vpop.f32.mrf.mxu0
      %v335 = vpop.f32.mrf.mxu0
      %336 = vdwg.mxu0
      %337 = vrot.lane.b32.xlu0 %v232, 126
      %v338 = vpop.permute.xlu0 %337
      %339 = vrot.lane.b32.xlu0 %v233, 126
      %v340 = vpop.permute.xlu0 %339
      %341 = vrot.lane.b32.xlu0 %v234, 126
      %v342 = vpop.permute.xlu0 %341
      %vm343 = vcmask 1031168
      %v344 = vsel %vm343, %v338, %v340
      %v345 = vsel %vm343, %v340, %v342
      %v349 = vsel %vm246, %v215, 0
      %351 = vmatprep.subr.bf16.mxu0 0
      %352 = vmatpush1.bf16.msra.mxu0 0
      %353 = vmatprep.subr.bf16.mxu0 0
      %354 = vmatpush1.bf16.msra.mxu0 0
      %355 = vmatprep.subr.bf16.mxu0 0
      %356 = vmatpush1.bf16.msra.mxu0 0
      %357 = vmatprep.subr.bf16.mxu0 0
      %358 = vmatpush1.bf16.msra.mxu0 0
      %359 = vmatprep.subr.bf16.mxu0 0
      %360 = vmatpush1.bf16.msra.mxu0 0
      %361 = vmatprep.subr.bf16.mxu0 0
      %362 = vmatpush1.bf16.msra.mxu0 0
      %363 = vmatprep.subr.bf16.mxu0 0
      %364 = vmatpush1.bf16.msra.mxu0 0
      %365 = vmatprep.subr.bf16.mxu0 %v345
      %366 = vmatpush1.bf16.msra.mxu0 %v344
      %367 = vmatprep.subr.bf16.mxu0 0
      %368 = vmatpush2.bf16.msra.mxu0 0
      %369 = vmatprep.subr.bf16.mxu0 0
      %370 = vmatpush2.bf16.msra.mxu0 0
      %371 = vmatprep.subr.bf16.mxu0 0
      %372 = vmatpush2.bf16.msra.mxu0 0
      %373 = vmatprep.subr.bf16.mxu0 0
      %374 = vmatpush2.bf16.msra.mxu0 0
      %375 = vmatprep.subr.bf16.mxu0 0
      %376 = vmatpush2.bf16.msra.mxu0 0
      %377 = vmatprep.subr.bf16.mxu0 0
      %378 = vmatpush2.bf16.msra.mxu0 0
      %379 = vmatprep.subr.bf16.mxu0 0
      %380 = vmatpush2.bf16.msra.mxu0 0
      %381 = vmatprep.subr.bf16.mxu0 0
      %382 = vmatpush2.bf16.msra.mxu0 0
      %383 = vmatprep.mubr.bf16.mxu0 0
      %384 = vmatmul.mubr.bf16.gmra.mxu0 %v349
      %v385 = vpop.f32.mrf.mxu0
      %v386 = vadd.f32 0.0, %v385
      %v387 = vpop.f32.mrf.mxu0
      %v388 = vadd.f32 0.0, %v387
      %v389 = vpop.f32.mrf.mxu0
      %v390 = vpop.f32.mrf.mxu0
      %391 = vdwg.mxu0
      %v392 = vadd.f32 %v331, %v386
      %v393 = vadd.f32 %v333, %v388
      %394 = vrot.lane.b32.xlu0 %v232, 110
      %v395 = vpop.permute.xlu0 %394
      %396 = vrot.lane.b32.xlu0 %v233, 110
      %v397 = vpop.permute.xlu0 %396
      %398 = vrot.lane.b32.xlu0 %v234, 110
      %v399 = vpop.permute.xlu0 %398
      %vm400 = vcmask 900096
      %v401 = vsel %vm400, %v395, %v397
      %v402 = vsel %vm400, %v397, %v399
      %v406 = vsel %vm246, %v216, 0
      %408 = vmatprep.subr.bf16.mxu0 0
      %409 = vmatpush1.bf16.msra.mxu0 0
      %410 = vmatprep.subr.bf16.mxu0 0
      %411 = vmatpush1.bf16.msra.mxu0 0
      %412 = vmatprep.subr.bf16.mxu0 0
      %413 = vmatpush1.bf16.msra.mxu0 0
      %414 = vmatprep.subr.bf16.mxu0 0
      %415 = vmatpush1.bf16.msra.mxu0 0
      %416 = vmatprep.subr.bf16.mxu0 0
      %417 = vmatpush1.bf16.msra.mxu0 0
      %418 = vmatprep.subr.bf16.mxu0 0
      %419 = vmatpush1.bf16.msra.mxu0 0
      %420 = vmatprep.subr.bf16.mxu0 0
      %421 = vmatpush1.bf16.msra.mxu0 0
      %422 = vmatprep.subr.bf16.mxu0 %v402
      %423 = vmatpush1.bf16.msra.mxu0 %v401
      %424 = vmatprep.subr.bf16.mxu0 0
      %425 = vmatpush2.bf16.msra.mxu0 0
      %426 = vmatprep.subr.bf16.mxu0 0
      %427 = vmatpush2.bf16.msra.mxu0 0
      %428 = vmatprep.subr.bf16.mxu0 0
      %429 = vmatpush2.bf16.msra.mxu0 0
      %430 = vmatprep.subr.bf16.mxu0 0
      %431 = vmatpush2.bf16.msra.mxu0 0
      %432 = vmatprep.subr.bf16.mxu0 0
      %433 = vmatpush2.bf16.msra.mxu0 0
      %434 = vmatprep.subr.bf16.mxu0 0
      %435 = vmatpush2.bf16.msra.mxu0 0
      %436 = vmatprep.subr.bf16.mxu0 0
      %437 = vmatpush2.bf16.msra.mxu0 0
      %438 = vmatprep.subr.bf16.mxu0 0
      %439 = vmatpush2.bf16.msra.mxu0 0
      %440 = vmatprep.mubr.bf16.mxu0 0
      %441 = vmatmul.mubr.bf16.gmra.mxu0 %v406
      %v442 = vpop.f32.mrf.mxu0
      %v443 = vadd.f32 0.0, %v442
      %v444 = vpop.f32.mrf.mxu0
      %v445 = vadd.f32 0.0, %v444
      %v446 = vpop.f32.mrf.mxu0
      %v447 = vpop.f32.mrf.mxu0
      %448 = vdwg.mxu0
      %v449 = vadd.f32 %v392, %v443
      %v450 = vadd.f32 %v393, %v445
      %451 = vrot.lane.b32.xlu0 %v232, 109
      %v452 = vpop.permute.xlu0 %451
      %453 = vrot.lane.b32.xlu0 %v233, 109
      %v454 = vpop.permute.xlu0 %453
      %455 = vrot.lane.b32.xlu0 %v234, 109
      %v456 = vpop.permute.xlu0 %455
      %vm457 = vcmask 891904
      %v458 = vsel %vm457, %v452, %v454
      %v459 = vsel %vm457, %v454, %v456
      %v463 = vsel %vm246, %v217, 0
      %465 = vmatprep.subr.bf16.mxu0 0
      %466 = vmatpush1.bf16.msra.mxu0 0
      %467 = vmatprep.subr.bf16.mxu0 0
      %468 = vmatpush1.bf16.msra.mxu0 0
      %469 = vmatprep.subr.bf16.mxu0 0
      %470 = vmatpush1.bf16.msra.mxu0 0
      %471 = vmatprep.subr.bf16.mxu0 0
      %472 = vmatpush1.bf16.msra.mxu0 0
      %473 = vmatprep.subr.bf16.mxu0 0
      %474 = vmatpush1.bf16.msra.mxu0 0
      %475 = vmatprep.subr.bf16.mxu0 0
      %476 = vmatpush1.bf16.msra.mxu0 0
      %477 = vmatprep.subr.bf16.mxu0 0
      %478 = vmatpush1.bf16.msra.mxu0 0
      %479 = vmatprep.subr.bf16.mxu0 %v459
      %480 = vmatpush1.bf16.msra.mxu0 %v458
      %481 = vmatprep.subr.bf16.mxu0 0
      %482 = vmatpush2.bf16.msra.mxu0 0
      %483 = vmatprep.subr.bf16.mxu0 0
      %484 = vmatpush2.bf16.msra.mxu0 0
      %485 = vmatprep.subr.bf16.mxu0 0
      %486 = vmatpush2.bf16.msra.mxu0 0
      %487 = vmatprep.subr.bf16.mxu0 0
      %488 = vmatpush2.bf16.msra.mxu0 0
      %489 = vmatprep.subr.bf16.mxu0 0
      %490 = vmatpush2.bf16.msra.mxu0 0
      %491 = vmatprep.subr.bf16.mxu0 0
      %492 = vmatpush2.bf16.msra.mxu0 0
      %493 = vmatprep.subr.bf16.mxu0 0
      %494 = vmatpush2.bf16.msra.mxu0 0
      %495 = vmatprep.subr.bf16.mxu0 0
      %496 = vmatpush2.bf16.msra.mxu0 0
      %497 = vmatprep.mubr.bf16.mxu0 0
      %498 = vmatmul.mubr.bf16.gmra.mxu0 %v463
      %v499 = vpop.f32.mrf.mxu0
      %v500 = vadd.f32 0.0, %v499
      %v501 = vpop.f32.mrf.mxu0
      %v502 = vadd.f32 0.0, %v501
      %v503 = vpop.f32.mrf.mxu0
      %v504 = vpop.f32.mrf.mxu0
      %505 = vdwg.mxu0
      %v506 = vadd.f32 %v449, %v500
      %v507 = vadd.f32 %v450, %v502
      %508 = vrot.lane.b32.xlu0 %v232, 108
      %v509 = vpop.permute.xlu0 %508
      %510 = vrot.lane.b32.xlu0 %v233, 108
      %v511 = vpop.permute.xlu0 %510
      %512 = vrot.lane.b32.xlu0 %v234, 108
      %v513 = vpop.permute.xlu0 %512
      %vm514 = vcmask 883712
      %v515 = vsel %vm514, %v509, %v511
      %v516 = vsel %vm514, %v511, %v513
      %v520 = vsel %vm246, %v218, 0
      %522 = vmatprep.subr.bf16.mxu0 0
      %523 = vmatpush1.bf16.msra.mxu0 0
      %524 = vmatprep.subr.bf16.mxu0 0
      %525 = vmatpush1.bf16.msra.mxu0 0
      %526 = vmatprep.subr.bf16.mxu0 0
      %527 = vmatpush1.bf16.msra.mxu0 0
      %528 = vmatprep.subr.bf16.mxu0 0
      %529 = vmatpush1.bf16.msra.mxu0 0
      %530 = vmatprep.subr.bf16.mxu0 0
      %531 = vmatpush1.bf16.msra.mxu0 0
      %532 = vmatprep.subr.bf16.mxu0 0
      %533 = vmatpush1.bf16.msra.mxu0 0
      %534 = vmatprep.subr.bf16.mxu0 0
      %535 = vmatpush1.bf16.msra.mxu0 0
      %536 = vmatprep.subr.bf16.mxu0 %v516
      %537 = vmatpush1.bf16.msra.mxu0 %v515
      %538 = vmatprep.subr.bf16.mxu0 0
      %539 = vmatpush2.bf16.msra.mxu0 0
      %540 = vmatprep.subr.bf16.mxu0 0
      %541 = vmatpush2.bf16.msra.mxu0 0
      %542 = vmatprep.subr.bf16.mxu0 0
      %543 = vmatpush2.bf16.msra.mxu0 0
      %544 = vmatprep.subr.bf16.mxu0 0
      %545 = vmatpush2.bf16.msra.mxu0 0
      %546 = vmatprep.subr.bf16.mxu0 0
      %547 = vmatpush2.bf16.msra.mxu0 0
      %548 = vmatprep.subr.bf16.mxu0 0
      %549 = vmatpush2.bf16.msra.mxu0 0
      %550 = vmatprep.subr.bf16.mxu0 0
      %551 = vmatpush2.bf16.msra.mxu0 0
      %552 = vmatprep.subr.bf16.mxu0 0
      %553 = vmatpush2.bf16.msra.mxu0 0
      %554 = vmatprep.mubr.bf16.mxu0 0
      %555 = vmatmul.mubr.bf16.gmra.mxu0 %v520
      %v556 = vpop.f32.mrf.mxu0
      %v557 = vadd.f32 0.0, %v556
      %v558 = vpop.f32.mrf.mxu0
      %v559 = vadd.f32 0.0, %v558
      %v560 = vpop.f32.mrf.mxu0
      %v561 = vpop.f32.mrf.mxu0
      %562 = vdwg.mxu0
      %v563 = vadd.f32 %v506, %v557
      %v564 = vadd.f32 %v507, %v559
      %565 = vrot.lane.b32.xlu0 %v232, 92
      %v566 = vpop.permute.xlu0 %565
      %567 = vrot.lane.b32.xlu0 %v233, 92
      %v568 = vpop.permute.xlu0 %567
      %569 = vrot.lane.b32.xlu0 %v234, 92
      %v570 = vpop.permute.xlu0 %569
      %vm571 = vcmask 752640
      %v572 = vsel %vm571, %v566, %v568
      %v573 = vsel %vm571, %v568, %v570
      %v577 = vsel %vm246, %v219, 0
      %579 = vmatprep.subr.bf16.mxu0 0
      %580 = vmatpush1.bf16.msra.mxu0 0
      %581 = vmatprep.subr.bf16.mxu0 0
      %582 = vmatpush1.bf16.msra.mxu0 0
      %583 = vmatprep.subr.bf16.mxu0 0
      %584 = vmatpush1.bf16.msra.mxu0 0
      %585 = vmatprep.subr.bf16.mxu0 0
      %586 = vmatpush1.bf16.msra.mxu0 0
      %587 = vmatprep.subr.bf16.mxu0 0
      %588 = vmatpush1.bf16.msra.mxu0 0
      %589 = vmatprep.subr.bf16.mxu0 0
      %590 = vmatpush1.bf16.msra.mxu0 0
      %591 = vmatprep.subr.bf16.mxu0 0
      %592 = vmatpush1.bf16.msra.mxu0 0
      %593 = vmatprep.subr.bf16.mxu0 %v573
      %594 = vmatpush1.bf16.msra.mxu0 %v572
      %595 = vmatprep.subr.bf16.mxu0 0
      %596 = vmatpush2.bf16.msra.mxu0 0
      %597 = vmatprep.subr.bf16.mxu0 0
      %598 = vmatpush2.bf16.msra.mxu0 0
      %599 = vmatprep.subr.bf16.mxu0 0
      %600 = vmatpush2.bf16.msra.mxu0 0
      %601 = vmatprep.subr.bf16.mxu0 0
      %602 = vmatpush2.bf16.msra.mxu0 0
      %603 = vmatprep.subr.bf16.mxu0 0
      %604 = vmatpush2.bf16.msra.mxu0 0
      %605 = vmatprep.subr.bf16.mxu0 0
      %606 = vmatpush2.bf16.msra.mxu0 0
      %607 = vmatprep.subr.bf16.mxu0 0
      %608 = vmatpush2.bf16.msra.mxu0 0
      %609 = vmatprep.subr.bf16.mxu0 0
      %610 = vmatpush2.bf16.msra.mxu0 0
      %611 = vmatprep.mubr.bf16.mxu0 0
      %612 = vmatmul.mubr.bf16.gmra.mxu0 %v577
      %v613 = vpop.f32.mrf.mxu0
      %v614 = vadd.f32 0.0, %v613
      %v615 = vpop.f32.mrf.mxu0
      %v616 = vadd.f32 0.0, %v615
      %v617 = vpop.f32.mrf.mxu0
      %v618 = vpop.f32.mrf.mxu0
      %619 = vdwg.mxu0
      %v620 = vadd.f32 %v563, %v614
      %v621 = vadd.f32 %v564, %v616
      %622 = vrot.lane.b32.xlu0 %v232, 91
      %v623 = vpop.permute.xlu0 %622
      %624 = vrot.lane.b32.xlu0 %v233, 91
      %v625 = vpop.permute.xlu0 %624
      %626 = vrot.lane.b32.xlu0 %v234, 91
      %v627 = vpop.permute.xlu0 %626
      %vm628 = vcmask 744448
      %v629 = vsel %vm628, %v623, %v625
      %v630 = vsel %vm628, %v625, %v627
      %v634 = vsel %vm246, %v220, 0
      %636 = vmatprep.subr.bf16.mxu0 0
      %637 = vmatpush1.bf16.msra.mxu0 0
      %638 = vmatprep.subr.bf16.mxu0 0
      %639 = vmatpush1.bf16.msra.mxu0 0
      %640 = vmatprep.subr.bf16.mxu0 0
      %641 = vmatpush1.bf16.msra.mxu0 0
      %642 = vmatprep.subr.bf16.mxu0 0
      %643 = vmatpush1.bf16.msra.mxu0 0
      %644 = vmatprep.subr.bf16.mxu0 0
      %645 = vmatpush1.bf16.msra.mxu0 0
      %646 = vmatprep.subr.bf16.mxu0 0
      %647 = vmatpush1.bf16.msra.mxu0 0
      %648 = vmatprep.subr.bf16.mxu0 0
      %649 = vmatpush1.bf16.msra.mxu0 0
      %650 = vmatprep.subr.bf16.mxu0 %v630
      %651 = vmatpush1.bf16.msra.mxu0 %v629
      %652 = vmatprep.subr.bf16.mxu0 0
      %653 = vmatpush2.bf16.msra.mxu0 0
      %654 = vmatprep.subr.bf16.mxu0 0
      %655 = vmatpush2.bf16.msra.mxu0 0
      %656 = vmatprep.subr.bf16.mxu0 0
      %657 = vmatpush2.bf16.msra.mxu0 0
      %658 = vmatprep.subr.bf16.mxu0 0
      %659 = vmatpush2.bf16.msra.mxu0 0
      %660 = vmatprep.subr.bf16.mxu0 0
      %661 = vmatpush2.bf16.msra.mxu0 0
      %662 = vmatprep.subr.bf16.mxu0 0
      %663 = vmatpush2.bf16.msra.mxu0 0
      %664 = vmatprep.subr.bf16.mxu0 0
      %665 = vmatpush2.bf16.msra.mxu0 0
      %666 = vmatprep.subr.bf16.mxu0 0
      %667 = vmatpush2.bf16.msra.mxu0 0
      %668 = vmatprep.mubr.bf16.mxu0 0
      %669 = vmatmul.mubr.bf16.gmra.mxu0 %v634
      %v670 = vpop.f32.mrf.mxu0
      %v671 = vadd.f32 0.0, %v670
      %v672 = vpop.f32.mrf.mxu0
      %v673 = vadd.f32 0.0, %v672
      %v674 = vpop.f32.mrf.mxu0
      %v675 = vpop.f32.mrf.mxu0
      %676 = vdwg.mxu0
      %v677 = vadd.f32 %v620, %v671
      %v678 = vadd.f32 %v621, %v673
      %679 = vrot.lane.b32.xlu0 %v232, 90
      %v680 = vpop.permute.xlu0 %679
      %681 = vrot.lane.b32.xlu0 %v233, 90
      %v682 = vpop.permute.xlu0 %681
      %683 = vrot.lane.b32.xlu0 %v234, 90
      %v684 = vpop.permute.xlu0 %683
      %vm685 = vcmask 736256
      %v686 = vsel %vm685, %v680, %v682
      %v687 = vsel %vm685, %v682, %v684
      %v691 = vsel %vm246, %v221, 0
      %693 = vmatprep.subr.bf16.mxu0 0
      %694 = vmatpush1.bf16.msra.mxu0 0
      %695 = vmatprep.subr.bf16.mxu0 0
      %696 = vmatpush1.bf16.msra.mxu0 0
      %697 = vmatprep.subr.bf16.mxu0 0
      %698 = vmatpush1.bf16.msra.mxu0 0
      %699 = vmatprep.subr.bf16.mxu0 0
      %700 = vmatpush1.bf16.msra.mxu0 0
      %701 = vmatprep.subr.bf16.mxu0 0
      %702 = vmatpush1.bf16.msra.mxu0 0
      %703 = vmatprep.subr.bf16.mxu0 0
      %704 = vmatpush1.bf16.msra.mxu0 0
      %705 = vmatprep.subr.bf16.mxu0 0
      %706 = vmatpush1.bf16.msra.mxu0 0
      %707 = vmatprep.subr.bf16.mxu0 %v687
      %708 = vmatpush1.bf16.msra.mxu0 %v686
      %709 = vmatprep.subr.bf16.mxu0 0
      %710 = vmatpush2.bf16.msra.mxu0 0
      %711 = vmatprep.subr.bf16.mxu0 0
      %712 = vmatpush2.bf16.msra.mxu0 0
      %713 = vmatprep.subr.bf16.mxu0 0
      %714 = vmatpush2.bf16.msra.mxu0 0
      %715 = vmatprep.subr.bf16.mxu0 0
      %716 = vmatpush2.bf16.msra.mxu0 0
      %717 = vmatprep.subr.bf16.mxu0 0
      %718 = vmatpush2.bf16.msra.mxu0 0
      %719 = vmatprep.subr.bf16.mxu0 0
      %720 = vmatpush2.bf16.msra.mxu0 0
      %721 = vmatprep.subr.bf16.mxu0 0
      %722 = vmatpush2.bf16.msra.mxu0 0
      %723 = vmatprep.subr.bf16.mxu0 0
      %724 = vmatpush2.bf16.msra.mxu0 0
      %725 = vmatprep.mubr.bf16.mxu0 0
      %726 = vmatmul.mubr.bf16.gmra.mxu0 %v691
      %v727 = vpop.f32.mrf.mxu0
      %v728 = vadd.f32 0.0, %v727
      %v729 = vpop.f32.mrf.mxu0
      %v730 = vadd.f32 0.0, %v729
      %v731 = vpop.f32.mrf.mxu0
      %v732 = vpop.f32.mrf.mxu0
      %733 = vdwg.mxu0
      %v734 = vadd.f32 %v677, %v728
      %v735 = vadd.f32 %v678, %v730
      %v736 = vld [vmem:[%s2] sm:$0xf]
      %738 = vset.pattern.permute.xlu0 0
      %739 = vperm.xlu0 %738, %v736
      %v740 = vpop.permute.xlu0 %739
      %v742 = vmul.f32 %v734, %v740
      %v743 = vmul.f32 %v735, %v740
      %744 = vset.pattern.permute.xlu0 1
      %745 = vperm.xlu0 %744, %v736
      %v746 = vpop.permute.xlu0 %745
      %v748 = vadd.f32 %v742, %v746
      %v749 = vadd.f32 %v743, %v746
      %v750 = vmax.f32 %v748, 0.0
      %v751 = vmax.f32 %v749, 0.0
      %v754 = vcombine.low %v750, %v751
      %756 = vst [vmem:[%s206] sm:$0xff] %v754
      %s757 = smul.u32 2, %s19
      %p758 = scmp.lt.s32.totalorder %s18, 1
      %s759 = scalar_select %p758, %s18, 1
      %p760 = scmp.lt.s32.totalorder %s757, 3
      %s761 = scalar_select %p760, %s757, 3
      %s762 = smul.addr %s759, 4
      %s763 = sadd.s32 %s761, %s762
      %s764 = smul.addr %s763, 4
      %s765 = scalar_lea.vmem %s3, %s764
      // Predicated region
      $region33: #{rsu4_forward.8} parent=31 // pred_check
        %p766 = pneg %p116
      $region34: #{rsu4_forward.8} parent=31 // pred_check_branch
        %768 = sbr.rel (%p766) target = $region36
      $region35: #{rsu4_forward.8} parent=31 // pred_region
        %s769 = smul.u32 2, %s19
      $region36: #{rsu4_forward.8} parent=31 // pred_fallthru
        _
    $region32: #{rsu4_forward.8} parent=5 // pred_fallthru
      _
    %p770 = scmp.le.s32.totalorder 2, %s9
    // Predicated region
    $region37: #{rsu4_forward.8} parent=5 // pred_check
      %p771 = pneg %p770
    $region38: #{rsu4_forward.8} parent=5 // pred_check_branch
      %773 = sbr.rel (%p771) target = $region40
    $region39: #{rsu4_forward.8} parent=5 // pred_region
      %s774 = ssub.s32 %s9, 2
      // Predicated region
      $region41: #{rsu4_forward.8} parent=39 // pred_check
        %p775 = pneg %p122
      $region42: #{rsu4_forward.8} parent=39 // pred_check_branch
        %777 = sbr.rel (%p775) target = $region44
      $region43: #{rsu4_forward.8} parent=39 // pred_region
        %s778 = smul.u32 2, %s21
        %p779 = scmp.lt.s32.totalorder %s20, 1
        %s780 = scalar_select %p779, %s20, 1
        %p781 = scmp.lt.s32.totalorder %s778, 3
        %s782 = scalar_select %p781, %s778, 3
        %s783 = smul.addr %s780, 4
        %s784 = sadd.s32 %s782, %s783
        %s785 = smul.addr %s784, 4
        %s786 = scalar_lea.vmem %s3, %s785
      $region44: #{rsu4_forward.8} parent=39 // pred_fallthru
        _
    $region40: #{rsu4_forward.8} parent=5 // pred_fallthru
      _
  $region6: #{rsu4_forward.8} parent=0 // loop_footer
    %s13 = sadd.s32 1, %s9
  $region7: #{rsu4_forward.8} parent=0 // loop_footer_branch
    %8 = sbr.rel target = $region3
  $region8: #{rsu4_forward.8} parent=0 // loop_exit
    _

// kernel: rsu4_forward.9
$region0: #{rsu4_forward.9}
  #allocation0 [shape = 'u32[]', space=smem, size = 0x4, offset = 0x4, fixed_abs, tag = 'smem constant byte address 0x4 - core index']
  #allocation1 [shape = 'u32[144,128]{1,0:T(1,128)}', space=vmem, size = 0x12000, scoped, tag = 'internal scratch']
  %s0 = inlined_call_operand.vmem [shape: bf16[2,2,16,294], index: 0, kind: input, shape index: {}]
  %s1 = inlined_call_operand.vmem [shape: bf16[9,8,16], index: 1, kind: input, shape index: {}]
  %s2 = inlined_call_operand.vmem [shape: f32[8,2], index: 2, kind: input, shape index: {}]
  %s3 = inlined_call_operand.vmem [shape: bf16[2,8,512], index: 3, kind: output, shape index: {}]
  %s4 = sld [smem:[#allocation0]]
  $region45: #{rsu4_forward.9} parent=0
    _
  %s6 = ssub.s32 1, %s4
  %s7 = scalar_select 0, %s6, %s4
  loop: start=0, step=1, limit=6
  $region2: #{rsu4_forward.9} parent=0 // loop_pre_header
    _
  $region3: #{rsu4_forward.9} parent=0 // loop_header
    %s9 = sphi 0, %s13
    %p10 = scmp.ge.s32.totalorder %s9, 6
    %s16 = sphi 0, %s28
    %s17 = sphi 0, %s24
    %s18 = sphi 0, %s16
    %s19 = sphi 0, %s17
    %s20 = sphi 0, %s18
    %s21 = sphi 0, %s19
    %s33 = sphi 0, %s35
    %s36 = sphi 0, %s33
    %s37 = sphi 0, %s36
    %s53 = sphi 0, %s37
    %s57 = sphi 0, %s57
    %s59 = sphi 0, %s57
    %s60 = sphi 0, %s59
    %s74 = sphi 0, %s60
    %s78 = sphi 0, %s78
    %s80 = sphi 0, %s78
    %s81 = sphi 0, %s80
    %s95 = sphi 0, %s81
    %s103 = sphi 0, %s105
    %s106 = sphi 0, %s103
    %s107 = sphi 0, %s106
    %s123 = sphi 0, %s107
  $region4: #{rsu4_forward.9} parent=0 // loop_header_branch
    %12 = sbr.rel (%p10) target = $region8
  $region5: #{rsu4_forward.9} parent=0 // loop_body
    %s14 = ssub.s32 %s9, 1
    %s15 = ssub.s32 %s9, 2
    %s22 = sadd.s32 1, %s17
    %p23 = scmp.ge.s32.totalorder %s22, 2
    %s24 = scalar_select %p23, 0, %s22
    %s25 = sadd.s32 1, %s16
    %s26 = scalar_select %p23, %s25, %s16
    %p27 = scmp.ge.s32.totalorder %s26, 2
    %s28 = scalar_select %p27, 0, %s26
    %s29 = ssub.s32 %s16, %s28
    %s30 = ssub.s32 %s17, %s24
    %s31 = sor.u32 %s29, %s30
    %p32 = scmp.eq.s32.totalorder %s31, 0
    %s34 = sadd.s32 %s33, 1
    %s35 = scalar_select %p32, %s33, %s34
    %p38 = pneg %p32
    %p39 = scmp.eq.s32.totalorder %s9, 3
    %p40 = por %p38, %p39
    %p41 = scmp.ne.s32.totalorder %s33, %s36
    %p42 = scmp.eq.s32.totalorder %s9, 0
    %p43 = por %p41, %p42
    %p44 = scmp.ne.s32.totalorder %s33, %s36
    %p45 = scmp.eq.s32.totalorder %s14, 3
    %p46 = por %p44, %p45
    %p47 = scmp.ne.s32.totalorder %s36, %s37
    %p48 = scmp.eq.s32.totalorder %s14, 0
    %p49 = por %p47, %p48
    %p50 = scmp.ne.s32.totalorder %s36, %s37
    %p51 = scmp.eq.s32.totalorder %s15, 3
    %p52 = por %p50, %p51
    %p54 = scmp.ne.s32.totalorder %s37, %s53
    %p55 = scmp.eq.s32.totalorder %s15, 0
    %p56 = por %p54, %p55
    %s58 = sadd.s32 %s57, 1
    %p61 = scmp.eq.s32.totalorder %s9, 3
    %p62 = scmp.ne.s32.totalorder %s57, %s59
    %p63 = scmp.eq.s32.totalorder %s9, 0
    %p64 = por %p62, %p63
    %p65 = scmp.ne.s32.totalorder %s57, %s59
    %p66 = scmp.eq.s32.totalorder %s14, 3
    %p67 = por %p65, %p66
    %p68 = scmp.ne.s32.totalorder %s59, %s60
    %p69 = scmp.eq.s32.totalorder %s14, 0
    %p70 = por %p68, %p69
    %p71 = scmp.ne.s32.totalorder %s59, %s60
    %p72 = scmp.eq.s32.totalorder %s15, 3
    %p73 = por %p71, %p72
    %p75 = scmp.ne.s32.totalorder %s60, %s74
    %p76 = scmp.eq.s32.totalorder %s15, 0
    %p77 = por %p75, %p76
    %s79 = sadd.s32 %s78, 1
    %p82 = scmp.eq.s32.totalorder %s9, 3
    %p83 = scmp.ne.s32.totalorder %s78, %s80
    %p84 = scmp.eq.s32.totalorder %s9, 0
    %p85 = por %p83, %p84
    %p86 = scmp.ne.s32.totalorder %s78, %s80
    %p87 = scmp.eq.s32.totalorder %s14, 3
    %p88 = por %p86, %p87
    %p89 = scmp.ne.s32.totalorder %s80, %s81
    %p90 = scmp.eq.s32.totalorder %s14, 0
    %p91 = por %p89, %p90
    %p92 = scmp.ne.s32.totalorder %s80, %s81
    %p93 = scmp.eq.s32.totalorder %s15, 3
    %p94 = por %p92, %p93
    %p96 = scmp.ne.s32.totalorder %s81, %s95
    %p97 = scmp.eq.s32.totalorder %s15, 0
    %p98 = por %p96, %p97
    %s99 = ssub.s32 %s16, %s28
    %s100 = ssub.s32 %s17, %s24
    %s101 = sor.u32 %s99, %s100
    %p102 = scmp.eq.s32.totalorder %s101, 0
    %s104 = sadd.s32 %s103, 1
    %s105 = scalar_select %p102, %s103, %s104
    %p108 = pneg %p102
    %p109 = scmp.eq.s32.totalorder %s9, 3
    %p110 = por %p108, %p109
    %p111 = scmp.ne.s32.totalorder %s103, %s106
    %p112 = scmp.eq.s32.totalorder %s9, 0
    %p113 = por %p111, %p112
    %p114 = scmp.ne.s32.totalorder %s103, %s106
    %p115 = scmp.eq.s32.totalorder %s14, 3
    %p116 = por %p114, %p115
    %p117 = scmp.ne.s32.totalorder %s106, %s107
    %p118 = scmp.eq.s32.totalorder %s14, 0
    %p119 = por %p117, %p118
    %p120 = scmp.ne.s32.totalorder %s106, %s107
    %p121 = scmp.eq.s32.totalorder %s15, 3
    %p122 = por %p120, %p121
    %p124 = scmp.ne.s32.totalorder %s107, %s123
    %p125 = scmp.eq.s32.totalorder %s15, 0
    %p126 = por %p124, %p125
    %p127 = scmp.le.s32.totalorder 1, %s9
    %p128 = scmp.lt.s32.totalorder %s9, 5
    %p129 = pnand %p127, %p128
    %p130 = pneg %p129
    // Predicated region
    $region9: #{rsu4_forward.9} parent=5 // pred_check
      _
    $region10: #{rsu4_forward.9} parent=5 // pred_check_branch
      %132 = sbr.rel (%p129) target = $region12
    $region11: #{rsu4_forward.9} parent=5 // pred_region
      %s133 = ssub.s32 %s9, 1
      // Predicated region
      $region13: #{rsu4_forward.9} parent=11 // pred_check
        %p134 = pneg %p70
      $region14: #{rsu4_forward.9} parent=11 // pred_check_branch
        %136 = sbr.rel (%p134) target = $region16
      $region15: #{rsu4_forward.9} parent=11 // pred_region
        _
      $region16: #{rsu4_forward.9} parent=11 // pred_fallthru
        _
      // Predicated region
      $region17: #{rsu4_forward.9} parent=11 // pred_check
        %p137 = pneg %p91
      $region18: #{rsu4_forward.9} parent=11 // pred_check_branch
        %139 = sbr.rel (%p137) target = $region20
      $region19: #{rsu4_forward.9} parent=11 // pred_region
        _
      $region20: #{rsu4_forward.9} parent=11 // pred_fallthru
        _
    $region12: #{rsu4_forward.9} parent=5 // pred_fallthru
      _
    %p140 = scmp.lt.s32.totalorder %s9, 4
    // Predicated region
    $region21: #{rsu4_forward.9} parent=5 // pred_check
      %p141 = pneg %p140
    $region22: #{rsu4_forward.9} parent=5 // pred_check_branch
      %143 = sbr.rel (%p141) target = $region24
    $region23: #{rsu4_forward.9} parent=5 // pred_region
      // Predicated region
      $region25: #{rsu4_forward.9} parent=23 // pred_check
        %p144 = pneg %p43
      $region26: #{rsu4_forward.9} parent=23 // pred_check_branch
        %146 = sbr.rel (%p144) target = $region28
      $region27: #{rsu4_forward.9} parent=23 // pred_region
        %p147 = scmp.lt.s32.totalorder %s16, 1
        %s148 = scalar_select %p147, %s16, 1
        %p149 = scmp.lt.s32.totalorder %s17, 1
        %s150 = scalar_select %p149, %s17, 1
        %s151 = smul.addr %s150, 6
        %s152 = smul.addr %s148, 12
        %s153 = sadd.s32 %s151, %s152
        %s154 = smul.addr %s153, 4
        %s155 = scalar_lea.vmem %s0, %s154
      $region28: #{rsu4_forward.9} parent=23 // pred_fallthru
        _
    $region24: #{rsu4_forward.9} parent=5 // pred_fallthru
      _
    %p156 = scmp.le.s32.totalorder 1, %s9
    %p157 = scmp.lt.s32.totalorder %s9, 5
    %p158 = pnand %p156, %p157
    %p159 = pneg %p158
    // Predicated region
    $region29: #{rsu4_forward.9} parent=5 // pred_check
      _
    $region30: #{rsu4_forward.9} parent=5 // pred_check_branch
      %161 = sbr.rel (%p158) target = $region32
    $region31: #{rsu4_forward.9} parent=5 // pred_region
      %s162 = ssub.s32 %s9, 1
      %p163 = scmp.lt.s32.totalorder %s18, 1
      %s164 = scalar_select %p163, %s18, 1
      %p165 = scmp.lt.s32.totalorder %s19, 1
      %s166 = scalar_select %p165, %s19, 1
      %s167 = smul.addr %s166, 6
      %s168 = smul.addr %s164, 12
      %s169 = sadd.s32 %s167, %s168
      %s170 = smul.addr %s169, 4
      %s171 = scalar_lea.vmem %s0, %s170
      %p172 = pneg %p49
      %p173 = pneg %p46
      %p174 = pneg %p70
      %p175 = pneg %p67
      %p176 = pneg %p91
      %p177 = pneg %p88
      %p178 = pneg %p119
      %p179 = pneg %p116
      %s180 = smul.u32 2, %s19
      %p181 = scmp.lt.s32.totalorder %s18, 1
      %s182 = scalar_select %p181, %s18, 1
      %p183 = scmp.lt.s32.totalorder %s180, 3
      %s184 = scalar_select %p183, %s180, 3
      %s185 = smul.addr %s182, 4
      %s186 = sadd.s32 %s184, %s185
      %s187 = smul.addr %s186, 4
      %s188 = scalar_lea.vmem %s3, %s187
      %p189 = scmp.lt.s32.totalorder %s18, 1
      %s190 = scalar_select %p189, %s18, 1
      %p191 = scmp.lt.s32.totalorder %s19, 1
      %s192 = scalar_select %p191, %s19, 1
      %s193 = smul.addr %s192, 6
      %s194 = smul.addr %s190, 12
      %s195 = sadd.s32 %s193, %s194
      %s196 = smul.addr %s195, 4
      %s197 = scalar_lea.vmem %s0, %s196
      %s198 = smul.u32 2, %s19
      %p199 = scmp.lt.s32.totalorder %s18, 1
      %s200 = scalar_select %p199, %s18, 1
      %p201 = scmp.lt.s32.totalorder %s198, 3
      %s202 = scalar_select %p201, %s198, 3
      %s203 = smul.addr %s200, 4
      %s204 = sadd.s32 %s202, %s203
      %s205 = smul.addr %s204, 4
      %s206 = scalar_lea.vmem %s3, %s205
      %s207 = smul.u32 2, %s19
      %v209 = vld [vmem:[%s197] sm:$0xff]
      %v210 = vld [vmem:[%s197 + $0x8] sm:$0xf]
      %v211 = vld [vmem:[%s197 + $0xc] sm:$0xff]
      %v212 = vld [vmem:[%s197 + $0x14] sm:$0xf]
      %v213 = vld [vmem:[%s1] sm:$0xf]
      %v214 = vld [vmem:[%s1 + $0x4] sm:$0xf]
      %v215 = vld [vmem:[%s1 + $0x8] sm:$0xf]
      %v216 = vld [vmem:[%s1 + $0xc] sm:$0xf]
      %v217 = vld [vmem:[%s1 + $0x10] sm:$0xf]
      %v218 = vld [vmem:[%s1 + $0x14] sm:$0xf]
      %v219 = vld [vmem:[%s1 + $0x18] sm:$0xf]
      %v220 = vld [vmem:[%s1 + $0x1c] sm:$0xf]
      %v221 = vld [vmem:[%s1 + $0x20] sm:$0xf]
      %v226 = vunpack.c.l.b16 %v209
      %v227 = vunpack.c.h.b16 %v209
      %v228 = vunpack.c.l.b16 %v210
      %v229 = vunpack.c.l.b16 %v211
      %v230 = vunpack.c.h.b16 %v211
      %v231 = vunpack.c.l.b16 %v212
      %v232 = vpack.c.b16 %v229, %v226
      %v233 = vpack.c.b16 %v230, %v227
      %v234 = vpack.c.b16 %v231, %v228
      %235 = vrot.lane.b32.xlu0 %v232, 127
      %v236 = vpop.permute.xlu0 %235
      %237 = vrot.lane.b32.xlu0 %v233, 127
      %v238 = vpop.permute.xlu0 %237
      %239 = vrot.lane.b32.xlu0 %v234, 127
      %v240 = vpop.permute.xlu0 %239
      %vm241 = vcmask 1039360
      %v242 = vsel %vm241, %v236, %v238
      %v243 = vsel %vm241, %v238, %v240
      %vm246 = vcmask 130048
      %v248 = vsel %vm246, %v214, 0
      %250 = vmatprep.subr.bf16.mxu0 0
      %251 = vmatpush1.bf16.msra.mxu0 0
      %252 = vmatprep.subr.bf16.mxu0 0
      %253 = vmatpush1.bf16.msra.mxu0 0
      %254 = vmatprep.subr.bf16.mxu0 0
      %255 = vmatpush1.bf16.msra.mxu0 0
      %256 = vmatprep.subr.bf16.mxu0 0
      %257 = vmatpush1.bf16.msra.mxu0 0
      %258 = vmatprep.subr.bf16.mxu0 0
      %259 = vmatpush1.bf16.msra.mxu0 0
      %260 = vmatprep.subr.bf16.mxu0 0
      %261 = vmatpush1.bf16.msra.mxu0 0
      %262 = vmatprep.subr.bf16.mxu0 0
      %263 = vmatpush1.bf16.msra.mxu0 0
      %264 = vmatprep.subr.bf16.mxu0 %v243
      %265 = vmatpush1.bf16.msra.mxu0 %v242
      %266 = vmatprep.subr.bf16.mxu0 0
      %267 = vmatpush2.bf16.msra.mxu0 0
      %268 = vmatprep.subr.bf16.mxu0 0
      %269 = vmatpush2.bf16.msra.mxu0 0
      %270 = vmatprep.subr.bf16.mxu0 0
      %271 = vmatpush2.bf16.msra.mxu0 0
      %272 = vmatprep.subr.bf16.mxu0 0
      %273 = vmatpush2.bf16.msra.mxu0 0
      %274 = vmatprep.subr.bf16.mxu0 0
      %275 = vmatpush2.bf16.msra.mxu0 0
      %276 = vmatprep.subr.bf16.mxu0 0
      %277 = vmatpush2.bf16.msra.mxu0 0
      %278 = vmatprep.subr.bf16.mxu0 0
      %279 = vmatpush2.bf16.msra.mxu0 0
      %280 = vmatprep.subr.bf16.mxu0 0
      %281 = vmatpush2.bf16.msra.mxu0 0
      %282 = vmatprep.mubr.bf16.mxu0 0
      %283 = vmatmul.mubr.bf16.gmra.mxu0 %v248
      %v284 = vpop.f32.mrf.mxu0
      %v285 = vadd.f32 0.0, %v284
      %v286 = vpop.f32.mrf.mxu0
      %v287 = vadd.f32 0.0, %v286
      %v288 = vpop.f32.mrf.mxu0
      %v289 = vpop.f32.mrf.mxu0
      %290 = vdwg.mxu0
      %v294 = vsel %vm246, %v213, 0
      %296 = vmatprep.subr.bf16.mxu0 0
      %297 = vmatpush1.bf16.msra.mxu0 0
      %298 = vmatprep.subr.bf16.mxu0 0
      %299 = vmatpush1.bf16.msra.mxu0 0
      %300 = vmatprep.subr.bf16.mxu0 0
      %301 = vmatpush1.bf16.msra.mxu0 0
      %302 = vmatprep.subr.bf16.mxu0 0
      %303 = vmatpush1.bf16.msra.mxu0 0
      %304 = vmatprep.subr.bf16.mxu0 0
      %305 = vmatpush1.bf16.msra.mxu0 0
      %306 = vmatprep.subr.bf16.mxu0 0
      %307 = vmatpush1.bf16.msra.mxu0 0
      %308 = vmatprep.subr.bf16.mxu0 0
      %309 = vmatpush1.bf16.msra.mxu0 0
      %310 = vmatprep.subr.bf16.mxu0 %v233
      %311 = vmatpush1.bf16.msra.mxu0 %v232
      %312 = vmatprep.subr.bf16.mxu0 0
      %313 = vmatpush2.bf16.msra.mxu0 0
      %314 = vmatprep.subr.bf16.mxu0 0
      %315 = vmatpush2.bf16.msra.mxu0 0
      %316 = vmatprep.subr.bf16.mxu0 0
      %317 = vmatpush2.bf16.msra.mxu0 0
      %318 = vmatprep.subr.bf16.mxu0 0
      %319 = vmatpush2.bf16.msra.mxu0 0
      %320 = vmatprep.subr.bf16.mxu0 0
      %321 = vmatpush2.bf16.msra.mxu0 0
      %322 = vmatprep.subr.bf16.mxu0 0
      %323 = vmatpush2.bf16.msra.mxu0 0
      %324 = vmatprep.subr.bf16.mxu0 0
      %325 = vmatpush2.bf16.msra.mxu0 0
      %326 = vmatprep.subr.bf16.mxu0 0
      %327 = vmatpush2.bf16.msra.mxu0 0
      %328 = vmatprep.mubr.bf16.mxu0 0
      %329 = vmatmul.mubr.bf16.gmra.mxu0 %v294
      %v330 = vpop.f32.mrf.mxu0
      %v331 = vadd.f32 %v285, %v330
      %v332 = vpop.f32.mrf.mxu0
      %v333 = vadd.f32 %v287, %v332
      %v334 = vpop.f32.mrf.mxu0
      %v335 = vpop.f32.mrf.mxu0
      %336 = vdwg.mxu0
      %337 = vrot.lane.b32.xlu0 %v232, 126
      %v338 = vpop.permute.xlu0 %337
      %339 = vrot.lane.b32.xlu0 %v233, 126
      %v340 = vpop.permute.xlu0 %339
      %341 = vrot.lane.b32.xlu0 %v234, 126
      %v342 = vpop.permute.xlu0 %341
      %vm343 = vcmask 1031168
      %v344 = vsel %vm343, %v338, %v340
      %v345 = vsel %vm343, %v340, %v342
      %v349 = vsel %vm246, %v215, 0
      %351 = vmatprep.subr.bf16.mxu0 0
      %352 = vmatpush1.bf16.msra.mxu0 0
      %353 = vmatprep.subr.bf16.mxu0 0
      %354 = vmatpush1.bf16.msra.mxu0 0
      %355 = vmatprep.subr.bf16.mxu0 0
      %356 = vmatpush1.bf16.msra.mxu0 0
      %357 = vmatprep.subr.bf16.mxu0 0
      %358 = vmatpush1.bf16.msra.mxu0 0
      %359 = vmatprep.subr.bf16.mxu0 0
      %360 = vmatpush1.bf16.msra.mxu0 0
      %361 = vmatprep.subr.bf16.mxu0 0
      %362 = vmatpush1.bf16.msra.mxu0 0
      %363 = vmatprep.subr.bf16.mxu0 0
      %364 = vmatpush1.bf16.msra.mxu0 0
      %365 = vmatprep.subr.bf16.mxu0 %v345
      %366 = vmatpush1.bf16.msra.mxu0 %v344
      %367 = vmatprep.subr.bf16.mxu0 0
      %368 = vmatpush2.bf16.msra.mxu0 0
      %369 = vmatprep.subr.bf16.mxu0 0
      %370 = vmatpush2.bf16.msra.mxu0 0
      %371 = vmatprep.subr.bf16.mxu0 0
      %372 = vmatpush2.bf16.msra.mxu0 0
      %373 = vmatprep.subr.bf16.mxu0 0
      %374 = vmatpush2.bf16.msra.mxu0 0
      %375 = vmatprep.subr.bf16.mxu0 0
      %376 = vmatpush2.bf16.msra.mxu0 0
      %377 = vmatprep.subr.bf16.mxu0 0
      %378 = vmatpush2.bf16.msra.mxu0 0
      %379 = vmatprep.subr.bf16.mxu0 0
      %380 = vmatpush2.bf16.msra.mxu0 0
      %381 = vmatprep.subr.bf16.mxu0 0
      %382 = vmatpush2.bf16.msra.mxu0 0
      %383 = vmatprep.mubr.bf16.mxu0 0
      %384 = vmatmul.mubr.bf16.gmra.mxu0 %v349
      %v385 = vpop.f32.mrf.mxu0
      %v386 = vadd.f32 0.0, %v385
      %v387 = vpop.f32.mrf.mxu0
      %v388 = vadd.f32 0.0, %v387
      %v389 = vpop.f32.mrf.mxu0
      %v390 = vpop.f32.mrf.mxu0
      %391 = vdwg.mxu0
      %v392 = vadd.f32 %v331, %v386
      %v393 = vadd.f32 %v333, %v388
      %394 = vrot.lane.b32.xlu0 %v232, 110
      %v395 = vpop.permute.xlu0 %394
      %396 = vrot.lane.b32.xlu0 %v233, 110
      %v397 = vpop.permute.xlu0 %396
      %398 = vrot.lane.b32.xlu0 %v234, 110
      %v399 = vpop.permute.xlu0 %398
      %vm400 = vcmask 900096
      %v401 = vsel %vm400, %v395, %v397
      %v402 = vsel %vm400, %v397, %v399
      %v406 = vsel %vm246, %v216, 0
      %408 = vmatprep.subr.bf16.mxu0 0
      %409 = vmatpush1.bf16.msra.mxu0 0
      %410 = vmatprep.subr.bf16.mxu0 0
      %411 = vmatpush1.bf16.msra.mxu0 0
      %412 = vmatprep.subr.bf16.mxu0 0
      %413 = vmatpush1.bf16.msra.mxu0 0
      %414 = vmatprep.subr.bf16.mxu0 0
      %415 = vmatpush1.bf16.msra.mxu0 0
      %416 = vmatprep.subr.bf16.mxu0 0
      %417 = vmatpush1.bf16.msra.mxu0 0
      %418 = vmatprep.subr.bf16.mxu0 0
      %419 = vmatpush1.bf16.msra.mxu0 0
      %420 = vmatprep.subr.bf16.mxu0 0
      %421 = vmatpush1.bf16.msra.mxu0 0
      %422 = vmatprep.subr.bf16.mxu0 %v402
      %423 = vmatpush1.bf16.msra.mxu0 %v401
      %424 = vmatprep.subr.bf16.mxu0 0
      %425 = vmatpush2.bf16.msra.mxu0 0
      %426 = vmatprep.subr.bf16.mxu0 0
      %427 = vmatpush2.bf16.msra.mxu0 0
      %428 = vmatprep.subr.bf16.mxu0 0
      %429 = vmatpush2.bf16.msra.mxu0 0
      %430 = vmatprep.subr.bf16.mxu0 0
      %431 = vmatpush2.bf16.msra.mxu0 0
      %432 = vmatprep.subr.bf16.mxu0 0
      %433 = vmatpush2.bf16.msra.mxu0 0
      %434 = vmatprep.subr.bf16.mxu0 0
      %435 = vmatpush2.bf16.msra.mxu0 0
      %436 = vmatprep.subr.bf16.mxu0 0
      %437 = vmatpush2.bf16.msra.mxu0 0
      %438 = vmatprep.subr.bf16.mxu0 0
      %439 = vmatpush2.bf16.msra.mxu0 0
      %440 = vmatprep.mubr.bf16.mxu0 0
      %441 = vmatmul.mubr.bf16.gmra.mxu0 %v406
      %v442 = vpop.f32.mrf.mxu0
      %v443 = vadd.f32 0.0, %v442
      %v444 = vpop.f32.mrf.mxu0
      %v445 = vadd.f32 0.0, %v444
      %v446 = vpop.f32.mrf.mxu0
      %v447 = vpop.f32.mrf.mxu0
      %448 = vdwg.mxu0
      %v449 = vadd.f32 %v392, %v443
      %v450 = vadd.f32 %v393, %v445
      %451 = vrot.lane.b32.xlu0 %v232, 109
      %v452 = vpop.permute.xlu0 %451
      %453 = vrot.lane.b32.xlu0 %v233, 109
      %v454 = vpop.permute.xlu0 %453
      %455 = vrot.lane.b32.xlu0 %v234, 109
      %v456 = vpop.permute.xlu0 %455
      %vm457 = vcmask 891904
      %v458 = vsel %vm457, %v452, %v454
      %v459 = vsel %vm457, %v454, %v456
      %v463 = vsel %vm246, %v217, 0
      %465 = vmatprep.subr.bf16.mxu0 0
      %466 = vmatpush1.bf16.msra.mxu0 0
      %467 = vmatprep.subr.bf16.mxu0 0
      %468 = vmatpush1.bf16.msra.mxu0 0
      %469 = vmatprep.subr.bf16.mxu0 0
      %470 = vmatpush1.bf16.msra.mxu0 0
      %471 = vmatprep.subr.bf16.mxu0 0
      %472 = vmatpush1.bf16.msra.mxu0 0
      %473 = vmatprep.subr.bf16.mxu0 0
      %474 = vmatpush1.bf16.msra.mxu0 0
      %475 = vmatprep.subr.bf16.mxu0 0
      %476 = vmatpush1.bf16.msra.mxu0 0
      %477 = vmatprep.subr.bf16.mxu0 0
      %478 = vmatpush1.bf16.msra.mxu0 0
      %479 = vmatprep.subr.bf16.mxu0 %v459
      %480 = vmatpush1.bf16.msra.mxu0 %v458
      %481 = vmatprep.subr.bf16.mxu0 0
      %482 = vmatpush2.bf16.msra.mxu0 0
      %483 = vmatprep.subr.bf16.mxu0 0
      %484 = vmatpush2.bf16.msra.mxu0 0
      %485 = vmatprep.subr.bf16.mxu0 0
      %486 = vmatpush2.bf16.msra.mxu0 0
      %487 = vmatprep.subr.bf16.mxu0 0
      %488 = vmatpush2.bf16.msra.mxu0 0
      %489 = vmatprep.subr.bf16.mxu0 0
      %490 = vmatpush2.bf16.msra.mxu0 0
      %491 = vmatprep.subr.bf16.mxu0 0
      %492 = vmatpush2.bf16.msra.mxu0 0
      %493 = vmatprep.subr.bf16.mxu0 0
      %494 = vmatpush2.bf16.msra.mxu0 0
      %495 = vmatprep.subr.bf16.mxu0 0
      %496 = vmatpush2.bf16.msra.mxu0 0
      %497 = vmatprep.mubr.bf16.mxu0 0
      %498 = vmatmul.mubr.bf16.gmra.mxu0 %v463
      %v499 = vpop.f32.mrf.mxu0
      %v500 = vadd.f32 0.0, %v499
      %v501 = vpop.f32.mrf.mxu0
      %v502 = vadd.f32 0.0, %v501
      %v503 = vpop.f32.mrf.mxu0
      %v504 = vpop.f32.mrf.mxu0
      %505 = vdwg.mxu0
      %v506 = vadd.f32 %v449, %v500
      %v507 = vadd.f32 %v450, %v502
      %508 = vrot.lane.b32.xlu0 %v232, 108
      %v509 = vpop.permute.xlu0 %508
      %510 = vrot.lane.b32.xlu0 %v233, 108
      %v511 = vpop.permute.xlu0 %510
      %512 = vrot.lane.b32.xlu0 %v234, 108
      %v513 = vpop.permute.xlu0 %512
      %vm514 = vcmask 883712
      %v515 = vsel %vm514, %v509, %v511
      %v516 = vsel %vm514, %v511, %v513
      %v520 = vsel %vm246, %v218, 0
      %522 = vmatprep.subr.bf16.mxu0 0
      %523 = vmatpush1.bf16.msra.mxu0 0
      %524 = vmatprep.subr.bf16.mxu0 0
      %525 = vmatpush1.bf16.msra.mxu0 0
      %526 = vmatprep.subr.bf16.mxu0 0
      %527 = vmatpush1.bf16.msra.mxu0 0
      %528 = vmatprep.subr.bf16.mxu0 0
      %529 = vmatpush1.bf16.msra.mxu0 0
      %530 = vmatprep.subr.bf16.mxu0 0
      %531 = vmatpush1.bf16.msra.mxu0 0
      %532 = vmatprep.subr.bf16.mxu0 0
      %533 = vmatpush1.bf16.msra.mxu0 0
      %534 = vmatprep.subr.bf16.mxu0 0
      %535 = vmatpush1.bf16.msra.mxu0 0
      %536 = vmatprep.subr.bf16.mxu0 %v516
      %537 = vmatpush1.bf16.msra.mxu0 %v515
      %538 = vmatprep.subr.bf16.mxu0 0
      %539 = vmatpush2.bf16.msra.mxu0 0
      %540 = vmatprep.subr.bf16.mxu0 0
      %541 = vmatpush2.bf16.msra.mxu0 0
      %542 = vmatprep.subr.bf16.mxu0 0
      %543 = vmatpush2.bf16.msra.mxu0 0
      %544 = vmatprep.subr.bf16.mxu0 0
      %545 = vmatpush2.bf16.msra.mxu0 0
      %546 = vmatprep.subr.bf16.mxu0 0
      %547 = vmatpush2.bf16.msra.mxu0 0
      %548 = vmatprep.subr.bf16.mxu0 0
      %549 = vmatpush2.bf16.msra.mxu0 0
      %550 = vmatprep.subr.bf16.mxu0 0
      %551 = vmatpush2.bf16.msra.mxu0 0
      %552 = vmatprep.subr.bf16.mxu0 0
      %553 = vmatpush2.bf16.msra.mxu0 0
      %554 = vmatprep.mubr.bf16.mxu0 0
      %555 = vmatmul.mubr.bf16.gmra.mxu0 %v520
      %v556 = vpop.f32.mrf.mxu0
      %v557 = vadd.f32 0.0, %v556
      %v558 = vpop.f32.mrf.mxu0
      %v559 = vadd.f32 0.0, %v558
      %v560 = vpop.f32.mrf.mxu0
      %v561 = vpop.f32.mrf.mxu0
      %562 = vdwg.mxu0
      %v563 = vadd.f32 %v506, %v557
      %v564 = vadd.f32 %v507, %v559
      %565 = vrot.lane.b32.xlu0 %v232, 92
      %v566 = vpop.permute.xlu0 %565
      %567 = vrot.lane.b32.xlu0 %v233, 92
      %v568 = vpop.permute.xlu0 %567
      %569 = vrot.lane.b32.xlu0 %v234, 92
      %v570 = vpop.permute.xlu0 %569
      %vm571 = vcmask 752640
      %v572 = vsel %vm571, %v566, %v568
      %v573 = vsel %vm571, %v568, %v570
      %v577 = vsel %vm246, %v219, 0
      %579 = vmatprep.subr.bf16.mxu0 0
      %580 = vmatpush1.bf16.msra.mxu0 0
      %581 = vmatprep.subr.bf16.mxu0 0
      %582 = vmatpush1.bf16.msra.mxu0 0
      %583 = vmatprep.subr.bf16.mxu0 0
      %584 = vmatpush1.bf16.msra.mxu0 0
      %585 = vmatprep.subr.bf16.mxu0 0
      %586 = vmatpush1.bf16.msra.mxu0 0
      %587 = vmatprep.subr.bf16.mxu0 0
      %588 = vmatpush1.bf16.msra.mxu0 0
      %589 = vmatprep.subr.bf16.mxu0 0
      %590 = vmatpush1.bf16.msra.mxu0 0
      %591 = vmatprep.subr.bf16.mxu0 0
      %592 = vmatpush1.bf16.msra.mxu0 0
      %593 = vmatprep.subr.bf16.mxu0 %v573
      %594 = vmatpush1.bf16.msra.mxu0 %v572
      %595 = vmatprep.subr.bf16.mxu0 0
      %596 = vmatpush2.bf16.msra.mxu0 0
      %597 = vmatprep.subr.bf16.mxu0 0
      %598 = vmatpush2.bf16.msra.mxu0 0
      %599 = vmatprep.subr.bf16.mxu0 0
      %600 = vmatpush2.bf16.msra.mxu0 0
      %601 = vmatprep.subr.bf16.mxu0 0
      %602 = vmatpush2.bf16.msra.mxu0 0
      %603 = vmatprep.subr.bf16.mxu0 0
      %604 = vmatpush2.bf16.msra.mxu0 0
      %605 = vmatprep.subr.bf16.mxu0 0
      %606 = vmatpush2.bf16.msra.mxu0 0
      %607 = vmatprep.subr.bf16.mxu0 0
      %608 = vmatpush2.bf16.msra.mxu0 0
      %609 = vmatprep.subr.bf16.mxu0 0
      %610 = vmatpush2.bf16.msra.mxu0 0
      %611 = vmatprep.mubr.bf16.mxu0 0
      %612 = vmatmul.mubr.bf16.gmra.mxu0 %v577
      %v613 = vpop.f32.mrf.mxu0
      %v614 = vadd.f32 0.0, %v613
      %v615 = vpop.f32.mrf.mxu0
      %v616 = vadd.f32 0.0, %v615
      %v617 = vpop.f32.mrf.mxu0
      %v618 = vpop.f32.mrf.mxu0
      %619 = vdwg.mxu0
      %v620 = vadd.f32 %v563, %v614
      %v621 = vadd.f32 %v564, %v616
      %622 = vrot.lane.b32.xlu0 %v232, 91
      %v623 = vpop.permute.xlu0 %622
      %624 = vrot.lane.b32.xlu0 %v233, 91
      %v625 = vpop.permute.xlu0 %624
      %626 = vrot.lane.b32.xlu0 %v234, 91
      %v627 = vpop.permute.xlu0 %626
      %vm628 = vcmask 744448
      %v629 = vsel %vm628, %v623, %v625
      %v630 = vsel %vm628, %v625, %v627
      %v634 = vsel %vm246, %v220, 0
      %636 = vmatprep.subr.bf16.mxu0 0
      %637 = vmatpush1.bf16.msra.mxu0 0
      %638 = vmatprep.subr.bf16.mxu0 0
      %639 = vmatpush1.bf16.msra.mxu0 0
      %640 = vmatprep.subr.bf16.mxu0 0
      %641 = vmatpush1.bf16.msra.mxu0 0
      %642 = vmatprep.subr.bf16.mxu0 0
      %643 = vmatpush1.bf16.msra.mxu0 0
      %644 = vmatprep.subr.bf16.mxu0 0
      %645 = vmatpush1.bf16.msra.mxu0 0
      %646 = vmatprep.subr.bf16.mxu0 0
      %647 = vmatpush1.bf16.msra.mxu0 0
      %648 = vmatprep.subr.bf16.mxu0 0
      %649 = vmatpush1.bf16.msra.mxu0 0
      %650 = vmatprep.subr.bf16.mxu0 %v630
      %651 = vmatpush1.bf16.msra.mxu0 %v629
      %652 = vmatprep.subr.bf16.mxu0 0
      %653 = vmatpush2.bf16.msra.mxu0 0
      %654 = vmatprep.subr.bf16.mxu0 0
      %655 = vmatpush2.bf16.msra.mxu0 0
      %656 = vmatprep.subr.bf16.mxu0 0
      %657 = vmatpush2.bf16.msra.mxu0 0
      %658 = vmatprep.subr.bf16.mxu0 0
      %659 = vmatpush2.bf16.msra.mxu0 0
      %660 = vmatprep.subr.bf16.mxu0 0
      %661 = vmatpush2.bf16.msra.mxu0 0
      %662 = vmatprep.subr.bf16.mxu0 0
      %663 = vmatpush2.bf16.msra.mxu0 0
      %664 = vmatprep.subr.bf16.mxu0 0
      %665 = vmatpush2.bf16.msra.mxu0 0
      %666 = vmatprep.subr.bf16.mxu0 0
      %667 = vmatpush2.bf16.msra.mxu0 0
      %668 = vmatprep.mubr.bf16.mxu0 0
      %669 = vmatmul.mubr.bf16.gmra.mxu0 %v634
      %v670 = vpop.f32.mrf.mxu0
      %v671 = vadd.f32 0.0, %v670
      %v672 = vpop.f32.mrf.mxu0
      %v673 = vadd.f32 0.0, %v672
      %v674 = vpop.f32.mrf.mxu0
      %v675 = vpop.f32.mrf.mxu0
      %676 = vdwg.mxu0
      %v677 = vadd.f32 %v620, %v671
      %v678 = vadd.f32 %v621, %v673
      %679 = vrot.lane.b32.xlu0 %v232, 90
      %v680 = vpop.permute.xlu0 %679
      %681 = vrot.lane.b32.xlu0 %v233, 90
      %v682 = vpop.permute.xlu0 %681
      %683 = vrot.lane.b32.xlu0 %v234, 90
      %v684 = vpop.permute.xlu0 %683
      %vm685 = vcmask 736256
      %v686 = vsel %vm685, %v680, %v682
      %v687 = vsel %vm685, %v682, %v684
      %v691 = vsel %vm246, %v221, 0
      %693 = vmatprep.subr.bf16.mxu0 0
      %694 = vmatpush1.bf16.msra.mxu0 0
      %695 = vmatprep.subr.bf16.mxu0 0
      %696 = vmatpush1.bf16.msra.mxu0 0
      %697 = vmatprep.subr.bf16.mxu0 0
      %698 = vmatpush1.bf16.msra.mxu0 0
      %699 = vmatprep.subr.bf16.mxu0 0
      %700 = vmatpush1.bf16.msra.mxu0 0
      %701 = vmatprep.subr.bf16.mxu0 0
      %702 = vmatpush1.bf16.msra.mxu0 0
      %703 = vmatprep.subr.bf16.mxu0 0
      %704 = vmatpush1.bf16.msra.mxu0 0
      %705 = vmatprep.subr.bf16.mxu0 0
      %706 = vmatpush1.bf16.msra.mxu0 0
      %707 = vmatprep.subr.bf16.mxu0 %v687
      %708 = vmatpush1.bf16.msra.mxu0 %v686
      %709 = vmatprep.subr.bf16.mxu0 0
      %710 = vmatpush2.bf16.msra.mxu0 0
      %711 = vmatprep.subr.bf16.mxu0 0
      %712 = vmatpush2.bf16.msra.mxu0 0
      %713 = vmatprep.subr.bf16.mxu0 0
      %714 = vmatpush2.bf16.msra.mxu0 0
      %715 = vmatprep.subr.bf16.mxu0 0
      %716 = vmatpush2.bf16.msra.mxu0 0
      %717 = vmatprep.subr.bf16.mxu0 0
      %718 = vmatpush2.bf16.msra.mxu0 0
      %719 = vmatprep.subr.bf16.mxu0 0
      %720 = vmatpush2.bf16.msra.mxu0 0
      %721 = vmatprep.subr.bf16.mxu0 0
      %722 = vmatpush2.bf16.msra.mxu0 0
      %723 = vmatprep.subr.bf16.mxu0 0
      %724 = vmatpush2.bf16.msra.mxu0 0
      %725 = vmatprep.mubr.bf16.mxu0 0
      %726 = vmatmul.mubr.bf16.gmra.mxu0 %v691
      %v727 = vpop.f32.mrf.mxu0
      %v728 = vadd.f32 0.0, %v727
      %v729 = vpop.f32.mrf.mxu0
      %v730 = vadd.f32 0.0, %v729
      %v731 = vpop.f32.mrf.mxu0
      %v732 = vpop.f32.mrf.mxu0
      %733 = vdwg.mxu0
      %v734 = vadd.f32 %v677, %v728
      %v735 = vadd.f32 %v678, %v730
      %v736 = vld [vmem:[%s2] sm:$0xff]
      %738 = vset.pattern.permute.xlu0 0
      %739 = vperm.xlu0 %738, %v736
      %v740 = vpop.permute.xlu0 %739
      %v742 = vmul.f32 %v734, %v740
      %v743 = vmul.f32 %v735, %v740
      %744 = vset.pattern.permute.xlu0 1
      %745 = vperm.xlu0 %744, %v736
      %v746 = vpop.permute.xlu0 %745
      %v748 = vadd.f32 %v742, %v746
      %v749 = vadd.f32 %v743, %v746
      %v750 = vmax.f32 %v748, 0.0
      %v751 = vmax.f32 %v749, 0.0
      %v752 = vpack.c.bf16 %v750, %v750
      %v753 = vpack.c.bf16 %v751, %v751
      %v756 = vunpack.c.l.b16 %v752
      %v757 = vunpack.c.l.b16 %v753
      %v758 = vpack.c.b16 %v757, %v756
      %760 = vst [vmem:[%s206] sm:$0xff] %v758
      %s761 = smul.u32 2, %s19
      %p762 = scmp.lt.s32.totalorder %s18, 1
      %s763 = scalar_select %p762, %s18, 1
      %p764 = scmp.lt.s32.totalorder %s761, 3
      %s765 = scalar_select %p764, %s761, 3
      %s766 = smul.addr %s763, 4
      %s767 = sadd.s32 %s765, %s766
      %s768 = smul.addr %s767, 4
      %s769 = scalar_lea.vmem %s3, %s768
      // Predicated region
      $region33: #{rsu4_forward.9} parent=31 // pred_check
        %p770 = pneg %p116
      $region34: #{rsu4_forward.9} parent=31 // pred_check_branch
        %772 = sbr.rel (%p770) target = $region36
      $region35: #{rsu4_forward.9} parent=31 // pred_region
        %s773 = smul.u32 2, %s19
      $region36: #{rsu4_forward.9} parent=31 // pred_fallthru
        _
    $region32: #{rsu4_forward.9} parent=5 // pred_fallthru
      _
    %p774 = scmp.le.s32.totalorder 2, %s9
    // Predicated region
    $region37: #{rsu4_forward.9} parent=5 // pred_check
      %p775 = pneg %p774
    $region38: #{rsu4_forward.9} parent=5 // pred_check_branch
      %777 = sbr.rel (%p775) target = $region40
    $region39: #{rsu4_forward.9} parent=5 // pred_region
      %s778 = ssub.s32 %s9, 2
      // Predicated region
      $region41: #{rsu4_forward.9} parent=39 // pred_check
        %p779 = pneg %p122
      $region42: #{rsu4_forward.9} parent=39 // pred_check_branch
        %781 = sbr.rel (%p779) target = $region44
      $region43: #{rsu4_forward.9} parent=39 // pred_region
        %s782 = smul.u32 2, %s21
        %p783 = scmp.lt.s32.totalorder %s20, 1
        %s784 = scalar_select %p783, %s20, 1
        %p785 = scmp.lt.s32.totalorder %s782, 3
        %s786 = scalar_select %p785, %s782, 3
        %s787 = smul.addr %s784, 4
        %s788 = sadd.s32 %s786, %s787
        %s789 = smul.addr %s788, 4
        %s790 = scalar_lea.vmem %s3, %s789
      $region44: #{rsu4_forward.9} parent=39 // pred_fallthru
        _
    $region40: #{rsu4_forward.9} parent=5 // pred_fallthru
      _
  $region6: #{rsu4_forward.9} parent=0 // loop_footer
    %s13 = sadd.s32 1, %s9
  $region7: #{rsu4_forward.9} parent=0 // loop_footer_branch
    %8 = sbr.rel target = $region3
  $region8: #{rsu4_forward.9} parent=0 // loop_exit
    _

// kernel: rsu4_forward.10
$region0: #{rsu4_forward.10}
  #allocation0 [shape = 'u32[]', space=smem, size = 0x4, offset = 0x4, fixed_abs, tag = 'smem constant byte address 0x4 - core index']
  #allocation1 [shape = 'u32[144,128]{1,0:T(1,128)}', space=vmem, size = 0x12000, scoped, tag = 'internal scratch']
  %s0 = inlined_call_operand.vmem [shape: bf16[2,1,16,150], index: 0, kind: input, shape index: {}]
  %s1 = inlined_call_operand.vmem [shape: bf16[9,8,16], index: 1, kind: input, shape index: {}]
  %s2 = inlined_call_operand.vmem [shape: f32[8,2], index: 2, kind: input, shape index: {}]
  %s3 = inlined_call_operand.vmem [shape: bf16[2,8,128], index: 3, kind: output, shape index: {}]
  %s4 = sld [smem:[#allocation0]]
  $region45: #{rsu4_forward.10} parent=0
    _
  %s6 = ssub.s32 1, %s4
  %s7 = scalar_select 0, %s6, %s4
  loop: start=0, step=1, limit=4
  $region2: #{rsu4_forward.10} parent=0 // loop_pre_header
    _
  $region3: #{rsu4_forward.10} parent=0 // loop_header
    %s9 = sphi 0, %s13
    %p10 = scmp.ge.s32.totalorder %s9, 4
    %s16 = sphi 0, %s28
    %s17 = sphi 0, %s24
    %s18 = sphi 0, %s16
    %s19 = sphi 0, %s17
    %s20 = sphi 0, %s18
    %s21 = sphi 0, %s19
    %s33 = sphi 0, %s35
    %s36 = sphi 0, %s33
    %s37 = sphi 0, %s36
    %s53 = sphi 0, %s37
    %s57 = sphi 0, %s57
    %s59 = sphi 0, %s57
    %s60 = sphi 0, %s59
    %s74 = sphi 0, %s60
    %s78 = sphi 0, %s78
    %s80 = sphi 0, %s78
    %s81 = sphi 0, %s80
    %s95 = sphi 0, %s81
    %s103 = sphi 0, %s105
    %s106 = sphi 0, %s103
    %s107 = sphi 0, %s106
    %s123 = sphi 0, %s107
  $region4: #{rsu4_forward.10} parent=0 // loop_header_branch
    %12 = sbr.rel (%p10) target = $region8
  $region5: #{rsu4_forward.10} parent=0 // loop_body
    %s14 = ssub.s32 %s9, 1
    %s15 = ssub.s32 %s9, 2
    %s22 = sadd.s32 1, %s17
    %p23 = scmp.ge.s32.totalorder %s22, 1
    %s24 = scalar_select %p23, 0, %s22
    %s25 = sadd.s32 1, %s16
    %s26 = scalar_select %p23, %s25, %s16
    %p27 = scmp.ge.s32.totalorder %s26, 2
    %s28 = scalar_select %p27, 0, %s26
    %s29 = ssub.s32 %s16, %s28
    %s30 = ssub.s32 %s17, %s24
    %s31 = sor.u32 %s29, %s30
    %p32 = scmp.eq.s32.totalorder %s31, 0
    %s34 = sadd.s32 %s33, 1
    %s35 = scalar_select %p32, %s33, %s34
    %p38 = pneg %p32
    %p39 = scmp.eq.s32.totalorder %s9, 1
    %p40 = por %p38, %p39
    %p41 = scmp.ne.s32.totalorder %s33, %s36
    %p42 = scmp.eq.s32.totalorder %s9, 0
    %p43 = por %p41, %p42
    %p44 = scmp.ne.s32.totalorder %s33, %s36
    %p45 = scmp.eq.s32.totalorder %s14, 1
    %p46 = por %p44, %p45
    %p47 = scmp.ne.s32.totalorder %s36, %s37
    %p48 = scmp.eq.s32.totalorder %s14, 0
    %p49 = por %p47, %p48
    %p50 = scmp.ne.s32.totalorder %s36, %s37
    %p51 = scmp.eq.s32.totalorder %s15, 1
    %p52 = por %p50, %p51
    %p54 = scmp.ne.s32.totalorder %s37, %s53
    %p55 = scmp.eq.s32.totalorder %s15, 0
    %p56 = por %p54, %p55
    %s58 = sadd.s32 %s57, 1
    %p61 = scmp.eq.s32.totalorder %s9, 1
    %p62 = scmp.ne.s32.totalorder %s57, %s59
    %p63 = scmp.eq.s32.totalorder %s9, 0
    %p64 = por %p62, %p63
    %p65 = scmp.ne.s32.totalorder %s57, %s59
    %p66 = scmp.eq.s32.totalorder %s14, 1
    %p67 = por %p65, %p66
    %p68 = scmp.ne.s32.totalorder %s59, %s60
    %p69 = scmp.eq.s32.totalorder %s14, 0
    %p70 = por %p68, %p69
    %p71 = scmp.ne.s32.totalorder %s59, %s60
    %p72 = scmp.eq.s32.totalorder %s15, 1
    %p73 = por %p71, %p72
    %p75 = scmp.ne.s32.totalorder %s60, %s74
    %p76 = scmp.eq.s32.totalorder %s15, 0
    %p77 = por %p75, %p76
    %s79 = sadd.s32 %s78, 1
    %p82 = scmp.eq.s32.totalorder %s9, 1
    %p83 = scmp.ne.s32.totalorder %s78, %s80
    %p84 = scmp.eq.s32.totalorder %s9, 0
    %p85 = por %p83, %p84
    %p86 = scmp.ne.s32.totalorder %s78, %s80
    %p87 = scmp.eq.s32.totalorder %s14, 1
    %p88 = por %p86, %p87
    %p89 = scmp.ne.s32.totalorder %s80, %s81
    %p90 = scmp.eq.s32.totalorder %s14, 0
    %p91 = por %p89, %p90
    %p92 = scmp.ne.s32.totalorder %s80, %s81
    %p93 = scmp.eq.s32.totalorder %s15, 1
    %p94 = por %p92, %p93
    %p96 = scmp.ne.s32.totalorder %s81, %s95
    %p97 = scmp.eq.s32.totalorder %s15, 0
    %p98 = por %p96, %p97
    %s99 = ssub.s32 %s16, %s28
    %s100 = ssub.s32 %s17, %s24
    %s101 = sor.u32 %s99, %s100
    %p102 = scmp.eq.s32.totalorder %s101, 0
    %s104 = sadd.s32 %s103, 1
    %s105 = scalar_select %p102, %s103, %s104
    %p108 = pneg %p102
    %p109 = scmp.eq.s32.totalorder %s9, 1
    %p110 = por %p108, %p109
    %p111 = scmp.ne.s32.totalorder %s103, %s106
    %p112 = scmp.eq.s32.totalorder %s9, 0
    %p113 = por %p111, %p112
    %p114 = scmp.ne.s32.totalorder %s103, %s106
    %p115 = scmp.eq.s32.totalorder %s14, 1
    %p116 = por %p114, %p115
    %p117 = scmp.ne.s32.totalorder %s106, %s107
    %p118 = scmp.eq.s32.totalorder %s14, 0
    %p119 = por %p117, %p118
    %p120 = scmp.ne.s32.totalorder %s106, %s107
    %p121 = scmp.eq.s32.totalorder %s15, 1
    %p122 = por %p120, %p121
    %p124 = scmp.ne.s32.totalorder %s107, %s123
    %p125 = scmp.eq.s32.totalorder %s15, 0
    %p126 = por %p124, %p125
    %p127 = scmp.le.s32.totalorder 1, %s9
    %p128 = scmp.lt.s32.totalorder %s9, 3
    %p129 = pnand %p127, %p128
    %p130 = pneg %p129
    // Predicated region
    $region9: #{rsu4_forward.10} parent=5 // pred_check
      _
    $region10: #{rsu4_forward.10} parent=5 // pred_check_branch
      %132 = sbr.rel (%p129) target = $region12
    $region11: #{rsu4_forward.10} parent=5 // pred_region
      %s133 = ssub.s32 %s9, 1
      // Predicated region
      $region13: #{rsu4_forward.10} parent=11 // pred_check
        %p134 = pneg %p70
      $region14: #{rsu4_forward.10} parent=11 // pred_check_branch
        %136 = sbr.rel (%p134) target = $region16
      $region15: #{rsu4_forward.10} parent=11 // pred_region
        _
      $region16: #{rsu4_forward.10} parent=11 // pred_fallthru
        _
      // Predicated region
      $region17: #{rsu4_forward.10} parent=11 // pred_check
        %p137 = pneg %p91
      $region18: #{rsu4_forward.10} parent=11 // pred_check_branch
        %139 = sbr.rel (%p137) target = $region20
      $region19: #{rsu4_forward.10} parent=11 // pred_region
        _
      $region20: #{rsu4_forward.10} parent=11 // pred_fallthru
        _
    $region12: #{rsu4_forward.10} parent=5 // pred_fallthru
      _
    %p140 = scmp.lt.s32.totalorder %s9, 2
    // Predicated region
    $region21: #{rsu4_forward.10} parent=5 // pred_check
      %p141 = pneg %p140
    $region22: #{rsu4_forward.10} parent=5 // pred_check_branch
      %143 = sbr.rel (%p141) target = $region24
    $region23: #{rsu4_forward.10} parent=5 // pred_region
      // Predicated region
      $region25: #{rsu4_forward.10} parent=23 // pred_check
        %p144 = pneg %p43
      $region26: #{rsu4_forward.10} parent=23 // pred_check_branch
        %146 = sbr.rel (%p144) target = $region28
      $region27: #{rsu4_forward.10} parent=23 // pred_region
        %p147 = scmp.lt.s32.totalorder %s16, 1
        %s148 = scalar_select %p147, %s16, 1
        %p149 = scmp.lt.s32.totalorder %s17, 0
        %s150 = scalar_select %p149, %s17, 0
        %s151 = smul.addr %s150, 4
        %s152 = smul.addr %s148, 4
        %s153 = sadd.s32 %s151, %s152
        %s154 = smul.addr %s153, 4
        %s155 = scalar_lea.vmem %s0, %s154
      $region28: #{rsu4_forward.10} parent=23 // pred_fallthru
        _
    $region24: #{rsu4_forward.10} parent=5 // pred_fallthru
      _
    %p156 = scmp.le.s32.totalorder 1, %s9
    %p157 = scmp.lt.s32.totalorder %s9, 3
    %p158 = pnand %p156, %p157
    %p159 = pneg %p158
    // Predicated region
    $region29: #{rsu4_forward.10} parent=5 // pred_check
      _
    $region30: #{rsu4_forward.10} parent=5 // pred_check_branch
      %161 = sbr.rel (%p158) target = $region32
    $region31: #{rsu4_forward.10} parent=5 // pred_region
      %s162 = ssub.s32 %s9, 1
      %p163 = scmp.lt.s32.totalorder %s18, 1
      %s164 = scalar_select %p163, %s18, 1
      %p165 = scmp.lt.s32.totalorder %s19, 0
      %s166 = scalar_select %p165, %s19, 0
      %s167 = smul.addr %s166, 4
      %s168 = smul.addr %s164, 4
      %s169 = sadd.s32 %s167, %s168
      %s170 = smul.addr %s169, 4
      %s171 = scalar_lea.vmem %s0, %s170
      %p172 = pneg %p49
      %p173 = pneg %p46
      %p174 = pneg %p70
      %p175 = pneg %p67
      %p176 = pneg %p91
      %p177 = pneg %p88
      %p178 = pneg %p119
      %p179 = pneg %p116
      %p180 = scmp.lt.s32.totalorder %s18, 1
      %s181 = scalar_select %p180, %s18, 1
      %p182 = scmp.lt.s32.totalorder %s19, 0
      %s183 = scalar_select %p182, %s19, 0
      %s184 = sadd.s32 %s183, %s181
      %s185 = smul.addr %s184, 4
      %s186 = scalar_lea.vmem %s3, %s185
      %p187 = scmp.lt.s32.totalorder %s18, 1
      %s188 = scalar_select %p187, %s18, 1
      %p189 = scmp.lt.s32.totalorder %s19, 0
      %s190 = scalar_select %p189, %s19, 0
      %s191 = smul.addr %s190, 4
      %s192 = smul.addr %s188, 4
      %s193 = sadd.s32 %s191, %s192
      %s194 = smul.addr %s193, 4
      %s195 = scalar_lea.vmem %s0, %s194
      %p196 = scmp.lt.s32.totalorder %s18, 1
      %s197 = scalar_select %p196, %s18, 1
      %p198 = scmp.lt.s32.totalorder %s19, 0
      %s199 = scalar_select %p198, %s19, 0
      %s200 = sadd.s32 %s199, %s197
      %s201 = smul.addr %s200, 4
      %s202 = scalar_lea.vmem %s3, %s201
      %v204 = vld [vmem:[%s195] sm:$0xff]
      %v205 = vld [vmem:[%s195 + $0x8] sm:$0xff]
      %v206 = vld [vmem:[%s1] sm:$0xf]
      %v207 = vld [vmem:[%s1 + $0x4] sm:$0xf]
      %v208 = vld [vmem:[%s1 + $0x8] sm:$0xf]
      %v209 = vld [vmem:[%s1 + $0xc] sm:$0xf]
      %v210 = vld [vmem:[%s1 + $0x10] sm:$0xf]
      %v211 = vld [vmem:[%s1 + $0x14] sm:$0xf]
      %v212 = vld [vmem:[%s1 + $0x18] sm:$0xf]
      %v213 = vld [vmem:[%s1 + $0x1c] sm:$0xf]
      %v214 = vld [vmem:[%s1 + $0x20] sm:$0xf]
      %v217 = vunpack.c.l.b16 %v204
      %v218 = vunpack.c.h.b16 %v204
      %v219 = vunpack.c.l.b16 %v205
      %v220 = vunpack.c.h.b16 %v205
      %v221 = vpack.c.b16 %v219, %v217
      %v222 = vpack.c.b16 %v220, %v218
      %223 = vrot.lane.b32.xlu0 %v221, 127
      %v224 = vpop.permute.xlu0 %223
      %225 = vrot.lane.b32.xlu0 %v222, 127
      %v226 = vpop.permute.xlu0 %225
      %vm227 = vcmask 1039360
      %v228 = vsel %vm227, %v224, %v226
      %vm230 = vcmask 130048
      %v232 = vsel %vm230, %v207, 0
      %234 = vmatprep.subr.bf16.mxu0 0
      %235 = vmatpush1.bf16.msra.mxu0 0
      %236 = vmatprep.subr.bf16.mxu0 0
      %237 = vmatpush1.bf16.msra.mxu0 0
      %238 = vmatprep.subr.bf16.mxu0 0
      %239 = vmatpush1.bf16.msra.mxu0 0
      %240 = vmatprep.subr.bf16.mxu0 0
      %241 = vmatpush1.bf16.msra.mxu0 0
      %242 = vmatprep.subr.bf16.mxu0 0
      %243 = vmatpush1.bf16.msra.mxu0 0
      %244 = vmatprep.subr.bf16.mxu0 0
      %245 = vmatpush1.bf16.msra.mxu0 0
      %246 = vmatprep.subr.bf16.mxu0 0
      %247 = vmatpush1.bf16.msra.mxu0 0
      %248 = vmatprep.subr.bf16.mxu0 0
      %249 = vmatpush1.bf16.msra.mxu0 %v228
      %250 = vmatprep.subr.bf16.mxu0 0
      %251 = vmatpush2.bf16.msra.mxu0 0
      %252 = vmatprep.subr.bf16.mxu0 0
      %253 = vmatpush2.bf16.msra.mxu0 0
      %254 = vmatprep.subr.bf16.mxu0 0
      %255 = vmatpush2.bf16.msra.mxu0 0
      %256 = vmatprep.subr.bf16.mxu0 0
      %257 = vmatpush2.bf16.msra.mxu0 0
      %258 = vmatprep.subr.bf16.mxu0 0
      %259 = vmatpush2.bf16.msra.mxu0 0
      %260 = vmatprep.subr.bf16.mxu0 0
      %261 = vmatpush2.bf16.msra.mxu0 0
      %262 = vmatprep.subr.bf16.mxu0 0
      %263 = vmatpush2.bf16.msra.mxu0 0
      %264 = vmatprep.subr.bf16.mxu0 0
      %265 = vmatpush2.bf16.msra.mxu0 0
      %266 = vmatprep.mubr.bf16.mxu0 0
      %267 = vmatmul.mubr.bf16.gmra.mxu0 %v232
      %v268 = vpop.f32.mrf.mxu0
      %v269 = vadd.f32 0.0, %v268
      %v270 = vpop.f32.mrf.mxu0
      %v271 = vpop.f32.mrf.mxu0
      %v272 = vpop.f32.mrf.mxu0
      %273 = vdwg.mxu0
      %v276 = vsel %vm230, %v206, 0
      %278 = vmatprep.subr.bf16.mxu0 0
      %279 = vmatpush1.bf16.msra.mxu0 0
      %280 = vmatprep.subr.bf16.mxu0 0
      %281 = vmatpush1.bf16.msra.mxu0 0
      %282 = vmatprep.subr.bf16.mxu0 0
      %283 = vmatpush1.bf16.msra.mxu0 0
      %284 = vmatprep.subr.bf16.mxu0 0
      %285 = vmatpush1.bf16.msra.mxu0 0
      %286 = vmatprep.subr.bf16.mxu0 0
      %287 = vmatpush1.bf16.msra.mxu0 0
      %288 = vmatprep.subr.bf16.mxu0 0
      %289 = vmatpush1.bf16.msra.mxu0 0
      %290 = vmatprep.subr.bf16.mxu0 0
      %291 = vmatpush1.bf16.msra.mxu0 0
      %292 = vmatprep.subr.bf16.mxu0 0
      %293 = vmatpush1.bf16.msra.mxu0 %v221
      %294 = vmatprep.subr.bf16.mxu0 0
      %295 = vmatpush2.bf16.msra.mxu0 0
      %296 = vmatprep.subr.bf16.mxu0 0
      %297 = vmatpush2.bf16.msra.mxu0 0
      %298 = vmatprep.subr.bf16.mxu0 0
      %299 = vmatpush2.bf16.msra.mxu0 0
      %300 = vmatprep.subr.bf16.mxu0 0
      %301 = vmatpush2.bf16.msra.mxu0 0
      %302 = vmatprep.subr.bf16.mxu0 0
      %303 = vmatpush2.bf16.msra.mxu0 0
      %304 = vmatprep.subr.bf16.mxu0 0
      %305 = vmatpush2.bf16.msra.mxu0 0
      %306 = vmatprep.subr.bf16.mxu0 0
      %307 = vmatpush2.bf16.msra.mxu0 0
      %308 = vmatprep.subr.bf16.mxu0 0
      %309 = vmatpush2.bf16.msra.mxu0 0
      %310 = vmatprep.mubr.bf16.mxu0 0
      %311 = vmatmul.mubr.bf16.gmra.mxu0 %v276
      %v312 = vpop.f32.mrf.mxu0
      %v313 = vadd.f32 %v269, %v312
      %v314 = vpop.f32.mrf.mxu0
      %v315 = vpop.f32.mrf.mxu0
      %v316 = vpop.f32.mrf.mxu0
      %317 = vdwg.mxu0
      %318 = vrot.lane.b32.xlu0 %v221, 126
      %v319 = vpop.permute.xlu0 %318
      %320 = vrot.lane.b32.xlu0 %v222, 126
      %v321 = vpop.permute.xlu0 %320
      %vm322 = vcmask 1031168
      %v323 = vsel %vm322, %v319, %v321
      %v326 = vsel %vm230, %v208, 0
      %328 = vmatprep.subr.bf16.mxu0 0
      %329 = vmatpush1.bf16.msra.mxu0 0
      %330 = vmatprep.subr.bf16.mxu0 0
      %331 = vmatpush1.bf16.msra.mxu0 0
      %332 = vmatprep.subr.bf16.mxu0 0
      %333 = vmatpush1.bf16.msra.mxu0 0
      %334 = vmatprep.subr.bf16.mxu0 0
      %335 = vmatpush1.bf16.msra.mxu0 0
      %336 = vmatprep.subr.bf16.mxu0 0
      %337 = vmatpush1.bf16.msra.mxu0 0
      %338 = vmatprep.subr.bf16.mxu0 0
      %339 = vmatpush1.bf16.msra.mxu0 0
      %340 = vmatprep.subr.bf16.mxu0 0
      %341 = vmatpush1.bf16.msra.mxu0 0
      %342 = vmatprep.subr.bf16.mxu0 0
      %343 = vmatpush1.bf16.msra.mxu0 %v323
      %344 = vmatprep.subr.bf16.mxu0 0
      %345 = vmatpush2.bf16.msra.mxu0 0
      %346 = vmatprep.subr.bf16.mxu0 0
      %347 = vmatpush2.bf16.msra.mxu0 0
      %348 = vmatprep.subr.bf16.mxu0 0
      %349 = vmatpush2.bf16.msra.mxu0 0
      %350 = vmatprep.subr.bf16.mxu0 0
      %351 = vmatpush2.bf16.msra.mxu0 0
      %352 = vmatprep.subr.bf16.mxu0 0
      %353 = vmatpush2.bf16.msra.mxu0 0
      %354 = vmatprep.subr.bf16.mxu0 0
      %355 = vmatpush2.bf16.msra.mxu0 0
      %356 = vmatprep.subr.bf16.mxu0 0
      %357 = vmatpush2.bf16.msra.mxu0 0
      %358 = vmatprep.subr.bf16.mxu0 0
      %359 = vmatpush2.bf16.msra.mxu0 0
      %360 = vmatprep.mubr.bf16.mxu0 0
      %361 = vmatmul.mubr.bf16.gmra.mxu0 %v326
      %v362 = vpop.f32.mrf.mxu0
      %v363 = vadd.f32 0.0, %v362
      %v364 = vpop.f32.mrf.mxu0
      %v365 = vpop.f32.mrf.mxu0
      %v366 = vpop.f32.mrf.mxu0
      %367 = vdwg.mxu0
      %v368 = vadd.f32 %v313, %v363
      %369 = vrot.lane.b32.xlu0 %v221, 118
      %v370 = vpop.permute.xlu0 %369
      %371 = vrot.lane.b32.xlu0 %v222, 118
      %v372 = vpop.permute.xlu0 %371
      %vm373 = vcmask 965632
      %v374 = vsel %vm373, %v370, %v372
      %v377 = vsel %vm230, %v209, 0
      %379 = vmatprep.subr.bf16.mxu0 0
      %380 = vmatpush1.bf16.msra.mxu0 0
      %381 = vmatprep.subr.bf16.mxu0 0
      %382 = vmatpush1.bf16.msra.mxu0 0
      %383 = vmatprep.subr.bf16.mxu0 0
      %384 = vmatpush1.bf16.msra.mxu0 0
      %385 = vmatprep.subr.bf16.mxu0 0
      %386 = vmatpush1.bf16.msra.mxu0 0
      %387 = vmatprep.subr.bf16.mxu0 0
      %388 = vmatpush1.bf16.msra.mxu0 0
      %389 = vmatprep.subr.bf16.mxu0 0
      %390 = vmatpush1.bf16.msra.mxu0 0
      %391 = vmatprep.subr.bf16.mxu0 0
      %392 = vmatpush1.bf16.msra.mxu0 0
      %393 = vmatprep.subr.bf16.mxu0 0
      %394 = vmatpush1.bf16.msra.mxu0 %v374
      %395 = vmatprep.subr.bf16.mxu0 0
      %396 = vmatpush2.bf16.msra.mxu0 0
      %397 = vmatprep.subr.bf16.mxu0 0
      %398 = vmatpush2.bf16.msra.mxu0 0
      %399 = vmatprep.subr.bf16.mxu0 0
      %400 = vmatpush2.bf16.msra.mxu0 0
      %401 = vmatprep.subr.bf16.mxu0 0
      %402 = vmatpush2.bf16.msra.mxu0 0
      %403 = vmatprep.subr.bf16.mxu0 0
      %404 = vmatpush2.bf16.msra.mxu0 0
      %405 = vmatprep.subr.bf16.mxu0 0
      %406 = vmatpush2.bf16.msra.mxu0 0
      %407 = vmatprep.subr.bf16.mxu0 0
      %408 = vmatpush2.bf16.msra.mxu0 0
      %409 = vmatprep.subr.bf16.mxu0 0
      %410 = vmatpush2.bf16.msra.mxu0 0
      %411 = vmatprep.mubr.bf16.mxu0 0
      %412 = vmatmul.mubr.bf16.gmra.mxu0 %v377
      %v413 = vpop.f32.mrf.mxu0
      %v414 = vadd.f32 0.0, %v413
      %v415 = vpop.f32.mrf.mxu0
      %v416 = vpop.f32.mrf.mxu0
      %v417 = vpop.f32.mrf.mxu0
      %418 = vdwg.mxu0
      %v419 = vadd.f32 %v368, %v414
      %420 = vrot.lane.b32.xlu0 %v221, 117
      %v421 = vpop.permute.xlu0 %420
      %422 = vrot.lane.b32.xlu0 %v222, 117
      %v423 = vpop.permute.xlu0 %422
      %vm424 = vcmask 957440
      %v425 = vsel %vm424, %v421, %v423
      %v428 = vsel %vm230, %v210, 0
      %430 = vmatprep.subr.bf16.mxu0 0
      %431 = vmatpush1.bf16.msra.mxu0 0
      %432 = vmatprep.subr.bf16.mxu0 0
      %433 = vmatpush1.bf16.msra.mxu0 0
      %434 = vmatprep.subr.bf16.mxu0 0
      %435 = vmatpush1.bf16.msra.mxu0 0
      %436 = vmatprep.subr.bf16.mxu0 0
      %437 = vmatpush1.bf16.msra.mxu0 0
      %438 = vmatprep.subr.bf16.mxu0 0
      %439 = vmatpush1.bf16.msra.mxu0 0
      %440 = vmatprep.subr.bf16.mxu0 0
      %441 = vmatpush1.bf16.msra.mxu0 0
      %442 = vmatprep.subr.bf16.mxu0 0
      %443 = vmatpush1.bf16.msra.mxu0 0
      %444 = vmatprep.subr.bf16.mxu0 0
      %445 = vmatpush1.bf16.msra.mxu0 %v425
      %446 = vmatprep.subr.bf16.mxu0 0
      %447 = vmatpush2.bf16.msra.mxu0 0
      %448 = vmatprep.subr.bf16.mxu0 0
      %449 = vmatpush2.bf16.msra.mxu0 0
      %450 = vmatprep.subr.bf16.mxu0 0
      %451 = vmatpush2.bf16.msra.mxu0 0
      %452 = vmatprep.subr.bf16.mxu0 0
      %453 = vmatpush2.bf16.msra.mxu0 0
      %454 = vmatprep.subr.bf16.mxu0 0
      %455 = vmatpush2.bf16.msra.mxu0 0
      %456 = vmatprep.subr.bf16.mxu0 0
      %457 = vmatpush2.bf16.msra.mxu0 0
      %458 = vmatprep.subr.bf16.mxu0 0
      %459 = vmatpush2.bf16.msra.mxu0 0
      %460 = vmatprep.subr.bf16.mxu0 0
      %461 = vmatpush2.bf16.msra.mxu0 0
      %462 = vmatprep.mubr.bf16.mxu0 0
      %463 = vmatmul.mubr.bf16.gmra.mxu0 %v428
      %v464 = vpop.f32.mrf.mxu0
      %v465 = vadd.f32 0.0, %v464
      %v466 = vpop.f32.mrf.mxu0
      %v467 = vpop.f32.mrf.mxu0
      %v468 = vpop.f32.mrf.mxu0
      %469 = vdwg.mxu0
      %v470 = vadd.f32 %v419, %v465
      %471 = vrot.lane.b32.xlu0 %v221, 116
      %v472 = vpop.permute.xlu0 %471
      %473 = vrot.lane.b32.xlu0 %v222, 116
      %v474 = vpop.permute.xlu0 %473
      %vm475 = vcmask 949248
      %v476 = vsel %vm475, %v472, %v474
      %v479 = vsel %vm230, %v211, 0
      %481 = vmatprep.subr.bf16.mxu0 0
      %482 = vmatpush1.bf16.msra.mxu0 0
      %483 = vmatprep.subr.bf16.mxu0 0
      %484 = vmatpush1.bf16.msra.mxu0 0
      %485 = vmatprep.subr.bf16.mxu0 0
      %486 = vmatpush1.bf16.msra.mxu0 0
      %487 = vmatprep.subr.bf16.mxu0 0
      %488 = vmatpush1.bf16.msra.mxu0 0
      %489 = vmatprep.subr.bf16.mxu0 0
      %490 = vmatpush1.bf16.msra.mxu0 0
      %491 = vmatprep.subr.bf16.mxu0 0
      %492 = vmatpush1.bf16.msra.mxu0 0
      %493 = vmatprep.subr.bf16.mxu0 0
      %494 = vmatpush1.bf16.msra.mxu0 0
      %495 = vmatprep.subr.bf16.mxu0 0
      %496 = vmatpush1.bf16.msra.mxu0 %v476
      %497 = vmatprep.subr.bf16.mxu0 0
      %498 = vmatpush2.bf16.msra.mxu0 0
      %499 = vmatprep.subr.bf16.mxu0 0
      %500 = vmatpush2.bf16.msra.mxu0 0
      %501 = vmatprep.subr.bf16.mxu0 0
      %502 = vmatpush2.bf16.msra.mxu0 0
      %503 = vmatprep.subr.bf16.mxu0 0
      %504 = vmatpush2.bf16.msra.mxu0 0
      %505 = vmatprep.subr.bf16.mxu0 0
      %506 = vmatpush2.bf16.msra.mxu0 0
      %507 = vmatprep.subr.bf16.mxu0 0
      %508 = vmatpush2.bf16.msra.mxu0 0
      %509 = vmatprep.subr.bf16.mxu0 0
      %510 = vmatpush2.bf16.msra.mxu0 0
      %511 = vmatprep.subr.bf16.mxu0 0
      %512 = vmatpush2.bf16.msra.mxu0 0
      %513 = vmatprep.mubr.bf16.mxu0 0
      %514 = vmatmul.mubr.bf16.gmra.mxu0 %v479
      %v515 = vpop.f32.mrf.mxu0
      %v516 = vadd.f32 0.0, %v515
      %v517 = vpop.f32.mrf.mxu0
      %v518 = vpop.f32.mrf.mxu0
      %v519 = vpop.f32.mrf.mxu0
      %520 = vdwg.mxu0
      %v521 = vadd.f32 %v470, %v516
      %522 = vrot.lane.b32.xlu0 %v221, 108
      %v523 = vpop.permute.xlu0 %522
      %524 = vrot.lane.b32.xlu0 %v222, 108
      %v525 = vpop.permute.xlu0 %524
      %vm526 = vcmask 883712
      %v527 = vsel %vm526, %v523, %v525
      %v530 = vsel %vm230, %v212, 0
      %532 = vmatprep.subr.bf16.mxu0 0
      %533 = vmatpush1.bf16.msra.mxu0 0
      %534 = vmatprep.subr.bf16.mxu0 0
      %535 = vmatpush1.bf16.msra.mxu0 0
      %536 = vmatprep.subr.bf16.mxu0 0
      %537 = vmatpush1.bf16.msra.mxu0 0
      %538 = vmatprep.subr.bf16.mxu0 0
      %539 = vmatpush1.bf16.msra.mxu0 0
      %540 = vmatprep.subr.bf16.mxu0 0
      %541 = vmatpush1.bf16.msra.mxu0 0
      %542 = vmatprep.subr.bf16.mxu0 0
      %543 = vmatpush1.bf16.msra.mxu0 0
      %544 = vmatprep.subr.bf16.mxu0 0
      %545 = vmatpush1.bf16.msra.mxu0 0
      %546 = vmatprep.subr.bf16.mxu0 0
      %547 = vmatpush1.bf16.msra.mxu0 %v527
      %548 = vmatprep.subr.bf16.mxu0 0
      %549 = vmatpush2.bf16.msra.mxu0 0
      %550 = vmatprep.subr.bf16.mxu0 0
      %551 = vmatpush2.bf16.msra.mxu0 0
      %552 = vmatprep.subr.bf16.mxu0 0
      %553 = vmatpush2.bf16.msra.mxu0 0
      %554 = vmatprep.subr.bf16.mxu0 0
      %555 = vmatpush2.bf16.msra.mxu0 0
      %556 = vmatprep.subr.bf16.mxu0 0
      %557 = vmatpush2.bf16.msra.mxu0 0
      %558 = vmatprep.subr.bf16.mxu0 0
      %559 = vmatpush2.bf16.msra.mxu0 0
      %560 = vmatprep.subr.bf16.mxu0 0
      %561 = vmatpush2.bf16.msra.mxu0 0
      %562 = vmatprep.subr.bf16.mxu0 0
      %563 = vmatpush2.bf16.msra.mxu0 0
      %564 = vmatprep.mubr.bf16.mxu0 0
      %565 = vmatmul.mubr.bf16.gmra.mxu0 %v530
      %v566 = vpop.f32.mrf.mxu0
      %v567 = vadd.f32 0.0, %v566
      %v568 = vpop.f32.mrf.mxu0
      %v569 = vpop.f32.mrf.mxu0
      %v570 = vpop.f32.mrf.mxu0
      %571 = vdwg.mxu0
      %v572 = vadd.f32 %v521, %v567
      %573 = vrot.lane.b32.xlu0 %v221, 107
      %v574 = vpop.permute.xlu0 %573
      %575 = vrot.lane.b32.xlu0 %v222, 107
      %v576 = vpop.permute.xlu0 %575
      %vm577 = vcmask 875520
      %v578 = vsel %vm577, %v574, %v576
      %v581 = vsel %vm230, %v213, 0
      %583 = vmatprep.subr.bf16.mxu0 0
      %584 = vmatpush1.bf16.msra.mxu0 0
      %585 = vmatprep.subr.bf16.mxu0 0
      %586 = vmatpush1.bf16.msra.mxu0 0
      %587 = vmatprep.subr.bf16.mxu0 0
      %588 = vmatpush1.bf16.msra.mxu0 0
      %589 = vmatprep.subr.bf16.mxu0 0
      %590 = vmatpush1.bf16.msra.mxu0 0
      %591 = vmatprep.subr.bf16.mxu0 0
      %592 = vmatpush1.bf16.msra.mxu0 0
      %593 = vmatprep.subr.bf16.mxu0 0
      %594 = vmatpush1.bf16.msra.mxu0 0
      %595 = vmatprep.subr.bf16.mxu0 0
      %596 = vmatpush1.bf16.msra.mxu0 0
      %597 = vmatprep.subr.bf16.mxu0 0
      %598 = vmatpush1.bf16.msra.mxu0 %v578
      %599 = vmatprep.subr.bf16.mxu0 0
      %600 = vmatpush2.bf16.msra.mxu0 0
      %601 = vmatprep.subr.bf16.mxu0 0
      %602 = vmatpush2.bf16.msra.mxu0 0
      %603 = vmatprep.subr.bf16.mxu0 0
      %604 = vmatpush2.bf16.msra.mxu0 0
      %605 = vmatprep.subr.bf16.mxu0 0
      %606 = vmatpush2.bf16.msra.mxu0 0
      %607 = vmatprep.subr.bf16.mxu0 0
      %608 = vmatpush2.bf16.msra.mxu0 0
      %609 = vmatprep.subr.bf16.mxu0 0
      %610 = vmatpush2.bf16.msra.mxu0 0
      %611 = vmatprep.subr.bf16.mxu0 0
      %612 = vmatpush2.bf16.msra.mxu0 0
      %613 = vmatprep.subr.bf16.mxu0 0
      %614 = vmatpush2.bf16.msra.mxu0 0
      %615 = vmatprep.mubr.bf16.mxu0 0
      %616 = vmatmul.mubr.bf16.gmra.mxu0 %v581
      %v617 = vpop.f32.mrf.mxu0
      %v618 = vadd.f32 0.0, %v617
      %v619 = vpop.f32.mrf.mxu0
      %v620 = vpop.f32.mrf.mxu0
      %v621 = vpop.f32.mrf.mxu0
      %622 = vdwg.mxu0
      %v623 = vadd.f32 %v572, %v618
      %624 = vrot.lane.b32.xlu0 %v221, 106
      %v625 = vpop.permute.xlu0 %624
      %626 = vrot.lane.b32.xlu0 %v222, 106
      %v627 = vpop.permute.xlu0 %626
      %vm628 = vcmask 867328
      %v629 = vsel %vm628, %v625, %v627
      %v632 = vsel %vm230, %v214, 0
      %634 = vmatprep.subr.bf16.mxu0 0
      %635 = vmatpush1.bf16.msra.mxu0 0
      %636 = vmatprep.subr.bf16.mxu0 0
      %637 = vmatpush1.bf16.msra.mxu0 0
      %638 = vmatprep.subr.bf16.mxu0 0
      %639 = vmatpush1.bf16.msra.mxu0 0
      %640 = vmatprep.subr.bf16.mxu0 0
      %641 = vmatpush1.bf16.msra.mxu0 0
      %642 = vmatprep.subr.bf16.mxu0 0
      %643 = vmatpush1.bf16.msra.mxu0 0
      %644 = vmatprep.subr.bf16.mxu0 0
      %645 = vmatpush1.bf16.msra.mxu0 0
      %646 = vmatprep.subr.bf16.mxu0 0
      %647 = vmatpush1.bf16.msra.mxu0 0
      %648 = vmatprep.subr.bf16.mxu0 0
      %649 = vmatpush1.bf16.msra.mxu0 %v629
      %650 = vmatprep.subr.bf16.mxu0 0
      %651 = vmatpush2.bf16.msra.mxu0 0
      %652 = vmatprep.subr.bf16.mxu0 0
      %653 = vmatpush2.bf16.msra.mxu0 0
      %654 = vmatprep.subr.bf16.mxu0 0
      %655 = vmatpush2.bf16.msra.mxu0 0
      %656 = vmatprep.subr.bf16.mxu0 0
      %657 = vmatpush2.bf16.msra.mxu0 0
      %658 = vmatprep.subr.bf16.mxu0 0
      %659 = vmatpush2.bf16.msra.mxu0 0
      %660 = vmatprep.subr.bf16.mxu0 0
      %661 = vmatpush2.bf16.msra.mxu0 0
      %662 = vmatprep.subr.bf16.mxu0 0
      %663 = vmatpush2.bf16.msra.mxu0 0
      %664 = vmatprep.subr.bf16.mxu0 0
      %665 = vmatpush2.bf16.msra.mxu0 0
      %666 = vmatprep.mubr.bf16.mxu0 0
      %667 = vmatmul.mubr.bf16.gmra.mxu0 %v632
      %v668 = vpop.f32.mrf.mxu0
      %v669 = vadd.f32 0.0, %v668
      %v670 = vpop.f32.mrf.mxu0
      %v671 = vpop.f32.mrf.mxu0
      %v672 = vpop.f32.mrf.mxu0
      %673 = vdwg.mxu0
      %v674 = vadd.f32 %v623, %v669
      %v675 = vld [vmem:[%s2] sm:$0xff]
      %677 = vset.pattern.permute.xlu0 0
      %678 = vperm.xlu0 %677, %v675
      %v679 = vpop.permute.xlu0 %678
      %v681 = vmul.f32 %v674, %v679
      %682 = vset.pattern.permute.xlu0 1
      %683 = vperm.xlu0 %682, %v675
      %v684 = vpop.permute.xlu0 %683
      %v686 = vadd.f32 %v681, %v684
      %v687 = vmax.f32 %v686, 0.0
      %v688 = vpack.c.bf16 %v687, %v687
      %689 = vst [vmem:[%s202] sm:$0xf] %v688
      %p690 = scmp.lt.s32.totalorder %s18, 1
      %s691 = scalar_select %p690, %s18, 1
      %p692 = scmp.lt.s32.totalorder %s19, 0
      %s693 = scalar_select %p692, %s19, 0
      %s694 = sadd.s32 %s693, %s691
      %s695 = smul.addr %s694, 4
      %s696 = scalar_lea.vmem %s3, %s695
      // Predicated region
      $region33: #{rsu4_forward.10} parent=31 // pred_check
        %p697 = pneg %p116
      $region34: #{rsu4_forward.10} parent=31 // pred_check_branch
        %699 = sbr.rel (%p697) target = $region36
      $region35: #{rsu4_forward.10} parent=31 // pred_region
        _
      $region36: #{rsu4_forward.10} parent=31 // pred_fallthru
        _
    $region32: #{rsu4_forward.10} parent=5 // pred_fallthru
      _
    %p700 = scmp.le.s32.totalorder 2, %s9
    // Predicated region
    $region37: #{rsu4_forward.10} parent=5 // pred_check
      %p701 = pneg %p700
    $region38: #{rsu4_forward.10} parent=5 // pred_check_branch
      %703 = sbr.rel (%p701) target = $region40
    $region39: #{rsu4_forward.10} parent=5 // pred_region
      %s704 = ssub.s32 %s9, 2
      // Predicated region
      $region41: #{rsu4_forward.10} parent=39 // pred_check
        %p705 = pneg %p122
      $region42: #{rsu4_forward.10} parent=39 // pred_check_branch
        %707 = sbr.rel (%p705) target = $region44
      $region43: #{rsu4_forward.10} parent=39 // pred_region
        %p708 = scmp.lt.s32.totalorder %s20, 1
        %s709 = scalar_select %p708, %s20, 1
        %p710 = scmp.lt.s32.totalorder %s21, 0
        %s711 = scalar_select %p710, %s21, 0
        %s712 = sadd.s32 %s711, %s709
        %s713 = smul.addr %s712, 4
        %s714 = scalar_lea.vmem %s3, %s713
      $region44: #{rsu4_forward.10} parent=39 // pred_fallthru
        _
    $region40: #{rsu4_forward.10} parent=5 // pred_fallthru
      _
  $region6: #{rsu4_forward.10} parent=0 // loop_footer
    %s13 = sadd.s32 1, %s9
  $region7: #{rsu4_forward.10} parent=0 // loop_footer_branch
    %8 = sbr.rel target = $region3
  $region8: #{rsu4_forward.10} parent=0 // loop_exit
    _

// kernel: rsu4_forward.11
$region0: #{rsu4_forward.11}
  #allocation0 [shape = 'u32[]', space=smem, size = 0x4, offset = 0x4, fixed_abs, tag = 'smem constant byte address 0x4 - core index']
  #allocation1 [shape = 'u32[144,128]{1,0:T(1,128)}', space=vmem, size = 0x12000, scoped, tag = 'internal scratch']
  %s0 = inlined_call_operand.vmem [shape: bf16[2,1,16,142], index: 0, kind: input, shape index: {}]
  %s1 = inlined_call_operand.vmem [shape: bf16[9,8,16], index: 1, kind: input, shape index: {}]
  %s2 = inlined_call_operand.vmem [shape: f32[8,2], index: 2, kind: input, shape index: {}]
  %s3 = inlined_call_operand.vmem [shape: bf16[2,8,128], index: 3, kind: output, shape index: {}]
  %s4 = sld [smem:[#allocation0]]
  $region45: #{rsu4_forward.11} parent=0
    _
  %s6 = ssub.s32 1, %s4
  %s7 = scalar_select 0, %s6, %s4
  loop: start=0, step=1, limit=4
  $region2: #{rsu4_forward.11} parent=0 // loop_pre_header
    _
  $region3: #{rsu4_forward.11} parent=0 // loop_header
    %s9 = sphi 0, %s13
    %p10 = scmp.ge.s32.totalorder %s9, 4
    %s16 = sphi 0, %s28
    %s17 = sphi 0, %s24
    %s18 = sphi 0, %s16
    %s19 = sphi 0, %s17
    %s20 = sphi 0, %s18
    %s21 = sphi 0, %s19
    %s33 = sphi 0, %s35
    %s36 = sphi 0, %s33
    %s37 = sphi 0, %s36
    %s53 = sphi 0, %s37
    %s57 = sphi 0, %s57
    %s59 = sphi 0, %s57
    %s60 = sphi 0, %s59
    %s74 = sphi 0, %s60
    %s78 = sphi 0, %s78
    %s80 = sphi 0, %s78
    %s81 = sphi 0, %s80
    %s95 = sphi 0, %s81
    %s103 = sphi 0, %s105
    %s106 = sphi 0, %s103
    %s107 = sphi 0, %s106
    %s123 = sphi 0, %s107
  $region4: #{rsu4_forward.11} parent=0 // loop_header_branch
    %12 = sbr.rel (%p10) target = $region8
  $region5: #{rsu4_forward.11} parent=0 // loop_body
    %s14 = ssub.s32 %s9, 1
    %s15 = ssub.s32 %s9, 2
    %s22 = sadd.s32 1, %s17
    %p23 = scmp.ge.s32.totalorder %s22, 1
    %s24 = scalar_select %p23, 0, %s22
    %s25 = sadd.s32 1, %s16
    %s26 = scalar_select %p23, %s25, %s16
    %p27 = scmp.ge.s32.totalorder %s26, 2
    %s28 = scalar_select %p27, 0, %s26
    %s29 = ssub.s32 %s16, %s28
    %s30 = ssub.s32 %s17, %s24
    %s31 = sor.u32 %s29, %s30
    %p32 = scmp.eq.s32.totalorder %s31, 0
    %s34 = sadd.s32 %s33, 1
    %s35 = scalar_select %p32, %s33, %s34
    %p38 = pneg %p32
    %p39 = scmp.eq.s32.totalorder %s9, 1
    %p40 = por %p38, %p39
    %p41 = scmp.ne.s32.totalorder %s33, %s36
    %p42 = scmp.eq.s32.totalorder %s9, 0
    %p43 = por %p41, %p42
    %p44 = scmp.ne.s32.totalorder %s33, %s36
    %p45 = scmp.eq.s32.totalorder %s14, 1
    %p46 = por %p44, %p45
    %p47 = scmp.ne.s32.totalorder %s36, %s37
    %p48 = scmp.eq.s32.totalorder %s14, 0
    %p49 = por %p47, %p48
    %p50 = scmp.ne.s32.totalorder %s36, %s37
    %p51 = scmp.eq.s32.totalorder %s15, 1
    %p52 = por %p50, %p51
    %p54 = scmp.ne.s32.totalorder %s37, %s53
    %p55 = scmp.eq.s32.totalorder %s15, 0
    %p56 = por %p54, %p55
    %s58 = sadd.s32 %s57, 1
    %p61 = scmp.eq.s32.totalorder %s9, 1
    %p62 = scmp.ne.s32.totalorder %s57, %s59
    %p63 = scmp.eq.s32.totalorder %s9, 0
    %p64 = por %p62, %p63
    %p65 = scmp.ne.s32.totalorder %s57, %s59
    %p66 = scmp.eq.s32.totalorder %s14, 1
    %p67 = por %p65, %p66
    %p68 = scmp.ne.s32.totalorder %s59, %s60
    %p69 = scmp.eq.s32.totalorder %s14, 0
    %p70 = por %p68, %p69
    %p71 = scmp.ne.s32.totalorder %s59, %s60
    %p72 = scmp.eq.s32.totalorder %s15, 1
    %p73 = por %p71, %p72
    %p75 = scmp.ne.s32.totalorder %s60, %s74
    %p76 = scmp.eq.s32.totalorder %s15, 0
    %p77 = por %p75, %p76
    %s79 = sadd.s32 %s78, 1
    %p82 = scmp.eq.s32.totalorder %s9, 1
    %p83 = scmp.ne.s32.totalorder %s78, %s80
    %p84 = scmp.eq.s32.totalorder %s9, 0
    %p85 = por %p83, %p84
    %p86 = scmp.ne.s32.totalorder %s78, %s80
    %p87 = scmp.eq.s32.totalorder %s14, 1
    %p88 = por %p86, %p87
    %p89 = scmp.ne.s32.totalorder %s80, %s81
    %p90 = scmp.eq.s32.totalorder %s14, 0
    %p91 = por %p89, %p90
    %p92 = scmp.ne.s32.totalorder %s80, %s81
    %p93 = scmp.eq.s32.totalorder %s15, 1
    %p94 = por %p92, %p93
    %p96 = scmp.ne.s32.totalorder %s81, %s95
    %p97 = scmp.eq.s32.totalorder %s15, 0
    %p98 = por %p96, %p97
    %s99 = ssub.s32 %s16, %s28
    %s100 = ssub.s32 %s17, %s24
    %s101 = sor.u32 %s99, %s100
    %p102 = scmp.eq.s32.totalorder %s101, 0
    %s104 = sadd.s32 %s103, 1
    %s105 = scalar_select %p102, %s103, %s104
    %p108 = pneg %p102
    %p109 = scmp.eq.s32.totalorder %s9, 1
    %p110 = por %p108, %p109
    %p111 = scmp.ne.s32.totalorder %s103, %s106
    %p112 = scmp.eq.s32.totalorder %s9, 0
    %p113 = por %p111, %p112
    %p114 = scmp.ne.s32.totalorder %s103, %s106
    %p115 = scmp.eq.s32.totalorder %s14, 1
    %p116 = por %p114, %p115
    %p117 = scmp.ne.s32.totalorder %s106, %s107
    %p118 = scmp.eq.s32.totalorder %s14, 0
    %p119 = por %p117, %p118
    %p120 = scmp.ne.s32.totalorder %s106, %s107
    %p121 = scmp.eq.s32.totalorder %s15, 1
    %p122 = por %p120, %p121
    %p124 = scmp.ne.s32.totalorder %s107, %s123
    %p125 = scmp.eq.s32.totalorder %s15, 0
    %p126 = por %p124, %p125
    %p127 = scmp.le.s32.totalorder 1, %s9
    %p128 = scmp.lt.s32.totalorder %s9, 3
    %p129 = pnand %p127, %p128
    %p130 = pneg %p129
    // Predicated region
    $region9: #{rsu4_forward.11} parent=5 // pred_check
      _
    $region10: #{rsu4_forward.11} parent=5 // pred_check_branch
      %132 = sbr.rel (%p129) target = $region12
    $region11: #{rsu4_forward.11} parent=5 // pred_region
      %s133 = ssub.s32 %s9, 1
      // Predicated region
      $region13: #{rsu4_forward.11} parent=11 // pred_check
        %p134 = pneg %p70
      $region14: #{rsu4_forward.11} parent=11 // pred_check_branch
        %136 = sbr.rel (%p134) target = $region16
      $region15: #{rsu4_forward.11} parent=11 // pred_region
        _
      $region16: #{rsu4_forward.11} parent=11 // pred_fallthru
        _
      // Predicated region
      $region17: #{rsu4_forward.11} parent=11 // pred_check
        %p137 = pneg %p91
      $region18: #{rsu4_forward.11} parent=11 // pred_check_branch
        %139 = sbr.rel (%p137) target = $region20
      $region19: #{rsu4_forward.11} parent=11 // pred_region
        _
      $region20: #{rsu4_forward.11} parent=11 // pred_fallthru
        _
    $region12: #{rsu4_forward.11} parent=5 // pred_fallthru
      _
    %p140 = scmp.lt.s32.totalorder %s9, 2
    // Predicated region
    $region21: #{rsu4_forward.11} parent=5 // pred_check
      %p141 = pneg %p140
    $region22: #{rsu4_forward.11} parent=5 // pred_check_branch
      %143 = sbr.rel (%p141) target = $region24
    $region23: #{rsu4_forward.11} parent=5 // pred_region
      // Predicated region
      $region25: #{rsu4_forward.11} parent=23 // pred_check
        %p144 = pneg %p43
      $region26: #{rsu4_forward.11} parent=23 // pred_check_branch
        %146 = sbr.rel (%p144) target = $region28
      $region27: #{rsu4_forward.11} parent=23 // pred_region
        %p147 = scmp.lt.s32.totalorder %s16, 1
        %s148 = scalar_select %p147, %s16, 1
        %p149 = scmp.lt.s32.totalorder %s17, 0
        %s150 = scalar_select %p149, %s17, 0
        %s151 = smul.addr %s150, 4
        %s152 = smul.addr %s148, 4
        %s153 = sadd.s32 %s151, %s152
        %s154 = smul.addr %s153, 4
        %s155 = scalar_lea.vmem %s0, %s154
      $region28: #{rsu4_forward.11} parent=23 // pred_fallthru
        _
    $region24: #{rsu4_forward.11} parent=5 // pred_fallthru
      _
    %p156 = scmp.le.s32.totalorder 1, %s9
    %p157 = scmp.lt.s32.totalorder %s9, 3
    %p158 = pnand %p156, %p157
    %p159 = pneg %p158
    // Predicated region
    $region29: #{rsu4_forward.11} parent=5 // pred_check
      _
    $region30: #{rsu4_forward.11} parent=5 // pred_check_branch
      %161 = sbr.rel (%p158) target = $region32
    $region31: #{rsu4_forward.11} parent=5 // pred_region
      %s162 = ssub.s32 %s9, 1
      %p163 = scmp.lt.s32.totalorder %s18, 1
      %s164 = scalar_select %p163, %s18, 1
      %p165 = scmp.lt.s32.totalorder %s19, 0
      %s166 = scalar_select %p165, %s19, 0
      %s167 = smul.addr %s166, 4
      %s168 = smul.addr %s164, 4
      %s169 = sadd.s32 %s167, %s168
      %s170 = smul.addr %s169, 4
      %s171 = scalar_lea.vmem %s0, %s170
      %p172 = pneg %p49
      %p173 = pneg %p46
      %p174 = pneg %p70
      %p175 = pneg %p67
      %p176 = pneg %p91
      %p177 = pneg %p88
      %p178 = pneg %p119
      %p179 = pneg %p116
      %p180 = scmp.lt.s32.totalorder %s18, 1
      %s181 = scalar_select %p180, %s18, 1
      %p182 = scmp.lt.s32.totalorder %s19, 0
      %s183 = scalar_select %p182, %s19, 0
      %s184 = sadd.s32 %s183, %s181
      %s185 = smul.addr %s184, 4
      %s186 = scalar_lea.vmem %s3, %s185
      %p187 = scmp.lt.s32.totalorder %s18, 1
      %s188 = scalar_select %p187, %s18, 1
      %p189 = scmp.lt.s32.totalorder %s19, 0
      %s190 = scalar_select %p189, %s19, 0
      %s191 = smul.addr %s190, 4
      %s192 = smul.addr %s188, 4
      %s193 = sadd.s32 %s191, %s192
      %s194 = smul.addr %s193, 4
      %s195 = scalar_lea.vmem %s0, %s194
      %p196 = scmp.lt.s32.totalorder %s18, 1
      %s197 = scalar_select %p196, %s18, 1
      %p198 = scmp.lt.s32.totalorder %s19, 0
      %s199 = scalar_select %p198, %s19, 0
      %s200 = sadd.s32 %s199, %s197
      %s201 = smul.addr %s200, 4
      %s202 = scalar_lea.vmem %s3, %s201
      %v204 = vld [vmem:[%s195] sm:$0xff]
      %v205 = vld [vmem:[%s195 + $0x8] sm:$0xff]
      %v206 = vld [vmem:[%s1] sm:$0xf]
      %v207 = vld [vmem:[%s1 + $0x4] sm:$0xf]
      %v208 = vld [vmem:[%s1 + $0x8] sm:$0xf]
      %v209 = vld [vmem:[%s1 + $0xc] sm:$0xf]
      %v210 = vld [vmem:[%s1 + $0x10] sm:$0xf]
      %v211 = vld [vmem:[%s1 + $0x14] sm:$0xf]
      %v212 = vld [vmem:[%s1 + $0x18] sm:$0xf]
      %v213 = vld [vmem:[%s1 + $0x1c] sm:$0xf]
      %v214 = vld [vmem:[%s1 + $0x20] sm:$0xf]
      %v217 = vunpack.c.l.b16 %v204
      %v218 = vunpack.c.h.b16 %v204
      %v219 = vunpack.c.l.b16 %v205
      %v220 = vunpack.c.h.b16 %v205
      %v221 = vpack.c.b16 %v219, %v217
      %v222 = vpack.c.b16 %v220, %v218
      %223 = vrot.lane.b32.xlu0 %v221, 127
      %v224 = vpop.permute.xlu0 %223
      %225 = vrot.lane.b32.xlu0 %v222, 127
      %v226 = vpop.permute.xlu0 %225
      %vm227 = vcmask 1039360
      %v228 = vsel %vm227, %v224, %v226
      %vm230 = vcmask 130048
      %v232 = vsel %vm230, %v207, 0
      %234 = vmatprep.subr.bf16.mxu0 0
      %235 = vmatpush1.bf16.msra.mxu0 0
      %236 = vmatprep.subr.bf16.mxu0 0
      %237 = vmatpush1.bf16.msra.mxu0 0
      %238 = vmatprep.subr.bf16.mxu0 0
      %239 = vmatpush1.bf16.msra.mxu0 0
      %240 = vmatprep.subr.bf16.mxu0 0
      %241 = vmatpush1.bf16.msra.mxu0 0
      %242 = vmatprep.subr.bf16.mxu0 0
      %243 = vmatpush1.bf16.msra.mxu0 0
      %244 = vmatprep.subr.bf16.mxu0 0
      %245 = vmatpush1.bf16.msra.mxu0 0
      %246 = vmatprep.subr.bf16.mxu0 0
      %247 = vmatpush1.bf16.msra.mxu0 0
      %248 = vmatprep.subr.bf16.mxu0 0
      %249 = vmatpush1.bf16.msra.mxu0 %v228
      %250 = vmatprep.subr.bf16.mxu0 0
      %251 = vmatpush2.bf16.msra.mxu0 0
      %252 = vmatprep.subr.bf16.mxu0 0
      %253 = vmatpush2.bf16.msra.mxu0 0
      %254 = vmatprep.subr.bf16.mxu0 0
      %255 = vmatpush2.bf16.msra.mxu0 0
      %256 = vmatprep.subr.bf16.mxu0 0
      %257 = vmatpush2.bf16.msra.mxu0 0
      %258 = vmatprep.subr.bf16.mxu0 0
      %259 = vmatpush2.bf16.msra.mxu0 0
      %260 = vmatprep.subr.bf16.mxu0 0
      %261 = vmatpush2.bf16.msra.mxu0 0
      %262 = vmatprep.subr.bf16.mxu0 0
      %263 = vmatpush2.bf16.msra.mxu0 0
      %264 = vmatprep.subr.bf16.mxu0 0
      %265 = vmatpush2.bf16.msra.mxu0 0
      %266 = vmatprep.mubr.bf16.mxu0 0
      %267 = vmatmul.mubr.bf16.gmra.mxu0 %v232
      %v268 = vpop.f32.mrf.mxu0
      %v269 = vadd.f32 0.0, %v268
      %v270 = vpop.f32.mrf.mxu0
      %v271 = vpop.f32.mrf.mxu0
      %v272 = vpop.f32.mrf.mxu0
      %273 = vdwg.mxu0
      %v276 = vsel %vm230, %v206, 0
      %278 = vmatprep.subr.bf16.mxu0 0
      %279 = vmatpush1.bf16.msra.mxu0 0
      %280 = vmatprep.subr.bf16.mxu0 0
      %281 = vmatpush1.bf16.msra.mxu0 0
      %282 = vmatprep.subr.bf16.mxu0 0
      %283 = vmatpush1.bf16.msra.mxu0 0
      %284 = vmatprep.subr.bf16.mxu0 0
      %285 = vmatpush1.bf16.msra.mxu0 0
      %286 = vmatprep.subr.bf16.mxu0 0
      %287 = vmatpush1.bf16.msra.mxu0 0
      %288 = vmatprep.subr.bf16.mxu0 0
      %289 = vmatpush1.bf16.msra.mxu0 0
      %290 = vmatprep.subr.bf16.mxu0 0
      %291 = vmatpush1.bf16.msra.mxu0 0
      %292 = vmatprep.subr.bf16.mxu0 0
      %293 = vmatpush1.bf16.msra.mxu0 %v221
      %294 = vmatprep.subr.bf16.mxu0 0
      %295 = vmatpush2.bf16.msra.mxu0 0
      %296 = vmatprep.subr.bf16.mxu0 0
      %297 = vmatpush2.bf16.msra.mxu0 0
      %298 = vmatprep.subr.bf16.mxu0 0
      %299 = vmatpush2.bf16.msra.mxu0 0
      %300 = vmatprep.subr.bf16.mxu0 0
      %301 = vmatpush2.bf16.msra.mxu0 0
      %302 = vmatprep.subr.bf16.mxu0 0
      %303 = vmatpush2.bf16.msra.mxu0 0
      %304 = vmatprep.subr.bf16.mxu0 0
      %305 = vmatpush2.bf16.msra.mxu0 0
      %306 = vmatprep.subr.bf16.mxu0 0
      %307 = vmatpush2.bf16.msra.mxu0 0
      %308 = vmatprep.subr.bf16.mxu0 0
      %309 = vmatpush2.bf16.msra.mxu0 0
      %310 = vmatprep.mubr.bf16.mxu0 0
      %311 = vmatmul.mubr.bf16.gmra.mxu0 %v276
      %v312 = vpop.f32.mrf.mxu0
      %v313 = vadd.f32 %v269, %v312
      %v314 = vpop.f32.mrf.mxu0
      %v315 = vpop.f32.mrf.mxu0
      %v316 = vpop.f32.mrf.mxu0
      %317 = vdwg.mxu0
      %318 = vrot.lane.b32.xlu0 %v221, 126
      %v319 = vpop.permute.xlu0 %318
      %320 = vrot.lane.b32.xlu0 %v222, 126
      %v321 = vpop.permute.xlu0 %320
      %vm322 = vcmask 1031168
      %v323 = vsel %vm322, %v319, %v321
      %v326 = vsel %vm230, %v208, 0
      %328 = vmatprep.subr.bf16.mxu0 0
      %329 = vmatpush1.bf16.msra.mxu0 0
      %330 = vmatprep.subr.bf16.mxu0 0
      %331 = vmatpush1.bf16.msra.mxu0 0
      %332 = vmatprep.subr.bf16.mxu0 0
      %333 = vmatpush1.bf16.msra.mxu0 0
      %334 = vmatprep.subr.bf16.mxu0 0
      %335 = vmatpush1.bf16.msra.mxu0 0
      %336 = vmatprep.subr.bf16.mxu0 0
      %337 = vmatpush1.bf16.msra.mxu0 0
      %338 = vmatprep.subr.bf16.mxu0 0
      %339 = vmatpush1.bf16.msra.mxu0 0
      %340 = vmatprep.subr.bf16.mxu0 0
      %341 = vmatpush1.bf16.msra.mxu0 0
      %342 = vmatprep.subr.bf16.mxu0 0
      %343 = vmatpush1.bf16.msra.mxu0 %v323
      %344 = vmatprep.subr.bf16.mxu0 0
      %345 = vmatpush2.bf16.msra.mxu0 0
      %346 = vmatprep.subr.bf16.mxu0 0
      %347 = vmatpush2.bf16.msra.mxu0 0
      %348 = vmatprep.subr.bf16.mxu0 0
      %349 = vmatpush2.bf16.msra.mxu0 0
      %350 = vmatprep.subr.bf16.mxu0 0
      %351 = vmatpush2.bf16.msra.mxu0 0
      %352 = vmatprep.subr.bf16.mxu0 0
      %353 = vmatpush2.bf16.msra.mxu0 0
      %354 = vmatprep.subr.bf16.mxu0 0
      %355 = vmatpush2.bf16.msra.mxu0 0
      %356 = vmatprep.subr.bf16.mxu0 0
      %357 = vmatpush2.bf16.msra.mxu0 0
      %358 = vmatprep.subr.bf16.mxu0 0
      %359 = vmatpush2.bf16.msra.mxu0 0
      %360 = vmatprep.mubr.bf16.mxu0 0
      %361 = vmatmul.mubr.bf16.gmra.mxu0 %v326
      %v362 = vpop.f32.mrf.mxu0
      %v363 = vadd.f32 0.0, %v362
      %v364 = vpop.f32.mrf.mxu0
      %v365 = vpop.f32.mrf.mxu0
      %v366 = vpop.f32.mrf.mxu0
      %367 = vdwg.mxu0
      %v368 = vadd.f32 %v313, %v363
      %369 = vrot.lane.b32.xlu0 %v221, 122
      %v370 = vpop.permute.xlu0 %369
      %371 = vrot.lane.b32.xlu0 %v222, 122
      %v372 = vpop.permute.xlu0 %371
      %vm373 = vcmask 998400
      %v374 = vsel %vm373, %v370, %v372
      %v377 = vsel %vm230, %v209, 0
      %379 = vmatprep.subr.bf16.mxu0 0
      %380 = vmatpush1.bf16.msra.mxu0 0
      %381 = vmatprep.subr.bf16.mxu0 0
      %382 = vmatpush1.bf16.msra.mxu0 0
      %383 = vmatprep.subr.bf16.mxu0 0
      %384 = vmatpush1.bf16.msra.mxu0 0
      %385 = vmatprep.subr.bf16.mxu0 0
      %386 = vmatpush1.bf16.msra.mxu0 0
      %387 = vmatprep.subr.bf16.mxu0 0
      %388 = vmatpush1.bf16.msra.mxu0 0
      %389 = vmatprep.subr.bf16.mxu0 0
      %390 = vmatpush1.bf16.msra.mxu0 0
      %391 = vmatprep.subr.bf16.mxu0 0
      %392 = vmatpush1.bf16.msra.mxu0 0
      %393 = vmatprep.subr.bf16.mxu0 0
      %394 = vmatpush1.bf16.msra.mxu0 %v374
      %395 = vmatprep.subr.bf16.mxu0 0
      %396 = vmatpush2.bf16.msra.mxu0 0
      %397 = vmatprep.subr.bf16.mxu0 0
      %398 = vmatpush2.bf16.msra.mxu0 0
      %399 = vmatprep.subr.bf16.mxu0 0
      %400 = vmatpush2.bf16.msra.mxu0 0
      %401 = vmatprep.subr.bf16.mxu0 0
      %402 = vmatpush2.bf16.msra.mxu0 0
      %403 = vmatprep.subr.bf16.mxu0 0
      %404 = vmatpush2.bf16.msra.mxu0 0
      %405 = vmatprep.subr.bf16.mxu0 0
      %406 = vmatpush2.bf16.msra.mxu0 0
      %407 = vmatprep.subr.bf16.mxu0 0
      %408 = vmatpush2.bf16.msra.mxu0 0
      %409 = vmatprep.subr.bf16.mxu0 0
      %410 = vmatpush2.bf16.msra.mxu0 0
      %411 = vmatprep.mubr.bf16.mxu0 0
      %412 = vmatmul.mubr.bf16.gmra.mxu0 %v377
      %v413 = vpop.f32.mrf.mxu0
      %v414 = vadd.f32 0.0, %v413
      %v415 = vpop.f32.mrf.mxu0
      %v416 = vpop.f32.mrf.mxu0
      %v417 = vpop.f32.mrf.mxu0
      %418 = vdwg.mxu0
      %v419 = vadd.f32 %v368, %v414
      %420 = vrot.lane.b32.xlu0 %v221, 121
      %v421 = vpop.permute.xlu0 %420
      %422 = vrot.lane.b32.xlu0 %v222, 121
      %v423 = vpop.permute.xlu0 %422
      %vm424 = vcmask 990208
      %v425 = vsel %vm424, %v421, %v423
      %v428 = vsel %vm230, %v210, 0
      %430 = vmatprep.subr.bf16.mxu0 0
      %431 = vmatpush1.bf16.msra.mxu0 0
      %432 = vmatprep.subr.bf16.mxu0 0
      %433 = vmatpush1.bf16.msra.mxu0 0
      %434 = vmatprep.subr.bf16.mxu0 0
      %435 = vmatpush1.bf16.msra.mxu0 0
      %436 = vmatprep.subr.bf16.mxu0 0
      %437 = vmatpush1.bf16.msra.mxu0 0
      %438 = vmatprep.subr.bf16.mxu0 0
      %439 = vmatpush1.bf16.msra.mxu0 0
      %440 = vmatprep.subr.bf16.mxu0 0
      %441 = vmatpush1.bf16.msra.mxu0 0
      %442 = vmatprep.subr.bf16.mxu0 0
      %443 = vmatpush1.bf16.msra.mxu0 0
      %444 = vmatprep.subr.bf16.mxu0 0
      %445 = vmatpush1.bf16.msra.mxu0 %v425
      %446 = vmatprep.subr.bf16.mxu0 0
      %447 = vmatpush2.bf16.msra.mxu0 0
      %448 = vmatprep.subr.bf16.mxu0 0
      %449 = vmatpush2.bf16.msra.mxu0 0
      %450 = vmatprep.subr.bf16.mxu0 0
      %451 = vmatpush2.bf16.msra.mxu0 0
      %452 = vmatprep.subr.bf16.mxu0 0
      %453 = vmatpush2.bf16.msra.mxu0 0
      %454 = vmatprep.subr.bf16.mxu0 0
      %455 = vmatpush2.bf16.msra.mxu0 0
      %456 = vmatprep.subr.bf16.mxu0 0
      %457 = vmatpush2.bf16.msra.mxu0 0
      %458 = vmatprep.subr.bf16.mxu0 0
      %459 = vmatpush2.bf16.msra.mxu0 0
      %460 = vmatprep.subr.bf16.mxu0 0
      %461 = vmatpush2.bf16.msra.mxu0 0
      %462 = vmatprep.mubr.bf16.mxu0 0
      %463 = vmatmul.mubr.bf16.gmra.mxu0 %v428
      %v464 = vpop.f32.mrf.mxu0
      %v465 = vadd.f32 0.0, %v464
      %v466 = vpop.f32.mrf.mxu0
      %v467 = vpop.f32.mrf.mxu0
      %v468 = vpop.f32.mrf.mxu0
      %469 = vdwg.mxu0
      %v470 = vadd.f32 %v419, %v465
      %471 = vrot.lane.b32.xlu0 %v221, 120
      %v472 = vpop.permute.xlu0 %471
      %473 = vrot.lane.b32.xlu0 %v222, 120
      %v474 = vpop.permute.xlu0 %473
      %vm475 = vcmask 982016
      %v476 = vsel %vm475, %v472, %v474
      %v479 = vsel %vm230, %v211, 0
      %481 = vmatprep.subr.bf16.mxu0 0
      %482 = vmatpush1.bf16.msra.mxu0 0
      %483 = vmatprep.subr.bf16.mxu0 0
      %484 = vmatpush1.bf16.msra.mxu0 0
      %485 = vmatprep.subr.bf16.mxu0 0
      %486 = vmatpush1.bf16.msra.mxu0 0
      %487 = vmatprep.subr.bf16.mxu0 0
      %488 = vmatpush1.bf16.msra.mxu0 0
      %489 = vmatprep.subr.bf16.mxu0 0
      %490 = vmatpush1.bf16.msra.mxu0 0
      %491 = vmatprep.subr.bf16.mxu0 0
      %492 = vmatpush1.bf16.msra.mxu0 0
      %493 = vmatprep.subr.bf16.mxu0 0
      %494 = vmatpush1.bf16.msra.mxu0 0
      %495 = vmatprep.subr.bf16.mxu0 0
      %496 = vmatpush1.bf16.msra.mxu0 %v476
      %497 = vmatprep.subr.bf16.mxu0 0
      %498 = vmatpush2.bf16.msra.mxu0 0
      %499 = vmatprep.subr.bf16.mxu0 0
      %500 = vmatpush2.bf16.msra.mxu0 0
      %501 = vmatprep.subr.bf16.mxu0 0
      %502 = vmatpush2.bf16.msra.mxu0 0
      %503 = vmatprep.subr.bf16.mxu0 0
      %504 = vmatpush2.bf16.msra.mxu0 0
      %505 = vmatprep.subr.bf16.mxu0 0
      %506 = vmatpush2.bf16.msra.mxu0 0
      %507 = vmatprep.subr.bf16.mxu0 0
      %508 = vmatpush2.bf16.msra.mxu0 0
      %509 = vmatprep.subr.bf16.mxu0 0
      %510 = vmatpush2.bf16.msra.mxu0 0
      %511 = vmatprep.subr.bf16.mxu0 0
      %512 = vmatpush2.bf16.msra.mxu0 0
      %513 = vmatprep.mubr.bf16.mxu0 0
      %514 = vmatmul.mubr.bf16.gmra.mxu0 %v479
      %v515 = vpop.f32.mrf.mxu0
      %v516 = vadd.f32 0.0, %v515
      %v517 = vpop.f32.mrf.mxu0
      %v518 = vpop.f32.mrf.mxu0
      %v519 = vpop.f32.mrf.mxu0
      %520 = vdwg.mxu0
      %v521 = vadd.f32 %v470, %v516
      %522 = vrot.lane.b32.xlu0 %v221, 116
      %v523 = vpop.permute.xlu0 %522
      %524 = vrot.lane.b32.xlu0 %v222, 116
      %v525 = vpop.permute.xlu0 %524
      %vm526 = vcmask 949248
      %v527 = vsel %vm526, %v523, %v525
      %v530 = vsel %vm230, %v212, 0
      %532 = vmatprep.subr.bf16.mxu0 0
      %533 = vmatpush1.bf16.msra.mxu0 0
      %534 = vmatprep.subr.bf16.mxu0 0
      %535 = vmatpush1.bf16.msra.mxu0 0
      %536 = vmatprep.subr.bf16.mxu0 0
      %537 = vmatpush1.bf16.msra.mxu0 0
      %538 = vmatprep.subr.bf16.mxu0 0
      %539 = vmatpush1.bf16.msra.mxu0 0
      %540 = vmatprep.subr.bf16.mxu0 0
      %541 = vmatpush1.bf16.msra.mxu0 0
      %542 = vmatprep.subr.bf16.mxu0 0
      %543 = vmatpush1.bf16.msra.mxu0 0
      %544 = vmatprep.subr.bf16.mxu0 0
      %545 = vmatpush1.bf16.msra.mxu0 0
      %546 = vmatprep.subr.bf16.mxu0 0
      %547 = vmatpush1.bf16.msra.mxu0 %v527
      %548 = vmatprep.subr.bf16.mxu0 0
      %549 = vmatpush2.bf16.msra.mxu0 0
      %550 = vmatprep.subr.bf16.mxu0 0
      %551 = vmatpush2.bf16.msra.mxu0 0
      %552 = vmatprep.subr.bf16.mxu0 0
      %553 = vmatpush2.bf16.msra.mxu0 0
      %554 = vmatprep.subr.bf16.mxu0 0
      %555 = vmatpush2.bf16.msra.mxu0 0
      %556 = vmatprep.subr.bf16.mxu0 0
      %557 = vmatpush2.bf16.msra.mxu0 0
      %558 = vmatprep.subr.bf16.mxu0 0
      %559 = vmatpush2.bf16.msra.mxu0 0
      %560 = vmatprep.subr.bf16.mxu0 0
      %561 = vmatpush2.bf16.msra.mxu0 0
      %562 = vmatprep.subr.bf16.mxu0 0
      %563 = vmatpush2.bf16.msra.mxu0 0
      %564 = vmatprep.mubr.bf16.mxu0 0
      %565 = vmatmul.mubr.bf16.gmra.mxu0 %v530
      %v566 = vpop.f32.mrf.mxu0
      %v567 = vadd.f32 0.0, %v566
      %v568 = vpop.f32.mrf.mxu0
      %v569 = vpop.f32.mrf.mxu0
      %v570 = vpop.f32.mrf.mxu0
      %571 = vdwg.mxu0
      %v572 = vadd.f32 %v521, %v567
      %573 = vrot.lane.b32.xlu0 %v221, 115
      %v574 = vpop.permute.xlu0 %573
      %575 = vrot.lane.b32.xlu0 %v222, 115
      %v576 = vpop.permute.xlu0 %575
      %vm577 = vcmask 941056
      %v578 = vsel %vm577, %v574, %v576
      %v581 = vsel %vm230, %v213, 0
      %583 = vmatprep.subr.bf16.mxu0 0
      %584 = vmatpush1.bf16.msra.mxu0 0
      %585 = vmatprep.subr.bf16.mxu0 0
      %586 = vmatpush1.bf16.msra.mxu0 0
      %587 = vmatprep.subr.bf16.mxu0 0
      %588 = vmatpush1.bf16.msra.mxu0 0
      %589 = vmatprep.subr.bf16.mxu0 0
      %590 = vmatpush1.bf16.msra.mxu0 0
      %591 = vmatprep.subr.bf16.mxu0 0
      %592 = vmatpush1.bf16.msra.mxu0 0
      %593 = vmatprep.subr.bf16.mxu0 0
      %594 = vmatpush1.bf16.msra.mxu0 0
      %595 = vmatprep.subr.bf16.mxu0 0
      %596 = vmatpush1.bf16.msra.mxu0 0
      %597 = vmatprep.subr.bf16.mxu0 0
      %598 = vmatpush1.bf16.msra.mxu0 %v578
      %599 = vmatprep.subr.bf16.mxu0 0
      %600 = vmatpush2.bf16.msra.mxu0 0
      %601 = vmatprep.subr.bf16.mxu0 0
      %602 = vmatpush2.bf16.msra.mxu0 0
      %603 = vmatprep.subr.bf16.mxu0 0
      %604 = vmatpush2.bf16.msra.mxu0 0
      %605 = vmatprep.subr.bf16.mxu0 0
      %606 = vmatpush2.bf16.msra.mxu0 0
      %607 = vmatprep.subr.bf16.mxu0 0
      %608 = vmatpush2.bf16.msra.mxu0 0
      %609 = vmatprep.subr.bf16.mxu0 0
      %610 = vmatpush2.bf16.msra.mxu0 0
      %611 = vmatprep.subr.bf16.mxu0 0
      %612 = vmatpush2.bf16.msra.mxu0 0
      %613 = vmatprep.subr.bf16.mxu0 0
      %614 = vmatpush2.bf16.msra.mxu0 0
      %615 = vmatprep.mubr.bf16.mxu0 0
      %616 = vmatmul.mubr.bf16.gmra.mxu0 %v581
      %v617 = vpop.f32.mrf.mxu0
      %v618 = vadd.f32 0.0, %v617
      %v619 = vpop.f32.mrf.mxu0
      %v620 = vpop.f32.mrf.mxu0
      %v621 = vpop.f32.mrf.mxu0
      %622 = vdwg.mxu0
      %v623 = vadd.f32 %v572, %v618
      %624 = vrot.lane.b32.xlu0 %v221, 114
      %v625 = vpop.permute.xlu0 %624
      %626 = vrot.lane.b32.xlu0 %v222, 114
      %v627 = vpop.permute.xlu0 %626
      %vm628 = vcmask 932864
      %v629 = vsel %vm628, %v625, %v627
      %v632 = vsel %vm230, %v214, 0
      %634 = vmatprep.subr.bf16.mxu0 0
      %635 = vmatpush1.bf16.msra.mxu0 0
      %636 = vmatprep.subr.bf16.mxu0 0
      %637 = vmatpush1.bf16.msra.mxu0 0
      %638 = vmatprep.subr.bf16.mxu0 0
      %639 = vmatpush1.bf16.msra.mxu0 0
      %640 = vmatprep.subr.bf16.mxu0 0
      %641 = vmatpush1.bf16.msra.mxu0 0
      %642 = vmatprep.subr.bf16.mxu0 0
      %643 = vmatpush1.bf16.msra.mxu0 0
      %644 = vmatprep.subr.bf16.mxu0 0
      %645 = vmatpush1.bf16.msra.mxu0 0
      %646 = vmatprep.subr.bf16.mxu0 0
      %647 = vmatpush1.bf16.msra.mxu0 0
      %648 = vmatprep.subr.bf16.mxu0 0
      %649 = vmatpush1.bf16.msra.mxu0 %v629
      %650 = vmatprep.subr.bf16.mxu0 0
      %651 = vmatpush2.bf16.msra.mxu0 0
      %652 = vmatprep.subr.bf16.mxu0 0
      %653 = vmatpush2.bf16.msra.mxu0 0
      %654 = vmatprep.subr.bf16.mxu0 0
      %655 = vmatpush2.bf16.msra.mxu0 0
      %656 = vmatprep.subr.bf16.mxu0 0
      %657 = vmatpush2.bf16.msra.mxu0 0
      %658 = vmatprep.subr.bf16.mxu0 0
      %659 = vmatpush2.bf16.msra.mxu0 0
      %660 = vmatprep.subr.bf16.mxu0 0
      %661 = vmatpush2.bf16.msra.mxu0 0
      %662 = vmatprep.subr.bf16.mxu0 0
      %663 = vmatpush2.bf16.msra.mxu0 0
      %664 = vmatprep.subr.bf16.mxu0 0
      %665 = vmatpush2.bf16.msra.mxu0 0
      %666 = vmatprep.mubr.bf16.mxu0 0
      %667 = vmatmul.mubr.bf16.gmra.mxu0 %v632
      %v668 = vpop.f32.mrf.mxu0
      %v669 = vadd.f32 0.0, %v668
      %v670 = vpop.f32.mrf.mxu0
      %v671 = vpop.f32.mrf.mxu0
      %v672 = vpop.f32.mrf.mxu0
      %673 = vdwg.mxu0
      %v674 = vadd.f32 %v623, %v669
      %v675 = vld [vmem:[%s2] sm:$0xff]
      %677 = vset.pattern.permute.xlu0 0
      %678 = vperm.xlu0 %677, %v675
      %v679 = vpop.permute.xlu0 %678
      %v681 = vmul.f32 %v674, %v679
      %682 = vset.pattern.permute.xlu0 1
      %683 = vperm.xlu0 %682, %v675
      %v684 = vpop.permute.xlu0 %683
      %v686 = vadd.f32 %v681, %v684
      %v687 = vmax.f32 %v686, 0.0
      %v688 = vpack.c.bf16 %v687, %v687
      %689 = vst [vmem:[%s202] sm:$0xf] %v688
      %p690 = scmp.lt.s32.totalorder %s18, 1
      %s691 = scalar_select %p690, %s18, 1
      %p692 = scmp.lt.s32.totalorder %s19, 0
      %s693 = scalar_select %p692, %s19, 0
      %s694 = sadd.s32 %s693, %s691
      %s695 = smul.addr %s694, 4
      %s696 = scalar_lea.vmem %s3, %s695
      // Predicated region
      $region33: #{rsu4_forward.11} parent=31 // pred_check
        %p697 = pneg %p116
      $region34: #{rsu4_forward.11} parent=31 // pred_check_branch
        %699 = sbr.rel (%p697) target = $region36
      $region35: #{rsu4_forward.11} parent=31 // pred_region
        _
      $region36: #{rsu4_forward.11} parent=31 // pred_fallthru
        _
    $region32: #{rsu4_forward.11} parent=5 // pred_fallthru
      _
    %p700 = scmp.le.s32.totalorder 2, %s9
    // Predicated region
    $region37: #{rsu4_forward.11} parent=5 // pred_check
      %p701 = pneg %p700
    $region38: #{rsu4_forward.11} parent=5 // pred_check_branch
      %703 = sbr.rel (%p701) target = $region40
    $region39: #{rsu4_forward.11} parent=5 // pred_region
      %s704 = ssub.s32 %s9, 2
      // Predicated region
      $region41: #{rsu4_forward.11} parent=39 // pred_check
        %p705 = pneg %p122
      $region42: #{rsu4_forward.11} parent=39 // pred_check_branch
        %707 = sbr.rel (%p705) target = $region44
      $region43: #{rsu4_forward.11} parent=39 // pred_region
        %p708 = scmp.lt.s32.totalorder %s20, 1
        %s709 = scalar_select %p708, %s20, 1
        %p710 = scmp.lt.s32.totalorder %s21, 0
        %s711 = scalar_select %p710, %s21, 0
        %s712 = sadd.s32 %s711, %s709
        %s713 = smul.addr %s712, 4
        %s714 = scalar_lea.vmem %s3, %s713
      $region44: #{rsu4_forward.11} parent=39 // pred_fallthru
        _
    $region40: #{rsu4_forward.11} parent=5 // pred_fallthru
      _
  $region6: #{rsu4_forward.11} parent=0 // loop_footer
    %s13 = sadd.s32 1, %s9
  $region7: #{rsu4_forward.11} parent=0 // loop_footer_branch
    %8 = sbr.rel target = $region3
  $region8: #{rsu4_forward.11} parent=0 // loop_exit
    _

// kernel: rsu4_forward.12
$region0: #{rsu4_forward.12}
  #allocation0 [shape = 'u32[]', space=smem, size = 0x4, offset = 0x4, fixed_abs, tag = 'smem constant byte address 0x4 - core index']
  #allocation1 [shape = 'u32[144,128]{1,0:T(1,128)}', space=vmem, size = 0x12000, scoped, tag = 'internal scratch']
  %s0 = inlined_call_operand.vmem [shape: bf16[2,1,16,164], index: 0, kind: input, shape index: {}]
  %s1 = inlined_call_operand.vmem [shape: bf16[9,8,16], index: 1, kind: input, shape index: {}]
  %s2 = inlined_call_operand.vmem [shape: f32[8,2], index: 2, kind: input, shape index: {}]
  %s3 = inlined_call_operand.vmem [shape: bf16[2,8,128], index: 3, kind: output, shape index: {}]
  %s4 = sld [smem:[#allocation0]]
  $region45: #{rsu4_forward.12} parent=0
    _
  %s6 = ssub.s32 1, %s4
  %s7 = scalar_select 0, %s6, %s4
  loop: start=0, step=1, limit=4
  $region2: #{rsu4_forward.12} parent=0 // loop_pre_header
    _
  $region3: #{rsu4_forward.12} parent=0 // loop_header
    %s9 = sphi 0, %s13
    %p10 = scmp.ge.s32.totalorder %s9, 4
    %s16 = sphi 0, %s28
    %s17 = sphi 0, %s24
    %s18 = sphi 0, %s16
    %s19 = sphi 0, %s17
    %s20 = sphi 0, %s18
    %s21 = sphi 0, %s19
    %s33 = sphi 0, %s35
    %s36 = sphi 0, %s33
    %s37 = sphi 0, %s36
    %s53 = sphi 0, %s37
    %s57 = sphi 0, %s57
    %s59 = sphi 0, %s57
    %s60 = sphi 0, %s59
    %s74 = sphi 0, %s60
    %s78 = sphi 0, %s78
    %s80 = sphi 0, %s78
    %s81 = sphi 0, %s80
    %s95 = sphi 0, %s81
    %s103 = sphi 0, %s105
    %s106 = sphi 0, %s103
    %s107 = sphi 0, %s106
    %s123 = sphi 0, %s107
  $region4: #{rsu4_forward.12} parent=0 // loop_header_branch
    %12 = sbr.rel (%p10) target = $region8
  $region5: #{rsu4_forward.12} parent=0 // loop_body
    %s14 = ssub.s32 %s9, 1
    %s15 = ssub.s32 %s9, 2
    %s22 = sadd.s32 1, %s17
    %p23 = scmp.ge.s32.totalorder %s22, 1
    %s24 = scalar_select %p23, 0, %s22
    %s25 = sadd.s32 1, %s16
    %s26 = scalar_select %p23, %s25, %s16
    %p27 = scmp.ge.s32.totalorder %s26, 2
    %s28 = scalar_select %p27, 0, %s26
    %s29 = ssub.s32 %s16, %s28
    %s30 = ssub.s32 %s17, %s24
    %s31 = sor.u32 %s29, %s30
    %p32 = scmp.eq.s32.totalorder %s31, 0
    %s34 = sadd.s32 %s33, 1
    %s35 = scalar_select %p32, %s33, %s34
    %p38 = pneg %p32
    %p39 = scmp.eq.s32.totalorder %s9, 1
    %p40 = por %p38, %p39
    %p41 = scmp.ne.s32.totalorder %s33, %s36
    %p42 = scmp.eq.s32.totalorder %s9, 0
    %p43 = por %p41, %p42
    %p44 = scmp.ne.s32.totalorder %s33, %s36
    %p45 = scmp.eq.s32.totalorder %s14, 1
    %p46 = por %p44, %p45
    %p47 = scmp.ne.s32.totalorder %s36, %s37
    %p48 = scmp.eq.s32.totalorder %s14, 0
    %p49 = por %p47, %p48
    %p50 = scmp.ne.s32.totalorder %s36, %s37
    %p51 = scmp.eq.s32.totalorder %s15, 1
    %p52 = por %p50, %p51
    %p54 = scmp.ne.s32.totalorder %s37, %s53
    %p55 = scmp.eq.s32.totalorder %s15, 0
    %p56 = por %p54, %p55
    %s58 = sadd.s32 %s57, 1
    %p61 = scmp.eq.s32.totalorder %s9, 1
    %p62 = scmp.ne.s32.totalorder %s57, %s59
    %p63 = scmp.eq.s32.totalorder %s9, 0
    %p64 = por %p62, %p63
    %p65 = scmp.ne.s32.totalorder %s57, %s59
    %p66 = scmp.eq.s32.totalorder %s14, 1
    %p67 = por %p65, %p66
    %p68 = scmp.ne.s32.totalorder %s59, %s60
    %p69 = scmp.eq.s32.totalorder %s14, 0
    %p70 = por %p68, %p69
    %p71 = scmp.ne.s32.totalorder %s59, %s60
    %p72 = scmp.eq.s32.totalorder %s15, 1
    %p73 = por %p71, %p72
    %p75 = scmp.ne.s32.totalorder %s60, %s74
    %p76 = scmp.eq.s32.totalorder %s15, 0
    %p77 = por %p75, %p76
    %s79 = sadd.s32 %s78, 1
    %p82 = scmp.eq.s32.totalorder %s9, 1
    %p83 = scmp.ne.s32.totalorder %s78, %s80
    %p84 = scmp.eq.s32.totalorder %s9, 0
    %p85 = por %p83, %p84
    %p86 = scmp.ne.s32.totalorder %s78, %s80
    %p87 = scmp.eq.s32.totalorder %s14, 1
    %p88 = por %p86, %p87
    %p89 = scmp.ne.s32.totalorder %s80, %s81
    %p90 = scmp.eq.s32.totalorder %s14, 0
    %p91 = por %p89, %p90
    %p92 = scmp.ne.s32.totalorder %s80, %s81
    %p93 = scmp.eq.s32.totalorder %s15, 1
    %p94 = por %p92, %p93
    %p96 = scmp.ne.s32.totalorder %s81, %s95
    %p97 = scmp.eq.s32.totalorder %s15, 0
    %p98 = por %p96, %p97
    %s99 = ssub.s32 %s16, %s28
    %s100 = ssub.s32 %s17, %s24
    %s101 = sor.u32 %s99, %s100
    %p102 = scmp.eq.s32.totalorder %s101, 0
    %s104 = sadd.s32 %s103, 1
    %s105 = scalar_select %p102, %s103, %s104
    %p108 = pneg %p102
    %p109 = scmp.eq.s32.totalorder %s9, 1
    %p110 = por %p108, %p109
    %p111 = scmp.ne.s32.totalorder %s103, %s106
    %p112 = scmp.eq.s32.totalorder %s9, 0
    %p113 = por %p111, %p112
    %p114 = scmp.ne.s32.totalorder %s103, %s106
    %p115 = scmp.eq.s32.totalorder %s14, 1
    %p116 = por %p114, %p115
    %p117 = scmp.ne.s32.totalorder %s106, %s107
    %p118 = scmp.eq.s32.totalorder %s14, 0
    %p119 = por %p117, %p118
    %p120 = scmp.ne.s32.totalorder %s106, %s107
    %p121 = scmp.eq.s32.totalorder %s15, 1
    %p122 = por %p120, %p121
    %p124 = scmp.ne.s32.totalorder %s107, %s123
    %p125 = scmp.eq.s32.totalorder %s15, 0
    %p126 = por %p124, %p125
    %p127 = scmp.le.s32.totalorder 1, %s9
    %p128 = scmp.lt.s32.totalorder %s9, 3
    %p129 = pnand %p127, %p128
    %p130 = pneg %p129
    // Predicated region
    $region9: #{rsu4_forward.12} parent=5 // pred_check
      _
    $region10: #{rsu4_forward.12} parent=5 // pred_check_branch
      %132 = sbr.rel (%p129) target = $region12
    $region11: #{rsu4_forward.12} parent=5 // pred_region
      %s133 = ssub.s32 %s9, 1
      // Predicated region
      $region13: #{rsu4_forward.12} parent=11 // pred_check
        %p134 = pneg %p70
      $region14: #{rsu4_forward.12} parent=11 // pred_check_branch
        %136 = sbr.rel (%p134) target = $region16
      $region15: #{rsu4_forward.12} parent=11 // pred_region
        _
      $region16: #{rsu4_forward.12} parent=11 // pred_fallthru
        _
      // Predicated region
      $region17: #{rsu4_forward.12} parent=11 // pred_check
        %p137 = pneg %p91
      $region18: #{rsu4_forward.12} parent=11 // pred_check_branch
        %139 = sbr.rel (%p137) target = $region20
      $region19: #{rsu4_forward.12} parent=11 // pred_region
        _
      $region20: #{rsu4_forward.12} parent=11 // pred_fallthru
        _
    $region12: #{rsu4_forward.12} parent=5 // pred_fallthru
      _
    %p140 = scmp.lt.s32.totalorder %s9, 2
    // Predicated region
    $region21: #{rsu4_forward.12} parent=5 // pred_check
      %p141 = pneg %p140
    $region22: #{rsu4_forward.12} parent=5 // pred_check_branch
      %143 = sbr.rel (%p141) target = $region24
    $region23: #{rsu4_forward.12} parent=5 // pred_region
      // Predicated region
      $region25: #{rsu4_forward.12} parent=23 // pred_check
        %p144 = pneg %p43
      $region26: #{rsu4_forward.12} parent=23 // pred_check_branch
        %146 = sbr.rel (%p144) target = $region28
      $region27: #{rsu4_forward.12} parent=23 // pred_region
        %p147 = scmp.lt.s32.totalorder %s16, 1
        %s148 = scalar_select %p147, %s16, 1
        %p149 = scmp.lt.s32.totalorder %s17, 0
        %s150 = scalar_select %p149, %s17, 0
        %s151 = smul.addr %s150, 4
        %s152 = smul.addr %s148, 4
        %s153 = sadd.s32 %s151, %s152
        %s154 = smul.addr %s153, 4
        %s155 = scalar_lea.vmem %s0, %s154
      $region28: #{rsu4_forward.12} parent=23 // pred_fallthru
        _
    $region24: #{rsu4_forward.12} parent=5 // pred_fallthru
      _
    %p156 = scmp.le.s32.totalorder 1, %s9
    %p157 = scmp.lt.s32.totalorder %s9, 3
    %p158 = pnand %p156, %p157
    %p159 = pneg %p158
    // Predicated region
    $region29: #{rsu4_forward.12} parent=5 // pred_check
      _
    $region30: #{rsu4_forward.12} parent=5 // pred_check_branch
      %161 = sbr.rel (%p158) target = $region32
    $region31: #{rsu4_forward.12} parent=5 // pred_region
      %s162 = ssub.s32 %s9, 1
      %p163 = scmp.lt.s32.totalorder %s18, 1
      %s164 = scalar_select %p163, %s18, 1
      %p165 = scmp.lt.s32.totalorder %s19, 0
      %s166 = scalar_select %p165, %s19, 0
      %s167 = smul.addr %s166, 4
      %s168 = smul.addr %s164, 4
      %s169 = sadd.s32 %s167, %s168
      %s170 = smul.addr %s169, 4
      %s171 = scalar_lea.vmem %s0, %s170
      %p172 = pneg %p49
      %p173 = pneg %p46
      %p174 = pneg %p70
      %p175 = pneg %p67
      %p176 = pneg %p91
      %p177 = pneg %p88
      %p178 = pneg %p119
      %p179 = pneg %p116
      %p180 = scmp.lt.s32.totalorder %s18, 1
      %s181 = scalar_select %p180, %s18, 1
      %p182 = scmp.lt.s32.totalorder %s19, 0
      %s183 = scalar_select %p182, %s19, 0
      %s184 = sadd.s32 %s183, %s181
      %s185 = smul.addr %s184, 4
      %s186 = scalar_lea.vmem %s3, %s185
      %p187 = scmp.lt.s32.totalorder %s18, 1
      %s188 = scalar_select %p187, %s18, 1
      %p189 = scmp.lt.s32.totalorder %s19, 0
      %s190 = scalar_select %p189, %s19, 0
      %s191 = smul.addr %s190, 4
      %s192 = smul.addr %s188, 4
      %s193 = sadd.s32 %s191, %s192
      %s194 = smul.addr %s193, 4
      %s195 = scalar_lea.vmem %s0, %s194
      %p196 = scmp.lt.s32.totalorder %s18, 1
      %s197 = scalar_select %p196, %s18, 1
      %p198 = scmp.lt.s32.totalorder %s19, 0
      %s199 = scalar_select %p198, %s19, 0
      %s200 = sadd.s32 %s199, %s197
      %s201 = smul.addr %s200, 4
      %s202 = scalar_lea.vmem %s3, %s201
      %v204 = vld [vmem:[%s195] sm:$0xff]
      %v205 = vld [vmem:[%s195 + $0x8] sm:$0xff]
      %v206 = vld [vmem:[%s1] sm:$0xf]
      %v207 = vld [vmem:[%s1 + $0x4] sm:$0xf]
      %v208 = vld [vmem:[%s1 + $0x8] sm:$0xf]
      %v209 = vld [vmem:[%s1 + $0xc] sm:$0xf]
      %v210 = vld [vmem:[%s1 + $0x10] sm:$0xf]
      %v211 = vld [vmem:[%s1 + $0x14] sm:$0xf]
      %v212 = vld [vmem:[%s1 + $0x18] sm:$0xf]
      %v213 = vld [vmem:[%s1 + $0x1c] sm:$0xf]
      %v214 = vld [vmem:[%s1 + $0x20] sm:$0xf]
      %v217 = vunpack.c.l.b16 %v204
      %v218 = vunpack.c.h.b16 %v204
      %v219 = vunpack.c.l.b16 %v205
      %v220 = vunpack.c.h.b16 %v205
      %v221 = vpack.c.b16 %v219, %v217
      %v222 = vpack.c.b16 %v220, %v218
      %223 = vrot.lane.b32.xlu0 %v221, 126
      %v224 = vpop.permute.xlu0 %223
      %225 = vrot.lane.b32.xlu0 %v222, 126
      %v226 = vpop.permute.xlu0 %225
      %vm227 = vcmask 1031168
      %v228 = vsel %vm227, %v224, %v226
      %vm230 = vcmask 130048
      %v232 = vsel %vm230, %v207, 0
      %234 = vmatprep.subr.bf16.mxu0 0
      %235 = vmatpush1.bf16.msra.mxu0 0
      %236 = vmatprep.subr.bf16.mxu0 0
      %237 = vmatpush1.bf16.msra.mxu0 0
      %238 = vmatprep.subr.bf16.mxu0 0
      %239 = vmatpush1.bf16.msra.mxu0 0
      %240 = vmatprep.subr.bf16.mxu0 0
      %241 = vmatpush1.bf16.msra.mxu0 0
      %242 = vmatprep.subr.bf16.mxu0 0
      %243 = vmatpush1.bf16.msra.mxu0 0
      %244 = vmatprep.subr.bf16.mxu0 0
      %245 = vmatpush1.bf16.msra.mxu0 0
      %246 = vmatprep.subr.bf16.mxu0 0
      %247 = vmatpush1.bf16.msra.mxu0 0
      %248 = vmatprep.subr.bf16.mxu0 0
      %249 = vmatpush1.bf16.msra.mxu0 %v228
      %250 = vmatprep.subr.bf16.mxu0 0
      %251 = vmatpush2.bf16.msra.mxu0 0
      %252 = vmatprep.subr.bf16.mxu0 0
      %253 = vmatpush2.bf16.msra.mxu0 0
      %254 = vmatprep.subr.bf16.mxu0 0
      %255 = vmatpush2.bf16.msra.mxu0 0
      %256 = vmatprep.subr.bf16.mxu0 0
      %257 = vmatpush2.bf16.msra.mxu0 0
      %258 = vmatprep.subr.bf16.mxu0 0
      %259 = vmatpush2.bf16.msra.mxu0 0
      %260 = vmatprep.subr.bf16.mxu0 0
      %261 = vmatpush2.bf16.msra.mxu0 0
      %262 = vmatprep.subr.bf16.mxu0 0
      %263 = vmatpush2.bf16.msra.mxu0 0
      %264 = vmatprep.subr.bf16.mxu0 0
      %265 = vmatpush2.bf16.msra.mxu0 0
      %266 = vmatprep.mubr.bf16.mxu0 0
      %267 = vmatmul.mubr.bf16.gmra.mxu0 %v232
      %v268 = vpop.f32.mrf.mxu0
      %v269 = vadd.f32 0.0, %v268
      %v270 = vpop.f32.mrf.mxu0
      %v271 = vpop.f32.mrf.mxu0
      %v272 = vpop.f32.mrf.mxu0
      %273 = vdwg.mxu0
      %v276 = vsel %vm230, %v206, 0
      %278 = vmatprep.subr.bf16.mxu0 0
      %279 = vmatpush1.bf16.msra.mxu0 0
      %280 = vmatprep.subr.bf16.mxu0 0
      %281 = vmatpush1.bf16.msra.mxu0 0
      %282 = vmatprep.subr.bf16.mxu0 0
      %283 = vmatpush1.bf16.msra.mxu0 0
      %284 = vmatprep.subr.bf16.mxu0 0
      %285 = vmatpush1.bf16.msra.mxu0 0
      %286 = vmatprep.subr.bf16.mxu0 0
      %287 = vmatpush1.bf16.msra.mxu0 0
      %288 = vmatprep.subr.bf16.mxu0 0
      %289 = vmatpush1.bf16.msra.mxu0 0
      %290 = vmatprep.subr.bf16.mxu0 0
      %291 = vmatpush1.bf16.msra.mxu0 0
      %292 = vmatprep.subr.bf16.mxu0 0
      %293 = vmatpush1.bf16.msra.mxu0 %v221
      %294 = vmatprep.subr.bf16.mxu0 0
      %295 = vmatpush2.bf16.msra.mxu0 0
      %296 = vmatprep.subr.bf16.mxu0 0
      %297 = vmatpush2.bf16.msra.mxu0 0
      %298 = vmatprep.subr.bf16.mxu0 0
      %299 = vmatpush2.bf16.msra.mxu0 0
      %300 = vmatprep.subr.bf16.mxu0 0
      %301 = vmatpush2.bf16.msra.mxu0 0
      %302 = vmatprep.subr.bf16.mxu0 0
      %303 = vmatpush2.bf16.msra.mxu0 0
      %304 = vmatprep.subr.bf16.mxu0 0
      %305 = vmatpush2.bf16.msra.mxu0 0
      %306 = vmatprep.subr.bf16.mxu0 0
      %307 = vmatpush2.bf16.msra.mxu0 0
      %308 = vmatprep.subr.bf16.mxu0 0
      %309 = vmatpush2.bf16.msra.mxu0 0
      %310 = vmatprep.mubr.bf16.mxu0 0
      %311 = vmatmul.mubr.bf16.gmra.mxu0 %v276
      %v312 = vpop.f32.mrf.mxu0
      %v313 = vadd.f32 %v269, %v312
      %v314 = vpop.f32.mrf.mxu0
      %v315 = vpop.f32.mrf.mxu0
      %v316 = vpop.f32.mrf.mxu0
      %317 = vdwg.mxu0
      %318 = vrot.lane.b32.xlu0 %v221, 124
      %v319 = vpop.permute.xlu0 %318
      %320 = vrot.lane.b32.xlu0 %v222, 124
      %v321 = vpop.permute.xlu0 %320
      %vm322 = vcmask 1014784
      %v323 = vsel %vm322, %v319, %v321
      %v326 = vsel %vm230, %v208, 0
      %328 = vmatprep.subr.bf16.mxu0 0
      %329 = vmatpush1.bf16.msra.mxu0 0
      %330 = vmatprep.subr.bf16.mxu0 0
      %331 = vmatpush1.bf16.msra.mxu0 0
      %332 = vmatprep.subr.bf16.mxu0 0
      %333 = vmatpush1.bf16.msra.mxu0 0
      %334 = vmatprep.subr.bf16.mxu0 0
      %335 = vmatpush1.bf16.msra.mxu0 0
      %336 = vmatprep.subr.bf16.mxu0 0
      %337 = vmatpush1.bf16.msra.mxu0 0
      %338 = vmatprep.subr.bf16.mxu0 0
      %339 = vmatpush1.bf16.msra.mxu0 0
      %340 = vmatprep.subr.bf16.mxu0 0
      %341 = vmatpush1.bf16.msra.mxu0 0
      %342 = vmatprep.subr.bf16.mxu0 0
      %343 = vmatpush1.bf16.msra.mxu0 %v323
      %344 = vmatprep.subr.bf16.mxu0 0
      %345 = vmatpush2.bf16.msra.mxu0 0
      %346 = vmatprep.subr.bf16.mxu0 0
      %347 = vmatpush2.bf16.msra.mxu0 0
      %348 = vmatprep.subr.bf16.mxu0 0
      %349 = vmatpush2.bf16.msra.mxu0 0
      %350 = vmatprep.subr.bf16.mxu0 0
      %351 = vmatpush2.bf16.msra.mxu0 0
      %352 = vmatprep.subr.bf16.mxu0 0
      %353 = vmatpush2.bf16.msra.mxu0 0
      %354 = vmatprep.subr.bf16.mxu0 0
      %355 = vmatpush2.bf16.msra.mxu0 0
      %356 = vmatprep.subr.bf16.mxu0 0
      %357 = vmatpush2.bf16.msra.mxu0 0
      %358 = vmatprep.subr.bf16.mxu0 0
      %359 = vmatpush2.bf16.msra.mxu0 0
      %360 = vmatprep.mubr.bf16.mxu0 0
      %361 = vmatmul.mubr.bf16.gmra.mxu0 %v326
      %v362 = vpop.f32.mrf.mxu0
      %v363 = vadd.f32 0.0, %v362
      %v364 = vpop.f32.mrf.mxu0
      %v365 = vpop.f32.mrf.mxu0
      %v366 = vpop.f32.mrf.mxu0
      %367 = vdwg.mxu0
      %v368 = vadd.f32 %v313, %v363
      %369 = vrot.lane.b32.xlu0 %v221, 112
      %v370 = vpop.permute.xlu0 %369
      %371 = vrot.lane.b32.xlu0 %v222, 112
      %v372 = vpop.permute.xlu0 %371
      %vm373 = vcmask 916480
      %v374 = vsel %vm373, %v370, %v372
      %v377 = vsel %vm230, %v209, 0
      %379 = vmatprep.subr.bf16.mxu0 0
      %380 = vmatpush1.bf16.msra.mxu0 0
      %381 = vmatprep.subr.bf16.mxu0 0
      %382 = vmatpush1.bf16.msra.mxu0 0
      %383 = vmatprep.subr.bf16.mxu0 0
      %384 = vmatpush1.bf16.msra.mxu0 0
      %385 = vmatprep.subr.bf16.mxu0 0
      %386 = vmatpush1.bf16.msra.mxu0 0
      %387 = vmatprep.subr.bf16.mxu0 0
      %388 = vmatpush1.bf16.msra.mxu0 0
      %389 = vmatprep.subr.bf16.mxu0 0
      %390 = vmatpush1.bf16.msra.mxu0 0
      %391 = vmatprep.subr.bf16.mxu0 0
      %392 = vmatpush1.bf16.msra.mxu0 0
      %393 = vmatprep.subr.bf16.mxu0 0
      %394 = vmatpush1.bf16.msra.mxu0 %v374
      %395 = vmatprep.subr.bf16.mxu0 0
      %396 = vmatpush2.bf16.msra.mxu0 0
      %397 = vmatprep.subr.bf16.mxu0 0
      %398 = vmatpush2.bf16.msra.mxu0 0
      %399 = vmatprep.subr.bf16.mxu0 0
      %400 = vmatpush2.bf16.msra.mxu0 0
      %401 = vmatprep.subr.bf16.mxu0 0
      %402 = vmatpush2.bf16.msra.mxu0 0
      %403 = vmatprep.subr.bf16.mxu0 0
      %404 = vmatpush2.bf16.msra.mxu0 0
      %405 = vmatprep.subr.bf16.mxu0 0
      %406 = vmatpush2.bf16.msra.mxu0 0
      %407 = vmatprep.subr.bf16.mxu0 0
      %408 = vmatpush2.bf16.msra.mxu0 0
      %409 = vmatprep.subr.bf16.mxu0 0
      %410 = vmatpush2.bf16.msra.mxu0 0
      %411 = vmatprep.mubr.bf16.mxu0 0
      %412 = vmatmul.mubr.bf16.gmra.mxu0 %v377
      %v413 = vpop.f32.mrf.mxu0
      %v414 = vadd.f32 0.0, %v413
      %v415 = vpop.f32.mrf.mxu0
      %v416 = vpop.f32.mrf.mxu0
      %v417 = vpop.f32.mrf.mxu0
      %418 = vdwg.mxu0
      %v419 = vadd.f32 %v368, %v414
      %420 = vrot.lane.b32.xlu0 %v221, 110
      %v421 = vpop.permute.xlu0 %420
      %422 = vrot.lane.b32.xlu0 %v222, 110
      %v423 = vpop.permute.xlu0 %422
      %vm424 = vcmask 900096
      %v425 = vsel %vm424, %v421, %v423
      %v428 = vsel %vm230, %v210, 0
      %430 = vmatprep.subr.bf16.mxu0 0
      %431 = vmatpush1.bf16.msra.mxu0 0
      %432 = vmatprep.subr.bf16.mxu0 0
      %433 = vmatpush1.bf16.msra.mxu0 0
      %434 = vmatprep.subr.bf16.mxu0 0
      %435 = vmatpush1.bf16.msra.mxu0 0
      %436 = vmatprep.subr.bf16.mxu0 0
      %437 = vmatpush1.bf16.msra.mxu0 0
      %438 = vmatprep.subr.bf16.mxu0 0
      %439 = vmatpush1.bf16.msra.mxu0 0
      %440 = vmatprep.subr.bf16.mxu0 0
      %441 = vmatpush1.bf16.msra.mxu0 0
      %442 = vmatprep.subr.bf16.mxu0 0
      %443 = vmatpush1.bf16.msra.mxu0 0
      %444 = vmatprep.subr.bf16.mxu0 0
      %445 = vmatpush1.bf16.msra.mxu0 %v425
      %446 = vmatprep.subr.bf16.mxu0 0
      %447 = vmatpush2.bf16.msra.mxu0 0
      %448 = vmatprep.subr.bf16.mxu0 0
      %449 = vmatpush2.bf16.msra.mxu0 0
      %450 = vmatprep.subr.bf16.mxu0 0
      %451 = vmatpush2.bf16.msra.mxu0 0
      %452 = vmatprep.subr.bf16.mxu0 0
      %453 = vmatpush2.bf16.msra.mxu0 0
      %454 = vmatprep.subr.bf16.mxu0 0
      %455 = vmatpush2.bf16.msra.mxu0 0
      %456 = vmatprep.subr.bf16.mxu0 0
      %457 = vmatpush2.bf16.msra.mxu0 0
      %458 = vmatprep.subr.bf16.mxu0 0
      %459 = vmatpush2.bf16.msra.mxu0 0
      %460 = vmatprep.subr.bf16.mxu0 0
      %461 = vmatpush2.bf16.msra.mxu0 0
      %462 = vmatprep.mubr.bf16.mxu0 0
      %463 = vmatmul.mubr.bf16.gmra.mxu0 %v428
      %v464 = vpop.f32.mrf.mxu0
      %v465 = vadd.f32 0.0, %v464
      %v466 = vpop.f32.mrf.mxu0
      %v467 = vpop.f32.mrf.mxu0
      %v468 = vpop.f32.mrf.mxu0
      %469 = vdwg.mxu0
      %v470 = vadd.f32 %v419, %v465
      %471 = vrot.lane.b32.xlu0 %v221, 108
      %v472 = vpop.permute.xlu0 %471
      %473 = vrot.lane.b32.xlu0 %v222, 108
      %v474 = vpop.permute.xlu0 %473
      %vm475 = vcmask 883712
      %v476 = vsel %vm475, %v472, %v474
      %v479 = vsel %vm230, %v211, 0
      %481 = vmatprep.subr.bf16.mxu0 0
      %482 = vmatpush1.bf16.msra.mxu0 0
      %483 = vmatprep.subr.bf16.mxu0 0
      %484 = vmatpush1.bf16.msra.mxu0 0
      %485 = vmatprep.subr.bf16.mxu0 0
      %486 = vmatpush1.bf16.msra.mxu0 0
      %487 = vmatprep.subr.bf16.mxu0 0
      %488 = vmatpush1.bf16.msra.mxu0 0
      %489 = vmatprep.subr.bf16.mxu0 0
      %490 = vmatpush1.bf16.msra.mxu0 0
      %491 = vmatprep.subr.bf16.mxu0 0
      %492 = vmatpush1.bf16.msra.mxu0 0
      %493 = vmatprep.subr.bf16.mxu0 0
      %494 = vmatpush1.bf16.msra.mxu0 0
      %495 = vmatprep.subr.bf16.mxu0 0
      %496 = vmatpush1.bf16.msra.mxu0 %v476
      %497 = vmatprep.subr.bf16.mxu0 0
      %498 = vmatpush2.bf16.msra.mxu0 0
      %499 = vmatprep.subr.bf16.mxu0 0
      %500 = vmatpush2.bf16.msra.mxu0 0
      %501 = vmatprep.subr.bf16.mxu0 0
      %502 = vmatpush2.bf16.msra.mxu0 0
      %503 = vmatprep.subr.bf16.mxu0 0
      %504 = vmatpush2.bf16.msra.mxu0 0
      %505 = vmatprep.subr.bf16.mxu0 0
      %506 = vmatpush2.bf16.msra.mxu0 0
      %507 = vmatprep.subr.bf16.mxu0 0
      %508 = vmatpush2.bf16.msra.mxu0 0
      %509 = vmatprep.subr.bf16.mxu0 0
      %510 = vmatpush2.bf16.msra.mxu0 0
      %511 = vmatprep.subr.bf16.mxu0 0
      %512 = vmatpush2.bf16.msra.mxu0 0
      %513 = vmatprep.mubr.bf16.mxu0 0
      %514 = vmatmul.mubr.bf16.gmra.mxu0 %v479
      %v515 = vpop.f32.mrf.mxu0
      %v516 = vadd.f32 0.0, %v515
      %v517 = vpop.f32.mrf.mxu0
      %v518 = vpop.f32.mrf.mxu0
      %v519 = vpop.f32.mrf.mxu0
      %520 = vdwg.mxu0
      %v521 = vadd.f32 %v470, %v516
      %522 = vrot.lane.b32.xlu0 %v221, 96
      %v523 = vpop.permute.xlu0 %522
      %524 = vrot.lane.b32.xlu0 %v222, 96
      %v525 = vpop.permute.xlu0 %524
      %vm526 = vcmask 785408
      %v527 = vsel %vm526, %v523, %v525
      %v530 = vsel %vm230, %v212, 0
      %532 = vmatprep.subr.bf16.mxu0 0
      %533 = vmatpush1.bf16.msra.mxu0 0
      %534 = vmatprep.subr.bf16.mxu0 0
      %535 = vmatpush1.bf16.msra.mxu0 0
      %536 = vmatprep.subr.bf16.mxu0 0
      %537 = vmatpush1.bf16.msra.mxu0 0
      %538 = vmatprep.subr.bf16.mxu0 0
      %539 = vmatpush1.bf16.msra.mxu0 0
      %540 = vmatprep.subr.bf16.mxu0 0
      %541 = vmatpush1.bf16.msra.mxu0 0
      %542 = vmatprep.subr.bf16.mxu0 0
      %543 = vmatpush1.bf16.msra.mxu0 0
      %544 = vmatprep.subr.bf16.mxu0 0
      %545 = vmatpush1.bf16.msra.mxu0 0
      %546 = vmatprep.subr.bf16.mxu0 0
      %547 = vmatpush1.bf16.msra.mxu0 %v527
      %548 = vmatprep.subr.bf16.mxu0 0
      %549 = vmatpush2.bf16.msra.mxu0 0
      %550 = vmatprep.subr.bf16.mxu0 0
      %551 = vmatpush2.bf16.msra.mxu0 0
      %552 = vmatprep.subr.bf16.mxu0 0
      %553 = vmatpush2.bf16.msra.mxu0 0
      %554 = vmatprep.subr.bf16.mxu0 0
      %555 = vmatpush2.bf16.msra.mxu0 0
      %556 = vmatprep.subr.bf16.mxu0 0
      %557 = vmatpush2.bf16.msra.mxu0 0
      %558 = vmatprep.subr.bf16.mxu0 0
      %559 = vmatpush2.bf16.msra.mxu0 0
      %560 = vmatprep.subr.bf16.mxu0 0
      %561 = vmatpush2.bf16.msra.mxu0 0
      %562 = vmatprep.subr.bf16.mxu0 0
      %563 = vmatpush2.bf16.msra.mxu0 0
      %564 = vmatprep.mubr.bf16.mxu0 0
      %565 = vmatmul.mubr.bf16.gmra.mxu0 %v530
      %v566 = vpop.f32.mrf.mxu0
      %v567 = vadd.f32 0.0, %v566
      %v568 = vpop.f32.mrf.mxu0
      %v569 = vpop.f32.mrf.mxu0
      %v570 = vpop.f32.mrf.mxu0
      %571 = vdwg.mxu0
      %v572 = vadd.f32 %v521, %v567
      %573 = vrot.lane.b32.xlu0 %v221, 94
      %v574 = vpop.permute.xlu0 %573
      %575 = vrot.lane.b32.xlu0 %v222, 94
      %v576 = vpop.permute.xlu0 %575
      %vm577 = vcmask 769024
      %v578 = vsel %vm577, %v574, %v576
      %v581 = vsel %vm230, %v213, 0
      %583 = vmatprep.subr.bf16.mxu0 0
      %584 = vmatpush1.bf16.msra.mxu0 0
      %585 = vmatprep.subr.bf16.mxu0 0
      %586 = vmatpush1.bf16.msra.mxu0 0
      %587 = vmatprep.subr.bf16.mxu0 0
      %588 = vmatpush1.bf16.msra.mxu0 0
      %589 = vmatprep.subr.bf16.mxu0 0
      %590 = vmatpush1.bf16.msra.mxu0 0
      %591 = vmatprep.subr.bf16.mxu0 0
      %592 = vmatpush1.bf16.msra.mxu0 0
      %593 = vmatprep.subr.bf16.mxu0 0
      %594 = vmatpush1.bf16.msra.mxu0 0
      %595 = vmatprep.subr.bf16.mxu0 0
      %596 = vmatpush1.bf16.msra.mxu0 0
      %597 = vmatprep.subr.bf16.mxu0 0
      %598 = vmatpush1.bf16.msra.mxu0 %v578
      %599 = vmatprep.subr.bf16.mxu0 0
      %600 = vmatpush2.bf16.msra.mxu0 0
      %601 = vmatprep.subr.bf16.mxu0 0
      %602 = vmatpush2.bf16.msra.mxu0 0
      %603 = vmatprep.subr.bf16.mxu0 0
      %604 = vmatpush2.bf16.msra.mxu0 0
      %605 = vmatprep.subr.bf16.mxu0 0
      %606 = vmatpush2.bf16.msra.mxu0 0
      %607 = vmatprep.subr.bf16.mxu0 0
      %608 = vmatpush2.bf16.msra.mxu0 0
      %609 = vmatprep.subr.bf16.mxu0 0
      %610 = vmatpush2.bf16.msra.mxu0 0
      %611 = vmatprep.subr.bf16.mxu0 0
      %612 = vmatpush2.bf16.msra.mxu0 0
      %613 = vmatprep.subr.bf16.mxu0 0
      %614 = vmatpush2.bf16.msra.mxu0 0
      %615 = vmatprep.mubr.bf16.mxu0 0
      %616 = vmatmul.mubr.bf16.gmra.mxu0 %v581
      %v617 = vpop.f32.mrf.mxu0
      %v618 = vadd.f32 0.0, %v617
      %v619 = vpop.f32.mrf.mxu0
      %v620 = vpop.f32.mrf.mxu0
      %v621 = vpop.f32.mrf.mxu0
      %622 = vdwg.mxu0
      %v623 = vadd.f32 %v572, %v618
      %624 = vrot.lane.b32.xlu0 %v221, 92
      %v625 = vpop.permute.xlu0 %624
      %626 = vrot.lane.b32.xlu0 %v222, 92
      %v627 = vpop.permute.xlu0 %626
      %vm628 = vcmask 752640
      %v629 = vsel %vm628, %v625, %v627
      %v632 = vsel %vm230, %v214, 0
      %634 = vmatprep.subr.bf16.mxu0 0
      %635 = vmatpush1.bf16.msra.mxu0 0
      %636 = vmatprep.subr.bf16.mxu0 0
      %637 = vmatpush1.bf16.msra.mxu0 0
      %638 = vmatprep.subr.bf16.mxu0 0
      %639 = vmatpush1.bf16.msra.mxu0 0
      %640 = vmatprep.subr.bf16.mxu0 0
      %641 = vmatpush1.bf16.msra.mxu0 0
      %642 = vmatprep.subr.bf16.mxu0 0
      %643 = vmatpush1.bf16.msra.mxu0 0
      %644 = vmatprep.subr.bf16.mxu0 0
      %645 = vmatpush1.bf16.msra.mxu0 0
      %646 = vmatprep.subr.bf16.mxu0 0
      %647 = vmatpush1.bf16.msra.mxu0 0
      %648 = vmatprep.subr.bf16.mxu0 0
      %649 = vmatpush1.bf16.msra.mxu0 %v629
      %650 = vmatprep.subr.bf16.mxu0 0
      %651 = vmatpush2.bf16.msra.mxu0 0
      %652 = vmatprep.subr.bf16.mxu0 0
      %653 = vmatpush2.bf16.msra.mxu0 0
      %654 = vmatprep.subr.bf16.mxu0 0
      %655 = vmatpush2.bf16.msra.mxu0 0
      %656 = vmatprep.subr.bf16.mxu0 0
      %657 = vmatpush2.bf16.msra.mxu0 0
      %658 = vmatprep.subr.bf16.mxu0 0
      %659 = vmatpush2.bf16.msra.mxu0 0
      %660 = vmatprep.subr.bf16.mxu0 0
      %661 = vmatpush2.bf16.msra.mxu0 0
      %662 = vmatprep.subr.bf16.mxu0 0
      %663 = vmatpush2.bf16.msra.mxu0 0
      %664 = vmatprep.subr.bf16.mxu0 0
      %665 = vmatpush2.bf16.msra.mxu0 0
      %666 = vmatprep.mubr.bf16.mxu0 0
      %667 = vmatmul.mubr.bf16.gmra.mxu0 %v632
      %v668 = vpop.f32.mrf.mxu0
      %v669 = vadd.f32 0.0, %v668
      %v670 = vpop.f32.mrf.mxu0
      %v671 = vpop.f32.mrf.mxu0
      %v672 = vpop.f32.mrf.mxu0
      %673 = vdwg.mxu0
      %v674 = vadd.f32 %v623, %v669
      %v675 = vld [vmem:[%s2] sm:$0xff]
      %677 = vset.pattern.permute.xlu0 0
      %678 = vperm.xlu0 %677, %v675
      %v679 = vpop.permute.xlu0 %678
      %v681 = vmul.f32 %v674, %v679
      %682 = vset.pattern.permute.xlu0 1
      %683 = vperm.xlu0 %682, %v675
      %v684 = vpop.permute.xlu0 %683
      %v686 = vadd.f32 %v681, %v684
      %v687 = vmax.f32 %v686, 0.0
      %v688 = vpack.c.bf16 %v687, %v687
      %689 = vst [vmem:[%s202] sm:$0xf] %v688
      %p690 = scmp.lt.s32.totalorder %s18, 1
      %s691 = scalar_select %p690, %s18, 1
      %p692 = scmp.lt.s32.totalorder %s19, 0
      %s693 = scalar_select %p692, %s19, 0
      %s694 = sadd.s32 %s693, %s691
      %s695 = smul.addr %s694, 4
      %s696 = scalar_lea.vmem %s3, %s695
      // Predicated region
      $region33: #{rsu4_forward.12} parent=31 // pred_check
        %p697 = pneg %p116
      $region34: #{rsu4_forward.12} parent=31 // pred_check_branch
        %699 = sbr.rel (%p697) target = $region36
      $region35: #{rsu4_forward.12} parent=31 // pred_region
        _
      $region36: #{rsu4_forward.12} parent=31 // pred_fallthru
        _
    $region32: #{rsu4_forward.12} parent=5 // pred_fallthru
      _
    %p700 = scmp.le.s32.totalorder 2, %s9
    // Predicated region
    $region37: #{rsu4_forward.12} parent=5 // pred_check
      %p701 = pneg %p700
    $region38: #{rsu4_forward.12} parent=5 // pred_check_branch
      %703 = sbr.rel (%p701) target = $region40
    $region39: #{rsu4_forward.12} parent=5 // pred_region
      %s704 = ssub.s32 %s9, 2
      // Predicated region
      $region41: #{rsu4_forward.12} parent=39 // pred_check
        %p705 = pneg %p122
      $region42: #{rsu4_forward.12} parent=39 // pred_check_branch
        %707 = sbr.rel (%p705) target = $region44
      $region43: #{rsu4_forward.12} parent=39 // pred_region
        %p708 = scmp.lt.s32.totalorder %s20, 1
        %s709 = scalar_select %p708, %s20, 1
        %p710 = scmp.lt.s32.totalorder %s21, 0
        %s711 = scalar_select %p710, %s21, 0
        %s712 = sadd.s32 %s711, %s709
        %s713 = smul.addr %s712, 4
        %s714 = scalar_lea.vmem %s3, %s713
      $region44: #{rsu4_forward.12} parent=39 // pred_fallthru
        _
    $region40: #{rsu4_forward.12} parent=5 // pred_fallthru
      _
  $region6: #{rsu4_forward.12} parent=0 // loop_footer
    %s13 = sadd.s32 1, %s9
  $region7: #{rsu4_forward.12} parent=0 // loop_footer_branch
    %8 = sbr.rel target = $region3
  $region8: #{rsu4_forward.12} parent=0 // loop_exit
    _

// kernel: rsu4_forward.13
$region0: #{rsu4_forward.13}
  #allocation0 [shape = 'u32[]', space=smem, size = 0x4, offset = 0x4, fixed_abs, tag = 'smem constant byte address 0x4 - core index']
  #allocation1 [shape = 'u32[144,128]{1,0:T(1,128)}', space=vmem, size = 0x12000, scoped, tag = 'internal scratch']
  %s0 = inlined_call_operand.vmem [shape: bf16[2,1,16,142], index: 0, kind: input, shape index: {}]
  %s1 = inlined_call_operand.vmem [shape: bf16[2,1,16,142], index: 1, kind: input, shape index: {}]
  %s2 = inlined_call_operand.vmem [shape: bf16[9,8,16], index: 2, kind: input, shape index: {}]
  %s3 = inlined_call_operand.vmem [shape: bf16[9,8,16], index: 3, kind: input, shape index: {}]
  %s4 = inlined_call_operand.vmem [shape: f32[8,2], index: 4, kind: input, shape index: {}]
  %s5 = inlined_call_operand.vmem [shape: bf16[2,8,128], index: 5, kind: output, shape index: {}]
  %s6 = sld [smem:[#allocation0]]
  $region53: #{rsu4_forward.13} parent=0
    _
  %s8 = ssub.s32 1, %s6
  %s9 = scalar_select 0, %s8, %s6
  loop: start=0, step=1, limit=4
  $region2: #{rsu4_forward.13} parent=0 // loop_pre_header
    _
  $region3: #{rsu4_forward.13} parent=0 // loop_header
    %s11 = sphi 0, %s15
    %p12 = scmp.ge.s32.totalorder %s11, 4
    %s18 = sphi 0, %s30
    %s19 = sphi 0, %s26
    %s20 = sphi 0, %s18
    %s21 = sphi 0, %s19
    %s22 = sphi 0, %s20
    %s23 = sphi 0, %s21
    %s35 = sphi 0, %s37
    %s38 = sphi 0, %s35
    %s39 = sphi 0, %s38
    %s55 = sphi 0, %s39
    %s63 = sphi 0, %s65
    %s66 = sphi 0, %s63
    %s67 = sphi 0, %s66
    %s83 = sphi 0, %s67
    %s87 = sphi 0, %s87
    %s89 = sphi 0, %s87
    %s90 = sphi 0, %s89
    %s104 = sphi 0, %s90
    %s108 = sphi 0, %s108
    %s110 = sphi 0, %s108
    %s111 = sphi 0, %s110
    %s125 = sphi 0, %s111
    %s129 = sphi 0, %s129
    %s131 = sphi 0, %s129
    %s132 = sphi 0, %s131
    %s146 = sphi 0, %s132
    %s154 = sphi 0, %s156
    %s157 = sphi 0, %s154
    %s158 = sphi 0, %s157
    %s174 = sphi 0, %s158
  $region4: #{rsu4_forward.13} parent=0 // loop_header_branch
    %14 = sbr.rel (%p12) target = $region8
  $region5: #{rsu4_forward.13} parent=0 // loop_body
    %s16 = ssub.s32 %s11, 1
    %s17 = ssub.s32 %s11, 2
    %s24 = sadd.s32 1, %s19
    %p25 = scmp.ge.s32.totalorder %s24, 1
    %s26 = scalar_select %p25, 0, %s24
    %s27 = sadd.s32 1, %s18
    %s28 = scalar_select %p25, %s27, %s18
    %p29 = scmp.ge.s32.totalorder %s28, 2
    %s30 = scalar_select %p29, 0, %s28
    %s31 = ssub.s32 %s18, %s30
    %s32 = ssub.s32 %s19, %s26
    %s33 = sor.u32 %s31, %s32
    %p34 = scmp.eq.s32.totalorder %s33, 0
    %s36 = sadd.s32 %s35, 1
    %s37 = scalar_select %p34, %s35, %s36
    %p40 = pneg %p34
    %p41 = scmp.eq.s32.totalorder %s11, 1
    %p42 = por %p40, %p41
    %p43 = scmp.ne.s32.totalorder %s35, %s38
    %p44 = scmp.eq.s32.totalorder %s11, 0
    %p45 = por %p43, %p44
    %p46 = scmp.ne.s32.totalorder %s35, %s38
    %p47 = scmp.eq.s32.totalorder %s16, 1
    %p48 = por %p46, %p47
    %p49 = scmp.ne.s32.totalorder %s38, %s39
    %p50 = scmp.eq.s32.totalorder %s16, 0
    %p51 = por %p49, %p50
    %p52 = scmp.ne.s32.totalorder %s38, %s39
    %p53 = scmp.eq.s32.totalorder %s17, 1
    %p54 = por %p52, %p53
    %p56 = scmp.ne.s32.totalorder %s39, %s55
    %p57 = scmp.eq.s32.totalorder %s17, 0
    %p58 = por %p56, %p57
    %s59 = ssub.s32 %s18, %s30
    %s60 = ssub.s32 %s19, %s26
    %s61 = sor.u32 %s59, %s60
    %p62 = scmp.eq.s32.totalorder %s61, 0
    %s64 = sadd.s32 %s63, 1
    %s65 = scalar_select %p62, %s63, %s64
    %p68 = pneg %p62
    %p69 = scmp.eq.s32.totalorder %s11, 1
    %p70 = por %p68, %p69
    %p71 = scmp.ne.s32.totalorder %s63, %s66
    %p72 = scmp.eq.s32.totalorder %s11, 0
    %p73 = por %p71, %p72
    %p74 = scmp.ne.s32.totalorder %s63, %s66
    %p75 = scmp.eq.s32.totalorder %s16, 1
    %p76 = por %p74, %p75
    %p77 = scmp.ne.s32.totalorder %s66, %s67
    %p78 = scmp.eq.s32.totalorder %s16, 0
    %p79 = por %p77, %p78
    %p80 = scmp.ne.s32.totalorder %s66, %s67
    %p81 = scmp.eq.s32.totalorder %s17, 1
    %p82 = por %p80, %p81
    %p84 = scmp.ne.s32.totalorder %s67, %s83
    %p85 = scmp.eq.s32.totalorder %s17, 0
    %p86 = por %p84, %p85
    %s88 = sadd.s32 %s87, 1
    %p91 = scmp.eq.s32.totalorder %s11, 1
    %p92 = scmp.ne.s32.totalorder %s87, %s89
    %p93 = scmp.eq.s32.totalorder %s11, 0
    %p94 = por %p92, %p93
    %p95 = scmp.ne.s32.totalorder %s87, %s89
    %p96 = scmp.eq.s32.totalorder %s16, 1
    %p97 = por %p95, %p96
    %p98 = scmp.ne.s32.totalorder %s89, %s90
    %p99 = scmp.eq.s32.totalorder %s16, 0
    %p100 = por %p98, %p99
    %p101 = scmp.ne.s32.totalorder %s89, %s90
    %p102 = scmp.eq.s32.totalorder %s17, 1
    %p103 = por %p101, %p102
    %p105 = scmp.ne.s32.totalorder %s90, %s104
    %p106 = scmp.eq.s32.totalorder %s17, 0
    %p107 = por %p105, %p106
    %s109 = sadd.s32 %s108, 1
    %p112 = scmp.eq.s32.totalorder %s11, 1
    %p113 = scmp.ne.s32.totalorder %s108, %s110
    %p114 = scmp.eq.s32.totalorder %s11, 0
    %p115 = por %p113, %p114
    %p116 = scmp.ne.s32.totalorder %s108, %s110
    %p117 = scmp.eq.s32.totalorder %s16, 1
    %p118 = por %p116, %p117
    %p119 = scmp.ne.s32.totalorder %s110, %s111
    %p120 = scmp.eq.s32.totalorder %s16, 0
    %p121 = por %p119, %p120
    %p122 = scmp.ne.s32.totalorder %s110, %s111
    %p123 = scmp.eq.s32.totalorder %s17, 1
    %p124 = por %p122, %p123
    %p126 = scmp.ne.s32.totalorder %s111, %s125
    %p127 = scmp.eq.s32.totalorder %s17, 0
    %p128 = por %p126, %p127
    %s130 = sadd.s32 %s129, 1
    %p133 = scmp.eq.s32.totalorder %s11, 1
    %p134 = scmp.ne.s32.totalorder %s129, %s131
    %p135 = scmp.eq.s32.totalorder %s11, 0
    %p136 = por %p134, %p135
    %p137 = scmp.ne.s32.totalorder %s129, %s131
    %p138 = scmp.eq.s32.totalorder %s16, 1
    %p139 = por %p137, %p138
    %p140 = scmp.ne.s32.totalorder %s131, %s132
    %p141 = scmp.eq.s32.totalorder %s16, 0
    %p142 = por %p140, %p141
    %p143 = scmp.ne.s32.totalorder %s131, %s132
    %p144 = scmp.eq.s32.totalorder %s17, 1
    %p145 = por %p143, %p144
    %p147 = scmp.ne.s32.totalorder %s132, %s146
    %p148 = scmp.eq.s32.totalorder %s17, 0
    %p149 = por %p147, %p148
    %s150 = ssub.s32 %s18, %s30
    %s151 = ssub.s32 %s19, %s26
    %s152 = sor.u32 %s150, %s151
    %p153 = scmp.eq.s32.totalorder %s152, 0
    %s155 = sadd.s32 %s154, 1
    %s156 = scalar_select %p153, %s154, %s155
    %p159 = pneg %p153
    %p160 = scmp.eq.s32.totalorder %s11, 1
    %p161 = por %p159, %p160
    %p162 = scmp.ne.s32.totalorder %s154, %s157
    %p163 = scmp.eq.s32.totalorder %s11, 0
    %p164 = por %p162, %p163
    %p165 = scmp.ne.s32.totalorder %s154, %s157
    %p166 = scmp.eq.s32.totalorder %s16, 1
    %p167 = por %p165, %p166
    %p168 = scmp.ne.s32.totalorder %s157, %s158
    %p169 = scmp.eq.s32.totalorder %s16, 0
    %p170 = por %p168, %p169
    %p171 = scmp.ne.s32.totalorder %s157, %s158
    %p172 = scmp.eq.s32.totalorder %s17, 1
    %p173 = por %p171, %p172
    %p175 = scmp.ne.s32.totalorder %s158, %s174
    %p176 = scmp.eq.s32.totalorder %s17, 0
    %p177 = por %p175, %p176
    %p178 = scmp.le.s32.totalorder 1, %s11
    %p179 = scmp.lt.s32.totalorder %s11, 3
    %p180 = pnand %p178, %p179
    %p181 = pneg %p180
    // Predicated region
    $region9: #{rsu4_forward.13} parent=5 // pred_check
      _
    $region10: #{rsu4_forward.13} parent=5 // pred_check_branch
      %183 = sbr.rel (%p180) target = $region12
    $region11: #{rsu4_forward.13} parent=5 // pred_region
      %s184 = ssub.s32 %s11, 1
      // Predicated region
      $region13: #{rsu4_forward.13} parent=11 // pred_check
        %p185 = pneg %p100
      $region14: #{rsu4_forward.13} parent=11 // pred_check_branch
        %187 = sbr.rel (%p185) target = $region16
      $region15: #{rsu4_forward.13} parent=11 // pred_region
        _
      $region16: #{rsu4_forward.13} parent=11 // pred_fallthru
        _
      // Predicated region
      $region17: #{rsu4_forward.13} parent=11 // pred_check
        %p188 = pneg %p121
      $region18: #{rsu4_forward.13} parent=11 // pred_check_branch
        %190 = sbr.rel (%p188) target = $region20
      $region19: #{rsu4_forward.13} parent=11 // pred_region
        _
      $region20: #{rsu4_forward.13} parent=11 // pred_fallthru
        _
      // Predicated region
      $region21: #{rsu4_forward.13} parent=11 // pred_check
        %p191 = pneg %p142
      $region22: #{rsu4_forward.13} parent=11 // pred_check_branch
        %193 = sbr.rel (%p191) target = $region24
      $region23: #{rsu4_forward.13} parent=11 // pred_region
        _
      $region24: #{rsu4_forward.13} parent=11 // pred_fallthru
        _
    $region12: #{rsu4_forward.13} parent=5 // pred_fallthru
      _
    %p194 = scmp.lt.s32.totalorder %s11, 2
    // Predicated region
    $region25: #{rsu4_forward.13} parent=5 // pred_check
      %p195 = pneg %p194
    $region26: #{rsu4_forward.13} parent=5 // pred_check_branch
      %197 = sbr.rel (%p195) target = $region28
    $region27: #{rsu4_forward.13} parent=5 // pred_region
      // Predicated region
      $region29: #{rsu4_forward.13} parent=27 // pred_check
        %p198 = pneg %p45
      $region30: #{rsu4_forward.13} parent=27 // pred_check_branch
        %200 = sbr.rel (%p198) target = $region32
      $region31: #{rsu4_forward.13} parent=27 // pred_region
        %p201 = scmp.lt.s32.totalorder %s18, 1
        %s202 = scalar_select %p201, %s18, 1
        %p203 = scmp.lt.s32.totalorder %s19, 0
        %s204 = scalar_select %p203, %s19, 0
        %s205 = smul.addr %s204, 4
        %s206 = smul.addr %s202, 4
        %s207 = sadd.s32 %s205, %s206
        %s208 = smul.addr %s207, 4
        %s209 = scalar_lea.vmem %s0, %s208
      $region32: #{rsu4_forward.13} parent=27 // pred_fallthru
        _
      // Predicated region
      $region33: #{rsu4_forward.13} parent=27 // pred_check
        %p210 = pneg %p73
      $region34: #{rsu4_forward.13} parent=27 // pred_check_branch
        %212 = sbr.rel (%p210) target = $region36
      $region35: #{rsu4_forward.13} parent=27 // pred_region
        %p213 = scmp.lt.s32.totalorder %s18, 1
        %s214 = scalar_select %p213, %s18, 1
        %p215 = scmp.lt.s32.totalorder %s19, 0
        %s216 = scalar_select %p215, %s19, 0
        %s217 = smul.addr %s216, 4
        %s218 = smul.addr %s214, 4
        %s219 = sadd.s32 %s217, %s218
        %s220 = smul.addr %s219, 4
        %s221 = scalar_lea.vmem %s1, %s220
      $region36: #{rsu4_forward.13} parent=27 // pred_fallthru
        _
    $region28: #{rsu4_forward.13} parent=5 // pred_fallthru
      _
    %p222 = scmp.le.s32.totalorder 1, %s11
    %p223 = scmp.lt.s32.totalorder %s11, 3
    %p224 = pnand %p222, %p223
    %p225 = pneg %p224
    // Predicated region
    $region37: #{rsu4_forward.13} parent=5 // pred_check
      _
    $region38: #{rsu4_forward.13} parent=5 // pred_check_branch
      %227 = sbr.rel (%p224) target = $region40
    $region39: #{rsu4_forward.13} parent=5 // pred_region
      %s228 = ssub.s32 %s11, 1
      %p229 = scmp.lt.s32.totalorder %s20, 1
      %s230 = scalar_select %p229, %s20, 1
      %p231 = scmp.lt.s32.totalorder %s21, 0
      %s232 = scalar_select %p231, %s21, 0
      %s233 = smul.addr %s232, 4
      %s234 = smul.addr %s230, 4
      %s235 = sadd.s32 %s233, %s234
      %s236 = smul.addr %s235, 4
      %s237 = scalar_lea.vmem %s0, %s236
      %p238 = pneg %p51
      %p239 = pneg %p48
      %p240 = scmp.lt.s32.totalorder %s20, 1
      %s241 = scalar_select %p240, %s20, 1
      %p242 = scmp.lt.s32.totalorder %s21, 0
      %s243 = scalar_select %p242, %s21, 0
      %s244 = smul.addr %s243, 4
      %s245 = smul.addr %s241, 4
      %s246 = sadd.s32 %s244, %s245
      %s247 = smul.addr %s246, 4
      %s248 = scalar_lea.vmem %s1, %s247
      %p249 = pneg %p79
      %p250 = pneg %p76
      %p251 = pneg %p100
      %p252 = pneg %p97
      %p253 = pneg %p121
      %p254 = pneg %p118
      %p255 = pneg %p142
      %p256 = pneg %p139
      %p257 = pneg %p170
      %p258 = pneg %p167
      %p259 = scmp.lt.s32.totalorder %s20, 1
      %s260 = scalar_select %p259, %s20, 1
      %p261 = scmp.lt.s32.totalorder %s21, 0
      %s262 = scalar_select %p261, %s21, 0
      %s263 = sadd.s32 %s262, %s260
      %s264 = smul.addr %s263, 4
      %s265 = scalar_lea.vmem %s5, %s264
      %p266 = scmp.lt.s32.totalorder %s20, 1
      %s267 = scalar_select %p266, %s20, 1
      %p268 = scmp.lt.s32.totalorder %s21, 0
      %s269 = scalar_select %p268, %s21, 0
      %s270 = smul.addr %s269, 4
      %s271 = smul.addr %s267, 4
      %s272 = sadd.s32 %s270, %s271
      %s273 = smul.addr %s272, 4
      %s274 = scalar_lea.vmem %s0, %s273
      %p275 = scmp.lt.s32.totalorder %s20, 1
      %s276 = scalar_select %p275, %s20, 1
      %p277 = scmp.lt.s32.totalorder %s21, 0
      %s278 = scalar_select %p277, %s21, 0
      %s279 = smul.addr %s278, 4
      %s280 = smul.addr %s276, 4
      %s281 = sadd.s32 %s279, %s280
      %s282 = smul.addr %s281, 4
      %s283 = scalar_lea.vmem %s1, %s282
      %p284 = scmp.lt.s32.totalorder %s20, 1
      %s285 = scalar_select %p284, %s20, 1
      %p286 = scmp.lt.s32.totalorder %s21, 0
      %s287 = scalar_select %p286, %s21, 0
      %s288 = sadd.s32 %s287, %s285
      %s289 = smul.addr %s288, 4
      %s290 = scalar_lea.vmem %s5, %s289
      %v292 = vld [vmem:[%s274] sm:$0xff]
      %v293 = vld [vmem:[%s274 + $0x8] sm:$0xff]
      %v294 = vld [vmem:[%s2] sm:$0xf]
      %v295 = vld [vmem:[%s2 + $0x4] sm:$0xf]
      %v296 = vld [vmem:[%s2 + $0x8] sm:$0xf]
      %v297 = vld [vmem:[%s2 + $0xc] sm:$0xf]
      %v298 = vld [vmem:[%s2 + $0x10] sm:$0xf]
      %v299 = vld [vmem:[%s2 + $0x14] sm:$0xf]
      %v300 = vld [vmem:[%s2 + $0x18] sm:$0xf]
      %v301 = vld [vmem:[%s2 + $0x1c] sm:$0xf]
      %v302 = vld [vmem:[%s2 + $0x20] sm:$0xf]
      %v305 = vunpack.c.l.b16 %v292
      %v306 = vunpack.c.h.b16 %v292
      %v307 = vunpack.c.l.b16 %v293
      %v308 = vunpack.c.h.b16 %v293
      %v309 = vpack.c.b16 %v307, %v305
      %v310 = vpack.c.b16 %v308, %v306
      %311 = vrot.lane.b32.xlu0 %v309, 127
      %v312 = vpop.permute.xlu0 %311
      %313 = vrot.lane.b32.xlu0 %v310, 127
      %v314 = vpop.permute.xlu0 %313
      %vm315 = vcmask 1039360
      %v316 = vsel %vm315, %v312, %v314
      %vm318 = vcmask 130048
      %v320 = vsel %vm318, %v295, 0
      %322 = vmatprep.subr.bf16.mxu0 0
      %323 = vmatpush1.bf16.msra.mxu0 0
      %324 = vmatprep.subr.bf16.mxu0 0
      %325 = vmatpush1.bf16.msra.mxu0 0
      %326 = vmatprep.subr.bf16.mxu0 0
      %327 = vmatpush1.bf16.msra.mxu0 0
      %328 = vmatprep.subr.bf16.mxu0 0
      %329 = vmatpush1.bf16.msra.mxu0 0
      %330 = vmatprep.subr.bf16.mxu0 0
      %331 = vmatpush1.bf16.msra.mxu0 0
      %332 = vmatprep.subr.bf16.mxu0 0
      %333 = vmatpush1.bf16.msra.mxu0 0
      %334 = vmatprep.subr.bf16.mxu0 0
      %335 = vmatpush1.bf16.msra.mxu0 0
      %336 = vmatprep.subr.bf16.mxu0 0
      %337 = vmatpush1.bf16.msra.mxu0 %v316
      %338 = vmatprep.subr.bf16.mxu0 0
      %339 = vmatpush2.bf16.msra.mxu0 0
      %340 = vmatprep.subr.bf16.mxu0 0
      %341 = vmatpush2.bf16.msra.mxu0 0
      %342 = vmatprep.subr.bf16.mxu0 0
      %343 = vmatpush2.bf16.msra.mxu0 0
      %344 = vmatprep.subr.bf16.mxu0 0
      %345 = vmatpush2.bf16.msra.mxu0 0
      %346 = vmatprep.subr.bf16.mxu0 0
      %347 = vmatpush2.bf16.msra.mxu0 0
      %348 = vmatprep.subr.bf16.mxu0 0
      %349 = vmatpush2.bf16.msra.mxu0 0
      %350 = vmatprep.subr.bf16.mxu0 0
      %351 = vmatpush2.bf16.msra.mxu0 0
      %352 = vmatprep.subr.bf16.mxu0 0
      %353 = vmatpush2.bf16.msra.mxu0 0
      %354 = vmatprep.mubr.bf16.mxu0 0
      %355 = vmatmul.mubr.bf16.gmra.mxu0 %v320
      %v356 = vpop.f32.mrf.mxu0
      %v357 = vadd.f32 0.0, %v356
      %v358 = vpop.f32.mrf.mxu0
      %v359 = vpop.f32.mrf.mxu0
      %v360 = vpop.f32.mrf.mxu0
      %361 = vdwg.mxu0
      %v364 = vsel %vm318, %v294, 0
      %366 = vmatprep.subr.bf16.mxu0 0
      %367 = vmatpush1.bf16.msra.mxu0 0
      %368 = vmatprep.subr.bf16.mxu0 0
      %369 = vmatpush1.bf16.msra.mxu0 0
      %370 = vmatprep.subr.bf16.mxu0 0
      %371 = vmatpush1.bf16.msra.mxu0 0
      %372 = vmatprep.subr.bf16.mxu0 0
      %373 = vmatpush1.bf16.msra.mxu0 0
      %374 = vmatprep.subr.bf16.mxu0 0
      %375 = vmatpush1.bf16.msra.mxu0 0
      %376 = vmatprep.subr.bf16.mxu0 0
      %377 = vmatpush1.bf16.msra.mxu0 0
      %378 = vmatprep.subr.bf16.mxu0 0
      %379 = vmatpush1.bf16.msra.mxu0 0
      %380 = vmatprep.subr.bf16.mxu0 0
      %381 = vmatpush1.bf16.msra.mxu0 %v309
      %382 = vmatprep.subr.bf16.mxu0 0
      %383 = vmatpush2.bf16.msra.mxu0 0
      %384 = vmatprep.subr.bf16.mxu0 0
      %385 = vmatpush2.bf16.msra.mxu0 0
      %386 = vmatprep.subr.bf16.mxu0 0
      %387 = vmatpush2.bf16.msra.mxu0 0
      %388 = vmatprep.subr.bf16.mxu0 0
      %389 = vmatpush2.bf16.msra.mxu0 0
      %390 = vmatprep.subr.bf16.mxu0 0
      %391 = vmatpush2.bf16.msra.mxu0 0
      %392 = vmatprep.subr.bf16.mxu0 0
      %393 = vmatpush2.bf16.msra.mxu0 0
      %394 = vmatprep.subr.bf16.mxu0 0
      %395 = vmatpush2.bf16.msra.mxu0 0
      %396 = vmatprep.subr.bf16.mxu0 0
      %397 = vmatpush2.bf16.msra.mxu0 0
      %398 = vmatprep.mubr.bf16.mxu0 0
      %399 = vmatmul.mubr.bf16.gmra.mxu0 %v364
      %v400 = vpop.f32.mrf.mxu0
      %v401 = vadd.f32 %v357, %v400
      %v402 = vpop.f32.mrf.mxu0
      %v403 = vpop.f32.mrf.mxu0
      %v404 = vpop.f32.mrf.mxu0
      %405 = vdwg.mxu0
      %406 = vrot.lane.b32.xlu0 %v309, 126
      %v407 = vpop.permute.xlu0 %406
      %408 = vrot.lane.b32.xlu0 %v310, 126
      %v409 = vpop.permute.xlu0 %408
      %vm410 = vcmask 1031168
      %v411 = vsel %vm410, %v407, %v409
      %v414 = vsel %vm318, %v296, 0
      %416 = vmatprep.subr.bf16.mxu0 0
      %417 = vmatpush1.bf16.msra.mxu0 0
      %418 = vmatprep.subr.bf16.mxu0 0
      %419 = vmatpush1.bf16.msra.mxu0 0
      %420 = vmatprep.subr.bf16.mxu0 0
      %421 = vmatpush1.bf16.msra.mxu0 0
      %422 = vmatprep.subr.bf16.mxu0 0
      %423 = vmatpush1.bf16.msra.mxu0 0
      %424 = vmatprep.subr.bf16.mxu0 0
      %425 = vmatpush1.bf16.msra.mxu0 0
      %426 = vmatprep.subr.bf16.mxu0 0
      %427 = vmatpush1.bf16.msra.mxu0 0
      %428 = vmatprep.subr.bf16.mxu0 0
      %429 = vmatpush1.bf16.msra.mxu0 0
      %430 = vmatprep.subr.bf16.mxu0 0
      %431 = vmatpush1.bf16.msra.mxu0 %v411
      %432 = vmatprep.subr.bf16.mxu0 0
      %433 = vmatpush2.bf16.msra.mxu0 0
      %434 = vmatprep.subr.bf16.mxu0 0
      %435 = vmatpush2.bf16.msra.mxu0 0
      %436 = vmatprep.subr.bf16.mxu0 0
      %437 = vmatpush2.bf16.msra.mxu0 0
      %438 = vmatprep.subr.bf16.mxu0 0
      %439 = vmatpush2.bf16.msra.mxu0 0
      %440 = vmatprep.subr.bf16.mxu0 0
      %441 = vmatpush2.bf16.msra.mxu0 0
      %442 = vmatprep.subr.bf16.mxu0 0
      %443 = vmatpush2.bf16.msra.mxu0 0
      %444 = vmatprep.subr.bf16.mxu0 0
      %445 = vmatpush2.bf16.msra.mxu0 0
      %446 = vmatprep.subr.bf16.mxu0 0
      %447 = vmatpush2.bf16.msra.mxu0 0
      %448 = vmatprep.mubr.bf16.mxu0 0
      %449 = vmatmul.mubr.bf16.gmra.mxu0 %v414
      %v450 = vpop.f32.mrf.mxu0
      %v451 = vadd.f32 0.0, %v450
      %v452 = vpop.f32.mrf.mxu0
      %v453 = vpop.f32.mrf.mxu0
      %v454 = vpop.f32.mrf.mxu0
      %455 = vdwg.mxu0
      %v456 = vadd.f32 %v401, %v451
      %457 = vrot.lane.b32.xlu0 %v309, 122
      %v458 = vpop.permute.xlu0 %457
      %459 = vrot.lane.b32.xlu0 %v310, 122
      %v460 = vpop.permute.xlu0 %459
      %vm461 = vcmask 998400
      %v462 = vsel %vm461, %v458, %v460
      %v465 = vsel %vm318, %v297, 0
      %467 = vmatprep.subr.bf16.mxu0 0
      %468 = vmatpush1.bf16.msra.mxu0 0
      %469 = vmatprep.subr.bf16.mxu0 0
      %470 = vmatpush1.bf16.msra.mxu0 0
      %471 = vmatprep.subr.bf16.mxu0 0
      %472 = vmatpush1.bf16.msra.mxu0 0
      %473 = vmatprep.subr.bf16.mxu0 0
      %474 = vmatpush1.bf16.msra.mxu0 0
      %475 = vmatprep.subr.bf16.mxu0 0
      %476 = vmatpush1.bf16.msra.mxu0 0
      %477 = vmatprep.subr.bf16.mxu0 0
      %478 = vmatpush1.bf16.msra.mxu0 0
      %479 = vmatprep.subr.bf16.mxu0 0
      %480 = vmatpush1.bf16.msra.mxu0 0
      %481 = vmatprep.subr.bf16.mxu0 0
      %482 = vmatpush1.bf16.msra.mxu0 %v462
      %483 = vmatprep.subr.bf16.mxu0 0
      %484 = vmatpush2.bf16.msra.mxu0 0
      %485 = vmatprep.subr.bf16.mxu0 0
      %486 = vmatpush2.bf16.msra.mxu0 0
      %487 = vmatprep.subr.bf16.mxu0 0
      %488 = vmatpush2.bf16.msra.mxu0 0
      %489 = vmatprep.subr.bf16.mxu0 0
      %490 = vmatpush2.bf16.msra.mxu0 0
      %491 = vmatprep.subr.bf16.mxu0 0
      %492 = vmatpush2.bf16.msra.mxu0 0
      %493 = vmatprep.subr.bf16.mxu0 0
      %494 = vmatpush2.bf16.msra.mxu0 0
      %495 = vmatprep.subr.bf16.mxu0 0
      %496 = vmatpush2.bf16.msra.mxu0 0
      %497 = vmatprep.subr.bf16.mxu0 0
      %498 = vmatpush2.bf16.msra.mxu0 0
      %499 = vmatprep.mubr.bf16.mxu0 0
      %500 = vmatmul.mubr.bf16.gmra.mxu0 %v465
      %v501 = vpop.f32.mrf.mxu0
      %v502 = vadd.f32 0.0, %v501
      %v503 = vpop.f32.mrf.mxu0
      %v504 = vpop.f32.mrf.mxu0
      %v505 = vpop.f32.mrf.mxu0
      %506 = vdwg.mxu0
      %v507 = vadd.f32 %v456, %v502
      %508 = vrot.lane.b32.xlu0 %v309, 121
      %v509 = vpop.permute.xlu0 %508
      %510 = vrot.lane.b32.xlu0 %v310, 121
      %v511 = vpop.permute.xlu0 %510
      %vm512 = vcmask 990208
      %v513 = vsel %vm512, %v509, %v511
      %v516 = vsel %vm318, %v298, 0
      %518 = vmatprep.subr.bf16.mxu0 0
      %519 = vmatpush1.bf16.msra.mxu0 0
      %520 = vmatprep.subr.bf16.mxu0 0
      %521 = vmatpush1.bf16.msra.mxu0 0
      %522 = vmatprep.subr.bf16.mxu0 0
      %523 = vmatpush1.bf16.msra.mxu0 0
      %524 = vmatprep.subr.bf16.mxu0 0
      %525 = vmatpush1.bf16.msra.mxu0 0
      %526 = vmatprep.subr.bf16.mxu0 0
      %527 = vmatpush1.bf16.msra.mxu0 0
      %528 = vmatprep.subr.bf16.mxu0 0
      %529 = vmatpush1.bf16.msra.mxu0 0
      %530 = vmatprep.subr.bf16.mxu0 0
      %531 = vmatpush1.bf16.msra.mxu0 0
      %532 = vmatprep.subr.bf16.mxu0 0
      %533 = vmatpush1.bf16.msra.mxu0 %v513
      %534 = vmatprep.subr.bf16.mxu0 0
      %535 = vmatpush2.bf16.msra.mxu0 0
      %536 = vmatprep.subr.bf16.mxu0 0
      %537 = vmatpush2.bf16.msra.mxu0 0
      %538 = vmatprep.subr.bf16.mxu0 0
      %539 = vmatpush2.bf16.msra.mxu0 0
      %540 = vmatprep.subr.bf16.mxu0 0
      %541 = vmatpush2.bf16.msra.mxu0 0
      %542 = vmatprep.subr.bf16.mxu0 0
      %543 = vmatpush2.bf16.msra.mxu0 0
      %544 = vmatprep.subr.bf16.mxu0 0
      %545 = vmatpush2.bf16.msra.mxu0 0
      %546 = vmatprep.subr.bf16.mxu0 0
      %547 = vmatpush2.bf16.msra.mxu0 0
      %548 = vmatprep.subr.bf16.mxu0 0
      %549 = vmatpush2.bf16.msra.mxu0 0
      %550 = vmatprep.mubr.bf16.mxu0 0
      %551 = vmatmul.mubr.bf16.gmra.mxu0 %v516
      %v552 = vpop.f32.mrf.mxu0
      %v553 = vadd.f32 0.0, %v552
      %v554 = vpop.f32.mrf.mxu0
      %v555 = vpop.f32.mrf.mxu0
      %v556 = vpop.f32.mrf.mxu0
      %557 = vdwg.mxu0
      %v558 = vadd.f32 %v507, %v553
      %559 = vrot.lane.b32.xlu0 %v309, 120
      %v560 = vpop.permute.xlu0 %559
      %561 = vrot.lane.b32.xlu0 %v310, 120
      %v562 = vpop.permute.xlu0 %561
      %vm563 = vcmask 982016
      %v564 = vsel %vm563, %v560, %v562
      %v567 = vsel %vm318, %v299, 0
      %569 = vmatprep.subr.bf16.mxu0 0
      %570 = vmatpush1.bf16.msra.mxu0 0
      %571 = vmatprep.subr.bf16.mxu0 0
      %572 = vmatpush1.bf16.msra.mxu0 0
      %573 = vmatprep.subr.bf16.mxu0 0
      %574 = vmatpush1.bf16.msra.mxu0 0
      %575 = vmatprep.subr.bf16.mxu0 0
      %576 = vmatpush1.bf16.msra.mxu0 0
      %577 = vmatprep.subr.bf16.mxu0 0
      %578 = vmatpush1.bf16.msra.mxu0 0
      %579 = vmatprep.subr.bf16.mxu0 0
      %580 = vmatpush1.bf16.msra.mxu0 0
      %581 = vmatprep.subr.bf16.mxu0 0
      %582 = vmatpush1.bf16.msra.mxu0 0
      %583 = vmatprep.subr.bf16.mxu0 0
      %584 = vmatpush1.bf16.msra.mxu0 %v564
      %585 = vmatprep.subr.bf16.mxu0 0
      %586 = vmatpush2.bf16.msra.mxu0 0
      %587 = vmatprep.subr.bf16.mxu0 0
      %588 = vmatpush2.bf16.msra.mxu0 0
      %589 = vmatprep.subr.bf16.mxu0 0
      %590 = vmatpush2.bf16.msra.mxu0 0
      %591 = vmatprep.subr.bf16.mxu0 0
      %592 = vmatpush2.bf16.msra.mxu0 0
      %593 = vmatprep.subr.bf16.mxu0 0
      %594 = vmatpush2.bf16.msra.mxu0 0
      %595 = vmatprep.subr.bf16.mxu0 0
      %596 = vmatpush2.bf16.msra.mxu0 0
      %597 = vmatprep.subr.bf16.mxu0 0
      %598 = vmatpush2.bf16.msra.mxu0 0
      %599 = vmatprep.subr.bf16.mxu0 0
      %600 = vmatpush2.bf16.msra.mxu0 0
      %601 = vmatprep.mubr.bf16.mxu0 0
      %602 = vmatmul.mubr.bf16.gmra.mxu0 %v567
      %v603 = vpop.f32.mrf.mxu0
      %v604 = vadd.f32 0.0, %v603
      %v605 = vpop.f32.mrf.mxu0
      %v606 = vpop.f32.mrf.mxu0
      %v607 = vpop.f32.mrf.mxu0
      %608 = vdwg.mxu0
      %v609 = vadd.f32 %v558, %v604
      %610 = vrot.lane.b32.xlu0 %v309, 116
      %v611 = vpop.permute.xlu0 %610
      %612 = vrot.lane.b32.xlu0 %v310, 116
      %v613 = vpop.permute.xlu0 %612
      %vm614 = vcmask 949248
      %v615 = vsel %vm614, %v611, %v613
      %v618 = vsel %vm318, %v300, 0
      %620 = vmatprep.subr.bf16.mxu0 0
      %621 = vmatpush1.bf16.msra.mxu0 0
      %622 = vmatprep.subr.bf16.mxu0 0
      %623 = vmatpush1.bf16.msra.mxu0 0
      %624 = vmatprep.subr.bf16.mxu0 0
      %625 = vmatpush1.bf16.msra.mxu0 0
      %626 = vmatprep.subr.bf16.mxu0 0
      %627 = vmatpush1.bf16.msra.mxu0 0
      %628 = vmatprep.subr.bf16.mxu0 0
      %629 = vmatpush1.bf16.msra.mxu0 0
      %630 = vmatprep.subr.bf16.mxu0 0
      %631 = vmatpush1.bf16.msra.mxu0 0
      %632 = vmatprep.subr.bf16.mxu0 0
      %633 = vmatpush1.bf16.msra.mxu0 0
      %634 = vmatprep.subr.bf16.mxu0 0
      %635 = vmatpush1.bf16.msra.mxu0 %v615
      %636 = vmatprep.subr.bf16.mxu0 0
      %637 = vmatpush2.bf16.msra.mxu0 0
      %638 = vmatprep.subr.bf16.mxu0 0
      %639 = vmatpush2.bf16.msra.mxu0 0
      %640 = vmatprep.subr.bf16.mxu0 0
      %641 = vmatpush2.bf16.msra.mxu0 0
      %642 = vmatprep.subr.bf16.mxu0 0
      %643 = vmatpush2.bf16.msra.mxu0 0
      %644 = vmatprep.subr.bf16.mxu0 0
      %645 = vmatpush2.bf16.msra.mxu0 0
      %646 = vmatprep.subr.bf16.mxu0 0
      %647 = vmatpush2.bf16.msra.mxu0 0
      %648 = vmatprep.subr.bf16.mxu0 0
      %649 = vmatpush2.bf16.msra.mxu0 0
      %650 = vmatprep.subr.bf16.mxu0 0
      %651 = vmatpush2.bf16.msra.mxu0 0
      %652 = vmatprep.mubr.bf16.mxu0 0
      %653 = vmatmul.mubr.bf16.gmra.mxu0 %v618
      %v654 = vpop.f32.mrf.mxu0
      %v655 = vadd.f32 0.0, %v654
      %v656 = vpop.f32.mrf.mxu0
      %v657 = vpop.f32.mrf.mxu0
      %v658 = vpop.f32.mrf.mxu0
      %659 = vdwg.mxu0
      %v660 = vadd.f32 %v609, %v655
      %661 = vrot.lane.b32.xlu0 %v309, 115
      %v662 = vpop.permute.xlu0 %661
      %663 = vrot.lane.b32.xlu0 %v310, 115
      %v664 = vpop.permute.xlu0 %663
      %vm665 = vcmask 941056
      %v666 = vsel %vm665, %v662, %v664
      %v669 = vsel %vm318, %v301, 0
      %671 = vmatprep.subr.bf16.mxu0 0
      %672 = vmatpush1.bf16.msra.mxu0 0
      %673 = vmatprep.subr.bf16.mxu0 0
      %674 = vmatpush1.bf16.msra.mxu0 0
      %675 = vmatprep.subr.bf16.mxu0 0
      %676 = vmatpush1.bf16.msra.mxu0 0
      %677 = vmatprep.subr.bf16.mxu0 0
      %678 = vmatpush1.bf16.msra.mxu0 0
      %679 = vmatprep.subr.bf16.mxu0 0
      %680 = vmatpush1.bf16.msra.mxu0 0
      %681 = vmatprep.subr.bf16.mxu0 0
      %682 = vmatpush1.bf16.msra.mxu0 0
      %683 = vmatprep.subr.bf16.mxu0 0
      %684 = vmatpush1.bf16.msra.mxu0 0
      %685 = vmatprep.subr.bf16.mxu0 0
      %686 = vmatpush1.bf16.msra.mxu0 %v666
      %687 = vmatprep.subr.bf16.mxu0 0
      %688 = vmatpush2.bf16.msra.mxu0 0
      %689 = vmatprep.subr.bf16.mxu0 0
      %690 = vmatpush2.bf16.msra.mxu0 0
      %691 = vmatprep.subr.bf16.mxu0 0
      %692 = vmatpush2.bf16.msra.mxu0 0
      %693 = vmatprep.subr.bf16.mxu0 0
      %694 = vmatpush2.bf16.msra.mxu0 0
      %695 = vmatprep.subr.bf16.mxu0 0
      %696 = vmatpush2.bf16.msra.mxu0 0
      %697 = vmatprep.subr.bf16.mxu0 0
      %698 = vmatpush2.bf16.msra.mxu0 0
      %699 = vmatprep.subr.bf16.mxu0 0
      %700 = vmatpush2.bf16.msra.mxu0 0
      %701 = vmatprep.subr.bf16.mxu0 0
      %702 = vmatpush2.bf16.msra.mxu0 0
      %703 = vmatprep.mubr.bf16.mxu0 0
      %704 = vmatmul.mubr.bf16.gmra.mxu0 %v669
      %v705 = vpop.f32.mrf.mxu0
      %v706 = vadd.f32 0.0, %v705
      %v707 = vpop.f32.mrf.mxu0
      %v708 = vpop.f32.mrf.mxu0
      %v709 = vpop.f32.mrf.mxu0
      %710 = vdwg.mxu0
      %v711 = vadd.f32 %v660, %v706
      %712 = vrot.lane.b32.xlu0 %v309, 114
      %v713 = vpop.permute.xlu0 %712
      %714 = vrot.lane.b32.xlu0 %v310, 114
      %v715 = vpop.permute.xlu0 %714
      %vm716 = vcmask 932864
      %v717 = vsel %vm716, %v713, %v715
      %v720 = vsel %vm318, %v302, 0
      %722 = vmatprep.subr.bf16.mxu0 0
      %723 = vmatpush1.bf16.msra.mxu0 0
      %724 = vmatprep.subr.bf16.mxu0 0
      %725 = vmatpush1.bf16.msra.mxu0 0
      %726 = vmatprep.subr.bf16.mxu0 0
      %727 = vmatpush1.bf16.msra.mxu0 0
      %728 = vmatprep.subr.bf16.mxu0 0
      %729 = vmatpush1.bf16.msra.mxu0 0
      %730 = vmatprep.subr.bf16.mxu0 0
      %731 = vmatpush1.bf16.msra.mxu0 0
      %732 = vmatprep.subr.bf16.mxu0 0
      %733 = vmatpush1.bf16.msra.mxu0 0
      %734 = vmatprep.subr.bf16.mxu0 0
      %735 = vmatpush1.bf16.msra.mxu0 0
      %736 = vmatprep.subr.bf16.mxu0 0
      %737 = vmatpush1.bf16.msra.mxu0 %v717
      %738 = vmatprep.subr.bf16.mxu0 0
      %739 = vmatpush2.bf16.msra.mxu0 0
      %740 = vmatprep.subr.bf16.mxu0 0
      %741 = vmatpush2.bf16.msra.mxu0 0
      %742 = vmatprep.subr.bf16.mxu0 0
      %743 = vmatpush2.bf16.msra.mxu0 0
      %744 = vmatprep.subr.bf16.mxu0 0
      %745 = vmatpush2.bf16.msra.mxu0 0
      %746 = vmatprep.subr.bf16.mxu0 0
      %747 = vmatpush2.bf16.msra.mxu0 0
      %748 = vmatprep.subr.bf16.mxu0 0
      %749 = vmatpush2.bf16.msra.mxu0 0
      %750 = vmatprep.subr.bf16.mxu0 0
      %751 = vmatpush2.bf16.msra.mxu0 0
      %752 = vmatprep.subr.bf16.mxu0 0
      %753 = vmatpush2.bf16.msra.mxu0 0
      %754 = vmatprep.mubr.bf16.mxu0 0
      %755 = vmatmul.mubr.bf16.gmra.mxu0 %v720
      %v756 = vpop.f32.mrf.mxu0
      %v757 = vadd.f32 0.0, %v756
      %v758 = vpop.f32.mrf.mxu0
      %v759 = vpop.f32.mrf.mxu0
      %v760 = vpop.f32.mrf.mxu0
      %761 = vdwg.mxu0
      %v762 = vadd.f32 %v711, %v757
      %v763 = vld [vmem:[%s283] sm:$0xff]
      %v764 = vld [vmem:[%s283 + $0x8] sm:$0xff]
      %v765 = vld [vmem:[%s3] sm:$0xf]
      %v766 = vld [vmem:[%s3 + $0x4] sm:$0xf]
      %v767 = vld [vmem:[%s3 + $0x8] sm:$0xf]
      %v768 = vld [vmem:[%s3 + $0xc] sm:$0xf]
      %v769 = vld [vmem:[%s3 + $0x10] sm:$0xf]
      %v770 = vld [vmem:[%s3 + $0x14] sm:$0xf]
      %v771 = vld [vmem:[%s3 + $0x18] sm:$0xf]
      %v772 = vld [vmem:[%s3 + $0x1c] sm:$0xf]
      %v773 = vld [vmem:[%s3 + $0x20] sm:$0xf]
      %v776 = vunpack.c.l.b16 %v763
      %v777 = vunpack.c.l.b16 %v764
      %v778 = vpack.c.b16 %v777, %v776
      %v781 = vsel %vm318, %v765, 0
      %783 = vmatprep.subr.bf16.mxu0 0
      %784 = vmatpush1.bf16.msra.mxu0 0
      %785 = vmatprep.subr.bf16.mxu0 0
      %786 = vmatpush1.bf16.msra.mxu0 0
      %787 = vmatprep.subr.bf16.mxu0 0
      %788 = vmatpush1.bf16.msra.mxu0 0
      %789 = vmatprep.subr.bf16.mxu0 0
      %790 = vmatpush1.bf16.msra.mxu0 0
      %791 = vmatprep.subr.bf16.mxu0 0
      %792 = vmatpush1.bf16.msra.mxu0 0
      %793 = vmatprep.subr.bf16.mxu0 0
      %794 = vmatpush1.bf16.msra.mxu0 0
      %795 = vmatprep.subr.bf16.mxu0 0
      %796 = vmatpush1.bf16.msra.mxu0 0
      %797 = vmatprep.subr.bf16.mxu0 0
      %798 = vmatpush1.bf16.msra.mxu0 %v778
      %799 = vmatprep.subr.bf16.mxu0 0
      %800 = vmatpush2.bf16.msra.mxu0 0
      %801 = vmatprep.subr.bf16.mxu0 0
      %802 = vmatpush2.bf16.msra.mxu0 0
      %803 = vmatprep.subr.bf16.mxu0 0
      %804 = vmatpush2.bf16.msra.mxu0 0
      %805 = vmatprep.subr.bf16.mxu0 0
      %806 = vmatpush2.bf16.msra.mxu0 0
      %807 = vmatprep.subr.bf16.mxu0 0
      %808 = vmatpush2.bf16.msra.mxu0 0
      %809 = vmatprep.subr.bf16.mxu0 0
      %810 = vmatpush2.bf16.msra.mxu0 0
      %811 = vmatprep.subr.bf16.mxu0 0
      %812 = vmatpush2.bf16.msra.mxu0 0
      %813 = vmatprep.subr.bf16.mxu0 0
      %814 = vmatpush2.bf16.msra.mxu0 0
      %815 = vmatprep.mubr.bf16.mxu0 0
      %816 = vmatmul.mubr.bf16.gmra.mxu0 %v781
      %v817 = vpop.f32.mrf.mxu0
      %v818 = vadd.f32 0.0, %v817
      %v819 = vpop.f32.mrf.mxu0
      %v820 = vpop.f32.mrf.mxu0
      %v821 = vpop.f32.mrf.mxu0
      %822 = vdwg.mxu0
      %v823 = vadd.f32 %v762, %v818
      %v824 = vunpack.c.h.b16 %v763
      %v825 = vunpack.c.h.b16 %v764
      %v826 = vpack.c.b16 %v825, %v824
      %827 = vrot.lane.b32.xlu0 %v778, 127
      %v828 = vpop.permute.xlu0 %827
      %829 = vrot.lane.b32.xlu0 %v826, 127
      %v830 = vpop.permute.xlu0 %829
      %v831 = vsel %vm315, %v828, %v830
      %v834 = vsel %vm318, %v766, 0
      %836 = vmatprep.subr.bf16.mxu0 0
      %837 = vmatpush1.bf16.msra.mxu0 0
      %838 = vmatprep.subr.bf16.mxu0 0
      %839 = vmatpush1.bf16.msra.mxu0 0
      %840 = vmatprep.subr.bf16.mxu0 0
      %841 = vmatpush1.bf16.msra.mxu0 0
      %842 = vmatprep.subr.bf16.mxu0 0
      %843 = vmatpush1.bf16.msra.mxu0 0
      %844 = vmatprep.subr.bf16.mxu0 0
      %845 = vmatpush1.bf16.msra.mxu0 0
      %846 = vmatprep.subr.bf16.mxu0 0
      %847 = vmatpush1.bf16.msra.mxu0 0
      %848 = vmatprep.subr.bf16.mxu0 0
      %849 = vmatpush1.bf16.msra.mxu0 0
      %850 = vmatprep.subr.bf16.mxu0 0
      %851 = vmatpush1.bf16.msra.mxu0 %v831
      %852 = vmatprep.subr.bf16.mxu0 0
      %853 = vmatpush2.bf16.msra.mxu0 0
      %854 = vmatprep.subr.bf16.mxu0 0
      %855 = vmatpush2.bf16.msra.mxu0 0
      %856 = vmatprep.subr.bf16.mxu0 0
      %857 = vmatpush2.bf16.msra.mxu0 0
      %858 = vmatprep.subr.bf16.mxu0 0
      %859 = vmatpush2.bf16.msra.mxu0 0
      %860 = vmatprep.subr.bf16.mxu0 0
      %861 = vmatpush2.bf16.msra.mxu0 0
      %862 = vmatprep.subr.bf16.mxu0 0
      %863 = vmatpush2.bf16.msra.mxu0 0
      %864 = vmatprep.subr.bf16.mxu0 0
      %865 = vmatpush2.bf16.msra.mxu0 0
      %866 = vmatprep.subr.bf16.mxu0 0
      %867 = vmatpush2.bf16.msra.mxu0 0
      %868 = vmatprep.mubr.bf16.mxu0 0
      %869 = vmatmul.mubr.bf16.gmra.mxu0 %v834
      %v870 = vpop.f32.mrf.mxu0
      %v871 = vadd.f32 0.0, %v870
      %v872 = vpop.f32.mrf.mxu0
      %v873 = vpop.f32.mrf.mxu0
      %v874 = vpop.f32.mrf.mxu0
      %875 = vdwg.mxu0
      %v876 = vadd.f32 %v823, %v871
      %877 = vrot.lane.b32.xlu0 %v778, 126
      %v878 = vpop.permute.xlu0 %877
      %879 = vrot.lane.b32.xlu0 %v826, 126
      %v880 = vpop.permute.xlu0 %879
      %v881 = vsel %vm410, %v878, %v880
      %v884 = vsel %vm318, %v767, 0
      %886 = vmatprep.subr.bf16.mxu0 0
      %887 = vmatpush1.bf16.msra.mxu0 0
      %888 = vmatprep.subr.bf16.mxu0 0
      %889 = vmatpush1.bf16.msra.mxu0 0
      %890 = vmatprep.subr.bf16.mxu0 0
      %891 = vmatpush1.bf16.msra.mxu0 0
      %892 = vmatprep.subr.bf16.mxu0 0
      %893 = vmatpush1.bf16.msra.mxu0 0
      %894 = vmatprep.subr.bf16.mxu0 0
      %895 = vmatpush1.bf16.msra.mxu0 0
      %896 = vmatprep.subr.bf16.mxu0 0
      %897 = vmatpush1.bf16.msra.mxu0 0
      %898 = vmatprep.subr.bf16.mxu0 0
      %899 = vmatpush1.bf16.msra.mxu0 0
      %900 = vmatprep.subr.bf16.mxu0 0
      %901 = vmatpush1.bf16.msra.mxu0 %v881
      %902 = vmatprep.subr.bf16.mxu0 0
      %903 = vmatpush2.bf16.msra.mxu0 0
      %904 = vmatprep.subr.bf16.mxu0 0
      %905 = vmatpush2.bf16.msra.mxu0 0
      %906 = vmatprep.subr.bf16.mxu0 0
      %907 = vmatpush2.bf16.msra.mxu0 0
      %908 = vmatprep.subr.bf16.mxu0 0
      %909 = vmatpush2.bf16.msra.mxu0 0
      %910 = vmatprep.subr.bf16.mxu0 0
      %911 = vmatpush2.bf16.msra.mxu0 0
      %912 = vmatprep.subr.bf16.mxu0 0
      %913 = vmatpush2.bf16.msra.mxu0 0
      %914 = vmatprep.subr.bf16.mxu0 0
      %915 = vmatpush2.bf16.msra.mxu0 0
      %916 = vmatprep.subr.bf16.mxu0 0
      %917 = vmatpush2.bf16.msra.mxu0 0
      %918 = vmatprep.mubr.bf16.mxu0 0
      %919 = vmatmul.mubr.bf16.gmra.mxu0 %v884
      %v920 = vpop.f32.mrf.mxu0
      %v921 = vadd.f32 0.0, %v920
      %v922 = vpop.f32.mrf.mxu0
      %v923 = vpop.f32.mrf.mxu0
      %v924 = vpop.f32.mrf.mxu0
      %925 = vdwg.mxu0
      %v926 = vadd.f32 %v876, %v921
      %927 = vrot.lane.b32.xlu0 %v778, 122
      %v928 = vpop.permute.xlu0 %927
      %929 = vrot.lane.b32.xlu0 %v826, 122
      %v930 = vpop.permute.xlu0 %929
      %v931 = vsel %vm461, %v928, %v930
      %v934 = vsel %vm318, %v768, 0
      %936 = vmatprep.subr.bf16.mxu0 0
      %937 = vmatpush1.bf16.msra.mxu0 0
      %938 = vmatprep.subr.bf16.mxu0 0
      %939 = vmatpush1.bf16.msra.mxu0 0
      %940 = vmatprep.subr.bf16.mxu0 0
      %941 = vmatpush1.bf16.msra.mxu0 0
      %942 = vmatprep.subr.bf16.mxu0 0
      %943 = vmatpush1.bf16.msra.mxu0 0
      %944 = vmatprep.subr.bf16.mxu0 0
      %945 = vmatpush1.bf16.msra.mxu0 0
      %946 = vmatprep.subr.bf16.mxu0 0
      %947 = vmatpush1.bf16.msra.mxu0 0
      %948 = vmatprep.subr.bf16.mxu0 0
      %949 = vmatpush1.bf16.msra.mxu0 0
      %950 = vmatprep.subr.bf16.mxu0 0
      %951 = vmatpush1.bf16.msra.mxu0 %v931
      %952 = vmatprep.subr.bf16.mxu0 0
      %953 = vmatpush2.bf16.msra.mxu0 0
      %954 = vmatprep.subr.bf16.mxu0 0
      %955 = vmatpush2.bf16.msra.mxu0 0
      %956 = vmatprep.subr.bf16.mxu0 0
      %957 = vmatpush2.bf16.msra.mxu0 0
      %958 = vmatprep.subr.bf16.mxu0 0
      %959 = vmatpush2.bf16.msra.mxu0 0
      %960 = vmatprep.subr.bf16.mxu0 0
      %961 = vmatpush2.bf16.msra.mxu0 0
      %962 = vmatprep.subr.bf16.mxu0 0
      %963 = vmatpush2.bf16.msra.mxu0 0
      %964 = vmatprep.subr.bf16.mxu0 0
      %965 = vmatpush2.bf16.msra.mxu0 0
      %966 = vmatprep.subr.bf16.mxu0 0
      %967 = vmatpush2.bf16.msra.mxu0 0
      %968 = vmatprep.mubr.bf16.mxu0 0
      %969 = vmatmul.mubr.bf16.gmra.mxu0 %v934
      %v970 = vpop.f32.mrf.mxu0
      %v971 = vadd.f32 0.0, %v970
      %v972 = vpop.f32.mrf.mxu0
      %v973 = vpop.f32.mrf.mxu0
      %v974 = vpop.f32.mrf.mxu0
      %975 = vdwg.mxu0
      %v976 = vadd.f32 %v926, %v971
      %977 = vrot.lane.b32.xlu0 %v778, 121
      %v978 = vpop.permute.xlu0 %977
      %979 = vrot.lane.b32.xlu0 %v826, 121
      %v980 = vpop.permute.xlu0 %979
      %v981 = vsel %vm512, %v978, %v980
      %v984 = vsel %vm318, %v769, 0
      %986 = vmatprep.subr.bf16.mxu0 0
      %987 = vmatpush1.bf16.msra.mxu0 0
      %988 = vmatprep.subr.bf16.mxu0 0
      %989 = vmatpush1.bf16.msra.mxu0 0
      %990 = vmatprep.subr.bf16.mxu0 0
      %991 = vmatpush1.bf16.msra.mxu0 0
      %992 = vmatprep.subr.bf16.mxu0 0
      %993 = vmatpush1.bf16.msra.mxu0 0
      %994 = vmatprep.subr.bf16.mxu0 0
      %995 = vmatpush1.bf16.msra.mxu0 0
      %996 = vmatprep.subr.bf16.mxu0 0
      %997 = vmatpush1.bf16.msra.mxu0 0
      %998 = vmatprep.subr.bf16.mxu0 0
      %999 = vmatpush1.bf16.msra.mxu0 0
      %1000 = vmatprep.subr.bf16.mxu0 0
      %1001 = vmatpush1.bf16.msra.mxu0 %v981
      %1002 = vmatprep.subr.bf16.mxu0 0
      %1003 = vmatpush2.bf16.msra.mxu0 0
      %1004 = vmatprep.subr.bf16.mxu0 0
      %1005 = vmatpush2.bf16.msra.mxu0 0
      %1006 = vmatprep.subr.bf16.mxu0 0
      %1007 = vmatpush2.bf16.msra.mxu0 0
      %1008 = vmatprep.subr.bf16.mxu0 0
      %1009 = vmatpush2.bf16.msra.mxu0 0
      %1010 = vmatprep.subr.bf16.mxu0 0
      %1011 = vmatpush2.bf16.msra.mxu0 0
      %1012 = vmatprep.subr.bf16.mxu0 0
      %1013 = vmatpush2.bf16.msra.mxu0 0
      %1014 = vmatprep.subr.bf16.mxu0 0
      %1015 = vmatpush2.bf16.msra.mxu0 0
      %1016 = vmatprep.subr.bf16.mxu0 0
      %1017 = vmatpush2.bf16.msra.mxu0 0
      %1018 = vmatprep.mubr.bf16.mxu0 0
      %1019 = vmatmul.mubr.bf16.gmra.mxu0 %v984
      %v1020 = vpop.f32.mrf.mxu0
      %v1021 = vadd.f32 0.0, %v1020
      %v1022 = vpop.f32.mrf.mxu0
      %v1023 = vpop.f32.mrf.mxu0
      %v1024 = vpop.f32.mrf.mxu0
      %1025 = vdwg.mxu0
      %v1026 = vadd.f32 %v976, %v1021
      %1027 = vrot.lane.b32.xlu0 %v778, 120
      %v1028 = vpop.permute.xlu0 %1027
      %1029 = vrot.lane.b32.xlu0 %v826, 120
      %v1030 = vpop.permute.xlu0 %1029
      %v1031 = vsel %vm563, %v1028, %v1030
      %v1034 = vsel %vm318, %v770, 0
      %1036 = vmatprep.subr.bf16.mxu0 0
      %1037 = vmatpush1.bf16.msra.mxu0 0
      %1038 = vmatprep.subr.bf16.mxu0 0
      %1039 = vmatpush1.bf16.msra.mxu0 0
      %1040 = vmatprep.subr.bf16.mxu0 0
      %1041 = vmatpush1.bf16.msra.mxu0 0
      %1042 = vmatprep.subr.bf16.mxu0 0
      %1043 = vmatpush1.bf16.msra.mxu0 0
      %1044 = vmatprep.subr.bf16.mxu0 0
      %1045 = vmatpush1.bf16.msra.mxu0 0
      %1046 = vmatprep.subr.bf16.mxu0 0
      %1047 = vmatpush1.bf16.msra.mxu0 0
      %1048 = vmatprep.subr.bf16.mxu0 0
      %1049 = vmatpush1.bf16.msra.mxu0 0
      %1050 = vmatprep.subr.bf16.mxu0 0
      %1051 = vmatpush1.bf16.msra.mxu0 %v1031
      %1052 = vmatprep.subr.bf16.mxu0 0
      %1053 = vmatpush2.bf16.msra.mxu0 0
      %1054 = vmatprep.subr.bf16.mxu0 0
      %1055 = vmatpush2.bf16.msra.mxu0 0
      %1056 = vmatprep.subr.bf16.mxu0 0
      %1057 = vmatpush2.bf16.msra.mxu0 0
      %1058 = vmatprep.subr.bf16.mxu0 0
      %1059 = vmatpush2.bf16.msra.mxu0 0
      %1060 = vmatprep.subr.bf16.mxu0 0
      %1061 = vmatpush2.bf16.msra.mxu0 0
      %1062 = vmatprep.subr.bf16.mxu0 0
      %1063 = vmatpush2.bf16.msra.mxu0 0
      %1064 = vmatprep.subr.bf16.mxu0 0
      %1065 = vmatpush2.bf16.msra.mxu0 0
      %1066 = vmatprep.subr.bf16.mxu0 0
      %1067 = vmatpush2.bf16.msra.mxu0 0
      %1068 = vmatprep.mubr.bf16.mxu0 0
      %1069 = vmatmul.mubr.bf16.gmra.mxu0 %v1034
      %v1070 = vpop.f32.mrf.mxu0
      %v1071 = vadd.f32 0.0, %v1070
      %v1072 = vpop.f32.mrf.mxu0
      %v1073 = vpop.f32.mrf.mxu0
      %v1074 = vpop.f32.mrf.mxu0
      %1075 = vdwg.mxu0
      %v1076 = vadd.f32 %v1026, %v1071
      %1077 = vrot.lane.b32.xlu0 %v778, 116
      %v1078 = vpop.permute.xlu0 %1077
      %1079 = vrot.lane.b32.xlu0 %v826, 116
      %v1080 = vpop.permute.xlu0 %1079
      %v1081 = vsel %vm614, %v1078, %v1080
      %v1084 = vsel %vm318, %v771, 0
      %1086 = vmatprep.subr.bf16.mxu0 0
      %1087 = vmatpush1.bf16.msra.mxu0 0
      %1088 = vmatprep.subr.bf16.mxu0 0
      %1089 = vmatpush1.bf16.msra.mxu0 0
      %1090 = vmatprep.subr.bf16.mxu0 0
      %1091 = vmatpush1.bf16.msra.mxu0 0
      %1092 = vmatprep.subr.bf16.mxu0 0
      %1093 = vmatpush1.bf16.msra.mxu0 0
      %1094 = vmatprep.subr.bf16.mxu0 0
      %1095 = vmatpush1.bf16.msra.mxu0 0
      %1096 = vmatprep.subr.bf16.mxu0 0
      %1097 = vmatpush1.bf16.msra.mxu0 0
      %1098 = vmatprep.subr.bf16.mxu0 0
      %1099 = vmatpush1.bf16.msra.mxu0 0
      %1100 = vmatprep.subr.bf16.mxu0 0
      %1101 = vmatpush1.bf16.msra.mxu0 %v1081
      %1102 = vmatprep.subr.bf16.mxu0 0
      %1103 = vmatpush2.bf16.msra.mxu0 0
      %1104 = vmatprep.subr.bf16.mxu0 0
      %1105 = vmatpush2.bf16.msra.mxu0 0
      %1106 = vmatprep.subr.bf16.mxu0 0
      %1107 = vmatpush2.bf16.msra.mxu0 0
      %1108 = vmatprep.subr.bf16.mxu0 0
      %1109 = vmatpush2.bf16.msra.mxu0 0
      %1110 = vmatprep.subr.bf16.mxu0 0
      %1111 = vmatpush2.bf16.msra.mxu0 0
      %1112 = vmatprep.subr.bf16.mxu0 0
      %1113 = vmatpush2.bf16.msra.mxu0 0
      %1114 = vmatprep.subr.bf16.mxu0 0
      %1115 = vmatpush2.bf16.msra.mxu0 0
      %1116 = vmatprep.subr.bf16.mxu0 0
      %1117 = vmatpush2.bf16.msra.mxu0 0
      %1118 = vmatprep.mubr.bf16.mxu0 0
      %1119 = vmatmul.mubr.bf16.gmra.mxu0 %v1084
      %v1120 = vpop.f32.mrf.mxu0
      %v1121 = vadd.f32 0.0, %v1120
      %v1122 = vpop.f32.mrf.mxu0
      %v1123 = vpop.f32.mrf.mxu0
      %v1124 = vpop.f32.mrf.mxu0
      %1125 = vdwg.mxu0
      %v1126 = vadd.f32 %v1076, %v1121
      %1127 = vrot.lane.b32.xlu0 %v778, 115
      %v1128 = vpop.permute.xlu0 %1127
      %1129 = vrot.lane.b32.xlu0 %v826, 115
      %v1130 = vpop.permute.xlu0 %1129
      %v1131 = vsel %vm665, %v1128, %v1130
      %v1134 = vsel %vm318, %v772, 0
      %1136 = vmatprep.subr.bf16.mxu0 0
      %1137 = vmatpush1.bf16.msra.mxu0 0
      %1138 = vmatprep.subr.bf16.mxu0 0
      %1139 = vmatpush1.bf16.msra.mxu0 0
      %1140 = vmatprep.subr.bf16.mxu0 0
      %1141 = vmatpush1.bf16.msra.mxu0 0
      %1142 = vmatprep.subr.bf16.mxu0 0
      %1143 = vmatpush1.bf16.msra.mxu0 0
      %1144 = vmatprep.subr.bf16.mxu0 0
      %1145 = vmatpush1.bf16.msra.mxu0 0
      %1146 = vmatprep.subr.bf16.mxu0 0
      %1147 = vmatpush1.bf16.msra.mxu0 0
      %1148 = vmatprep.subr.bf16.mxu0 0
      %1149 = vmatpush1.bf16.msra.mxu0 0
      %1150 = vmatprep.subr.bf16.mxu0 0
      %1151 = vmatpush1.bf16.msra.mxu0 %v1131
      %1152 = vmatprep.subr.bf16.mxu0 0
      %1153 = vmatpush2.bf16.msra.mxu0 0
      %1154 = vmatprep.subr.bf16.mxu0 0
      %1155 = vmatpush2.bf16.msra.mxu0 0
      %1156 = vmatprep.subr.bf16.mxu0 0
      %1157 = vmatpush2.bf16.msra.mxu0 0
      %1158 = vmatprep.subr.bf16.mxu0 0
      %1159 = vmatpush2.bf16.msra.mxu0 0
      %1160 = vmatprep.subr.bf16.mxu0 0
      %1161 = vmatpush2.bf16.msra.mxu0 0
      %1162 = vmatprep.subr.bf16.mxu0 0
      %1163 = vmatpush2.bf16.msra.mxu0 0
      %1164 = vmatprep.subr.bf16.mxu0 0
      %1165 = vmatpush2.bf16.msra.mxu0 0
      %1166 = vmatprep.subr.bf16.mxu0 0
      %1167 = vmatpush2.bf16.msra.mxu0 0
      %1168 = vmatprep.mubr.bf16.mxu0 0
      %1169 = vmatmul.mubr.bf16.gmra.mxu0 %v1134
      %v1170 = vpop.f32.mrf.mxu0
      %v1171 = vadd.f32 0.0, %v1170
      %v1172 = vpop.f32.mrf.mxu0
      %v1173 = vpop.f32.mrf.mxu0
      %v1174 = vpop.f32.mrf.mxu0
      %1175 = vdwg.mxu0
      %v1176 = vadd.f32 %v1126, %v1171
      %1177 = vrot.lane.b32.xlu0 %v778, 114
      %v1178 = vpop.permute.xlu0 %1177
      %1179 = vrot.lane.b32.xlu0 %v826, 114
      %v1180 = vpop.permute.xlu0 %1179
      %v1181 = vsel %vm716, %v1178, %v1180
      %v1184 = vsel %vm318, %v773, 0
      %1186 = vmatprep.subr.bf16.mxu0 0
      %1187 = vmatpush1.bf16.msra.mxu0 0
      %1188 = vmatprep.subr.bf16.mxu0 0
      %1189 = vmatpush1.bf16.msra.mxu0 0
      %1190 = vmatprep.subr.bf16.mxu0 0
      %1191 = vmatpush1.bf16.msra.mxu0 0
      %1192 = vmatprep.subr.bf16.mxu0 0
      %1193 = vmatpush1.bf16.msra.mxu0 0
      %1194 = vmatprep.subr.bf16.mxu0 0
      %1195 = vmatpush1.bf16.msra.mxu0 0
      %1196 = vmatprep.subr.bf16.mxu0 0
      %1197 = vmatpush1.bf16.msra.mxu0 0
      %1198 = vmatprep.subr.bf16.mxu0 0
      %1199 = vmatpush1.bf16.msra.mxu0 0
      %1200 = vmatprep.subr.bf16.mxu0 0
      %1201 = vmatpush1.bf16.msra.mxu0 %v1181
      %1202 = vmatprep.subr.bf16.mxu0 0
      %1203 = vmatpush2.bf16.msra.mxu0 0
      %1204 = vmatprep.subr.bf16.mxu0 0
      %1205 = vmatpush2.bf16.msra.mxu0 0
      %1206 = vmatprep.subr.bf16.mxu0 0
      %1207 = vmatpush2.bf16.msra.mxu0 0
      %1208 = vmatprep.subr.bf16.mxu0 0
      %1209 = vmatpush2.bf16.msra.mxu0 0
      %1210 = vmatprep.subr.bf16.mxu0 0
      %1211 = vmatpush2.bf16.msra.mxu0 0
      %1212 = vmatprep.subr.bf16.mxu0 0
      %1213 = vmatpush2.bf16.msra.mxu0 0
      %1214 = vmatprep.subr.bf16.mxu0 0
      %1215 = vmatpush2.bf16.msra.mxu0 0
      %1216 = vmatprep.subr.bf16.mxu0 0
      %1217 = vmatpush2.bf16.msra.mxu0 0
      %1218 = vmatprep.mubr.bf16.mxu0 0
      %1219 = vmatmul.mubr.bf16.gmra.mxu0 %v1184
      %v1220 = vpop.f32.mrf.mxu0
      %v1221 = vadd.f32 0.0, %v1220
      %v1222 = vpop.f32.mrf.mxu0
      %v1223 = vpop.f32.mrf.mxu0
      %v1224 = vpop.f32.mrf.mxu0
      %1225 = vdwg.mxu0
      %v1226 = vadd.f32 %v1176, %v1221
      %v1227 = vld [vmem:[%s4] sm:$0xff]
      %1229 = vset.pattern.permute.xlu0 0
      %1230 = vperm.xlu0 %1229, %v1227
      %v1231 = vpop.permute.xlu0 %1230
      %v1233 = vmul.f32 %v1226, %v1231
      %1234 = vset.pattern.permute.xlu0 1
      %1235 = vperm.xlu0 %1234, %v1227
      %v1236 = vpop.permute.xlu0 %1235
      %v1238 = vadd.f32 %v1233, %v1236
      %v1239 = vmax.f32 %v1238, 0.0
      %v1240 = vpack.c.bf16 %v1239, %v1239
      %1241 = vst [vmem:[%s290] sm:$0xf] %v1240
      %p1242 = scmp.lt.s32.totalorder %s20, 1
      %s1243 = scalar_select %p1242, %s20, 1
      %p1244 = scmp.lt.s32.totalorder %s21, 0
      %s1245 = scalar_select %p1244, %s21, 0
      %s1246 = sadd.s32 %s1245, %s1243
      %s1247 = smul.addr %s1246, 4
      %s1248 = scalar_lea.vmem %s5, %s1247
      // Predicated region
      $region41: #{rsu4_forward.13} parent=39 // pred_check
        %p1249 = pneg %p167
      $region42: #{rsu4_forward.13} parent=39 // pred_check_branch
        %1251 = sbr.rel (%p1249) target = $region44
      $region43: #{rsu4_forward.13} parent=39 // pred_region
        _
      $region44: #{rsu4_forward.13} parent=39 // pred_fallthru
        _
    $region40: #{rsu4_forward.13} parent=5 // pred_fallthru
      _
    %p1252 = scmp.le.s32.totalorder 2, %s11
    // Predicated region
    $region45: #{rsu4_forward.13} parent=5 // pred_check
      %p1253 = pneg %p1252
    $region46: #{rsu4_forward.13} parent=5 // pred_check_branch
      %1255 = sbr.rel (%p1253) target = $region48
    $region47: #{rsu4_forward.13} parent=5 // pred_region
      %s1256 = ssub.s32 %s11, 2
      // Predicated region
      $region49: #{rsu4_forward.13} parent=47 // pred_check
        %p1257 = pneg %p173
      $region50: #{rsu4_forward.13} parent=47 // pred_check_branch
        %1259 = sbr.rel (%p1257) target = $region52
      $region51: #{rsu4_forward.13} parent=47 // pred_region
        %p1260 = scmp.lt.s32.totalorder %s22, 1
        %s1261 = scalar_select %p1260, %s22, 1
        %p1262 = scmp.lt.s32.totalorder %s23, 0
        %s1263 = scalar_select %p1262, %s23, 0
        %s1264 = sadd.s32 %s1263, %s1261
        %s1265 = smul.addr %s1264, 4
        %s1266 = scalar_lea.vmem %s5, %s1265
      $region52: #{rsu4_forward.13} parent=47 // pred_fallthru
        _
    $region48: #{rsu4_forward.13} parent=5 // pred_fallthru
      _
  $region6: #{rsu4_forward.13} parent=0 // loop_footer
    %s15 = sadd.s32 1, %s11
  $region7: #{rsu4_forward.13} parent=0 // loop_footer_branch
    %10 = sbr.rel target = $region3
  $region8: #{rsu4_forward.13} parent=0 // loop_exit
    _

// kernel: rsu4_forward.14
$region0: #{rsu4_forward.14}
  #allocation0 [shape = 'u32[]', space=smem, size = 0x4, offset = 0x4, fixed_abs, tag = 'smem constant byte address 0x4 - core index']
  #allocation1 [shape = 'u32[144,128]{1,0:T(1,128)}', space=vmem, size = 0x12000, scoped, tag = 'internal scratch']
  %s0 = inlined_call_operand.vmem [shape: bf16[2,1,16,150], index: 0, kind: input, shape index: {}]
  %s1 = inlined_call_operand.vmem [shape: bf16[2,1,16,150], index: 1, kind: input, shape index: {}]
  %s2 = inlined_call_operand.vmem [shape: bf16[9,8,16], index: 2, kind: input, shape index: {}]
  %s3 = inlined_call_operand.vmem [shape: bf16[9,8,16], index: 3, kind: input, shape index: {}]
  %s4 = inlined_call_operand.vmem [shape: f32[8,2], index: 4, kind: input, shape index: {}]
  %s5 = inlined_call_operand.vmem [shape: bf16[2,8,128], index: 5, kind: output, shape index: {}]
  %s6 = sld [smem:[#allocation0]]
  $region53: #{rsu4_forward.14} parent=0
    _
  %s8 = ssub.s32 1, %s6
  %s9 = scalar_select 0, %s8, %s6
  loop: start=0, step=1, limit=4
  $region2: #{rsu4_forward.14} parent=0 // loop_pre_header
    _
  $region3: #{rsu4_forward.14} parent=0 // loop_header
    %s11 = sphi 0, %s15
    %p12 = scmp.ge.s32.totalorder %s11, 4
    %s18 = sphi 0, %s30
    %s19 = sphi 0, %s26
    %s20 = sphi 0, %s18
    %s21 = sphi 0, %s19
    %s22 = sphi 0, %s20
    %s23 = sphi 0, %s21
    %s35 = sphi 0, %s37
    %s38 = sphi 0, %s35
    %s39 = sphi 0, %s38
    %s55 = sphi 0, %s39
    %s63 = sphi 0, %s65
    %s66 = sphi 0, %s63
    %s67 = sphi 0, %s66
    %s83 = sphi 0, %s67
    %s87 = sphi 0, %s87
    %s89 = sphi 0, %s87
    %s90 = sphi 0, %s89
    %s104 = sphi 0, %s90
    %s108 = sphi 0, %s108
    %s110 = sphi 0, %s108
    %s111 = sphi 0, %s110
    %s125 = sphi 0, %s111
    %s129 = sphi 0, %s129
    %s131 = sphi 0, %s129
    %s132 = sphi 0, %s131
    %s146 = sphi 0, %s132
    %s154 = sphi 0, %s156
    %s157 = sphi 0, %s154
    %s158 = sphi 0, %s157
    %s174 = sphi 0, %s158
  $region4: #{rsu4_forward.14} parent=0 // loop_header_branch
    %14 = sbr.rel (%p12) target = $region8
  $region5: #{rsu4_forward.14} parent=0 // loop_body
    %s16 = ssub.s32 %s11, 1
    %s17 = ssub.s32 %s11, 2
    %s24 = sadd.s32 1, %s19
    %p25 = scmp.ge.s32.totalorder %s24, 1
    %s26 = scalar_select %p25, 0, %s24
    %s27 = sadd.s32 1, %s18
    %s28 = scalar_select %p25, %s27, %s18
    %p29 = scmp.ge.s32.totalorder %s28, 2
    %s30 = scalar_select %p29, 0, %s28
    %s31 = ssub.s32 %s18, %s30
    %s32 = ssub.s32 %s19, %s26
    %s33 = sor.u32 %s31, %s32
    %p34 = scmp.eq.s32.totalorder %s33, 0
    %s36 = sadd.s32 %s35, 1
    %s37 = scalar_select %p34, %s35, %s36
    %p40 = pneg %p34
    %p41 = scmp.eq.s32.totalorder %s11, 1
    %p42 = por %p40, %p41
    %p43 = scmp.ne.s32.totalorder %s35, %s38
    %p44 = scmp.eq.s32.totalorder %s11, 0
    %p45 = por %p43, %p44
    %p46 = scmp.ne.s32.totalorder %s35, %s38
    %p47 = scmp.eq.s32.totalorder %s16, 1
    %p48 = por %p46, %p47
    %p49 = scmp.ne.s32.totalorder %s38, %s39
    %p50 = scmp.eq.s32.totalorder %s16, 0
    %p51 = por %p49, %p50
    %p52 = scmp.ne.s32.totalorder %s38, %s39
    %p53 = scmp.eq.s32.totalorder %s17, 1
    %p54 = por %p52, %p53
    %p56 = scmp.ne.s32.totalorder %s39, %s55
    %p57 = scmp.eq.s32.totalorder %s17, 0
    %p58 = por %p56, %p57
    %s59 = ssub.s32 %s18, %s30
    %s60 = ssub.s32 %s19, %s26
    %s61 = sor.u32 %s59, %s60
    %p62 = scmp.eq.s32.totalorder %s61, 0
    %s64 = sadd.s32 %s63, 1
    %s65 = scalar_select %p62, %s63, %s64
    %p68 = pneg %p62
    %p69 = scmp.eq.s32.totalorder %s11, 1
    %p70 = por %p68, %p69
    %p71 = scmp.ne.s32.totalorder %s63, %s66
    %p72 = scmp.eq.s32.totalorder %s11, 0
    %p73 = por %p71, %p72
    %p74 = scmp.ne.s32.totalorder %s63, %s66
    %p75 = scmp.eq.s32.totalorder %s16, 1
    %p76 = por %p74, %p75
    %p77 = scmp.ne.s32.totalorder %s66, %s67
    %p78 = scmp.eq.s32.totalorder %s16, 0
    %p79 = por %p77, %p78
    %p80 = scmp.ne.s32.totalorder %s66, %s67
    %p81 = scmp.eq.s32.totalorder %s17, 1
    %p82 = por %p80, %p81
    %p84 = scmp.ne.s32.totalorder %s67, %s83
    %p85 = scmp.eq.s32.totalorder %s17, 0
    %p86 = por %p84, %p85
    %s88 = sadd.s32 %s87, 1
    %p91 = scmp.eq.s32.totalorder %s11, 1
    %p92 = scmp.ne.s32.totalorder %s87, %s89
    %p93 = scmp.eq.s32.totalorder %s11, 0
    %p94 = por %p92, %p93
    %p95 = scmp.ne.s32.totalorder %s87, %s89
    %p96 = scmp.eq.s32.totalorder %s16, 1
    %p97 = por %p95, %p96
    %p98 = scmp.ne.s32.totalorder %s89, %s90
    %p99 = scmp.eq.s32.totalorder %s16, 0
    %p100 = por %p98, %p99
    %p101 = scmp.ne.s32.totalorder %s89, %s90
    %p102 = scmp.eq.s32.totalorder %s17, 1
    %p103 = por %p101, %p102
    %p105 = scmp.ne.s32.totalorder %s90, %s104
    %p106 = scmp.eq.s32.totalorder %s17, 0
    %p107 = por %p105, %p106
    %s109 = sadd.s32 %s108, 1
    %p112 = scmp.eq.s32.totalorder %s11, 1
    %p113 = scmp.ne.s32.totalorder %s108, %s110
    %p114 = scmp.eq.s32.totalorder %s11, 0
    %p115 = por %p113, %p114
    %p116 = scmp.ne.s32.totalorder %s108, %s110
    %p117 = scmp.eq.s32.totalorder %s16, 1
    %p118 = por %p116, %p117
    %p119 = scmp.ne.s32.totalorder %s110, %s111
    %p120 = scmp.eq.s32.totalorder %s16, 0
    %p121 = por %p119, %p120
    %p122 = scmp.ne.s32.totalorder %s110, %s111
    %p123 = scmp.eq.s32.totalorder %s17, 1
    %p124 = por %p122, %p123
    %p126 = scmp.ne.s32.totalorder %s111, %s125
    %p127 = scmp.eq.s32.totalorder %s17, 0
    %p128 = por %p126, %p127
    %s130 = sadd.s32 %s129, 1
    %p133 = scmp.eq.s32.totalorder %s11, 1
    %p134 = scmp.ne.s32.totalorder %s129, %s131
    %p135 = scmp.eq.s32.totalorder %s11, 0
    %p136 = por %p134, %p135
    %p137 = scmp.ne.s32.totalorder %s129, %s131
    %p138 = scmp.eq.s32.totalorder %s16, 1
    %p139 = por %p137, %p138
    %p140 = scmp.ne.s32.totalorder %s131, %s132
    %p141 = scmp.eq.s32.totalorder %s16, 0
    %p142 = por %p140, %p141
    %p143 = scmp.ne.s32.totalorder %s131, %s132
    %p144 = scmp.eq.s32.totalorder %s17, 1
    %p145 = por %p143, %p144
    %p147 = scmp.ne.s32.totalorder %s132, %s146
    %p148 = scmp.eq.s32.totalorder %s17, 0
    %p149 = por %p147, %p148
    %s150 = ssub.s32 %s18, %s30
    %s151 = ssub.s32 %s19, %s26
    %s152 = sor.u32 %s150, %s151
    %p153 = scmp.eq.s32.totalorder %s152, 0
    %s155 = sadd.s32 %s154, 1
    %s156 = scalar_select %p153, %s154, %s155
    %p159 = pneg %p153
    %p160 = scmp.eq.s32.totalorder %s11, 1
    %p161 = por %p159, %p160
    %p162 = scmp.ne.s32.totalorder %s154, %s157
    %p163 = scmp.eq.s32.totalorder %s11, 0
    %p164 = por %p162, %p163
    %p165 = scmp.ne.s32.totalorder %s154, %s157
    %p166 = scmp.eq.s32.totalorder %s16, 1
    %p167 = por %p165, %p166
    %p168 = scmp.ne.s32.totalorder %s157, %s158
    %p169 = scmp.eq.s32.totalorder %s16, 0
    %p170 = por %p168, %p169
    %p171 = scmp.ne.s32.totalorder %s157, %s158
    %p172 = scmp.eq.s32.totalorder %s17, 1
    %p173 = por %p171, %p172
    %p175 = scmp.ne.s32.totalorder %s158, %s174
    %p176 = scmp.eq.s32.totalorder %s17, 0
    %p177 = por %p175, %p176
    %p178 = scmp.le.s32.totalorder 1, %s11
    %p179 = scmp.lt.s32.totalorder %s11, 3
    %p180 = pnand %p178, %p179
    %p181 = pneg %p180
    // Predicated region
    $region9: #{rsu4_forward.14} parent=5 // pred_check
      _
    $region10: #{rsu4_forward.14} parent=5 // pred_check_branch
      %183 = sbr.rel (%p180) target = $region12
    $region11: #{rsu4_forward.14} parent=5 // pred_region
      %s184 = ssub.s32 %s11, 1
      // Predicated region
      $region13: #{rsu4_forward.14} parent=11 // pred_check
        %p185 = pneg %p100
      $region14: #{rsu4_forward.14} parent=11 // pred_check_branch
        %187 = sbr.rel (%p185) target = $region16
      $region15: #{rsu4_forward.14} parent=11 // pred_region
        _
      $region16: #{rsu4_forward.14} parent=11 // pred_fallthru
        _
      // Predicated region
      $region17: #{rsu4_forward.14} parent=11 // pred_check
        %p188 = pneg %p121
      $region18: #{rsu4_forward.14} parent=11 // pred_check_branch
        %190 = sbr.rel (%p188) target = $region20
      $region19: #{rsu4_forward.14} parent=11 // pred_region
        _
      $region20: #{rsu4_forward.14} parent=11 // pred_fallthru
        _
      // Predicated region
      $region21: #{rsu4_forward.14} parent=11 // pred_check
        %p191 = pneg %p142
      $region22: #{rsu4_forward.14} parent=11 // pred_check_branch
        %193 = sbr.rel (%p191) target = $region24
      $region23: #{rsu4_forward.14} parent=11 // pred_region
        _
      $region24: #{rsu4_forward.14} parent=11 // pred_fallthru
        _
    $region12: #{rsu4_forward.14} parent=5 // pred_fallthru
      _
    %p194 = scmp.lt.s32.totalorder %s11, 2
    // Predicated region
    $region25: #{rsu4_forward.14} parent=5 // pred_check
      %p195 = pneg %p194
    $region26: #{rsu4_forward.14} parent=5 // pred_check_branch
      %197 = sbr.rel (%p195) target = $region28
    $region27: #{rsu4_forward.14} parent=5 // pred_region
      // Predicated region
      $region29: #{rsu4_forward.14} parent=27 // pred_check
        %p198 = pneg %p45
      $region30: #{rsu4_forward.14} parent=27 // pred_check_branch
        %200 = sbr.rel (%p198) target = $region32
      $region31: #{rsu4_forward.14} parent=27 // pred_region
        %p201 = scmp.lt.s32.totalorder %s18, 1
        %s202 = scalar_select %p201, %s18, 1
        %p203 = scmp.lt.s32.totalorder %s19, 0
        %s204 = scalar_select %p203, %s19, 0
        %s205 = smul.addr %s204, 4
        %s206 = smul.addr %s202, 4
        %s207 = sadd.s32 %s205, %s206
        %s208 = smul.addr %s207, 4
        %s209 = scalar_lea.vmem %s0, %s208
      $region32: #{rsu4_forward.14} parent=27 // pred_fallthru
        _
      // Predicated region
      $region33: #{rsu4_forward.14} parent=27 // pred_check
        %p210 = pneg %p73
      $region34: #{rsu4_forward.14} parent=27 // pred_check_branch
        %212 = sbr.rel (%p210) target = $region36
      $region35: #{rsu4_forward.14} parent=27 // pred_region
        %p213 = scmp.lt.s32.totalorder %s18, 1
        %s214 = scalar_select %p213, %s18, 1
        %p215 = scmp.lt.s32.totalorder %s19, 0
        %s216 = scalar_select %p215, %s19, 0
        %s217 = smul.addr %s216, 4
        %s218 = smul.addr %s214, 4
        %s219 = sadd.s32 %s217, %s218
        %s220 = smul.addr %s219, 4
        %s221 = scalar_lea.vmem %s1, %s220
      $region36: #{rsu4_forward.14} parent=27 // pred_fallthru
        _
    $region28: #{rsu4_forward.14} parent=5 // pred_fallthru
      _
    %p222 = scmp.le.s32.totalorder 1, %s11
    %p223 = scmp.lt.s32.totalorder %s11, 3
    %p224 = pnand %p222, %p223
    %p225 = pneg %p224
    // Predicated region
    $region37: #{rsu4_forward.14} parent=5 // pred_check
      _
    $region38: #{rsu4_forward.14} parent=5 // pred_check_branch
      %227 = sbr.rel (%p224) target = $region40
    $region39: #{rsu4_forward.14} parent=5 // pred_region
      %s228 = ssub.s32 %s11, 1
      %p229 = scmp.lt.s32.totalorder %s20, 1
      %s230 = scalar_select %p229, %s20, 1
      %p231 = scmp.lt.s32.totalorder %s21, 0
      %s232 = scalar_select %p231, %s21, 0
      %s233 = smul.addr %s232, 4
      %s234 = smul.addr %s230, 4
      %s235 = sadd.s32 %s233, %s234
      %s236 = smul.addr %s235, 4
      %s237 = scalar_lea.vmem %s0, %s236
      %p238 = pneg %p51
      %p239 = pneg %p48
      %p240 = scmp.lt.s32.totalorder %s20, 1
      %s241 = scalar_select %p240, %s20, 1
      %p242 = scmp.lt.s32.totalorder %s21, 0
      %s243 = scalar_select %p242, %s21, 0
      %s244 = smul.addr %s243, 4
      %s245 = smul.addr %s241, 4
      %s246 = sadd.s32 %s244, %s245
      %s247 = smul.addr %s246, 4
      %s248 = scalar_lea.vmem %s1, %s247
      %p249 = pneg %p79
      %p250 = pneg %p76
      %p251 = pneg %p100
      %p252 = pneg %p97
      %p253 = pneg %p121
      %p254 = pneg %p118
      %p255 = pneg %p142
      %p256 = pneg %p139
      %p257 = pneg %p170
      %p258 = pneg %p167
      %p259 = scmp.lt.s32.totalorder %s20, 1
      %s260 = scalar_select %p259, %s20, 1
      %p261 = scmp.lt.s32.totalorder %s21, 0
      %s262 = scalar_select %p261, %s21, 0
      %s263 = sadd.s32 %s262, %s260
      %s264 = smul.addr %s263, 4
      %s265 = scalar_lea.vmem %s5, %s264
      %p266 = scmp.lt.s32.totalorder %s20, 1
      %s267 = scalar_select %p266, %s20, 1
      %p268 = scmp.lt.s32.totalorder %s21, 0
      %s269 = scalar_select %p268, %s21, 0
      %s270 = smul.addr %s269, 4
      %s271 = smul.addr %s267, 4
      %s272 = sadd.s32 %s270, %s271
      %s273 = smul.addr %s272, 4
      %s274 = scalar_lea.vmem %s0, %s273
      %p275 = scmp.lt.s32.totalorder %s20, 1
      %s276 = scalar_select %p275, %s20, 1
      %p277 = scmp.lt.s32.totalorder %s21, 0
      %s278 = scalar_select %p277, %s21, 0
      %s279 = smul.addr %s278, 4
      %s280 = smul.addr %s276, 4
      %s281 = sadd.s32 %s279, %s280
      %s282 = smul.addr %s281, 4
      %s283 = scalar_lea.vmem %s1, %s282
      %p284 = scmp.lt.s32.totalorder %s20, 1
      %s285 = scalar_select %p284, %s20, 1
      %p286 = scmp.lt.s32.totalorder %s21, 0
      %s287 = scalar_select %p286, %s21, 0
      %s288 = sadd.s32 %s287, %s285
      %s289 = smul.addr %s288, 4
      %s290 = scalar_lea.vmem %s5, %s289
      %v292 = vld [vmem:[%s274] sm:$0xff]
      %v293 = vld [vmem:[%s274 + $0x8] sm:$0xff]
      %v294 = vld [vmem:[%s2] sm:$0xf]
      %v295 = vld [vmem:[%s2 + $0x4] sm:$0xf]
      %v296 = vld [vmem:[%s2 + $0x8] sm:$0xf]
      %v297 = vld [vmem:[%s2 + $0xc] sm:$0xf]
      %v298 = vld [vmem:[%s2 + $0x10] sm:$0xf]
      %v299 = vld [vmem:[%s2 + $0x14] sm:$0xf]
      %v300 = vld [vmem:[%s2 + $0x18] sm:$0xf]
      %v301 = vld [vmem:[%s2 + $0x1c] sm:$0xf]
      %v302 = vld [vmem:[%s2 + $0x20] sm:$0xf]
      %v305 = vunpack.c.l.b16 %v292
      %v306 = vunpack.c.h.b16 %v292
      %v307 = vunpack.c.l.b16 %v293
      %v308 = vunpack.c.h.b16 %v293
      %v309 = vpack.c.b16 %v307, %v305
      %v310 = vpack.c.b16 %v308, %v306
      %311 = vrot.lane.b32.xlu0 %v309, 127
      %v312 = vpop.permute.xlu0 %311
      %313 = vrot.lane.b32.xlu0 %v310, 127
      %v314 = vpop.permute.xlu0 %313
      %vm315 = vcmask 1039360
      %v316 = vsel %vm315, %v312, %v314
      %vm318 = vcmask 130048
      %v320 = vsel %vm318, %v295, 0
      %322 = vmatprep.subr.bf16.mxu0 0
      %323 = vmatpush1.bf16.msra.mxu0 0
      %324 = vmatprep.subr.bf16.mxu0 0
      %325 = vmatpush1.bf16.msra.mxu0 0
      %326 = vmatprep.subr.bf16.mxu0 0
      %327 = vmatpush1.bf16.msra.mxu0 0
      %328 = vmatprep.subr.bf16.mxu0 0
      %329 = vmatpush1.bf16.msra.mxu0 0
      %330 = vmatprep.subr.bf16.mxu0 0
      %331 = vmatpush1.bf16.msra.mxu0 0
      %332 = vmatprep.subr.bf16.mxu0 0
      %333 = vmatpush1.bf16.msra.mxu0 0
      %334 = vmatprep.subr.bf16.mxu0 0
      %335 = vmatpush1.bf16.msra.mxu0 0
      %336 = vmatprep.subr.bf16.mxu0 0
      %337 = vmatpush1.bf16.msra.mxu0 %v316
      %338 = vmatprep.subr.bf16.mxu0 0
      %339 = vmatpush2.bf16.msra.mxu0 0
      %340 = vmatprep.subr.bf16.mxu0 0
      %341 = vmatpush2.bf16.msra.mxu0 0
      %342 = vmatprep.subr.bf16.mxu0 0
      %343 = vmatpush2.bf16.msra.mxu0 0
      %344 = vmatprep.subr.bf16.mxu0 0
      %345 = vmatpush2.bf16.msra.mxu0 0
      %346 = vmatprep.subr.bf16.mxu0 0
      %347 = vmatpush2.bf16.msra.mxu0 0
      %348 = vmatprep.subr.bf16.mxu0 0
      %349 = vmatpush2.bf16.msra.mxu0 0
      %350 = vmatprep.subr.bf16.mxu0 0
      %351 = vmatpush2.bf16.msra.mxu0 0
      %352 = vmatprep.subr.bf16.mxu0 0
      %353 = vmatpush2.bf16.msra.mxu0 0
      %354 = vmatprep.mubr.bf16.mxu0 0
      %355 = vmatmul.mubr.bf16.gmra.mxu0 %v320
      %v356 = vpop.f32.mrf.mxu0
      %v357 = vadd.f32 0.0, %v356
      %v358 = vpop.f32.mrf.mxu0
      %v359 = vpop.f32.mrf.mxu0
      %v360 = vpop.f32.mrf.mxu0
      %361 = vdwg.mxu0
      %v364 = vsel %vm318, %v294, 0
      %366 = vmatprep.subr.bf16.mxu0 0
      %367 = vmatpush1.bf16.msra.mxu0 0
      %368 = vmatprep.subr.bf16.mxu0 0
      %369 = vmatpush1.bf16.msra.mxu0 0
      %370 = vmatprep.subr.bf16.mxu0 0
      %371 = vmatpush1.bf16.msra.mxu0 0
      %372 = vmatprep.subr.bf16.mxu0 0
      %373 = vmatpush1.bf16.msra.mxu0 0
      %374 = vmatprep.subr.bf16.mxu0 0
      %375 = vmatpush1.bf16.msra.mxu0 0
      %376 = vmatprep.subr.bf16.mxu0 0
      %377 = vmatpush1.bf16.msra.mxu0 0
      %378 = vmatprep.subr.bf16.mxu0 0
      %379 = vmatpush1.bf16.msra.mxu0 0
      %380 = vmatprep.subr.bf16.mxu0 0
      %381 = vmatpush1.bf16.msra.mxu0 %v309
      %382 = vmatprep.subr.bf16.mxu0 0
      %383 = vmatpush2.bf16.msra.mxu0 0
      %384 = vmatprep.subr.bf16.mxu0 0
      %385 = vmatpush2.bf16.msra.mxu0 0
      %386 = vmatprep.subr.bf16.mxu0 0
      %387 = vmatpush2.bf16.msra.mxu0 0
      %388 = vmatprep.subr.bf16.mxu0 0
      %389 = vmatpush2.bf16.msra.mxu0 0
      %390 = vmatprep.subr.bf16.mxu0 0
      %391 = vmatpush2.bf16.msra.mxu0 0
      %392 = vmatprep.subr.bf16.mxu0 0
      %393 = vmatpush2.bf16.msra.mxu0 0
      %394 = vmatprep.subr.bf16.mxu0 0
      %395 = vmatpush2.bf16.msra.mxu0 0
      %396 = vmatprep.subr.bf16.mxu0 0
      %397 = vmatpush2.bf16.msra.mxu0 0
      %398 = vmatprep.mubr.bf16.mxu0 0
      %399 = vmatmul.mubr.bf16.gmra.mxu0 %v364
      %v400 = vpop.f32.mrf.mxu0
      %v401 = vadd.f32 %v357, %v400
      %v402 = vpop.f32.mrf.mxu0
      %v403 = vpop.f32.mrf.mxu0
      %v404 = vpop.f32.mrf.mxu0
      %405 = vdwg.mxu0
      %406 = vrot.lane.b32.xlu0 %v309, 126
      %v407 = vpop.permute.xlu0 %406
      %408 = vrot.lane.b32.xlu0 %v310, 126
      %v409 = vpop.permute.xlu0 %408
      %vm410 = vcmask 1031168
      %v411 = vsel %vm410, %v407, %v409
      %v414 = vsel %vm318, %v296, 0
      %416 = vmatprep.subr.bf16.mxu0 0
      %417 = vmatpush1.bf16.msra.mxu0 0
      %418 = vmatprep.subr.bf16.mxu0 0
      %419 = vmatpush1.bf16.msra.mxu0 0
      %420 = vmatprep.subr.bf16.mxu0 0
      %421 = vmatpush1.bf16.msra.mxu0 0
      %422 = vmatprep.subr.bf16.mxu0 0
      %423 = vmatpush1.bf16.msra.mxu0 0
      %424 = vmatprep.subr.bf16.mxu0 0
      %425 = vmatpush1.bf16.msra.mxu0 0
      %426 = vmatprep.subr.bf16.mxu0 0
      %427 = vmatpush1.bf16.msra.mxu0 0
      %428 = vmatprep.subr.bf16.mxu0 0
      %429 = vmatpush1.bf16.msra.mxu0 0
      %430 = vmatprep.subr.bf16.mxu0 0
      %431 = vmatpush1.bf16.msra.mxu0 %v411
      %432 = vmatprep.subr.bf16.mxu0 0
      %433 = vmatpush2.bf16.msra.mxu0 0
      %434 = vmatprep.subr.bf16.mxu0 0
      %435 = vmatpush2.bf16.msra.mxu0 0
      %436 = vmatprep.subr.bf16.mxu0 0
      %437 = vmatpush2.bf16.msra.mxu0 0
      %438 = vmatprep.subr.bf16.mxu0 0
      %439 = vmatpush2.bf16.msra.mxu0 0
      %440 = vmatprep.subr.bf16.mxu0 0
      %441 = vmatpush2.bf16.msra.mxu0 0
      %442 = vmatprep.subr.bf16.mxu0 0
      %443 = vmatpush2.bf16.msra.mxu0 0
      %444 = vmatprep.subr.bf16.mxu0 0
      %445 = vmatpush2.bf16.msra.mxu0 0
      %446 = vmatprep.subr.bf16.mxu0 0
      %447 = vmatpush2.bf16.msra.mxu0 0
      %448 = vmatprep.mubr.bf16.mxu0 0
      %449 = vmatmul.mubr.bf16.gmra.mxu0 %v414
      %v450 = vpop.f32.mrf.mxu0
      %v451 = vadd.f32 0.0, %v450
      %v452 = vpop.f32.mrf.mxu0
      %v453 = vpop.f32.mrf.mxu0
      %v454 = vpop.f32.mrf.mxu0
      %455 = vdwg.mxu0
      %v456 = vadd.f32 %v401, %v451
      %457 = vrot.lane.b32.xlu0 %v309, 118
      %v458 = vpop.permute.xlu0 %457
      %459 = vrot.lane.b32.xlu0 %v310, 118
      %v460 = vpop.permute.xlu0 %459
      %vm461 = vcmask 965632
      %v462 = vsel %vm461, %v458, %v460
      %v465 = vsel %vm318, %v297, 0
      %467 = vmatprep.subr.bf16.mxu0 0
      %468 = vmatpush1.bf16.msra.mxu0 0
      %469 = vmatprep.subr.bf16.mxu0 0
      %470 = vmatpush1.bf16.msra.mxu0 0
      %471 = vmatprep.subr.bf16.mxu0 0
      %472 = vmatpush1.bf16.msra.mxu0 0
      %473 = vmatprep.subr.bf16.mxu0 0
      %474 = vmatpush1.bf16.msra.mxu0 0
      %475 = vmatprep.subr.bf16.mxu0 0
      %476 = vmatpush1.bf16.msra.mxu0 0
      %477 = vmatprep.subr.bf16.mxu0 0
      %478 = vmatpush1.bf16.msra.mxu0 0
      %479 = vmatprep.subr.bf16.mxu0 0
      %480 = vmatpush1.bf16.msra.mxu0 0
      %481 = vmatprep.subr.bf16.mxu0 0
      %482 = vmatpush1.bf16.msra.mxu0 %v462
      %483 = vmatprep.subr.bf16.mxu0 0
      %484 = vmatpush2.bf16.msra.mxu0 0
      %485 = vmatprep.subr.bf16.mxu0 0
      %486 = vmatpush2.bf16.msra.mxu0 0
      %487 = vmatprep.subr.bf16.mxu0 0
      %488 = vmatpush2.bf16.msra.mxu0 0
      %489 = vmatprep.subr.bf16.mxu0 0
      %490 = vmatpush2.bf16.msra.mxu0 0
      %491 = vmatprep.subr.bf16.mxu0 0
      %492 = vmatpush2.bf16.msra.mxu0 0
      %493 = vmatprep.subr.bf16.mxu0 0
      %494 = vmatpush2.bf16.msra.mxu0 0
      %495 = vmatprep.subr.bf16.mxu0 0
      %496 = vmatpush2.bf16.msra.mxu0 0
      %497 = vmatprep.subr.bf16.mxu0 0
      %498 = vmatpush2.bf16.msra.mxu0 0
      %499 = vmatprep.mubr.bf16.mxu0 0
      %500 = vmatmul.mubr.bf16.gmra.mxu0 %v465
      %v501 = vpop.f32.mrf.mxu0
      %v502 = vadd.f32 0.0, %v501
      %v503 = vpop.f32.mrf.mxu0
      %v504 = vpop.f32.mrf.mxu0
      %v505 = vpop.f32.mrf.mxu0
      %506 = vdwg.mxu0
      %v507 = vadd.f32 %v456, %v502
      %508 = vrot.lane.b32.xlu0 %v309, 117
      %v509 = vpop.permute.xlu0 %508
      %510 = vrot.lane.b32.xlu0 %v310, 117
      %v511 = vpop.permute.xlu0 %510
      %vm512 = vcmask 957440
      %v513 = vsel %vm512, %v509, %v511
      %v516 = vsel %vm318, %v298, 0
      %518 = vmatprep.subr.bf16.mxu0 0
      %519 = vmatpush1.bf16.msra.mxu0 0
      %520 = vmatprep.subr.bf16.mxu0 0
      %521 = vmatpush1.bf16.msra.mxu0 0
      %522 = vmatprep.subr.bf16.mxu0 0
      %523 = vmatpush1.bf16.msra.mxu0 0
      %524 = vmatprep.subr.bf16.mxu0 0
      %525 = vmatpush1.bf16.msra.mxu0 0
      %526 = vmatprep.subr.bf16.mxu0 0
      %527 = vmatpush1.bf16.msra.mxu0 0
      %528 = vmatprep.subr.bf16.mxu0 0
      %529 = vmatpush1.bf16.msra.mxu0 0
      %530 = vmatprep.subr.bf16.mxu0 0
      %531 = vmatpush1.bf16.msra.mxu0 0
      %532 = vmatprep.subr.bf16.mxu0 0
      %533 = vmatpush1.bf16.msra.mxu0 %v513
      %534 = vmatprep.subr.bf16.mxu0 0
      %535 = vmatpush2.bf16.msra.mxu0 0
      %536 = vmatprep.subr.bf16.mxu0 0
      %537 = vmatpush2.bf16.msra.mxu0 0
      %538 = vmatprep.subr.bf16.mxu0 0
      %539 = vmatpush2.bf16.msra.mxu0 0
      %540 = vmatprep.subr.bf16.mxu0 0
      %541 = vmatpush2.bf16.msra.mxu0 0
      %542 = vmatprep.subr.bf16.mxu0 0
      %543 = vmatpush2.bf16.msra.mxu0 0
      %544 = vmatprep.subr.bf16.mxu0 0
      %545 = vmatpush2.bf16.msra.mxu0 0
      %546 = vmatprep.subr.bf16.mxu0 0
      %547 = vmatpush2.bf16.msra.mxu0 0
      %548 = vmatprep.subr.bf16.mxu0 0
      %549 = vmatpush2.bf16.msra.mxu0 0
      %550 = vmatprep.mubr.bf16.mxu0 0
      %551 = vmatmul.mubr.bf16.gmra.mxu0 %v516
      %v552 = vpop.f32.mrf.mxu0
      %v553 = vadd.f32 0.0, %v552
      %v554 = vpop.f32.mrf.mxu0
      %v555 = vpop.f32.mrf.mxu0
      %v556 = vpop.f32.mrf.mxu0
      %557 = vdwg.mxu0
      %v558 = vadd.f32 %v507, %v553
      %559 = vrot.lane.b32.xlu0 %v309, 116
      %v560 = vpop.permute.xlu0 %559
      %561 = vrot.lane.b32.xlu0 %v310, 116
      %v562 = vpop.permute.xlu0 %561
      %vm563 = vcmask 949248
      %v564 = vsel %vm563, %v560, %v562
      %v567 = vsel %vm318, %v299, 0
      %569 = vmatprep.subr.bf16.mxu0 0
      %570 = vmatpush1.bf16.msra.mxu0 0
      %571 = vmatprep.subr.bf16.mxu0 0
      %572 = vmatpush1.bf16.msra.mxu0 0
      %573 = vmatprep.subr.bf16.mxu0 0
      %574 = vmatpush1.bf16.msra.mxu0 0
      %575 = vmatprep.subr.bf16.mxu0 0
      %576 = vmatpush1.bf16.msra.mxu0 0
      %577 = vmatprep.subr.bf16.mxu0 0
      %578 = vmatpush1.bf16.msra.mxu0 0
      %579 = vmatprep.subr.bf16.mxu0 0
      %580 = vmatpush1.bf16.msra.mxu0 0
      %581 = vmatprep.subr.bf16.mxu0 0
      %582 = vmatpush1.bf16.msra.mxu0 0
      %583 = vmatprep.subr.bf16.mxu0 0
      %584 = vmatpush1.bf16.msra.mxu0 %v564
      %585 = vmatprep.subr.bf16.mxu0 0
      %586 = vmatpush2.bf16.msra.mxu0 0
      %587 = vmatprep.subr.bf16.mxu0 0
      %588 = vmatpush2.bf16.msra.mxu0 0
      %589 = vmatprep.subr.bf16.mxu0 0
      %590 = vmatpush2.bf16.msra.mxu0 0
      %591 = vmatprep.subr.bf16.mxu0 0
      %592 = vmatpush2.bf16.msra.mxu0 0
      %593 = vmatprep.subr.bf16.mxu0 0
      %594 = vmatpush2.bf16.msra.mxu0 0
      %595 = vmatprep.subr.bf16.mxu0 0
      %596 = vmatpush2.bf16.msra.mxu0 0
      %597 = vmatprep.subr.bf16.mxu0 0
      %598 = vmatpush2.bf16.msra.mxu0 0
      %599 = vmatprep.subr.bf16.mxu0 0
      %600 = vmatpush2.bf16.msra.mxu0 0
      %601 = vmatprep.mubr.bf16.mxu0 0
      %602 = vmatmul.mubr.bf16.gmra.mxu0 %v567
      %v603 = vpop.f32.mrf.mxu0
      %v604 = vadd.f32 0.0, %v603
      %v605 = vpop.f32.mrf.mxu0
      %v606 = vpop.f32.mrf.mxu0
      %v607 = vpop.f32.mrf.mxu0
      %608 = vdwg.mxu0
      %v609 = vadd.f32 %v558, %v604
      %610 = vrot.lane.b32.xlu0 %v309, 108
      %v611 = vpop.permute.xlu0 %610
      %612 = vrot.lane.b32.xlu0 %v310, 108
      %v613 = vpop.permute.xlu0 %612
      %vm614 = vcmask 883712
      %v615 = vsel %vm614, %v611, %v613
      %v618 = vsel %vm318, %v300, 0
      %620 = vmatprep.subr.bf16.mxu0 0
      %621 = vmatpush1.bf16.msra.mxu0 0
      %622 = vmatprep.subr.bf16.mxu0 0
      %623 = vmatpush1.bf16.msra.mxu0 0
      %624 = vmatprep.subr.bf16.mxu0 0
      %625 = vmatpush1.bf16.msra.mxu0 0
      %626 = vmatprep.subr.bf16.mxu0 0
      %627 = vmatpush1.bf16.msra.mxu0 0
      %628 = vmatprep.subr.bf16.mxu0 0
      %629 = vmatpush1.bf16.msra.mxu0 0
      %630 = vmatprep.subr.bf16.mxu0 0
      %631 = vmatpush1.bf16.msra.mxu0 0
      %632 = vmatprep.subr.bf16.mxu0 0
      %633 = vmatpush1.bf16.msra.mxu0 0
      %634 = vmatprep.subr.bf16.mxu0 0
      %635 = vmatpush1.bf16.msra.mxu0 %v615
      %636 = vmatprep.subr.bf16.mxu0 0
      %637 = vmatpush2.bf16.msra.mxu0 0
      %638 = vmatprep.subr.bf16.mxu0 0
      %639 = vmatpush2.bf16.msra.mxu0 0
      %640 = vmatprep.subr.bf16.mxu0 0
      %641 = vmatpush2.bf16.msra.mxu0 0
      %642 = vmatprep.subr.bf16.mxu0 0
      %643 = vmatpush2.bf16.msra.mxu0 0
      %644 = vmatprep.subr.bf16.mxu0 0
      %645 = vmatpush2.bf16.msra.mxu0 0
      %646 = vmatprep.subr.bf16.mxu0 0
      %647 = vmatpush2.bf16.msra.mxu0 0
      %648 = vmatprep.subr.bf16.mxu0 0
      %649 = vmatpush2.bf16.msra.mxu0 0
      %650 = vmatprep.subr.bf16.mxu0 0
      %651 = vmatpush2.bf16.msra.mxu0 0
      %652 = vmatprep.mubr.bf16.mxu0 0
      %653 = vmatmul.mubr.bf16.gmra.mxu0 %v618
      %v654 = vpop.f32.mrf.mxu0
      %v655 = vadd.f32 0.0, %v654
      %v656 = vpop.f32.mrf.mxu0
      %v657 = vpop.f32.mrf.mxu0
      %v658 = vpop.f32.mrf.mxu0
      %659 = vdwg.mxu0
      %v660 = vadd.f32 %v609, %v655
      %661 = vrot.lane.b32.xlu0 %v309, 107
      %v662 = vpop.permute.xlu0 %661
      %663 = vrot.lane.b32.xlu0 %v310, 107
      %v664 = vpop.permute.xlu0 %663
      %vm665 = vcmask 875520
      %v666 = vsel %vm665, %v662, %v664
      %v669 = vsel %vm318, %v301, 0
      %671 = vmatprep.subr.bf16.mxu0 0
      %672 = vmatpush1.bf16.msra.mxu0 0
      %673 = vmatprep.subr.bf16.mxu0 0
      %674 = vmatpush1.bf16.msra.mxu0 0
      %675 = vmatprep.subr.bf16.mxu0 0
      %676 = vmatpush1.bf16.msra.mxu0 0
      %677 = vmatprep.subr.bf16.mxu0 0
      %678 = vmatpush1.bf16.msra.mxu0 0
      %679 = vmatprep.subr.bf16.mxu0 0
      %680 = vmatpush1.bf16.msra.mxu0 0
      %681 = vmatprep.subr.bf16.mxu0 0
      %682 = vmatpush1.bf16.msra.mxu0 0
      %683 = vmatprep.subr.bf16.mxu0 0
      %684 = vmatpush1.bf16.msra.mxu0 0
      %685 = vmatprep.subr.bf16.mxu0 0
      %686 = vmatpush1.bf16.msra.mxu0 %v666
      %687 = vmatprep.subr.bf16.mxu0 0
      %688 = vmatpush2.bf16.msra.mxu0 0
      %689 = vmatprep.subr.bf16.mxu0 0
      %690 = vmatpush2.bf16.msra.mxu0 0
      %691 = vmatprep.subr.bf16.mxu0 0
      %692 = vmatpush2.bf16.msra.mxu0 0
      %693 = vmatprep.subr.bf16.mxu0 0
      %694 = vmatpush2.bf16.msra.mxu0 0
      %695 = vmatprep.subr.bf16.mxu0 0
      %696 = vmatpush2.bf16.msra.mxu0 0
      %697 = vmatprep.subr.bf16.mxu0 0
      %698 = vmatpush2.bf16.msra.mxu0 0
      %699 = vmatprep.subr.bf16.mxu0 0
      %700 = vmatpush2.bf16.msra.mxu0 0
      %701 = vmatprep.subr.bf16.mxu0 0
      %702 = vmatpush2.bf16.msra.mxu0 0
      %703 = vmatprep.mubr.bf16.mxu0 0
      %704 = vmatmul.mubr.bf16.gmra.mxu0 %v669
      %v705 = vpop.f32.mrf.mxu0
      %v706 = vadd.f32 0.0, %v705
      %v707 = vpop.f32.mrf.mxu0
      %v708 = vpop.f32.mrf.mxu0
      %v709 = vpop.f32.mrf.mxu0
      %710 = vdwg.mxu0
      %v711 = vadd.f32 %v660, %v706
      %712 = vrot.lane.b32.xlu0 %v309, 106
      %v713 = vpop.permute.xlu0 %712
      %714 = vrot.lane.b32.xlu0 %v310, 106
      %v715 = vpop.permute.xlu0 %714
      %vm716 = vcmask 867328
      %v717 = vsel %vm716, %v713, %v715
      %v720 = vsel %vm318, %v302, 0
      %722 = vmatprep.subr.bf16.mxu0 0
      %723 = vmatpush1.bf16.msra.mxu0 0
      %724 = vmatprep.subr.bf16.mxu0 0
      %725 = vmatpush1.bf16.msra.mxu0 0
      %726 = vmatprep.subr.bf16.mxu0 0
      %727 = vmatpush1.bf16.msra.mxu0 0
      %728 = vmatprep.subr.bf16.mxu0 0
      %729 = vmatpush1.bf16.msra.mxu0 0
      %730 = vmatprep.subr.bf16.mxu0 0
      %731 = vmatpush1.bf16.msra.mxu0 0
      %732 = vmatprep.subr.bf16.mxu0 0
      %733 = vmatpush1.bf16.msra.mxu0 0
      %734 = vmatprep.subr.bf16.mxu0 0
      %735 = vmatpush1.bf16.msra.mxu0 0
      %736 = vmatprep.subr.bf16.mxu0 0
      %737 = vmatpush1.bf16.msra.mxu0 %v717
      %738 = vmatprep.subr.bf16.mxu0 0
      %739 = vmatpush2.bf16.msra.mxu0 0
      %740 = vmatprep.subr.bf16.mxu0 0
      %741 = vmatpush2.bf16.msra.mxu0 0
      %742 = vmatprep.subr.bf16.mxu0 0
      %743 = vmatpush2.bf16.msra.mxu0 0
      %744 = vmatprep.subr.bf16.mxu0 0
      %745 = vmatpush2.bf16.msra.mxu0 0
      %746 = vmatprep.subr.bf16.mxu0 0
      %747 = vmatpush2.bf16.msra.mxu0 0
      %748 = vmatprep.subr.bf16.mxu0 0
      %749 = vmatpush2.bf16.msra.mxu0 0
      %750 = vmatprep.subr.bf16.mxu0 0
      %751 = vmatpush2.bf16.msra.mxu0 0
      %752 = vmatprep.subr.bf16.mxu0 0
      %753 = vmatpush2.bf16.msra.mxu0 0
      %754 = vmatprep.mubr.bf16.mxu0 0
      %755 = vmatmul.mubr.bf16.gmra.mxu0 %v720
      %v756 = vpop.f32.mrf.mxu0
      %v757 = vadd.f32 0.0, %v756
      %v758 = vpop.f32.mrf.mxu0
      %v759 = vpop.f32.mrf.mxu0
      %v760 = vpop.f32.mrf.mxu0
      %761 = vdwg.mxu0
      %v762 = vadd.f32 %v711, %v757
      %v763 = vld [vmem:[%s283] sm:$0xff]
      %v764 = vld [vmem:[%s283 + $0x8] sm:$0xff]
      %v765 = vld [vmem:[%s3] sm:$0xf]
      %v766 = vld [vmem:[%s3 + $0x4] sm:$0xf]
      %v767 = vld [vmem:[%s3 + $0x8] sm:$0xf]
      %v768 = vld [vmem:[%s3 + $0xc] sm:$0xf]
      %v769 = vld [vmem:[%s3 + $0x10] sm:$0xf]
      %v770 = vld [vmem:[%s3 + $0x14] sm:$0xf]
      %v771 = vld [vmem:[%s3 + $0x18] sm:$0xf]
      %v772 = vld [vmem:[%s3 + $0x1c] sm:$0xf]
      %v773 = vld [vmem:[%s3 + $0x20] sm:$0xf]
      %v776 = vunpack.c.l.b16 %v763
      %v777 = vunpack.c.l.b16 %v764
      %v778 = vpack.c.b16 %v777, %v776
      %v781 = vsel %vm318, %v765, 0
      %783 = vmatprep.subr.bf16.mxu0 0
      %784 = vmatpush1.bf16.msra.mxu0 0
      %785 = vmatprep.subr.bf16.mxu0 0
      %786 = vmatpush1.bf16.msra.mxu0 0
      %787 = vmatprep.subr.bf16.mxu0 0
      %788 = vmatpush1.bf16.msra.mxu0 0
      %789 = vmatprep.subr.bf16.mxu0 0
      %790 = vmatpush1.bf16.msra.mxu0 0
      %791 = vmatprep.subr.bf16.mxu0 0
      %792 = vmatpush1.bf16.msra.mxu0 0
      %793 = vmatprep.subr.bf16.mxu0 0
      %794 = vmatpush1.bf16.msra.mxu0 0
      %795 = vmatprep.subr.bf16.mxu0 0
      %796 = vmatpush1.bf16.msra.mxu0 0
      %797 = vmatprep.subr.bf16.mxu0 0
      %798 = vmatpush1.bf16.msra.mxu0 %v778
      %799 = vmatprep.subr.bf16.mxu0 0
      %800 = vmatpush2.bf16.msra.mxu0 0
      %801 = vmatprep.subr.bf16.mxu0 0
      %802 = vmatpush2.bf16.msra.mxu0 0
      %803 = vmatprep.subr.bf16.mxu0 0
      %804 = vmatpush2.bf16.msra.mxu0 0
      %805 = vmatprep.subr.bf16.mxu0 0
      %806 = vmatpush2.bf16.msra.mxu0 0
      %807 = vmatprep.subr.bf16.mxu0 0
      %808 = vmatpush2.bf16.msra.mxu0 0
      %809 = vmatprep.subr.bf16.mxu0 0
      %810 = vmatpush2.bf16.msra.mxu0 0
      %811 = vmatprep.subr.bf16.mxu0 0
      %812 = vmatpush2.bf16.msra.mxu0 0
      %813 = vmatprep.subr.bf16.mxu0 0
      %814 = vmatpush2.bf16.msra.mxu0 0
      %815 = vmatprep.mubr.bf16.mxu0 0
      %816 = vmatmul.mubr.bf16.gmra.mxu0 %v781
      %v817 = vpop.f32.mrf.mxu0
      %v818 = vadd.f32 0.0, %v817
      %v819 = vpop.f32.mrf.mxu0
      %v820 = vpop.f32.mrf.mxu0
      %v821 = vpop.f32.mrf.mxu0
      %822 = vdwg.mxu0
      %v823 = vadd.f32 %v762, %v818
      %v824 = vunpack.c.h.b16 %v763
      %v825 = vunpack.c.h.b16 %v764
      %v826 = vpack.c.b16 %v825, %v824
      %827 = vrot.lane.b32.xlu0 %v778, 127
      %v828 = vpop.permute.xlu0 %827
      %829 = vrot.lane.b32.xlu0 %v826, 127
      %v830 = vpop.permute.xlu0 %829
      %v831 = vsel %vm315, %v828, %v830
      %v834 = vsel %vm318, %v766, 0
      %836 = vmatprep.subr.bf16.mxu0 0
      %837 = vmatpush1.bf16.msra.mxu0 0
      %838 = vmatprep.subr.bf16.mxu0 0
      %839 = vmatpush1.bf16.msra.mxu0 0
      %840 = vmatprep.subr.bf16.mxu0 0
      %841 = vmatpush1.bf16.msra.mxu0 0
      %842 = vmatprep.subr.bf16.mxu0 0
      %843 = vmatpush1.bf16.msra.mxu0 0
      %844 = vmatprep.subr.bf16.mxu0 0
      %845 = vmatpush1.bf16.msra.mxu0 0
      %846 = vmatprep.subr.bf16.mxu0 0
      %847 = vmatpush1.bf16.msra.mxu0 0
      %848 = vmatprep.subr.bf16.mxu0 0
      %849 = vmatpush1.bf16.msra.mxu0 0
      %850 = vmatprep.subr.bf16.mxu0 0
      %851 = vmatpush1.bf16.msra.mxu0 %v831
      %852 = vmatprep.subr.bf16.mxu0 0
      %853 = vmatpush2.bf16.msra.mxu0 0
      %854 = vmatprep.subr.bf16.mxu0 0
      %855 = vmatpush2.bf16.msra.mxu0 0
      %856 = vmatprep.subr.bf16.mxu0 0
      %857 = vmatpush2.bf16.msra.mxu0 0
      %858 = vmatprep.subr.bf16.mxu0 0
      %859 = vmatpush2.bf16.msra.mxu0 0
      %860 = vmatprep.subr.bf16.mxu0 0
      %861 = vmatpush2.bf16.msra.mxu0 0
      %862 = vmatprep.subr.bf16.mxu0 0
      %863 = vmatpush2.bf16.msra.mxu0 0
      %864 = vmatprep.subr.bf16.mxu0 0
      %865 = vmatpush2.bf16.msra.mxu0 0
      %866 = vmatprep.subr.bf16.mxu0 0
      %867 = vmatpush2.bf16.msra.mxu0 0
      %868 = vmatprep.mubr.bf16.mxu0 0
      %869 = vmatmul.mubr.bf16.gmra.mxu0 %v834
      %v870 = vpop.f32.mrf.mxu0
      %v871 = vadd.f32 0.0, %v870
      %v872 = vpop.f32.mrf.mxu0
      %v873 = vpop.f32.mrf.mxu0
      %v874 = vpop.f32.mrf.mxu0
      %875 = vdwg.mxu0
      %v876 = vadd.f32 %v823, %v871
      %877 = vrot.lane.b32.xlu0 %v778, 126
      %v878 = vpop.permute.xlu0 %877
      %879 = vrot.lane.b32.xlu0 %v826, 126
      %v880 = vpop.permute.xlu0 %879
      %v881 = vsel %vm410, %v878, %v880
      %v884 = vsel %vm318, %v767, 0
      %886 = vmatprep.subr.bf16.mxu0 0
      %887 = vmatpush1.bf16.msra.mxu0 0
      %888 = vmatprep.subr.bf16.mxu0 0
      %889 = vmatpush1.bf16.msra.mxu0 0
      %890 = vmatprep.subr.bf16.mxu0 0
      %891 = vmatpush1.bf16.msra.mxu0 0
      %892 = vmatprep.subr.bf16.mxu0 0
      %893 = vmatpush1.bf16.msra.mxu0 0
      %894 = vmatprep.subr.bf16.mxu0 0
      %895 = vmatpush1.bf16.msra.mxu0 0
      %896 = vmatprep.subr.bf16.mxu0 0
      %897 = vmatpush1.bf16.msra.mxu0 0
      %898 = vmatprep.subr.bf16.mxu0 0
      %899 = vmatpush1.bf16.msra.mxu0 0
      %900 = vmatprep.subr.bf16.mxu0 0
      %901 = vmatpush1.bf16.msra.mxu0 %v881
      %902 = vmatprep.subr.bf16.mxu0 0
      %903 = vmatpush2.bf16.msra.mxu0 0
      %904 = vmatprep.subr.bf16.mxu0 0
      %905 = vmatpush2.bf16.msra.mxu0 0
      %906 = vmatprep.subr.bf16.mxu0 0
      %907 = vmatpush2.bf16.msra.mxu0 0
      %908 = vmatprep.subr.bf16.mxu0 0
      %909 = vmatpush2.bf16.msra.mxu0 0
      %910 = vmatprep.subr.bf16.mxu0 0
      %911 = vmatpush2.bf16.msra.mxu0 0
      %912 = vmatprep.subr.bf16.mxu0 0
      %913 = vmatpush2.bf16.msra.mxu0 0
      %914 = vmatprep.subr.bf16.mxu0 0
      %915 = vmatpush2.bf16.msra.mxu0 0
      %916 = vmatprep.subr.bf16.mxu0 0
      %917 = vmatpush2.bf16.msra.mxu0 0
      %918 = vmatprep.mubr.bf16.mxu0 0
      %919 = vmatmul.mubr.bf16.gmra.mxu0 %v884
      %v920 = vpop.f32.mrf.mxu0
      %v921 = vadd.f32 0.0, %v920
      %v922 = vpop.f32.mrf.mxu0
      %v923 = vpop.f32.mrf.mxu0
      %v924 = vpop.f32.mrf.mxu0
      %925 = vdwg.mxu0
      %v926 = vadd.f32 %v876, %v921
      %927 = vrot.lane.b32.xlu0 %v778, 118
      %v928 = vpop.permute.xlu0 %927
      %929 = vrot.lane.b32.xlu0 %v826, 118
      %v930 = vpop.permute.xlu0 %929
      %v931 = vsel %vm461, %v928, %v930
      %v934 = vsel %vm318, %v768, 0
      %936 = vmatprep.subr.bf16.mxu0 0
      %937 = vmatpush1.bf16.msra.mxu0 0
      %938 = vmatprep.subr.bf16.mxu0 0
      %939 = vmatpush1.bf16.msra.mxu0 0
      %940 = vmatprep.subr.bf16.mxu0 0
      %941 = vmatpush1.bf16.msra.mxu0 0
      %942 = vmatprep.subr.bf16.mxu0 0
      %943 = vmatpush1.bf16.msra.mxu0 0
      %944 = vmatprep.subr.bf16.mxu0 0
      %945 = vmatpush1.bf16.msra.mxu0 0
      %946 = vmatprep.subr.bf16.mxu0 0
      %947 = vmatpush1.bf16.msra.mxu0 0
      %948 = vmatprep.subr.bf16.mxu0 0
      %949 = vmatpush1.bf16.msra.mxu0 0
      %950 = vmatprep.subr.bf16.mxu0 0
      %951 = vmatpush1.bf16.msra.mxu0 %v931
      %952 = vmatprep.subr.bf16.mxu0 0
      %953 = vmatpush2.bf16.msra.mxu0 0
      %954 = vmatprep.subr.bf16.mxu0 0
      %955 = vmatpush2.bf16.msra.mxu0 0
      %956 = vmatprep.subr.bf16.mxu0 0
      %957 = vmatpush2.bf16.msra.mxu0 0
      %958 = vmatprep.subr.bf16.mxu0 0
      %959 = vmatpush2.bf16.msra.mxu0 0
      %960 = vmatprep.subr.bf16.mxu0 0
      %961 = vmatpush2.bf16.msra.mxu0 0
      %962 = vmatprep.subr.bf16.mxu0 0
      %963 = vmatpush2.bf16.msra.mxu0 0
      %964 = vmatprep.subr.bf16.mxu0 0
      %965 = vmatpush2.bf16.msra.mxu0 0
      %966 = vmatprep.subr.bf16.mxu0 0
      %967 = vmatpush2.bf16.msra.mxu0 0
      %968 = vmatprep.mubr.bf16.mxu0 0
      %969 = vmatmul.mubr.bf16.gmra.mxu0 %v934
      %v970 = vpop.f32.mrf.mxu0
      %v971 = vadd.f32 0.0, %v970
      %v972 = vpop.f32.mrf.mxu0
      %v973 = vpop.f32.mrf.mxu0
      %v974 = vpop.f32.mrf.mxu0
      %975 = vdwg.mxu0
      %v976 = vadd.f32 %v926, %v971
      %977 = vrot.lane.b32.xlu0 %v778, 117
      %v978 = vpop.permute.xlu0 %977
      %979 = vrot.lane.b32.xlu0 %v826, 117
      %v980 = vpop.permute.xlu0 %979
      %v981 = vsel %vm512, %v978, %v980
      %v984 = vsel %vm318, %v769, 0
      %986 = vmatprep.subr.bf16.mxu0 0
      %987 = vmatpush1.bf16.msra.mxu0 0
      %988 = vmatprep.subr.bf16.mxu0 0
      %989 = vmatpush1.bf16.msra.mxu0 0
      %990 = vmatprep.subr.bf16.mxu0 0
      %991 = vmatpush1.bf16.msra.mxu0 0
      %992 = vmatprep.subr.bf16.mxu0 0
      %993 = vmatpush1.bf16.msra.mxu0 0
      %994 = vmatprep.subr.bf16.mxu0 0
      %995 = vmatpush1.bf16.msra.mxu0 0
      %996 = vmatprep.subr.bf16.mxu0 0
      %997 = vmatpush1.bf16.msra.mxu0 0
      %998 = vmatprep.subr.bf16.mxu0 0
      %999 = vmatpush1.bf16.msra.mxu0 0
      %1000 = vmatprep.subr.bf16.mxu0 0
      %1001 = vmatpush1.bf16.msra.mxu0 %v981
      %1002 = vmatprep.subr.bf16.mxu0 0
      %1003 = vmatpush2.bf16.msra.mxu0 0
      %1004 = vmatprep.subr.bf16.mxu0 0
      %1005 = vmatpush2.bf16.msra.mxu0 0
      %1006 = vmatprep.subr.bf16.mxu0 0
      %1007 = vmatpush2.bf16.msra.mxu0 0
      %1008 = vmatprep.subr.bf16.mxu0 0
      %1009 = vmatpush2.bf16.msra.mxu0 0
      %1010 = vmatprep.subr.bf16.mxu0 0
      %1011 = vmatpush2.bf16.msra.mxu0 0
      %1012 = vmatprep.subr.bf16.mxu0 0
      %1013 = vmatpush2.bf16.msra.mxu0 0
      %1014 = vmatprep.subr.bf16.mxu0 0
      %1015 = vmatpush2.bf16.msra.mxu0 0
      %1016 = vmatprep.subr.bf16.mxu0 0
      %1017 = vmatpush2.bf16.msra.mxu0 0
      %1018 = vmatprep.mubr.bf16.mxu0 0
      %1019 = vmatmul.mubr.bf16.gmra.mxu0 %v984
      %v1020 = vpop.f32.mrf.mxu0
      %v1021 = vadd.f32 0.0, %v1020
      %v1022 = vpop.f32.mrf.mxu0
      %v1023 = vpop.f32.mrf.mxu0
      %v1024 = vpop.f32.mrf.mxu0
      %1025 = vdwg.mxu0
      %v1026 = vadd.f32 %v976, %v1021
      %1027 = vrot.lane.b32.xlu0 %v778, 116
      %v1028 = vpop.permute.xlu0 %1027
      %1029 = vrot.lane.b32.xlu0 %v826, 116
      %v1030 = vpop.permute.xlu0 %1029
      %v1031 = vsel %vm563, %v1028, %v1030
      %v1034 = vsel %vm318, %v770, 0
      %1036 = vmatprep.subr.bf16.mxu0 0
      %1037 = vmatpush1.bf16.msra.mxu0 0
      %1038 = vmatprep.subr.bf16.mxu0 0
      %1039 = vmatpush1.bf16.msra.mxu0 0
      %1040 = vmatprep.subr.bf16.mxu0 0
      %1041 = vmatpush1.bf16.msra.mxu0 0
      %1042 = vmatprep.subr.bf16.mxu0 0
      %1043 = vmatpush1.bf16.msra.mxu0 0
      %1044 = vmatprep.subr.bf16.mxu0 0
      %1045 = vmatpush1.bf16.msra.mxu0 0
      %1046 = vmatprep.subr.bf16.mxu0 0
      %1047 = vmatpush1.bf16.msra.mxu0 0
      %1048 = vmatprep.subr.bf16.mxu0 0
      %1049 = vmatpush1.bf16.msra.mxu0 0
      %1050 = vmatprep.subr.bf16.mxu0 0
      %1051 = vmatpush1.bf16.msra.mxu0 %v1031
      %1052 = vmatprep.subr.bf16.mxu0 0
      %1053 = vmatpush2.bf16.msra.mxu0 0
      %1054 = vmatprep.subr.bf16.mxu0 0
      %1055 = vmatpush2.bf16.msra.mxu0 0
      %1056 = vmatprep.subr.bf16.mxu0 0
      %1057 = vmatpush2.bf16.msra.mxu0 0
      %1058 = vmatprep.subr.bf16.mxu0 0
      %1059 = vmatpush2.bf16.msra.mxu0 0
      %1060 = vmatprep.subr.bf16.mxu0 0
      %1061 = vmatpush2.bf16.msra.mxu0 0
      %1062 = vmatprep.subr.bf16.mxu0 0
      %1063 = vmatpush2.bf16.msra.mxu0 0
      %1064 = vmatprep.subr.bf16.mxu0 0
      %1065 = vmatpush2.bf16.msra.mxu0 0
      %1066 = vmatprep.subr.bf16.mxu0 0
      %1067 = vmatpush2.bf16.msra.mxu0 0
      %1068 = vmatprep.mubr.bf16.mxu0 0
      %1069 = vmatmul.mubr.bf16.gmra.mxu0 %v1034
      %v1070 = vpop.f32.mrf.mxu0
      %v1071 = vadd.f32 0.0, %v1070
      %v1072 = vpop.f32.mrf.mxu0
      %v1073 = vpop.f32.mrf.mxu0
      %v1074 = vpop.f32.mrf.mxu0
      %1075 = vdwg.mxu0
      %v1076 = vadd.f32 %v1026, %v1071
      %1077 = vrot.lane.b32.xlu0 %v778, 108
      %v1078 = vpop.permute.xlu0 %1077
      %1079 = vrot.lane.b32.xlu0 %v826, 108
      %v1080 = vpop.permute.xlu0 %1079
      %v1081 = vsel %vm614, %v1078, %v1080
      %v1084 = vsel %vm318, %v771, 0
      %1086 = vmatprep.subr.bf16.mxu0 0
      %1087 = vmatpush1.bf16.msra.mxu0 0
      %1088 = vmatprep.subr.bf16.mxu0 0
      %1089 = vmatpush1.bf16.msra.mxu0 0
      %1090 = vmatprep.subr.bf16.mxu0 0
      %1091 = vmatpush1.bf16.msra.mxu0 0
      %1092 = vmatprep.subr.bf16.mxu0 0
      %1093 = vmatpush1.bf16.msra.mxu0 0
      %1094 = vmatprep.subr.bf16.mxu0 0
      %1095 = vmatpush1.bf16.msra.mxu0 0
      %1096 = vmatprep.subr.bf16.mxu0 0
      %1097 = vmatpush1.bf16.msra.mxu0 0
      %1098 = vmatprep.subr.bf16.mxu0 0
      %1099 = vmatpush1.bf16.msra.mxu0 0
      %1100 = vmatprep.subr.bf16.mxu0 0
      %1101 = vmatpush1.bf16.msra.mxu0 %v1081
      %1102 = vmatprep.subr.bf16.mxu0 0
      %1103 = vmatpush2.bf16.msra.mxu0 0
      %1104 = vmatprep.subr.bf16.mxu0 0
      %1105 = vmatpush2.bf16.msra.mxu0 0
      %1106 = vmatprep.subr.bf16.mxu0 0
      %1107 = vmatpush2.bf16.msra.mxu0 0
      %1108 = vmatprep.subr.bf16.mxu0 0
      %1109 = vmatpush2.bf16.msra.mxu0 0
      %1110 = vmatprep.subr.bf16.mxu0 0
      %1111 = vmatpush2.bf16.msra.mxu0 0
      %1112 = vmatprep.subr.bf16.mxu0 0
      %1113 = vmatpush2.bf16.msra.mxu0 0
      %1114 = vmatprep.subr.bf16.mxu0 0
      %1115 = vmatpush2.bf16.msra.mxu0 0
      %1116 = vmatprep.subr.bf16.mxu0 0
      %1117 = vmatpush2.bf16.msra.mxu0 0
      %1118 = vmatprep.mubr.bf16.mxu0 0
      %1119 = vmatmul.mubr.bf16.gmra.mxu0 %v1084
      %v1120 = vpop.f32.mrf.mxu0
      %v1121 = vadd.f32 0.0, %v1120
      %v1122 = vpop.f32.mrf.mxu0
      %v1123 = vpop.f32.mrf.mxu0
      %v1124 = vpop.f32.mrf.mxu0
      %1125 = vdwg.mxu0
      %v1126 = vadd.f32 %v1076, %v1121
      %1127 = vrot.lane.b32.xlu0 %v778, 107
      %v1128 = vpop.permute.xlu0 %1127
      %1129 = vrot.lane.b32.xlu0 %v826, 107
      %v1130 = vpop.permute.xlu0 %1129
      %v1131 = vsel %vm665, %v1128, %v1130
      %v1134 = vsel %vm318, %v772, 0
      %1136 = vmatprep.subr.bf16.mxu0 0
      %1137 = vmatpush1.bf16.msra.mxu0 0
      %1138 = vmatprep.subr.bf16.mxu0 0
      %1139 = vmatpush1.bf16.msra.mxu0 0
      %1140 = vmatprep.subr.bf16.mxu0 0
      %1141 = vmatpush1.bf16.msra.mxu0 0
      %1142 = vmatprep.subr.bf16.mxu0 0
      %1143 = vmatpush1.bf16.msra.mxu0 0
      %1144 = vmatprep.subr.bf16.mxu0 0
      %1145 = vmatpush1.bf16.msra.mxu0 0
      %1146 = vmatprep.subr.bf16.mxu0 0
      %1147 = vmatpush1.bf16.msra.mxu0 0
      %1148 = vmatprep.subr.bf16.mxu0 0
      %1149 = vmatpush1.bf16.msra.mxu0 0
      %1150 = vmatprep.subr.bf16.mxu0 0
      %1151 = vmatpush1.bf16.msra.mxu0 %v1131
      %1152 = vmatprep.subr.bf16.mxu0 0
      %1153 = vmatpush2.bf16.msra.mxu0 0
      %1154 = vmatprep.subr.bf16.mxu0 0
      %1155 = vmatpush2.bf16.msra.mxu0 0
      %1156 = vmatprep.subr.bf16.mxu0 0
      %1157 = vmatpush2.bf16.msra.mxu0 0
      %1158 = vmatprep.subr.bf16.mxu0 0
      %1159 = vmatpush2.bf16.msra.mxu0 0
      %1160 = vmatprep.subr.bf16.mxu0 0
      %1161 = vmatpush2.bf16.msra.mxu0 0
      %1162 = vmatprep.subr.bf16.mxu0 0
      %1163 = vmatpush2.bf16.msra.mxu0 0
      %1164 = vmatprep.subr.bf16.mxu0 0
      %1165 = vmatpush2.bf16.msra.mxu0 0
      %1166 = vmatprep.subr.bf16.mxu0 0
      %1167 = vmatpush2.bf16.msra.mxu0 0
      %1168 = vmatprep.mubr.bf16.mxu0 0
      %1169 = vmatmul.mubr.bf16.gmra.mxu0 %v1134
      %v1170 = vpop.f32.mrf.mxu0
      %v1171 = vadd.f32 0.0, %v1170
      %v1172 = vpop.f32.mrf.mxu0
      %v1173 = vpop.f32.mrf.mxu0
      %v1174 = vpop.f32.mrf.mxu0
      %1175 = vdwg.mxu0
      %v1176 = vadd.f32 %v1126, %v1171
      %1177 = vrot.lane.b32.xlu0 %v778, 106
      %v1178 = vpop.permute.xlu0 %1177
      %1179 = vrot.lane.b32.xlu0 %v826, 106
      %v1180 = vpop.permute.xlu0 %1179
      %v1181 = vsel %vm716, %v1178, %v1180
      %v1184 = vsel %vm318, %v773, 0
      %1186 = vmatprep.subr.bf16.mxu0 0
      %1187 = vmatpush1.bf16.msra.mxu0 0
      %1188 = vmatprep.subr.bf16.mxu0 0
      %1189 = vmatpush1.bf16.msra.mxu0 0
      %1190 = vmatprep.subr.bf16.mxu0 0
      %1191 = vmatpush1.bf16.msra.mxu0 0
      %1192 = vmatprep.subr.bf16.mxu0 0
      %1193 = vmatpush1.bf16.msra.mxu0 0
      %1194 = vmatprep.subr.bf16.mxu0 0
      %1195 = vmatpush1.bf16.msra.mxu0 0
      %1196 = vmatprep.subr.bf16.mxu0 0
      %1197 = vmatpush1.bf16.msra.mxu0 0
      %1198 = vmatprep.subr.bf16.mxu0 0
      %1199 = vmatpush1.bf16.msra.mxu0 0
      %1200 = vmatprep.subr.bf16.mxu0 0
      %1201 = vmatpush1.bf16.msra.mxu0 %v1181
      %1202 = vmatprep.subr.bf16.mxu0 0
      %1203 = vmatpush2.bf16.msra.mxu0 0
      %1204 = vmatprep.subr.bf16.mxu0 0
      %1205 = vmatpush2.bf16.msra.mxu0 0
      %1206 = vmatprep.subr.bf16.mxu0 0
      %1207 = vmatpush2.bf16.msra.mxu0 0
      %1208 = vmatprep.subr.bf16.mxu0 0
      %1209 = vmatpush2.bf16.msra.mxu0 0
      %1210 = vmatprep.subr.bf16.mxu0 0
      %1211 = vmatpush2.bf16.msra.mxu0 0
      %1212 = vmatprep.subr.bf16.mxu0 0
      %1213 = vmatpush2.bf16.msra.mxu0 0
      %1214 = vmatprep.subr.bf16.mxu0 0
      %1215 = vmatpush2.bf16.msra.mxu0 0
      %1216 = vmatprep.subr.bf16.mxu0 0
      %1217 = vmatpush2.bf16.msra.mxu0 0
      %1218 = vmatprep.mubr.bf16.mxu0 0
      %1219 = vmatmul.mubr.bf16.gmra.mxu0 %v1184
      %v1220 = vpop.f32.mrf.mxu0
      %v1221 = vadd.f32 0.0, %v1220
      %v1222 = vpop.f32.mrf.mxu0
      %v1223 = vpop.f32.mrf.mxu0
      %v1224 = vpop.f32.mrf.mxu0
      %1225 = vdwg.mxu0
      %v1226 = vadd.f32 %v1176, %v1221
      %v1227 = vld [vmem:[%s4] sm:$0xff]
      %1229 = vset.pattern.permute.xlu0 0
      %1230 = vperm.xlu0 %1229, %v1227
      %v1231 = vpop.permute.xlu0 %1230
      %v1233 = vmul.f32 %v1226, %v1231
      %1234 = vset.pattern.permute.xlu0 1
      %1235 = vperm.xlu0 %1234, %v1227
      %v1236 = vpop.permute.xlu0 %1235
      %v1238 = vadd.f32 %v1233, %v1236
      %v1239 = vmax.f32 %v1238, 0.0
      %v1240 = vpack.c.bf16 %v1239, %v1239
      %1241 = vst [vmem:[%s290] sm:$0xf] %v1240
      %p1242 = scmp.lt.s32.totalorder %s20, 1
      %s1243 = scalar_select %p1242, %s20, 1
      %p1244 = scmp.lt.s32.totalorder %s21, 0
      %s1245 = scalar_select %p1244, %s21, 0
      %s1246 = sadd.s32 %s1245, %s1243
      %s1247 = smul.addr %s1246, 4
      %s1248 = scalar_lea.vmem %s5, %s1247
      // Predicated region
      $region41: #{rsu4_forward.14} parent=39 // pred_check
        %p1249 = pneg %p167
      $region42: #{rsu4_forward.14} parent=39 // pred_check_branch
        %1251 = sbr.rel (%p1249) target = $region44
      $region43: #{rsu4_forward.14} parent=39 // pred_region
        _
      $region44: #{rsu4_forward.14} parent=39 // pred_fallthru
        _
    $region40: #{rsu4_forward.14} parent=5 // pred_fallthru
      _
    %p1252 = scmp.le.s32.totalorder 2, %s11
    // Predicated region
    $region45: #{rsu4_forward.14} parent=5 // pred_check
      %p1253 = pneg %p1252
    $region46: #{rsu4_forward.14} parent=5 // pred_check_branch
      %1255 = sbr.rel (%p1253) target = $region48
    $region47: #{rsu4_forward.14} parent=5 // pred_region
      %s1256 = ssub.s32 %s11, 2
      // Predicated region
      $region49: #{rsu4_forward.14} parent=47 // pred_check
        %p1257 = pneg %p173
      $region50: #{rsu4_forward.14} parent=47 // pred_check_branch
        %1259 = sbr.rel (%p1257) target = $region52
      $region51: #{rsu4_forward.14} parent=47 // pred_region
        %p1260 = scmp.lt.s32.totalorder %s22, 1
        %s1261 = scalar_select %p1260, %s22, 1
        %p1262 = scmp.lt.s32.totalorder %s23, 0
        %s1263 = scalar_select %p1262, %s23, 0
        %s1264 = sadd.s32 %s1263, %s1261
        %s1265 = smul.addr %s1264, 4
        %s1266 = scalar_lea.vmem %s5, %s1265
      $region52: #{rsu4_forward.14} parent=47 // pred_fallthru
        _
    $region48: #{rsu4_forward.14} parent=5 // pred_fallthru
      _
  $region6: #{rsu4_forward.14} parent=0 // loop_footer
    %s15 = sadd.s32 1, %s11
  $region7: #{rsu4_forward.14} parent=0 // loop_footer_branch
    %10 = sbr.rel target = $region3
  $region8: #{rsu4_forward.14} parent=0 // loop_exit
    _

// kernel: rsu4_forward.15
$region0: #{rsu4_forward.15}
  #allocation0 [shape = 'u32[]', space=smem, size = 0x4, offset = 0x4, fixed_abs, tag = 'smem constant byte address 0x4 - core index']
  #allocation1 [shape = 'u32[144,128]{1,0:T(1,128)}', space=vmem, size = 0x12000, scoped, tag = 'internal scratch']
  %s0 = inlined_call_operand.vmem [shape: bf16[2,2,16,294], index: 0, kind: input, shape index: {}]
  %s1 = inlined_call_operand.vmem [shape: bf16[2,2,16,294], index: 1, kind: input, shape index: {}]
  %s2 = inlined_call_operand.vmem [shape: bf16[9,4,16], index: 2, kind: input, shape index: {}]
  %s3 = inlined_call_operand.vmem [shape: bf16[9,4,16], index: 3, kind: input, shape index: {}]
  %s4 = inlined_call_operand.vmem [shape: f32[4,2], index: 4, kind: input, shape index: {}]
  %s5 = inlined_call_operand.vmem [shape: f32[2,4,512], index: 5, kind: input, shape index: {}]
  %s6 = inlined_call_operand.vmem [shape: f32[2,4,512], index: 6, kind: output, shape index: {}]
  %s7 = sld [smem:[#allocation0]]
  $region57: #{rsu4_forward.15} parent=0
    _
  %s9 = ssub.s32 1, %s7
  %s10 = scalar_select 0, %s9, %s7
  loop: start=0, step=1, limit=6
  $region2: #{rsu4_forward.15} parent=0 // loop_pre_header
    _
  $region3: #{rsu4_forward.15} parent=0 // loop_header
    %s12 = sphi 0, %s16
    %p13 = scmp.ge.s32.totalorder %s12, 6
    %s19 = sphi 0, %s31
    %s20 = sphi 0, %s27
    %s21 = sphi 0, %s19
    %s22 = sphi 0, %s20
    %s23 = sphi 0, %s21
    %s24 = sphi 0, %s22
    %s36 = sphi 0, %s38
    %s39 = sphi 0, %s36
    %s40 = sphi 0, %s39
    %s56 = sphi 0, %s40
    %s64 = sphi 0, %s66
    %s67 = sphi 0, %s64
    %s68 = sphi 0, %s67
    %s84 = sphi 0, %s68
    %s88 = sphi 0, %s88
    %s90 = sphi 0, %s88
    %s91 = sphi 0, %s90
    %s105 = sphi 0, %s91
    %s109 = sphi 0, %s109
    %s111 = sphi 0, %s109
    %s112 = sphi 0, %s111
    %s126 = sphi 0, %s112
    %s130 = sphi 0, %s130
    %s132 = sphi 0, %s130
    %s133 = sphi 0, %s132
    %s147 = sphi 0, %s133
    %s155 = sphi 0, %s157
    %s158 = sphi 0, %s155
    %s159 = sphi 0, %s158
    %s175 = sphi 0, %s159
    %s183 = sphi 0, %s185
    %s186 = sphi 0, %s183
    %s187 = sphi 0, %s186
    %s203 = sphi 0, %s187
  $region4: #{rsu4_forward.15} parent=0 // loop_header_branch
    %15 = sbr.rel (%p13) target = $region8
  $region5: #{rsu4_forward.15} parent=0 // loop_body
    %s17 = ssub.s32 %s12, 1
    %s18 = ssub.s32 %s12, 2
    %s25 = sadd.s32 1, %s20
    %p26 = scmp.ge.s32.totalorder %s25, 2
    %s27 = scalar_select %p26, 0, %s25
    %s28 = sadd.s32 1, %s19
    %s29 = scalar_select %p26, %s28, %s19
    %p30 = scmp.ge.s32.totalorder %s29, 2
    %s31 = scalar_select %p30, 0, %s29
    %s32 = ssub.s32 %s19, %s31
    %s33 = ssub.s32 %s20, %s27
    %s34 = sor.u32 %s32, %s33
    %p35 = scmp.eq.s32.totalorder %s34, 0
    %s37 = sadd.s32 %s36, 1
    %s38 = scalar_select %p35, %s36, %s37
    %p41 = pneg %p35
    %p42 = scmp.eq.s32.totalorder %s12, 3
    %p43 = por %p41, %p42
    %p44 = scmp.ne.s32.totalorder %s36, %s39
    %p45 = scmp.eq.s32.totalorder %s12, 0
    %p46 = por %p44, %p45
    %p47 = scmp.ne.s32.totalorder %s36, %s39
    %p48 = scmp.eq.s32.totalorder %s17, 3
    %p49 = por %p47, %p48
    %p50 = scmp.ne.s32.totalorder %s39, %s40
    %p51 = scmp.eq.s32.totalorder %s17, 0
    %p52 = por %p50, %p51
    %p53 = scmp.ne.s32.totalorder %s39, %s40
    %p54 = scmp.eq.s32.totalorder %s18, 3
    %p55 = por %p53, %p54
    %p57 = scmp.ne.s32.totalorder %s40, %s56
    %p58 = scmp.eq.s32.totalorder %s18, 0
    %p59 = por %p57, %p58
    %s60 = ssub.s32 %s19, %s31
    %s61 = ssub.s32 %s20, %s27
    %s62 = sor.u32 %s60, %s61
    %p63 = scmp.eq.s32.totalorder %s62, 0
    %s65 = sadd.s32 %s64, 1
    %s66 = scalar_select %p63, %s64, %s65
    %p69 = pneg %p63
    %p70 = scmp.eq.s32.totalorder %s12, 3
    %p71 = por %p69, %p70
    %p72 = scmp.ne.s32.totalorder %s64, %s67
    %p73 = scmp.eq.s32.totalorder %s12, 0
    %p74 = por %p72, %p73
    %p75 = scmp.ne.s32.totalorder %s64, %s67
    %p76 = scmp.eq.s32.totalorder %s17, 3
    %p77 = por %p75, %p76
    %p78 = scmp.ne.s32.totalorder %s67, %s68
    %p79 = scmp.eq.s32.totalorder %s17, 0
    %p80 = por %p78, %p79
    %p81 = scmp.ne.s32.totalorder %s67, %s68
    %p82 = scmp.eq.s32.totalorder %s18, 3
    %p83 = por %p81, %p82
    %p85 = scmp.ne.s32.totalorder %s68, %s84
    %p86 = scmp.eq.s32.totalorder %s18, 0
    %p87 = por %p85, %p86
    %s89 = sadd.s32 %s88, 1
    %p92 = scmp.eq.s32.totalorder %s12, 3
    %p93 = scmp.ne.s32.totalorder %s88, %s90
    %p94 = scmp.eq.s32.totalorder %s12, 0
    %p95 = por %p93, %p94
    %p96 = scmp.ne.s32.totalorder %s88, %s90
    %p97 = scmp.eq.s32.totalorder %s17, 3
    %p98 = por %p96, %p97
    %p99 = scmp.ne.s32.totalorder %s90, %s91
    %p100 = scmp.eq.s32.totalorder %s17, 0
    %p101 = por %p99, %p100
    %p102 = scmp.ne.s32.totalorder %s90, %s91
    %p103 = scmp.eq.s32.totalorder %s18, 3
    %p104 = por %p102, %p103
    %p106 = scmp.ne.s32.totalorder %s91, %s105
    %p107 = scmp.eq.s32.totalorder %s18, 0
    %p108 = por %p106, %p107
    %s110 = sadd.s32 %s109, 1
    %p113 = scmp.eq.s32.totalorder %s12, 3
    %p114 = scmp.ne.s32.totalorder %s109, %s111
    %p115 = scmp.eq.s32.totalorder %s12, 0
    %p116 = por %p114, %p115
    %p117 = scmp.ne.s32.totalorder %s109, %s111
    %p118 = scmp.eq.s32.totalorder %s17, 3
    %p119 = por %p117, %p118
    %p120 = scmp.ne.s32.totalorder %s111, %s112
    %p121 = scmp.eq.s32.totalorder %s17, 0
    %p122 = por %p120, %p121
    %p123 = scmp.ne.s32.totalorder %s111, %s112
    %p124 = scmp.eq.s32.totalorder %s18, 3
    %p125 = por %p123, %p124
    %p127 = scmp.ne.s32.totalorder %s112, %s126
    %p128 = scmp.eq.s32.totalorder %s18, 0
    %p129 = por %p127, %p128
    %s131 = sadd.s32 %s130, 1
    %p134 = scmp.eq.s32.totalorder %s12, 3
    %p135 = scmp.ne.s32.totalorder %s130, %s132
    %p136 = scmp.eq.s32.totalorder %s12, 0
    %p137 = por %p135, %p136
    %p138 = scmp.ne.s32.totalorder %s130, %s132
    %p139 = scmp.eq.s32.totalorder %s17, 3
    %p140 = por %p138, %p139
    %p141 = scmp.ne.s32.totalorder %s132, %s133
    %p142 = scmp.eq.s32.totalorder %s17, 0
    %p143 = por %p141, %p142
    %p144 = scmp.ne.s32.totalorder %s132, %s133
    %p145 = scmp.eq.s32.totalorder %s18, 3
    %p146 = por %p144, %p145
    %p148 = scmp.ne.s32.totalorder %s133, %s147
    %p149 = scmp.eq.s32.totalorder %s18, 0
    %p150 = por %p148, %p149
    %s151 = ssub.s32 %s19, %s31
    %s152 = ssub.s32 %s20, %s27
    %s153 = sor.u32 %s151, %s152
    %p154 = scmp.eq.s32.totalorder %s153, 0
    %s156 = sadd.s32 %s155, 1
    %s157 = scalar_select %p154, %s155, %s156
    %p160 = pneg %p154
    %p161 = scmp.eq.s32.totalorder %s12, 3
    %p162 = por %p160, %p161
    %p163 = scmp.ne.s32.totalorder %s155, %s158
    %p164 = scmp.eq.s32.totalorder %s12, 0
    %p165 = por %p163, %p164
    %p166 = scmp.ne.s32.totalorder %s155, %s158
    %p167 = scmp.eq.s32.totalorder %s17, 3
    %p168 = por %p166, %p167
    %p169 = scmp.ne.s32.totalorder %s158, %s159
    %p170 = scmp.eq.s32.totalorder %s17, 0
    %p171 = por %p169, %p170
    %p172 = scmp.ne.s32.totalorder %s158, %s159
    %p173 = scmp.eq.s32.totalorder %s18, 3
    %p174 = por %p172, %p173
    %p176 = scmp.ne.s32.totalorder %s159, %s175
    %p177 = scmp.eq.s32.totalorder %s18, 0
    %p178 = por %p176, %p177
    %s179 = ssub.s32 %s19, %s31
    %s180 = ssub.s32 %s20, %s27
    %s181 = sor.u32 %s179, %s180
    %p182 = scmp.eq.s32.totalorder %s181, 0
    %s184 = sadd.s32 %s183, 1
    %s185 = scalar_select %p182, %s183, %s184
    %p188 = pneg %p182
    %p189 = scmp.eq.s32.totalorder %s12, 3
    %p190 = por %p188, %p189
    %p191 = scmp.ne.s32.totalorder %s183, %s186
    %p192 = scmp.eq.s32.totalorder %s12, 0
    %p193 = por %p191, %p192
    %p194 = scmp.ne.s32.totalorder %s183, %s186
    %p195 = scmp.eq.s32.totalorder %s17, 3
    %p196 = por %p194, %p195
    %p197 = scmp.ne.s32.totalorder %s186, %s187
    %p198 = scmp.eq.s32.totalorder %s17, 0
    %p199 = por %p197, %p198
    %p200 = scmp.ne.s32.totalorder %s186, %s187
    %p201 = scmp.eq.s32.totalorder %s18, 3
    %p202 = por %p200, %p201
    %p204 = scmp.ne.s32.totalorder %s187, %s203
    %p205 = scmp.eq.s32.totalorder %s18, 0
    %p206 = por %p204, %p205
    %p207 = scmp.le.s32.totalorder 1, %s12
    %p208 = scmp.lt.s32.totalorder %s12, 5
    %p209 = pnand %p207, %p208
    %p210 = pneg %p209
    // Predicated region
    $region9: #{rsu4_forward.15} parent=5 // pred_check
      _
    $region10: #{rsu4_forward.15} parent=5 // pred_check_branch
      %212 = sbr.rel (%p209) target = $region12
    $region11: #{rsu4_forward.15} parent=5 // pred_region
      %s213 = ssub.s32 %s12, 1
      // Predicated region
      $region13: #{rsu4_forward.15} parent=11 // pred_check
        %p214 = pneg %p101
      $region14: #{rsu4_forward.15} parent=11 // pred_check_branch
        %216 = sbr.rel (%p214) target = $region16
      $region15: #{rsu4_forward.15} parent=11 // pred_region
        _
      $region16: #{rsu4_forward.15} parent=11 // pred_fallthru
        _
      // Predicated region
      $region17: #{rsu4_forward.15} parent=11 // pred_check
        %p217 = pneg %p122
      $region18: #{rsu4_forward.15} parent=11 // pred_check_branch
        %219 = sbr.rel (%p217) target = $region20
      $region19: #{rsu4_forward.15} parent=11 // pred_region
        _
      $region20: #{rsu4_forward.15} parent=11 // pred_fallthru
        _
      // Predicated region
      $region21: #{rsu4_forward.15} parent=11 // pred_check
        %p220 = pneg %p143
      $region22: #{rsu4_forward.15} parent=11 // pred_check_branch
        %222 = sbr.rel (%p220) target = $region24
      $region23: #{rsu4_forward.15} parent=11 // pred_region
        _
      $region24: #{rsu4_forward.15} parent=11 // pred_fallthru
        _
    $region12: #{rsu4_forward.15} parent=5 // pred_fallthru
      _
    %p223 = scmp.lt.s32.totalorder %s12, 4
    // Predicated region
    $region25: #{rsu4_forward.15} parent=5 // pred_check
      %p224 = pneg %p223
    $region26: #{rsu4_forward.15} parent=5 // pred_check_branch
      %226 = sbr.rel (%p224) target = $region28
    $region27: #{rsu4_forward.15} parent=5 // pred_region
      // Predicated region
      $region29: #{rsu4_forward.15} parent=27 // pred_check
        %p227 = pneg %p46
      $region30: #{rsu4_forward.15} parent=27 // pred_check_branch
        %229 = sbr.rel (%p227) target = $region32
      $region31: #{rsu4_forward.15} parent=27 // pred_region
        %p230 = scmp.lt.s32.totalorder %s19, 1
        %s231 = scalar_select %p230, %s19, 1
        %p232 = scmp.lt.s32.totalorder %s20, 1
        %s233 = scalar_select %p232, %s20, 1
        %s234 = smul.addr %s233, 6
        %s235 = smul.addr %s231, 12
        %s236 = sadd.s32 %s234, %s235
        %s237 = smul.addr %s236, 4
        %s238 = scalar_lea.vmem %s0, %s237
      $region32: #{rsu4_forward.15} parent=27 // pred_fallthru
        _
      // Predicated region
      $region33: #{rsu4_forward.15} parent=27 // pred_check
        %p239 = pneg %p74
      $region34: #{rsu4_forward.15} parent=27 // pred_check_branch
        %241 = sbr.rel (%p239) target = $region36
      $region35: #{rsu4_forward.15} parent=27 // pred_region
        %p242 = scmp.lt.s32.totalorder %s19, 1
        %s243 = scalar_select %p242, %s19, 1
        %p244 = scmp.lt.s32.totalorder %s20, 1
        %s245 = scalar_select %p244, %s20, 1
        %s246 = smul.addr %s245, 6
        %s247 = smul.addr %s243, 12
        %s248 = sadd.s32 %s246, %s247
        %s249 = smul.addr %s248, 4
        %s250 = scalar_lea.vmem %s1, %s249
      $region36: #{rsu4_forward.15} parent=27 // pred_fallthru
        _
      // Predicated region
      $region37: #{rsu4_forward.15} parent=27 // pred_check
        %p251 = pneg %p165
      $region38: #{rsu4_forward.15} parent=27 // pred_check_branch
        %253 = sbr.rel (%p251) target = $region40
      $region39: #{rsu4_forward.15} parent=27 // pred_region
        %s254 = smul.u32 2, %s20
        %p255 = scmp.lt.s32.totalorder %s19, 1
        %s256 = scalar_select %p255, %s19, 1
        %p257 = scmp.lt.s32.totalorder %s254, 3
        %s258 = scalar_select %p257, %s254, 3
        %s259 = smul.addr %s256, 4
        %s260 = sadd.s32 %s258, %s259
        %s261 = smul.addr %s260, 4
        %s262 = scalar_lea.vmem %s5, %s261
        %s263 = smul.u32 2, %s20
      $region40: #{rsu4_forward.15} parent=27 // pred_fallthru
        _
    $region28: #{rsu4_forward.15} parent=5 // pred_fallthru
      _
    %p264 = scmp.le.s32.totalorder 1, %s12
    %p265 = scmp.lt.s32.totalorder %s12, 5
    %p266 = pnand %p264, %p265
    %p267 = pneg %p266
    // Predicated region
    $region41: #{rsu4_forward.15} parent=5 // pred_check
      _
    $region42: #{rsu4_forward.15} parent=5 // pred_check_branch
      %269 = sbr.rel (%p266) target = $region44
    $region43: #{rsu4_forward.15} parent=5 // pred_region
      %s270 = ssub.s32 %s12, 1
      %p271 = scmp.lt.s32.totalorder %s21, 1
      %s272 = scalar_select %p271, %s21, 1
      %p273 = scmp.lt.s32.totalorder %s22, 1
      %s274 = scalar_select %p273, %s22, 1
      %s275 = smul.addr %s274, 6
      %s276 = smul.addr %s272, 12
      %s277 = sadd.s32 %s275, %s276
      %s278 = smul.addr %s277, 4
      %s279 = scalar_lea.vmem %s0, %s278
      %p280 = pneg %p52
      %p281 = pneg %p49
      %p282 = scmp.lt.s32.totalorder %s21, 1
      %s283 = scalar_select %p282, %s21, 1
      %p284 = scmp.lt.s32.totalorder %s22, 1
      %s285 = scalar_select %p284, %s22, 1
      %s286 = smul.addr %s285, 6
      %s287 = smul.addr %s283, 12
      %s288 = sadd.s32 %s286, %s287
      %s289 = smul.addr %s288, 4
      %s290 = scalar_lea.vmem %s1, %s289
      %p291 = pneg %p80
      %p292 = pneg %p77
      %p293 = pneg %p101
      %p294 = pneg %p98
      %p295 = pneg %p122
      %p296 = pneg %p119
      %p297 = pneg %p143
      %p298 = pneg %p140
      %s299 = smul.u32 2, %s22
      %p300 = scmp.lt.s32.totalorder %s21, 1
      %s301 = scalar_select %p300, %s21, 1
      %p302 = scmp.lt.s32.totalorder %s299, 3
      %s303 = scalar_select %p302, %s299, 3
      %s304 = smul.addr %s301, 4
      %s305 = sadd.s32 %s303, %s304
      %s306 = smul.addr %s305, 4
      %s307 = scalar_lea.vmem %s5, %s306
      %p308 = pneg %p171
      %p309 = pneg %p168
      %p310 = pneg %p199
      %p311 = pneg %p196
      %s312 = smul.u32 2, %s22
      %p313 = scmp.lt.s32.totalorder %s21, 1
      %s314 = scalar_select %p313, %s21, 1
      %p315 = scmp.lt.s32.totalorder %s312, 3
      %s316 = scalar_select %p315, %s312, 3
      %s317 = smul.addr %s314, 4
      %s318 = sadd.s32 %s316, %s317
      %s319 = smul.addr %s318, 4
      %s320 = scalar_lea.vmem %s6, %s319
      %p321 = scmp.lt.s32.totalorder %s21, 1
      %s322 = scalar_select %p321, %s21, 1
      %p323 = scmp.lt.s32.totalorder %s22, 1
      %s324 = scalar_select %p323, %s22, 1
      %s325 = smul.addr %s324, 6
      %s326 = smul.addr %s322, 12
      %s327 = sadd.s32 %s325, %s326
      %s328 = smul.addr %s327, 4
      %s329 = scalar_lea.vmem %s0, %s328
      %p330 = scmp.lt.s32.totalorder %s21, 1
      %s331 = scalar_select %p330, %s21, 1
      %p332 = scmp.lt.s32.totalorder %s22, 1
      %s333 = scalar_select %p332, %s22, 1
      %s334 = smul.addr %s333, 6
      %s335 = smul.addr %s331, 12
      %s336 = sadd.s32 %s334, %s335
      %s337 = smul.addr %s336, 4
      %s338 = scalar_lea.vmem %s1, %s337
      %s339 = smul.u32 2, %s22
      %p340 = scmp.lt.s32.totalorder %s21, 1
      %s341 = scalar_select %p340, %s21, 1
      %p342 = scmp.lt.s32.totalorder %s339, 3
      %s343 = scalar_select %p342, %s339, 3
      %s344 = smul.addr %s341, 4
      %s345 = sadd.s32 %s343, %s344
      %s346 = smul.addr %s345, 4
      %s347 = scalar_lea.vmem %s5, %s346
      %s348 = smul.u32 2, %s22
      %s349 = smul.u32 2, %s22
      %p350 = scmp.lt.s32.totalorder %s21, 1
      %s351 = scalar_select %p350, %s21, 1
      %p352 = scmp.lt.s32.totalorder %s349, 3
      %s353 = scalar_select %p352, %s349, 3
      %s354 = smul.addr %s351, 4
      %s355 = sadd.s32 %s353, %s354
      %s356 = smul.addr %s355, 4
      %s357 = scalar_lea.vmem %s6, %s356
      %s358 = smul.u32 2, %s22
      %v360 = vld [vmem:[%s329] sm:$0xff]
      %v361 = vld [vmem:[%s329 + $0x8] sm:$0xf]
      %v362 = vld [vmem:[%s329 + $0xc] sm:$0xff]
      %v363 = vld [vmem:[%s329 + $0x14] sm:$0xf]
      %v364 = vld [vmem:[%s2] sm:$0x3]
      %v365 = vld [vmem:[%s2 + $0x2] sm:$0x3]
      %v366 = vld [vmem:[%s2 + $0x4] sm:$0x3]
      %v367 = vld [vmem:[%s2 + $0x6] sm:$0x3]
      %v368 = vld [vmem:[%s2 + $0x8] sm:$0x3]
      %v369 = vld [vmem:[%s2 + $0xa] sm:$0x3]
      %v370 = vld [vmem:[%s2 + $0xc] sm:$0x3]
      %v371 = vld [vmem:[%s2 + $0xe] sm:$0x3]
      %v372 = vld [vmem:[%s2 + $0x10] sm:$0x3]
      %v377 = vunpack.c.l.b16 %v360
      %v378 = vunpack.c.h.b16 %v360
      %v379 = vunpack.c.l.b16 %v361
      %v380 = vunpack.c.l.b16 %v362
      %v381 = vunpack.c.h.b16 %v362
      %v382 = vunpack.c.l.b16 %v363
      %v383 = vpack.c.b16 %v380, %v377
      %v384 = vpack.c.b16 %v381, %v378
      %v385 = vpack.c.b16 %v382, %v379
      %386 = vrot.lane.b32.xlu0 %v383, 127
      %v387 = vpop.permute.xlu0 %386
      %388 = vrot.lane.b32.xlu0 %v384, 127
      %v389 = vpop.permute.xlu0 %388
      %390 = vrot.lane.b32.xlu0 %v385, 127
      %v391 = vpop.permute.xlu0 %390
      %vm392 = vcmask 1039360
      %v393 = vsel %vm392, %v387, %v389
      %v394 = vsel %vm392, %v389, %v391
      %vm397 = vcmask 130048
      %v399 = vsel %vm397, %v365, 0
      %401 = vmatprep.subr.bf16.mxu0 0
      %402 = vmatpush1.bf16.msra.mxu0 0
      %403 = vmatprep.subr.bf16.mxu0 0
      %404 = vmatpush1.bf16.msra.mxu0 0
      %405 = vmatprep.subr.bf16.mxu0 0
      %406 = vmatpush1.bf16.msra.mxu0 0
      %407 = vmatprep.subr.bf16.mxu0 0
      %408 = vmatpush1.bf16.msra.mxu0 0
      %409 = vmatprep.subr.bf16.mxu0 0
      %410 = vmatpush1.bf16.msra.mxu0 0
      %411 = vmatprep.subr.bf16.mxu0 0
      %412 = vmatpush1.bf16.msra.mxu0 0
      %413 = vmatprep.subr.bf16.mxu0 0
      %414 = vmatpush1.bf16.msra.mxu0 0
      %415 = vmatprep.subr.bf16.mxu0 %v394
      %416 = vmatpush1.bf16.msra.mxu0 %v393
      %417 = vmatprep.subr.bf16.mxu0 0
      %418 = vmatpush2.bf16.msra.mxu0 0
      %419 = vmatprep.subr.bf16.mxu0 0
      %420 = vmatpush2.bf16.msra.mxu0 0
      %421 = vmatprep.subr.bf16.mxu0 0
      %422 = vmatpush2.bf16.msra.mxu0 0
      %423 = vmatprep.subr.bf16.mxu0 0
      %424 = vmatpush2.bf16.msra.mxu0 0
      %425 = vmatprep.subr.bf16.mxu0 0
      %426 = vmatpush2.bf16.msra.mxu0 0
      %427 = vmatprep.subr.bf16.mxu0 0
      %428 = vmatpush2.bf16.msra.mxu0 0
      %429 = vmatprep.subr.bf16.mxu0 0
      %430 = vmatpush2.bf16.msra.mxu0 0
      %431 = vmatprep.subr.bf16.mxu0 0
      %432 = vmatpush2.bf16.msra.mxu0 0
      %433 = vmatprep.mubr.bf16.mxu0 0
      %434 = vmatmul.mubr.bf16.gmra.mxu0 %v399
      %v435 = vpop.f32.mrf.mxu0
      %v436 = vadd.f32 0.0, %v435
      %v437 = vpop.f32.mrf.mxu0
      %v438 = vadd.f32 0.0, %v437
      %v439 = vpop.f32.mrf.mxu0
      %v440 = vpop.f32.mrf.mxu0
      %441 = vdwg.mxu0
      %v445 = vsel %vm397, %v364, 0
      %447 = vmatprep.subr.bf16.mxu0 0
      %448 = vmatpush1.bf16.msra.mxu0 0
      %449 = vmatprep.subr.bf16.mxu0 0
      %450 = vmatpush1.bf16.msra.mxu0 0
      %451 = vmatprep.subr.bf16.mxu0 0
      %452 = vmatpush1.bf16.msra.mxu0 0
      %453 = vmatprep.subr.bf16.mxu0 0
      %454 = vmatpush1.bf16.msra.mxu0 0
      %455 = vmatprep.subr.bf16.mxu0 0
      %456 = vmatpush1.bf16.msra.mxu0 0
      %457 = vmatprep.subr.bf16.mxu0 0
      %458 = vmatpush1.bf16.msra.mxu0 0
      %459 = vmatprep.subr.bf16.mxu0 0
      %460 = vmatpush1.bf16.msra.mxu0 0
      %461 = vmatprep.subr.bf16.mxu0 %v384
      %462 = vmatpush1.bf16.msra.mxu0 %v383
      %463 = vmatprep.subr.bf16.mxu0 0
      %464 = vmatpush2.bf16.msra.mxu0 0
      %465 = vmatprep.subr.bf16.mxu0 0
      %466 = vmatpush2.bf16.msra.mxu0 0
      %467 = vmatprep.subr.bf16.mxu0 0
      %468 = vmatpush2.bf16.msra.mxu0 0
      %469 = vmatprep.subr.bf16.mxu0 0
      %470 = vmatpush2.bf16.msra.mxu0 0
      %471 = vmatprep.subr.bf16.mxu0 0
      %472 = vmatpush2.bf16.msra.mxu0 0
      %473 = vmatprep.subr.bf16.mxu0 0
      %474 = vmatpush2.bf16.msra.mxu0 0
      %475 = vmatprep.subr.bf16.mxu0 0
      %476 = vmatpush2.bf16.msra.mxu0 0
      %477 = vmatprep.subr.bf16.mxu0 0
      %478 = vmatpush2.bf16.msra.mxu0 0
      %479 = vmatprep.mubr.bf16.mxu0 0
      %480 = vmatmul.mubr.bf16.gmra.mxu0 %v445
      %v481 = vpop.f32.mrf.mxu0
      %v482 = vadd.f32 %v436, %v481
      %v483 = vpop.f32.mrf.mxu0
      %v484 = vadd.f32 %v438, %v483
      %v485 = vpop.f32.mrf.mxu0
      %v486 = vpop.f32.mrf.mxu0
      %487 = vdwg.mxu0
      %488 = vrot.lane.b32.xlu0 %v383, 126
      %v489 = vpop.permute.xlu0 %488
      %490 = vrot.lane.b32.xlu0 %v384, 126
      %v491 = vpop.permute.xlu0 %490
      %492 = vrot.lane.b32.xlu0 %v385, 126
      %v493 = vpop.permute.xlu0 %492
      %vm494 = vcmask 1031168
      %v495 = vsel %vm494, %v489, %v491
      %v496 = vsel %vm494, %v491, %v493
      %v500 = vsel %vm397, %v366, 0
      %502 = vmatprep.subr.bf16.mxu0 0
      %503 = vmatpush1.bf16.msra.mxu0 0
      %504 = vmatprep.subr.bf16.mxu0 0
      %505 = vmatpush1.bf16.msra.mxu0 0
      %506 = vmatprep.subr.bf16.mxu0 0
      %507 = vmatpush1.bf16.msra.mxu0 0
      %508 = vmatprep.subr.bf16.mxu0 0
      %509 = vmatpush1.bf16.msra.mxu0 0
      %510 = vmatprep.subr.bf16.mxu0 0
      %511 = vmatpush1.bf16.msra.mxu0 0
      %512 = vmatprep.subr.bf16.mxu0 0
      %513 = vmatpush1.bf16.msra.mxu0 0
      %514 = vmatprep.subr.bf16.mxu0 0
      %515 = vmatpush1.bf16.msra.mxu0 0
      %516 = vmatprep.subr.bf16.mxu0 %v496
      %517 = vmatpush1.bf16.msra.mxu0 %v495
      %518 = vmatprep.subr.bf16.mxu0 0
      %519 = vmatpush2.bf16.msra.mxu0 0
      %520 = vmatprep.subr.bf16.mxu0 0
      %521 = vmatpush2.bf16.msra.mxu0 0
      %522 = vmatprep.subr.bf16.mxu0 0
      %523 = vmatpush2.bf16.msra.mxu0 0
      %524 = vmatprep.subr.bf16.mxu0 0
      %525 = vmatpush2.bf16.msra.mxu0 0
      %526 = vmatprep.subr.bf16.mxu0 0
      %527 = vmatpush2.bf16.msra.mxu0 0
      %528 = vmatprep.subr.bf16.mxu0 0
      %529 = vmatpush2.bf16.msra.mxu0 0
      %530 = vmatprep.subr.bf16.mxu0 0
      %531 = vmatpush2.bf16.msra.mxu0 0
      %532 = vmatprep.subr.bf16.mxu0 0
      %533 = vmatpush2.bf16.msra.mxu0 0
      %534 = vmatprep.mubr.bf16.mxu0 0
      %535 = vmatmul.mubr.bf16.gmra.mxu0 %v500
      %v536 = vpop.f32.mrf.mxu0
      %v537 = vadd.f32 0.0, %v536
      %v538 = vpop.f32.mrf.mxu0
      %v539 = vadd.f32 0.0, %v538
      %v540 = vpop.f32.mrf.mxu0
      %v541 = vpop.f32.mrf.mxu0
      %542 = vdwg.mxu0
      %v543 = vadd.f32 %v482, %v537
      %v544 = vadd.f32 %v484, %v539
      %545 = vrot.lane.b32.xlu0 %v383, 110
      %v546 = vpop.permute.xlu0 %545
      %547 = vrot.lane.b32.xlu0 %v384, 110
      %v548 = vpop.permute.xlu0 %547
      %549 = vrot.lane.b32.xlu0 %v385, 110
      %v550 = vpop.permute.xlu0 %549
      %vm551 = vcmask 900096
      %v552 = vsel %vm551, %v546, %v548
      %v553 = vsel %vm551, %v548, %v550
      %v557 = vsel %vm397, %v367, 0
      %559 = vmatprep.subr.bf16.mxu0 0
      %560 = vmatpush1.bf16.msra.mxu0 0
      %561 = vmatprep.subr.bf16.mxu0 0
      %562 = vmatpush1.bf16.msra.mxu0 0
      %563 = vmatprep.subr.bf16.mxu0 0
      %564 = vmatpush1.bf16.msra.mxu0 0
      %565 = vmatprep.subr.bf16.mxu0 0
      %566 = vmatpush1.bf16.msra.mxu0 0
      %567 = vmatprep.subr.bf16.mxu0 0
      %568 = vmatpush1.bf16.msra.mxu0 0
      %569 = vmatprep.subr.bf16.mxu0 0
      %570 = vmatpush1.bf16.msra.mxu0 0
      %571 = vmatprep.subr.bf16.mxu0 0
      %572 = vmatpush1.bf16.msra.mxu0 0
      %573 = vmatprep.subr.bf16.mxu0 %v553
      %574 = vmatpush1.bf16.msra.mxu0 %v552
      %575 = vmatprep.subr.bf16.mxu0 0
      %576 = vmatpush2.bf16.msra.mxu0 0
      %577 = vmatprep.subr.bf16.mxu0 0
      %578 = vmatpush2.bf16.msra.mxu0 0
      %579 = vmatprep.subr.bf16.mxu0 0
      %580 = vmatpush2.bf16.msra.mxu0 0
      %581 = vmatprep.subr.bf16.mxu0 0
      %582 = vmatpush2.bf16.msra.mxu0 0
      %583 = vmatprep.subr.bf16.mxu0 0
      %584 = vmatpush2.bf16.msra.mxu0 0
      %585 = vmatprep.subr.bf16.mxu0 0
      %586 = vmatpush2.bf16.msra.mxu0 0
      %587 = vmatprep.subr.bf16.mxu0 0
      %588 = vmatpush2.bf16.msra.mxu0 0
      %589 = vmatprep.subr.bf16.mxu0 0
      %590 = vmatpush2.bf16.msra.mxu0 0
      %591 = vmatprep.mubr.bf16.mxu0 0
      %592 = vmatmul.mubr.bf16.gmra.mxu0 %v557
      %v593 = vpop.f32.mrf.mxu0
      %v594 = vadd.f32 0.0, %v593
      %v595 = vpop.f32.mrf.mxu0
      %v596 = vadd.f32 0.0, %v595
      %v597 = vpop.f32.mrf.mxu0
      %v598 = vpop.f32.mrf.mxu0
      %599 = vdwg.mxu0
      %v600 = vadd.f32 %v543, %v594
      %v601 = vadd.f32 %v544, %v596
      %602 = vrot.lane.b32.xlu0 %v383, 109
      %v603 = vpop.permute.xlu0 %602
      %604 = vrot.lane.b32.xlu0 %v384, 109
      %v605 = vpop.permute.xlu0 %604
      %606 = vrot.lane.b32.xlu0 %v385, 109
      %v607 = vpop.permute.xlu0 %606
      %vm608 = vcmask 891904
      %v609 = vsel %vm608, %v603, %v605
      %v610 = vsel %vm608, %v605, %v607
      %v614 = vsel %vm397, %v368, 0
      %616 = vmatprep.subr.bf16.mxu0 0
      %617 = vmatpush1.bf16.msra.mxu0 0
      %618 = vmatprep.subr.bf16.mxu0 0
      %619 = vmatpush1.bf16.msra.mxu0 0
      %620 = vmatprep.subr.bf16.mxu0 0
      %621 = vmatpush1.bf16.msra.mxu0 0
      %622 = vmatprep.subr.bf16.mxu0 0
      %623 = vmatpush1.bf16.msra.mxu0 0
      %624 = vmatprep.subr.bf16.mxu0 0
      %625 = vmatpush1.bf16.msra.mxu0 0
      %626 = vmatprep.subr.bf16.mxu0 0
      %627 = vmatpush1.bf16.msra.mxu0 0
      %628 = vmatprep.subr.bf16.mxu0 0
      %629 = vmatpush1.bf16.msra.mxu0 0
      %630 = vmatprep.subr.bf16.mxu0 %v610
      %631 = vmatpush1.bf16.msra.mxu0 %v609
      %632 = vmatprep.subr.bf16.mxu0 0
      %633 = vmatpush2.bf16.msra.mxu0 0
      %634 = vmatprep.subr.bf16.mxu0 0
      %635 = vmatpush2.bf16.msra.mxu0 0
      %636 = vmatprep.subr.bf16.mxu0 0
      %637 = vmatpush2.bf16.msra.mxu0 0
      %638 = vmatprep.subr.bf16.mxu0 0
      %639 = vmatpush2.bf16.msra.mxu0 0
      %640 = vmatprep.subr.bf16.mxu0 0
      %641 = vmatpush2.bf16.msra.mxu0 0
      %642 = vmatprep.subr.bf16.mxu0 0
      %643 = vmatpush2.bf16.msra.mxu0 0
      %644 = vmatprep.subr.bf16.mxu0 0
      %645 = vmatpush2.bf16.msra.mxu0 0
      %646 = vmatprep.subr.bf16.mxu0 0
      %647 = vmatpush2.bf16.msra.mxu0 0
      %648 = vmatprep.mubr.bf16.mxu0 0
      %649 = vmatmul.mubr.bf16.gmra.mxu0 %v614
      %v650 = vpop.f32.mrf.mxu0
      %v651 = vadd.f32 0.0, %v650
      %v652 = vpop.f32.mrf.mxu0
      %v653 = vadd.f32 0.0, %v652
      %v654 = vpop.f32.mrf.mxu0
      %v655 = vpop.f32.mrf.mxu0
      %656 = vdwg.mxu0
      %v657 = vadd.f32 %v600, %v651
      %v658 = vadd.f32 %v601, %v653
      %659 = vrot.lane.b32.xlu0 %v383, 108
      %v660 = vpop.permute.xlu0 %659
      %661 = vrot.lane.b32.xlu0 %v384, 108
      %v662 = vpop.permute.xlu0 %661
      %663 = vrot.lane.b32.xlu0 %v385, 108
      %v664 = vpop.permute.xlu0 %663
      %vm665 = vcmask 883712
      %v666 = vsel %vm665, %v660, %v662
      %v667 = vsel %vm665, %v662, %v664
      %v671 = vsel %vm397, %v369, 0
      %673 = vmatprep.subr.bf16.mxu0 0
      %674 = vmatpush1.bf16.msra.mxu0 0
      %675 = vmatprep.subr.bf16.mxu0 0
      %676 = vmatpush1.bf16.msra.mxu0 0
      %677 = vmatprep.subr.bf16.mxu0 0
      %678 = vmatpush1.bf16.msra.mxu0 0
      %679 = vmatprep.subr.bf16.mxu0 0
      %680 = vmatpush1.bf16.msra.mxu0 0
      %681 = vmatprep.subr.bf16.mxu0 0
      %682 = vmatpush1.bf16.msra.mxu0 0
      %683 = vmatprep.subr.bf16.mxu0 0
      %684 = vmatpush1.bf16.msra.mxu0 0
      %685 = vmatprep.subr.bf16.mxu0 0
      %686 = vmatpush1.bf16.msra.mxu0 0
      %687 = vmatprep.subr.bf16.mxu0 %v667
      %688 = vmatpush1.bf16.msra.mxu0 %v666
      %689 = vmatprep.subr.bf16.mxu0 0
      %690 = vmatpush2.bf16.msra.mxu0 0
      %691 = vmatprep.subr.bf16.mxu0 0
      %692 = vmatpush2.bf16.msra.mxu0 0
      %693 = vmatprep.subr.bf16.mxu0 0
      %694 = vmatpush2.bf16.msra.mxu0 0
      %695 = vmatprep.subr.bf16.mxu0 0
      %696 = vmatpush2.bf16.msra.mxu0 0
      %697 = vmatprep.subr.bf16.mxu0 0
      %698 = vmatpush2.bf16.msra.mxu0 0
      %699 = vmatprep.subr.bf16.mxu0 0
      %700 = vmatpush2.bf16.msra.mxu0 0
      %701 = vmatprep.subr.bf16.mxu0 0
      %702 = vmatpush2.bf16.msra.mxu0 0
      %703 = vmatprep.subr.bf16.mxu0 0
      %704 = vmatpush2.bf16.msra.mxu0 0
      %705 = vmatprep.mubr.bf16.mxu0 0
      %706 = vmatmul.mubr.bf16.gmra.mxu0 %v671
      %v707 = vpop.f32.mrf.mxu0
      %v708 = vadd.f32 0.0, %v707
      %v709 = vpop.f32.mrf.mxu0
      %v710 = vadd.f32 0.0, %v709
      %v711 = vpop.f32.mrf.mxu0
      %v712 = vpop.f32.mrf.mxu0
      %713 = vdwg.mxu0
      %v714 = vadd.f32 %v657, %v708
      %v715 = vadd.f32 %v658, %v710
      %716 = vrot.lane.b32.xlu0 %v383, 92
      %v717 = vpop.permute.xlu0 %716
      %718 = vrot.lane.b32.xlu0 %v384, 92
      %v719 = vpop.permute.xlu0 %718
      %720 = vrot.lane.b32.xlu0 %v385, 92
      %v721 = vpop.permute.xlu0 %720
      %vm722 = vcmask 752640
      %v723 = vsel %vm722, %v717, %v719
      %v724 = vsel %vm722, %v719, %v721
      %v728 = vsel %vm397, %v370, 0
      %730 = vmatprep.subr.bf16.mxu0 0
      %731 = vmatpush1.bf16.msra.mxu0 0
      %732 = vmatprep.subr.bf16.mxu0 0
      %733 = vmatpush1.bf16.msra.mxu0 0
      %734 = vmatprep.subr.bf16.mxu0 0
      %735 = vmatpush1.bf16.msra.mxu0 0
      %736 = vmatprep.subr.bf16.mxu0 0
      %737 = vmatpush1.bf16.msra.mxu0 0
      %738 = vmatprep.subr.bf16.mxu0 0
      %739 = vmatpush1.bf16.msra.mxu0 0
      %740 = vmatprep.subr.bf16.mxu0 0
      %741 = vmatpush1.bf16.msra.mxu0 0
      %742 = vmatprep.subr.bf16.mxu0 0
      %743 = vmatpush1.bf16.msra.mxu0 0
      %744 = vmatprep.subr.bf16.mxu0 %v724
      %745 = vmatpush1.bf16.msra.mxu0 %v723
      %746 = vmatprep.subr.bf16.mxu0 0
      %747 = vmatpush2.bf16.msra.mxu0 0
      %748 = vmatprep.subr.bf16.mxu0 0
      %749 = vmatpush2.bf16.msra.mxu0 0
      %750 = vmatprep.subr.bf16.mxu0 0
      %751 = vmatpush2.bf16.msra.mxu0 0
      %752 = vmatprep.subr.bf16.mxu0 0
      %753 = vmatpush2.bf16.msra.mxu0 0
      %754 = vmatprep.subr.bf16.mxu0 0
      %755 = vmatpush2.bf16.msra.mxu0 0
      %756 = vmatprep.subr.bf16.mxu0 0
      %757 = vmatpush2.bf16.msra.mxu0 0
      %758 = vmatprep.subr.bf16.mxu0 0
      %759 = vmatpush2.bf16.msra.mxu0 0
      %760 = vmatprep.subr.bf16.mxu0 0
      %761 = vmatpush2.bf16.msra.mxu0 0
      %762 = vmatprep.mubr.bf16.mxu0 0
      %763 = vmatmul.mubr.bf16.gmra.mxu0 %v728
      %v764 = vpop.f32.mrf.mxu0
      %v765 = vadd.f32 0.0, %v764
      %v766 = vpop.f32.mrf.mxu0
      %v767 = vadd.f32 0.0, %v766
      %v768 = vpop.f32.mrf.mxu0
      %v769 = vpop.f32.mrf.mxu0
      %770 = vdwg.mxu0
      %v771 = vadd.f32 %v714, %v765
      %v772 = vadd.f32 %v715, %v767
      %773 = vrot.lane.b32.xlu0 %v383, 91
      %v774 = vpop.permute.xlu0 %773
      %775 = vrot.lane.b32.xlu0 %v384, 91
      %v776 = vpop.permute.xlu0 %775
      %777 = vrot.lane.b32.xlu0 %v385, 91
      %v778 = vpop.permute.xlu0 %777
      %vm779 = vcmask 744448
      %v780 = vsel %vm779, %v774, %v776
      %v781 = vsel %vm779, %v776, %v778
      %v785 = vsel %vm397, %v371, 0
      %787 = vmatprep.subr.bf16.mxu0 0
      %788 = vmatpush1.bf16.msra.mxu0 0
      %789 = vmatprep.subr.bf16.mxu0 0
      %790 = vmatpush1.bf16.msra.mxu0 0
      %791 = vmatprep.subr.bf16.mxu0 0
      %792 = vmatpush1.bf16.msra.mxu0 0
      %793 = vmatprep.subr.bf16.mxu0 0
      %794 = vmatpush1.bf16.msra.mxu0 0
      %795 = vmatprep.subr.bf16.mxu0 0
      %796 = vmatpush1.bf16.msra.mxu0 0
      %797 = vmatprep.subr.bf16.mxu0 0
      %798 = vmatpush1.bf16.msra.mxu0 0
      %799 = vmatprep.subr.bf16.mxu0 0
      %800 = vmatpush1.bf16.msra.mxu0 0
      %801 = vmatprep.subr.bf16.mxu0 %v781
      %802 = vmatpush1.bf16.msra.mxu0 %v780
      %803 = vmatprep.subr.bf16.mxu0 0
      %804 = vmatpush2.bf16.msra.mxu0 0
      %805 = vmatprep.subr.bf16.mxu0 0
      %806 = vmatpush2.bf16.msra.mxu0 0
      %807 = vmatprep.subr.bf16.mxu0 0
      %808 = vmatpush2.bf16.msra.mxu0 0
      %809 = vmatprep.subr.bf16.mxu0 0
      %810 = vmatpush2.bf16.msra.mxu0 0
      %811 = vmatprep.subr.bf16.mxu0 0
      %812 = vmatpush2.bf16.msra.mxu0 0
      %813 = vmatprep.subr.bf16.mxu0 0
      %814 = vmatpush2.bf16.msra.mxu0 0
      %815 = vmatprep.subr.bf16.mxu0 0
      %816 = vmatpush2.bf16.msra.mxu0 0
      %817 = vmatprep.subr.bf16.mxu0 0
      %818 = vmatpush2.bf16.msra.mxu0 0
      %819 = vmatprep.mubr.bf16.mxu0 0
      %820 = vmatmul.mubr.bf16.gmra.mxu0 %v785
      %v821 = vpop.f32.mrf.mxu0
      %v822 = vadd.f32 0.0, %v821
      %v823 = vpop.f32.mrf.mxu0
      %v824 = vadd.f32 0.0, %v823
      %v825 = vpop.f32.mrf.mxu0
      %v826 = vpop.f32.mrf.mxu0
      %827 = vdwg.mxu0
      %v828 = vadd.f32 %v771, %v822
      %v829 = vadd.f32 %v772, %v824
      %830 = vrot.lane.b32.xlu0 %v383, 90
      %v831 = vpop.permute.xlu0 %830
      %832 = vrot.lane.b32.xlu0 %v384, 90
      %v833 = vpop.permute.xlu0 %832
      %834 = vrot.lane.b32.xlu0 %v385, 90
      %v835 = vpop.permute.xlu0 %834
      %vm836 = vcmask 736256
      %v837 = vsel %vm836, %v831, %v833
      %v838 = vsel %vm836, %v833, %v835
      %v842 = vsel %vm397, %v372, 0
      %844 = vmatprep.subr.bf16.mxu0 0
      %845 = vmatpush1.bf16.msra.mxu0 0
      %846 = vmatprep.subr.bf16.mxu0 0
      %847 = vmatpush1.bf16.msra.mxu0 0
      %848 = vmatprep.subr.bf16.mxu0 0
      %849 = vmatpush1.bf16.msra.mxu0 0
      %850 = vmatprep.subr.bf16.mxu0 0
      %851 = vmatpush1.bf16.msra.mxu0 0
      %852 = vmatprep.subr.bf16.mxu0 0
      %853 = vmatpush1.bf16.msra.mxu0 0
      %854 = vmatprep.subr.bf16.mxu0 0
      %855 = vmatpush1.bf16.msra.mxu0 0
      %856 = vmatprep.subr.bf16.mxu0 0
      %857 = vmatpush1.bf16.msra.mxu0 0
      %858 = vmatprep.subr.bf16.mxu0 %v838
      %859 = vmatpush1.bf16.msra.mxu0 %v837
      %860 = vmatprep.subr.bf16.mxu0 0
      %861 = vmatpush2.bf16.msra.mxu0 0
      %862 = vmatprep.subr.bf16.mxu0 0
      %863 = vmatpush2.bf16.msra.mxu0 0
      %864 = vmatprep.subr.bf16.mxu0 0
      %865 = vmatpush2.bf16.msra.mxu0 0
      %866 = vmatprep.subr.bf16.mxu0 0
      %867 = vmatpush2.bf16.msra.mxu0 0
      %868 = vmatprep.subr.bf16.mxu0 0
      %869 = vmatpush2.bf16.msra.mxu0 0
      %870 = vmatprep.subr.bf16.mxu0 0
      %871 = vmatpush2.bf16.msra.mxu0 0
      %872 = vmatprep.subr.bf16.mxu0 0
      %873 = vmatpush2.bf16.msra.mxu0 0
      %874 = vmatprep.subr.bf16.mxu0 0
      %875 = vmatpush2.bf16.msra.mxu0 0
      %876 = vmatprep.mubr.bf16.mxu0 0
      %877 = vmatmul.mubr.bf16.gmra.mxu0 %v842
      %v878 = vpop.f32.mrf.mxu0
      %v879 = vadd.f32 0.0, %v878
      %v880 = vpop.f32.mrf.mxu0
      %v881 = vadd.f32 0.0, %v880
      %v882 = vpop.f32.mrf.mxu0
      %v883 = vpop.f32.mrf.mxu0
      %884 = vdwg.mxu0
      %v885 = vadd.f32 %v828, %v879
      %v886 = vadd.f32 %v829, %v881
      %v887 = vld [vmem:[%s338] sm:$0xff]
      %v888 = vld [vmem:[%s338 + $0x8] sm:$0xf]
      %v889 = vld [vmem:[%s338 + $0xc] sm:$0xff]
      %v890 = vld [vmem:[%s338 + $0x14] sm:$0xf]
      %v891 = vld [vmem:[%s3] sm:$0x3]
      %v892 = vld [vmem:[%s3 + $0x2] sm:$0x3]
      %v893 = vld [vmem:[%s3 + $0x4] sm:$0x3]
      %v894 = vld [vmem:[%s3 + $0x6] sm:$0x3]
      %v895 = vld [vmem:[%s3 + $0x8] sm:$0x3]
      %v896 = vld [vmem:[%s3 + $0xa] sm:$0x3]
      %v897 = vld [vmem:[%s3 + $0xc] sm:$0x3]
      %v898 = vld [vmem:[%s3 + $0xe] sm:$0x3]
      %v899 = vld [vmem:[%s3 + $0x10] sm:$0x3]
      %v902 = vunpack.c.l.b16 %v887
      %v903 = vunpack.c.h.b16 %v887
      %v904 = vunpack.c.l.b16 %v889
      %v905 = vunpack.c.h.b16 %v889
      %v906 = vpack.c.b16 %v904, %v902
      %v907 = vpack.c.b16 %v905, %v903
      %v911 = vsel %vm397, %v891, 0
      %913 = vmatprep.subr.bf16.mxu0 0
      %914 = vmatpush1.bf16.msra.mxu0 0
      %915 = vmatprep.subr.bf16.mxu0 0
      %916 = vmatpush1.bf16.msra.mxu0 0
      %917 = vmatprep.subr.bf16.mxu0 0
      %918 = vmatpush1.bf16.msra.mxu0 0
      %919 = vmatprep.subr.bf16.mxu0 0
      %920 = vmatpush1.bf16.msra.mxu0 0
      %921 = vmatprep.subr.bf16.mxu0 0
      %922 = vmatpush1.bf16.msra.mxu0 0
      %923 = vmatprep.subr.bf16.mxu0 0
      %924 = vmatpush1.bf16.msra.mxu0 0
      %925 = vmatprep.subr.bf16.mxu0 0
      %926 = vmatpush1.bf16.msra.mxu0 0
      %927 = vmatprep.subr.bf16.mxu0 %v907
      %928 = vmatpush1.bf16.msra.mxu0 %v906
      %929 = vmatprep.subr.bf16.mxu0 0
      %930 = vmatpush2.bf16.msra.mxu0 0
      %931 = vmatprep.subr.bf16.mxu0 0
      %932 = vmatpush2.bf16.msra.mxu0 0
      %933 = vmatprep.subr.bf16.mxu0 0
      %934 = vmatpush2.bf16.msra.mxu0 0
      %935 = vmatprep.subr.bf16.mxu0 0
      %936 = vmatpush2.bf16.msra.mxu0 0
      %937 = vmatprep.subr.bf16.mxu0 0
      %938 = vmatpush2.bf16.msra.mxu0 0
      %939 = vmatprep.subr.bf16.mxu0 0
      %940 = vmatpush2.bf16.msra.mxu0 0
      %941 = vmatprep.subr.bf16.mxu0 0
      %942 = vmatpush2.bf16.msra.mxu0 0
      %943 = vmatprep.subr.bf16.mxu0 0
      %944 = vmatpush2.bf16.msra.mxu0 0
      %945 = vmatprep.mubr.bf16.mxu0 0
      %946 = vmatmul.mubr.bf16.gmra.mxu0 %v911
      %v947 = vpop.f32.mrf.mxu0
      %v948 = vadd.f32 0.0, %v947
      %v949 = vpop.f32.mrf.mxu0
      %v950 = vadd.f32 0.0, %v949
      %v951 = vpop.f32.mrf.mxu0
      %v952 = vpop.f32.mrf.mxu0
      %953 = vdwg.mxu0
      %v954 = vadd.f32 %v885, %v948
      %v955 = vadd.f32 %v886, %v950
      %v958 = vunpack.c.l.b16 %v888
      %v959 = vunpack.c.l.b16 %v890
      %v960 = vpack.c.b16 %v959, %v958
      %961 = vrot.lane.b32.xlu0 %v906, 127
      %v962 = vpop.permute.xlu0 %961
      %963 = vrot.lane.b32.xlu0 %v907, 127
      %v964 = vpop.permute.xlu0 %963
      %965 = vrot.lane.b32.xlu0 %v960, 127
      %v966 = vpop.permute.xlu0 %965
      %v967 = vsel %vm392, %v962, %v964
      %v968 = vsel %vm392, %v964, %v966
      %v972 = vsel %vm397, %v892, 0
      %974 = vmatprep.subr.bf16.mxu0 0
      %975 = vmatpush1.bf16.msra.mxu0 0
      %976 = vmatprep.subr.bf16.mxu0 0
      %977 = vmatpush1.bf16.msra.mxu0 0
      %978 = vmatprep.subr.bf16.mxu0 0
      %979 = vmatpush1.bf16.msra.mxu0 0
      %980 = vmatprep.subr.bf16.mxu0 0
      %981 = vmatpush1.bf16.msra.mxu0 0
      %982 = vmatprep.subr.bf16.mxu0 0
      %983 = vmatpush1.bf16.msra.mxu0 0
      %984 = vmatprep.subr.bf16.mxu0 0
      %985 = vmatpush1.bf16.msra.mxu0 0
      %986 = vmatprep.subr.bf16.mxu0 0
      %987 = vmatpush1.bf16.msra.mxu0 0
      %988 = vmatprep.subr.bf16.mxu0 %v968
      %989 = vmatpush1.bf16.msra.mxu0 %v967
      %990 = vmatprep.subr.bf16.mxu0 0
      %991 = vmatpush2.bf16.msra.mxu0 0
      %992 = vmatprep.subr.bf16.mxu0 0
      %993 = vmatpush2.bf16.msra.mxu0 0
      %994 = vmatprep.subr.bf16.mxu0 0
      %995 = vmatpush2.bf16.msra.mxu0 0
      %996 = vmatprep.subr.bf16.mxu0 0
      %997 = vmatpush2.bf16.msra.mxu0 0
      %998 = vmatprep.subr.bf16.mxu0 0
      %999 = vmatpush2.bf16.msra.mxu0 0
      %1000 = vmatprep.subr.bf16.mxu0 0
      %1001 = vmatpush2.bf16.msra.mxu0 0
      %1002 = vmatprep.subr.bf16.mxu0 0
      %1003 = vmatpush2.bf16.msra.mxu0 0
      %1004 = vmatprep.subr.bf16.mxu0 0
      %1005 = vmatpush2.bf16.msra.mxu0 0
      %1006 = vmatprep.mubr.bf16.mxu0 0
      %1007 = vmatmul.mubr.bf16.gmra.mxu0 %v972
      %v1008 = vpop.f32.mrf.mxu0
      %v1009 = vadd.f32 0.0, %v1008
      %v1010 = vpop.f32.mrf.mxu0
      %v1011 = vadd.f32 0.0, %v1010
      %v1012 = vpop.f32.mrf.mxu0
      %v1013 = vpop.f32.mrf.mxu0
      %1014 = vdwg.mxu0
      %v1015 = vadd.f32 %v954, %v1009
      %v1016 = vadd.f32 %v955, %v1011
      %1017 = vrot.lane.b32.xlu0 %v906, 126
      %v1018 = vpop.permute.xlu0 %1017
      %1019 = vrot.lane.b32.xlu0 %v907, 126
      %v1020 = vpop.permute.xlu0 %1019
      %1021 = vrot.lane.b32.xlu0 %v960, 126
      %v1022 = vpop.permute.xlu0 %1021
      %v1023 = vsel %vm494, %v1018, %v1020
      %v1024 = vsel %vm494, %v1020, %v1022
      %v1028 = vsel %vm397, %v893, 0
      %1030 = vmatprep.subr.bf16.mxu0 0
      %1031 = vmatpush1.bf16.msra.mxu0 0
      %1032 = vmatprep.subr.bf16.mxu0 0
      %1033 = vmatpush1.bf16.msra.mxu0 0
      %1034 = vmatprep.subr.bf16.mxu0 0
      %1035 = vmatpush1.bf16.msra.mxu0 0
      %1036 = vmatprep.subr.bf16.mxu0 0
      %1037 = vmatpush1.bf16.msra.mxu0 0
      %1038 = vmatprep.subr.bf16.mxu0 0
      %1039 = vmatpush1.bf16.msra.mxu0 0
      %1040 = vmatprep.subr.bf16.mxu0 0
      %1041 = vmatpush1.bf16.msra.mxu0 0
      %1042 = vmatprep.subr.bf16.mxu0 0
      %1043 = vmatpush1.bf16.msra.mxu0 0
      %1044 = vmatprep.subr.bf16.mxu0 %v1024
      %1045 = vmatpush1.bf16.msra.mxu0 %v1023
      %1046 = vmatprep.subr.bf16.mxu0 0
      %1047 = vmatpush2.bf16.msra.mxu0 0
      %1048 = vmatprep.subr.bf16.mxu0 0
      %1049 = vmatpush2.bf16.msra.mxu0 0
      %1050 = vmatprep.subr.bf16.mxu0 0
      %1051 = vmatpush2.bf16.msra.mxu0 0
      %1052 = vmatprep.subr.bf16.mxu0 0
      %1053 = vmatpush2.bf16.msra.mxu0 0
      %1054 = vmatprep.subr.bf16.mxu0 0
      %1055 = vmatpush2.bf16.msra.mxu0 0
      %1056 = vmatprep.subr.bf16.mxu0 0
      %1057 = vmatpush2.bf16.msra.mxu0 0
      %1058 = vmatprep.subr.bf16.mxu0 0
      %1059 = vmatpush2.bf16.msra.mxu0 0
      %1060 = vmatprep.subr.bf16.mxu0 0
      %1061 = vmatpush2.bf16.msra.mxu0 0
      %1062 = vmatprep.mubr.bf16.mxu0 0
      %1063 = vmatmul.mubr.bf16.gmra.mxu0 %v1028
      %v1064 = vpop.f32.mrf.mxu0
      %v1065 = vadd.f32 0.0, %v1064
      %v1066 = vpop.f32.mrf.mxu0
      %v1067 = vadd.f32 0.0, %v1066
      %v1068 = vpop.f32.mrf.mxu0
      %v1069 = vpop.f32.mrf.mxu0
      %1070 = vdwg.mxu0
      %v1071 = vadd.f32 %v1015, %v1065
      %v1072 = vadd.f32 %v1016, %v1067
      %1073 = vrot.lane.b32.xlu0 %v906, 110
      %v1074 = vpop.permute.xlu0 %1073
      %1075 = vrot.lane.b32.xlu0 %v907, 110
      %v1076 = vpop.permute.xlu0 %1075
      %1077 = vrot.lane.b32.xlu0 %v960, 110
      %v1078 = vpop.permute.xlu0 %1077
      %v1079 = vsel %vm551, %v1074, %v1076
      %v1080 = vsel %vm551, %v1076, %v1078
      %v1084 = vsel %vm397, %v894, 0
      %1086 = vmatprep.subr.bf16.mxu0 0
      %1087 = vmatpush1.bf16.msra.mxu0 0
      %1088 = vmatprep.subr.bf16.mxu0 0
      %1089 = vmatpush1.bf16.msra.mxu0 0
      %1090 = vmatprep.subr.bf16.mxu0 0
      %1091 = vmatpush1.bf16.msra.mxu0 0
      %1092 = vmatprep.subr.bf16.mxu0 0
      %1093 = vmatpush1.bf16.msra.mxu0 0
      %1094 = vmatprep.subr.bf16.mxu0 0
      %1095 = vmatpush1.bf16.msra.mxu0 0
      %1096 = vmatprep.subr.bf16.mxu0 0
      %1097 = vmatpush1.bf16.msra.mxu0 0
      %1098 = vmatprep.subr.bf16.mxu0 0
      %1099 = vmatpush1.bf16.msra.mxu0 0
      %1100 = vmatprep.subr.bf16.mxu0 %v1080
      %1101 = vmatpush1.bf16.msra.mxu0 %v1079
      %1102 = vmatprep.subr.bf16.mxu0 0
      %1103 = vmatpush2.bf16.msra.mxu0 0
      %1104 = vmatprep.subr.bf16.mxu0 0
      %1105 = vmatpush2.bf16.msra.mxu0 0
      %1106 = vmatprep.subr.bf16.mxu0 0
      %1107 = vmatpush2.bf16.msra.mxu0 0
      %1108 = vmatprep.subr.bf16.mxu0 0
      %1109 = vmatpush2.bf16.msra.mxu0 0
      %1110 = vmatprep.subr.bf16.mxu0 0
      %1111 = vmatpush2.bf16.msra.mxu0 0
      %1112 = vmatprep.subr.bf16.mxu0 0
      %1113 = vmatpush2.bf16.msra.mxu0 0
      %1114 = vmatprep.subr.bf16.mxu0 0
      %1115 = vmatpush2.bf16.msra.mxu0 0
      %1116 = vmatprep.subr.bf16.mxu0 0
      %1117 = vmatpush2.bf16.msra.mxu0 0
      %1118 = vmatprep.mubr.bf16.mxu0 0
      %1119 = vmatmul.mubr.bf16.gmra.mxu0 %v1084
      %v1120 = vpop.f32.mrf.mxu0
      %v1121 = vadd.f32 0.0, %v1120
      %v1122 = vpop.f32.mrf.mxu0
      %v1123 = vadd.f32 0.0, %v1122
      %v1124 = vpop.f32.mrf.mxu0
      %v1125 = vpop.f32.mrf.mxu0
      %1126 = vdwg.mxu0
      %v1127 = vadd.f32 %v1071, %v1121
      %v1128 = vadd.f32 %v1072, %v1123
      %1129 = vrot.lane.b32.xlu0 %v906, 109
      %v1130 = vpop.permute.xlu0 %1129
      %1131 = vrot.lane.b32.xlu0 %v907, 109
      %v1132 = vpop.permute.xlu0 %1131
      %1133 = vrot.lane.b32.xlu0 %v960, 109
      %v1134 = vpop.permute.xlu0 %1133
      %v1135 = vsel %vm608, %v1130, %v1132
      %v1136 = vsel %vm608, %v1132, %v1134
      %v1140 = vsel %vm397, %v895, 0
      %1142 = vmatprep.subr.bf16.mxu0 0
      %1143 = vmatpush1.bf16.msra.mxu0 0
      %1144 = vmatprep.subr.bf16.mxu0 0
      %1145 = vmatpush1.bf16.msra.mxu0 0
      %1146 = vmatprep.subr.bf16.mxu0 0
      %1147 = vmatpush1.bf16.msra.mxu0 0
      %1148 = vmatprep.subr.bf16.mxu0 0
      %1149 = vmatpush1.bf16.msra.mxu0 0
      %1150 = vmatprep.subr.bf16.mxu0 0
      %1151 = vmatpush1.bf16.msra.mxu0 0
      %1152 = vmatprep.subr.bf16.mxu0 0
      %1153 = vmatpush1.bf16.msra.mxu0 0
      %1154 = vmatprep.subr.bf16.mxu0 0
      %1155 = vmatpush1.bf16.msra.mxu0 0
      %1156 = vmatprep.subr.bf16.mxu0 %v1136
      %1157 = vmatpush1.bf16.msra.mxu0 %v1135
      %1158 = vmatprep.subr.bf16.mxu0 0
      %1159 = vmatpush2.bf16.msra.mxu0 0
      %1160 = vmatprep.subr.bf16.mxu0 0
      %1161 = vmatpush2.bf16.msra.mxu0 0
      %1162 = vmatprep.subr.bf16.mxu0 0
      %1163 = vmatpush2.bf16.msra.mxu0 0
      %1164 = vmatprep.subr.bf16.mxu0 0
      %1165 = vmatpush2.bf16.msra.mxu0 0
      %1166 = vmatprep.subr.bf16.mxu0 0
      %1167 = vmatpush2.bf16.msra.mxu0 0
      %1168 = vmatprep.subr.bf16.mxu0 0
      %1169 = vmatpush2.bf16.msra.mxu0 0
      %1170 = vmatprep.subr.bf16.mxu0 0
      %1171 = vmatpush2.bf16.msra.mxu0 0
      %1172 = vmatprep.subr.bf16.mxu0 0
      %1173 = vmatpush2.bf16.msra.mxu0 0
      %1174 = vmatprep.mubr.bf16.mxu0 0
      %1175 = vmatmul.mubr.bf16.gmra.mxu0 %v1140
      %v1176 = vpop.f32.mrf.mxu0
      %v1177 = vadd.f32 0.0, %v1176
      %v1178 = vpop.f32.mrf.mxu0
      %v1179 = vadd.f32 0.0, %v1178
      %v1180 = vpop.f32.mrf.mxu0
      %v1181 = vpop.f32.mrf.mxu0
      %1182 = vdwg.mxu0
      %v1183 = vadd.f32 %v1127, %v1177
      %v1184 = vadd.f32 %v1128, %v1179
      %1185 = vrot.lane.b32.xlu0 %v906, 108
      %v1186 = vpop.permute.xlu0 %1185
      %1187 = vrot.lane.b32.xlu0 %v907, 108
      %v1188 = vpop.permute.xlu0 %1187
      %1189 = vrot.lane.b32.xlu0 %v960, 108
      %v1190 = vpop.permute.xlu0 %1189
      %v1191 = vsel %vm665, %v1186, %v1188
      %v1192 = vsel %vm665, %v1188, %v1190
      %v1196 = vsel %vm397, %v896, 0
      %1198 = vmatprep.subr.bf16.mxu0 0
      %1199 = vmatpush1.bf16.msra.mxu0 0
      %1200 = vmatprep.subr.bf16.mxu0 0
      %1201 = vmatpush1.bf16.msra.mxu0 0
      %1202 = vmatprep.subr.bf16.mxu0 0
      %1203 = vmatpush1.bf16.msra.mxu0 0
      %1204 = vmatprep.subr.bf16.mxu0 0
      %1205 = vmatpush1.bf16.msra.mxu0 0
      %1206 = vmatprep.subr.bf16.mxu0 0
      %1207 = vmatpush1.bf16.msra.mxu0 0
      %1208 = vmatprep.subr.bf16.mxu0 0
      %1209 = vmatpush1.bf16.msra.mxu0 0
      %1210 = vmatprep.subr.bf16.mxu0 0
      %1211 = vmatpush1.bf16.msra.mxu0 0
      %1212 = vmatprep.subr.bf16.mxu0 %v1192
      %1213 = vmatpush1.bf16.msra.mxu0 %v1191
      %1214 = vmatprep.subr.bf16.mxu0 0
      %1215 = vmatpush2.bf16.msra.mxu0 0
      %1216 = vmatprep.subr.bf16.mxu0 0
      %1217 = vmatpush2.bf16.msra.mxu0 0
      %1218 = vmatprep.subr.bf16.mxu0 0
      %1219 = vmatpush2.bf16.msra.mxu0 0
      %1220 = vmatprep.subr.bf16.mxu0 0
      %1221 = vmatpush2.bf16.msra.mxu0 0
      %1222 = vmatprep.subr.bf16.mxu0 0
      %1223 = vmatpush2.bf16.msra.mxu0 0
      %1224 = vmatprep.subr.bf16.mxu0 0
      %1225 = vmatpush2.bf16.msra.mxu0 0
      %1226 = vmatprep.subr.bf16.mxu0 0
      %1227 = vmatpush2.bf16.msra.mxu0 0
      %1228 = vmatprep.subr.bf16.mxu0 0
      %1229 = vmatpush2.bf16.msra.mxu0 0
      %1230 = vmatprep.mubr.bf16.mxu0 0
      %1231 = vmatmul.mubr.bf16.gmra.mxu0 %v1196
      %v1232 = vpop.f32.mrf.mxu0
      %v1233 = vadd.f32 0.0, %v1232
      %v1234 = vpop.f32.mrf.mxu0
      %v1235 = vadd.f32 0.0, %v1234
      %v1236 = vpop.f32.mrf.mxu0
      %v1237 = vpop.f32.mrf.mxu0
      %1238 = vdwg.mxu0
      %v1239 = vadd.f32 %v1183, %v1233
      %v1240 = vadd.f32 %v1184, %v1235
      %1241 = vrot.lane.b32.xlu0 %v906, 92
      %v1242 = vpop.permute.xlu0 %1241
      %1243 = vrot.lane.b32.xlu0 %v907, 92
      %v1244 = vpop.permute.xlu0 %1243
      %1245 = vrot.lane.b32.xlu0 %v960, 92
      %v1246 = vpop.permute.xlu0 %1245
      %v1247 = vsel %vm722, %v1242, %v1244
      %v1248 = vsel %vm722, %v1244, %v1246
      %v1252 = vsel %vm397, %v897, 0
      %1254 = vmatprep.subr.bf16.mxu0 0
      %1255 = vmatpush1.bf16.msra.mxu0 0
      %1256 = vmatprep.subr.bf16.mxu0 0
      %1257 = vmatpush1.bf16.msra.mxu0 0
      %1258 = vmatprep.subr.bf16.mxu0 0
      %1259 = vmatpush1.bf16.msra.mxu0 0
      %1260 = vmatprep.subr.bf16.mxu0 0
      %1261 = vmatpush1.bf16.msra.mxu0 0
      %1262 = vmatprep.subr.bf16.mxu0 0
      %1263 = vmatpush1.bf16.msra.mxu0 0
      %1264 = vmatprep.subr.bf16.mxu0 0
      %1265 = vmatpush1.bf16.msra.mxu0 0
      %1266 = vmatprep.subr.bf16.mxu0 0
      %1267 = vmatpush1.bf16.msra.mxu0 0
      %1268 = vmatprep.subr.bf16.mxu0 %v1248
      %1269 = vmatpush1.bf16.msra.mxu0 %v1247
      %1270 = vmatprep.subr.bf16.mxu0 0
      %1271 = vmatpush2.bf16.msra.mxu0 0
      %1272 = vmatprep.subr.bf16.mxu0 0
      %1273 = vmatpush2.bf16.msra.mxu0 0
      %1274 = vmatprep.subr.bf16.mxu0 0
      %1275 = vmatpush2.bf16.msra.mxu0 0
      %1276 = vmatprep.subr.bf16.mxu0 0
      %1277 = vmatpush2.bf16.msra.mxu0 0
      %1278 = vmatprep.subr.bf16.mxu0 0
      %1279 = vmatpush2.bf16.msra.mxu0 0
      %1280 = vmatprep.subr.bf16.mxu0 0
      %1281 = vmatpush2.bf16.msra.mxu0 0
      %1282 = vmatprep.subr.bf16.mxu0 0
      %1283 = vmatpush2.bf16.msra.mxu0 0
      %1284 = vmatprep.subr.bf16.mxu0 0
      %1285 = vmatpush2.bf16.msra.mxu0 0
      %1286 = vmatprep.mubr.bf16.mxu0 0
      %1287 = vmatmul.mubr.bf16.gmra.mxu0 %v1252
      %v1288 = vpop.f32.mrf.mxu0
      %v1289 = vadd.f32 0.0, %v1288
      %v1290 = vpop.f32.mrf.mxu0
      %v1291 = vadd.f32 0.0, %v1290
      %v1292 = vpop.f32.mrf.mxu0
      %v1293 = vpop.f32.mrf.mxu0
      %1294 = vdwg.mxu0
      %v1295 = vadd.f32 %v1239, %v1289
      %v1296 = vadd.f32 %v1240, %v1291
      %1297 = vrot.lane.b32.xlu0 %v906, 91
      %v1298 = vpop.permute.xlu0 %1297
      %1299 = vrot.lane.b32.xlu0 %v907, 91
      %v1300 = vpop.permute.xlu0 %1299
      %1301 = vrot.lane.b32.xlu0 %v960, 91
      %v1302 = vpop.permute.xlu0 %1301
      %v1303 = vsel %vm779, %v1298, %v1300
      %v1304 = vsel %vm779, %v1300, %v1302
      %v1308 = vsel %vm397, %v898, 0
      %1310 = vmatprep.subr.bf16.mxu0 0
      %1311 = vmatpush1.bf16.msra.mxu0 0
      %1312 = vmatprep.subr.bf16.mxu0 0
      %1313 = vmatpush1.bf16.msra.mxu0 0
      %1314 = vmatprep.subr.bf16.mxu0 0
      %1315 = vmatpush1.bf16.msra.mxu0 0
      %1316 = vmatprep.subr.bf16.mxu0 0
      %1317 = vmatpush1.bf16.msra.mxu0 0
      %1318 = vmatprep.subr.bf16.mxu0 0
      %1319 = vmatpush1.bf16.msra.mxu0 0
      %1320 = vmatprep.subr.bf16.mxu0 0
      %1321 = vmatpush1.bf16.msra.mxu0 0
      %1322 = vmatprep.subr.bf16.mxu0 0
      %1323 = vmatpush1.bf16.msra.mxu0 0
      %1324 = vmatprep.subr.bf16.mxu0 %v1304
      %1325 = vmatpush1.bf16.msra.mxu0 %v1303
      %1326 = vmatprep.subr.bf16.mxu0 0
      %1327 = vmatpush2.bf16.msra.mxu0 0
      %1328 = vmatprep.subr.bf16.mxu0 0
      %1329 = vmatpush2.bf16.msra.mxu0 0
      %1330 = vmatprep.subr.bf16.mxu0 0
      %1331 = vmatpush2.bf16.msra.mxu0 0
      %1332 = vmatprep.subr.bf16.mxu0 0
      %1333 = vmatpush2.bf16.msra.mxu0 0
      %1334 = vmatprep.subr.bf16.mxu0 0
      %1335 = vmatpush2.bf16.msra.mxu0 0
      %1336 = vmatprep.subr.bf16.mxu0 0
      %1337 = vmatpush2.bf16.msra.mxu0 0
      %1338 = vmatprep.subr.bf16.mxu0 0
      %1339 = vmatpush2.bf16.msra.mxu0 0
      %1340 = vmatprep.subr.bf16.mxu0 0
      %1341 = vmatpush2.bf16.msra.mxu0 0
      %1342 = vmatprep.mubr.bf16.mxu0 0
      %1343 = vmatmul.mubr.bf16.gmra.mxu0 %v1308
      %v1344 = vpop.f32.mrf.mxu0
      %v1345 = vadd.f32 0.0, %v1344
      %v1346 = vpop.f32.mrf.mxu0
      %v1347 = vadd.f32 0.0, %v1346
      %v1348 = vpop.f32.mrf.mxu0
      %v1349 = vpop.f32.mrf.mxu0
      %1350 = vdwg.mxu0
      %v1351 = vadd.f32 %v1295, %v1345
      %v1352 = vadd.f32 %v1296, %v1347
      %1353 = vrot.lane.b32.xlu0 %v906, 90
      %v1354 = vpop.permute.xlu0 %1353
      %1355 = vrot.lane.b32.xlu0 %v907, 90
      %v1356 = vpop.permute.xlu0 %1355
      %1357 = vrot.lane.b32.xlu0 %v960, 90
      %v1358 = vpop.permute.xlu0 %1357
      %v1359 = vsel %vm836, %v1354, %v1356
      %v1360 = vsel %vm836, %v1356, %v1358
      %v1364 = vsel %vm397, %v899, 0
      %1366 = vmatprep.subr.bf16.mxu0 0
      %1367 = vmatpush1.bf16.msra.mxu0 0
      %1368 = vmatprep.subr.bf16.mxu0 0
      %1369 = vmatpush1.bf16.msra.mxu0 0
      %1370 = vmatprep.subr.bf16.mxu0 0
      %1371 = vmatpush1.bf16.msra.mxu0 0
      %1372 = vmatprep.subr.bf16.mxu0 0
      %1373 = vmatpush1.bf16.msra.mxu0 0
      %1374 = vmatprep.subr.bf16.mxu0 0
      %1375 = vmatpush1.bf16.msra.mxu0 0
      %1376 = vmatprep.subr.bf16.mxu0 0
      %1377 = vmatpush1.bf16.msra.mxu0 0
      %1378 = vmatprep.subr.bf16.mxu0 0
      %1379 = vmatpush1.bf16.msra.mxu0 0
      %1380 = vmatprep.subr.bf16.mxu0 %v1360
      %1381 = vmatpush1.bf16.msra.mxu0 %v1359
      %1382 = vmatprep.subr.bf16.mxu0 0
      %1383 = vmatpush2.bf16.msra.mxu0 0
      %1384 = vmatprep.subr.bf16.mxu0 0
      %1385 = vmatpush2.bf16.msra.mxu0 0
      %1386 = vmatprep.subr.bf16.mxu0 0
      %1387 = vmatpush2.bf16.msra.mxu0 0
      %1388 = vmatprep.subr.bf16.mxu0 0
      %1389 = vmatpush2.bf16.msra.mxu0 0
      %1390 = vmatprep.subr.bf16.mxu0 0
      %1391 = vmatpush2.bf16.msra.mxu0 0
      %1392 = vmatprep.subr.bf16.mxu0 0
      %1393 = vmatpush2.bf16.msra.mxu0 0
      %1394 = vmatprep.subr.bf16.mxu0 0
      %1395 = vmatpush2.bf16.msra.mxu0 0
      %1396 = vmatprep.subr.bf16.mxu0 0
      %1397 = vmatpush2.bf16.msra.mxu0 0
      %1398 = vmatprep.mubr.bf16.mxu0 0
      %1399 = vmatmul.mubr.bf16.gmra.mxu0 %v1364
      %v1400 = vpop.f32.mrf.mxu0
      %v1401 = vadd.f32 0.0, %v1400
      %v1402 = vpop.f32.mrf.mxu0
      %v1403 = vadd.f32 0.0, %v1402
      %v1404 = vpop.f32.mrf.mxu0
      %v1405 = vpop.f32.mrf.mxu0
      %1406 = vdwg.mxu0
      %v1407 = vadd.f32 %v1351, %v1401
      %v1408 = vadd.f32 %v1352, %v1403
      %v1409 = vld [vmem:[%s4] sm:$0xf]
      %1411 = vset.pattern.permute.xlu0 0
      %1412 = vperm.xlu0 %1411, %v1409
      %v1413 = vpop.permute.xlu0 %1412
      %v1415 = vmul.f32 %v1407, %v1413
      %v1416 = vmul.f32 %v1408, %v1413
      %1417 = vset.pattern.permute.xlu0 1
      %1418 = vperm.xlu0 %1417, %v1409
      %v1419 = vpop.permute.xlu0 %1418
      %v1421 = vadd.f32 %v1415, %v1419
      %v1422 = vadd.f32 %v1416, %v1419
      %v1423 = vmax.f32 %v1421, 0.0
      %v1424 = vmax.f32 %v1422, 0.0
      %v1425 = vld [vmem:[%s347] sm:$0xff]
      %v1427 = vcombine.high %v1425, %v1425
      %v1429 = vadd.f32 %v1423, %v1425
      %v1430 = vadd.f32 %v1424, %v1427
      %v1433 = vcombine.low %v1429, %v1430
      %1435 = vst [vmem:[%s357] sm:$0xff] %v1433
      %s1436 = smul.u32 2, %s22
      %p1437 = scmp.lt.s32.totalorder %s21, 1
      %s1438 = scalar_select %p1437, %s21, 1
      %p1439 = scmp.lt.s32.totalorder %s1436, 3
      %s1440 = scalar_select %p1439, %s1436, 3
      %s1441 = smul.addr %s1438, 4
      %s1442 = sadd.s32 %s1440, %s1441
      %s1443 = smul.addr %s1442, 4
      %s1444 = scalar_lea.vmem %s6, %s1443
      // Predicated region
      $region45: #{rsu4_forward.15} parent=43 // pred_check
        %p1445 = pneg %p196
      $region46: #{rsu4_forward.15} parent=43 // pred_check_branch
        %1447 = sbr.rel (%p1445) target = $region48
      $region47: #{rsu4_forward.15} parent=43 // pred_region
        %s1448 = smul.u32 2, %s22
      $region48: #{rsu4_forward.15} parent=43 // pred_fallthru
        _
    $region44: #{rsu4_forward.15} parent=5 // pred_fallthru
      _
    %p1449 = scmp.le.s32.totalorder 2, %s12
    // Predicated region
    $region49: #{rsu4_forward.15} parent=5 // pred_check
      %p1450 = pneg %p1449
    $region50: #{rsu4_forward.15} parent=5 // pred_check_branch
      %1452 = sbr.rel (%p1450) target = $region52
    $region51: #{rsu4_forward.15} parent=5 // pred_region
      %s1453 = ssub.s32 %s12, 2
      // Predicated region
      $region53: #{rsu4_forward.15} parent=51 // pred_check
        %p1454 = pneg %p202
      $region54: #{rsu4_forward.15} parent=51 // pred_check_branch
        %1456 = sbr.rel (%p1454) target = $region56
      $region55: #{rsu4_forward.15} parent=51 // pred_region
        %s1457 = smul.u32 2, %s24
        %p1458 = scmp.lt.s32.totalorder %s23, 1
        %s1459 = scalar_select %p1458, %s23, 1
        %p1460 = scmp.lt.s32.totalorder %s1457, 3
        %s1461 = scalar_select %p1460, %s1457, 3
        %s1462 = smul.addr %s1459, 4
        %s1463 = sadd.s32 %s1461, %s1462
        %s1464 = smul.addr %s1463, 4
        %s1465 = scalar_lea.vmem %s6, %s1464
      $region56: #{rsu4_forward.15} parent=51 // pred_fallthru
        _
    $region52: #{rsu4_forward.15} parent=5 // pred_fallthru
      _
  $region6: #{rsu4_forward.15} parent=0 // loop_footer
    %s16 = sadd.s32 1, %s12
  $region7: #{rsu4_forward.15} parent=0 // loop_footer_branch
    %11 = sbr.rel target = $region3
  $region8: #{rsu4_forward.15} parent=0 // loop_exit
    _

</llo_original>
